<compile_context>
chip_gen: v7x
topology: tpu7x:2x2x1
jax: 0.10.0
libtpu: 0.0.40
codegen_flags: <defaults>
</compile_context>

<pallas_src>
import functools

import jax
import jax.numpy as jnp
from jax.experimental import pallas as pl
from jax.experimental.pallas import tpu as pltpu


def _round_up(x, m):
    return (x + m - 1) // m * m


# ----------------------------------------------------------------------------
# Pallas kernel: batched tiled matmul with K-accumulation and fused
# bias + activation epilogue.
#   a: (G, M, K) bf16, b: (G, K, N) bf16, bias: (G, 1, N) f32 -> (G, M, N)
# grid = (G, M-tiles, K-tiles); K is the last ("arbitrary") axis.
# ----------------------------------------------------------------------------
def _bmm_kernel(a_ref, b_ref, bias_ref, o_ref, acc_ref, *, act):
    @pl.when(pl.program_id(2) == 0)
    def _():
        acc_ref[...] = jnp.zeros_like(acc_ref)

    acc_ref[...] += jnp.dot(a_ref[0], b_ref[0],
                            preferred_element_type=jnp.float32)

    @pl.when(pl.program_id(2) == pl.num_programs(2) - 1)
    def _():
        acc = acc_ref[...] + bias_ref[0]
        if act == "leaky":
            acc = jnp.where(acc > 0, acc, 0.2 * acc)
        elif act == "relu":
            acc = jnp.maximum(acc, 0.0)
        elif act == "tanh":
            acc = jnp.tanh(acc)
        o_ref[0] = acc.astype(o_ref.dtype)


def pallas_bmm(a, b, bias=None, act=None, out_dtype=jnp.float32):
    """a: (G, M, K), b: (G, K, N), bias: (G, N) or None -> (G, M, N) f32."""
    G, M, K = a.shape
    _, _, N = b.shape

    # Lane-dense output: pad Cout up to a multiple of 128.
    Np = _round_up(N, 128)

    # M tiling: prefer >= 2 parallel M-tiles so megacore (v7x) engages.
    if M > 128:
        TM = 128
        Mp = _round_up(M, TM)
    elif M >= 16:
        Mp = _round_up(M, 16)
        TM = Mp // 2
    else:
        Mp = _round_up(M, 8)
        TM = Mp

    # K tiling (reduction axis last in the grid, accumulate in VMEM scratch).
    TK = K
    for cand in (1024, 512):
        if K > cand and K % cand == 0:
            TK = cand
            break
    KT = K // TK

    a_p = a.astype(jnp.bfloat16)
    if Mp != M:
        a_p = jnp.pad(a_p, ((0, 0), (0, Mp - M), (0, 0)))
    b_p = b.astype(jnp.bfloat16)
    if Np != N:
        b_p = jnp.pad(b_p, ((0, 0), (0, 0), (0, Np - N)))
    if bias is None:
        bias_p = jnp.zeros((G, 1, Np), jnp.float32)
    else:
        bias_p = bias.astype(jnp.float32).reshape(G, 1, N)
        if Np != N:
            bias_p = jnp.pad(bias_p, ((0, 0), (0, 0), (0, Np - N)))

    out = pl.pallas_call(
        functools.partial(_bmm_kernel, act=act),
        out_shape=jax.ShapeDtypeStruct((G, Mp, Np), out_dtype),
        grid=(G, Mp // TM, KT),
        in_specs=[
            pl.BlockSpec((1, TM, TK), lambda g, i, k: (g, i, k)),
            pl.BlockSpec((1, TK, Np), lambda g, i, k: (g, k, 0)),
            pl.BlockSpec((1, 1, Np), lambda g, i, k: (g, 0, 0)),
        ],
        out_specs=pl.BlockSpec((1, TM, Np), lambda g, i, k: (g, i, 0)),
        scratch_shapes=[pltpu.VMEM((TM, Np), jnp.float32)],
        compiler_params=pltpu.CompilerParams(
            dimension_semantics=("parallel", "parallel", "arbitrary"),
            vmem_limit_bytes=32 * 1024 * 1024,
        ),
    )(a_p, b_p, bias_p)
    return out[:, :M, :N]


# ----------------------------------------------------------------------------
# Conv glue — NHWC layout (channels last -> channels land in lanes, no 5-D
# transposes of activations; BN statistics become column reductions).
# ----------------------------------------------------------------------------
def conv4x4_s2(x, w, act=None):
    """x: (B, H, W, Cin) ; w: (Cout, Cin, 4, 4) PyTorch Conv2d layout.
    kernel 4x4, stride 2, pad 1."""
    x = x.astype(jnp.bfloat16)
    B, H, W, C = x.shape
    Cout = w.shape[0]
    Ho, Wo = H // 2, W // 2
    xp = jnp.pad(x, ((0, 0), (1, 1), (1, 1), (0, 0)))
    pats = [xp[:, di:di + 2 * Ho:2, dj:dj + 2 * Wo:2, :]
            for di in range(4) for dj in range(4)]
    p = jnp.stack(pats, axis=3).reshape(B * Ho * Wo, 16 * C)
    wm = w.transpose(2, 3, 1, 0).reshape(16 * C, Cout)     # (ky,kx,cin) x cout
    out = pallas_bmm(p[None], wm[None], act=act)[0]
    return out.reshape(B, Ho, Wo, Cout)


def conv4x4_s1(x, w, pad, bias=None, act=None):
    """x: (B, H, W, Cin) ; w: (Cout, Cin, 4, 4). kernel 4x4, stride 1."""
    x = x.astype(jnp.bfloat16)
    B, H, W, C = x.shape
    Cout = w.shape[0]
    xp = jnp.pad(x, ((0, 0), (pad, pad), (pad, pad), (0, 0)))
    Ho, Wo = H + 2 * pad - 3, W + 2 * pad - 3
    pats = [xp[:, di:di + Ho, dj:dj + Wo, :]
            for di in range(4) for dj in range(4)]
    p = jnp.stack(pats, axis=3).reshape(B * Ho * Wo, 16 * C)
    wm = w.transpose(2, 3, 1, 0).reshape(16 * C, Cout)
    out = pallas_bmm(p[None], wm[None],
                     bias=None if bias is None else bias[None], act=act)[0]
    return out.reshape(B, Ho, Wo, Cout)


def conv_transpose4x4_s2(x, w):
    """x: (B, H, W, Cin) ; w: (Cin, Cout, 4, 4) PyTorch ConvTranspose2d layout.
    kernel 4, stride 2, pad 1 -> output (B, 2H, 2W, Cout).

    Sub-pixel decomposition: output parity (r, s) at (2m+r, 2n+s) is a 2x2
    stride-1 conv of the 1-padded input with a parity-dependent sub-kernel.
    All 4 parities run as one batched Pallas matmul (G = 4, parallel axis)."""
    x = x.astype(jnp.bfloat16)
    B, H, W, C = x.shape
    Cout = w.shape[1]
    xp = jnp.pad(x, ((0, 0), (1, 1), (1, 1), (0, 0)))
    ky = {0: (3, 1), 1: (2, 0)}     # kernel-row taps per output-row parity
    kx = {0: (3, 1), 1: (2, 0)}     # kernel-col taps per output-col parity

    p_list, w_list = [], []
    for r in (0, 1):
        for s in (0, 1):
            pats = [xp[:, r + a:r + a + H, s + b:s + b + W, :]
                    for a in range(2) for b in range(2)]
            p_list.append(jnp.stack(pats, axis=3).reshape(B * H * W, 4 * C))
            wsub = w[:, :, list(ky[r]), :][:, :, :, list(kx[s])]  # (Cin,Cout,2,2)
            w_list.append(wsub.transpose(2, 3, 0, 1).reshape(4 * C, Cout))

    pa = jnp.stack(p_list, axis=0)            # (4, B*H*W, 4C)
    wb = jnp.stack(w_list, axis=0)            # (4, 4C, Cout)
    out = pallas_bmm(pa, wb)                  # (4, B*H*W, Cout)
    out = out.reshape(2, 2, B, H, W, Cout)
    # out[r, s, b, m, n, c] -> y[b, 2m+r, 2n+s, c]
    y = out.transpose(2, 3, 0, 4, 1, 5).reshape(B, 2 * H, 2 * W, Cout)
    return y


# ----------------------------------------------------------------------------
# Model blocks
# ----------------------------------------------------------------------------
def batchnorm_act(x, gamma, beta, act, eps=1e-5):
    """PyTorch BatchNorm2d in training mode (batch stats, biased variance),
    fused with the following activation as one elementwise pass (NHWC)."""
    mean = jnp.mean(x, axis=(0, 1, 2))
    var = jnp.var(x, axis=(0, 1, 2))
    scale = gamma / jnp.sqrt(var + eps)
    shift = beta - mean * scale
    y = x * scale + shift
    if act == "leaky":
        y = jnp.where(y > 0, y, 0.2 * y)
    elif act == "relu":
        y = jnp.maximum(y, 0.0)
    return y


def unet_down(x, w, bn=None):
    if bn is None:
        return conv4x4_s2(x, w, act="leaky")     # LeakyReLU(0.2) fused in kernel
    y = conv4x4_s2(x, w)
    return batchnorm_act(y, bn[0], bn[1], act="leaky")


def unet_up(x, skip, w, gamma, beta):
    y = conv_transpose4x4_s2(x, w)
    y = batchnorm_act(y, gamma, beta, act="relu")
    return jnp.concatenate([y, skip], axis=-1)


def final_block(x, w, b):
    x = jnp.repeat(jnp.repeat(x, 2, axis=1), 2, axis=2)   # nn.Upsample(2), nearest
    x = jnp.pad(x, ((0, 0), (1, 0), (1, 0), (0, 0)))      # nn.ZeroPad2d((1,0,1,0))
    return conv4x4_s1(x, w, pad=1, bias=b, act="tanh")    # Conv2d(64,out,4,pad=1)+Tanh


def unet_forward(x_nchw, params):
    x = jnp.transpose(x_nchw, (0, 2, 3, 1))                               # NHWC
    d1 = unet_down(x, params["d1_w"])                                     # (B, H/2,  W/2,  32)
    d2 = unet_down(d1, params["d2_w"], (params["d2_g"], params["d2_b"]))  # (B, H/4,  W/4, 128)
    d3 = unet_down(d2, params["d3_w"], (params["d3_g"], params["d3_b"]))  # (B, H/8,  W/8, 256)
    d4 = unet_down(d3, params["d4_w"], (params["d4_g"], params["d4_b"]))  # (B, H/16, W/16,256)
    d5 = unet_down(d4, params["d5_w"])                                    # (B, H/32, W/32,256)
    u1 = unet_up(d5, d4, params["u1_w"], params["u1_g"], params["u1_b"])  # (B, ..., 512)
    u2 = unet_up(u1, d3, params["u2_w"], params["u2_g"], params["u2_b"])
    u3 = unet_up(u2, d2, params["u3_w"], params["u3_g"], params["u3_b"])
    u45 = unet_up(u3, d1, params["u4_w"], params["u4_g"], params["u4_b"]) # (B, H/2, W/2, 64)
    u_out = final_block(u45, params["fin_w"], params["fin_b"])            # (B, H, W, 3)
    return jnp.transpose(u_out, (0, 3, 1, 2))                             # back to NCHW


# ----------------------------------------------------------------------------
# Deterministic parameter init (synthetic; shapes from UNet.__init__)
# Conv weights stored as bf16 (MXU operand dtype); BN/bias params in f32.
# ----------------------------------------------------------------------------
def init_params(key, in_channels=3, out_channels=3):
    ks = jax.random.split(key, 10)

    def nrm(k, shape, scale=0.05):
        return (scale * jax.random.normal(k, shape, jnp.float32)).astype(jnp.bfloat16)

    p = {}
    p["d1_w"] = nrm(ks[0], (32, in_channels, 4, 4))
    p["d2_w"] = nrm(ks[1], (128, 32, 4, 4))
    p["d3_w"] = nrm(ks[2], (256, 128, 4, 4))
    p["d4_w"] = nrm(ks[3], (256, 256, 4, 4))
    p["d5_w"] = nrm(ks[4], (256, 256, 4, 4))
    p["u1_w"] = nrm(ks[5], (256, 256, 4, 4))    # ConvTranspose2d(Cin, Cout, 4, 4)
    p["u2_w"] = nrm(ks[6], (512, 256, 4, 4))
    p["u3_w"] = nrm(ks[7], (512, 128, 4, 4))
    p["u4_w"] = nrm(ks[8], (256, 32, 4, 4))
    p["fin_w"] = nrm(ks[9], (out_channels, 64, 4, 4))
    p["fin_b"] = jnp.zeros((out_channels,), jnp.float32)
    for name, c in [("d2", 128), ("d3", 256), ("d4", 256),
                    ("u1", 256), ("u2", 256), ("u3", 128), ("u4", 32)]:
        p[name + "_g"] = jnp.ones((c,), jnp.float32)
        p[name + "_b"] = jnp.zeros((c,), jnp.float32)
    return p


if __name__ == "__main__":
    # Smallest spatial size supporting 5 stride-2 downsamples: 32.
    N = 32
    B = 2
    key = jax.random.PRNGKey(0)
    kp, kx = jax.random.split(key)
    params = init_params(kp)
    x = jax.random.normal(kx, (B, 3, N, N), jnp.float32)

    u_out = jax.jit(unet_forward)(x, params)
    jax.block_until_ready(u_out)

    assert u_out.shape == (B, 3, N, N)
    assert bool(jnp.all(jnp.isfinite(u_out)))
    print("KERNEL_OK")
</pallas_src>

<mosaic_0001>
module attributes {stable_mosaic.version = 11 : i64} {
  func.func @_bmm_kernel(%arg0: i32, %arg1: i32, %arg2: i32, %arg3: memref<1x128x48xbf16, #tpu.memory_space<vmem>>, %arg4: memref<1x48x128xbf16, #tpu.memory_space<vmem>>, %arg5: memref<1x1x128xf32, #tpu.memory_space<vmem>>, %arg6: memref<1x128x128xf32, #tpu.memory_space<vmem>>, %arg7: memref<128x128xf32, #tpu.memory_space<vmem>>) attributes {dimension_semantics = [#tpu.dimension_semantics<parallel>, #tpu.dimension_semantics<parallel>, #tpu.dimension_semantics<arbitrary>], iteration_bounds = array<i64: 1, 4, 1>, scalar_prefetch = 0 : i64, scratch_operands = 1 : i64, tpu.core_type = #tpu.core_type<tc>, window_params = [{transform_indices = @transform_0, window_bounds = array<i64: 1, 128, 48>}, {transform_indices = @transform_1, window_bounds = array<i64: 1, 48, 128>}, {transform_indices = @transform_2, window_bounds = array<i64: 1, 1, 128>}, {transform_indices = @transform_3, window_bounds = array<i64: 1, 128, 128>}]} {
    %c0_i32 = arith.constant 0 : i32
    %0 = arith.cmpi eq, %arg2, %c0_i32 : i32
    %1 = arith.extui %0 : i1 to i32
    %c0_i32_0 = arith.constant 0 : i32
    %2 = arith.cmpi ne, %1, %c0_i32_0 : i32
    scf.if %2 {
      %cst_12 = arith.constant 0.000000e+00 : f32
      %14 = vector.broadcast %cst_12 : f32 to vector<128x128xf32>
      %c0_13 = arith.constant 0 : index
      %c0_14 = arith.constant 0 : index
      %15 = vector.load %arg7[%c0_13, %c0_14] : memref<128x128xf32, #tpu.memory_space<vmem>>, vector<128x128xf32>
      tpu.vector_store %arg7[%c0_13, %c0_14], %14 {strides = array<i32>} : memref<128x128xf32, #tpu.memory_space<vmem>>, vector<128x128xf32>,
    } else {
    }
    %c0 = arith.constant 0 : index
    %c0_1 = arith.constant 0 : index
    %3 = vector.load %arg7[%c0, %c0_1] : memref<128x128xf32, #tpu.memory_space<vmem>>, vector<128x128xf32>
    %c0_2 = arith.constant 0 : index
    %c0_3 = arith.constant 0 : index
    %c0_4 = arith.constant 0 : index
    %4 = vector.load %arg3[%c0_2, %c0_3, %c0_4] : memref<1x128x48xbf16, #tpu.memory_space<vmem>>, vector<1x128x48xbf16>
    %5 = vector.shape_cast %4 : vector<1x128x48xbf16> to vector<128x48xbf16>
    %c0_5 = arith.constant 0 : index
    %c0_6 = arith.constant 0 : index
    %c0_7 = arith.constant 0 : index
    %6 = vector.load %arg4[%c0_5, %c0_6, %c0_7] : memref<1x48x128xbf16, #tpu.memory_space<vmem>>, vector<1x48x128xbf16>
    %7 = vector.shape_cast %6 : vector<1x48x128xbf16> to vector<48x128xbf16>
    %cst = arith.constant dense<0.000000e+00> : vector<128x128xf32>
    %8 = tpu.matmul %5, %7, %cst {dimension_numbers = #tpu.dot_dimension_numbers<[1], [0], [0], [1], [0, 0, 1, 1], [], []>} : vector<128x48xbf16>, vector<48x128xbf16>, vector<128x128xf32> -> vector<128x128xf32>
    %9 = arith.addf %3, %8 : vector<128x128xf32>
    %c0_8 = arith.constant 0 : index
    %c0_9 = arith.constant 0 : index
    %10 = vector.load %arg7[%c0_8, %c0_9] : memref<128x128xf32, #tpu.memory_space<vmem>>, vector<128x128xf32>
    tpu.vector_store %arg7[%c0_8, %c0_9], %9 {strides = array<i32>} : memref<128x128xf32, #tpu.memory_space<vmem>>, vector<128x128xf32>,
    %c0_i32_10 = arith.constant 0 : i32
    %11 = arith.cmpi eq, %arg2, %c0_i32_10 : i32
    %12 = arith.extui %11 : i1 to i32
    %c0_i32_11 = arith.constant 0 : i32
    %13 = arith.cmpi ne, %12, %c0_i32_11 : i32
    scf.if %13 {
      %c0_12 = arith.constant 0 : index
      %c0_13 = arith.constant 0 : index
      %14 = vector.load %arg7[%c0_12, %c0_13] : memref<128x128xf32, #tpu.memory_space<vmem>>, vector<128x128xf32>
      %c0_14 = arith.constant 0 : index
      %c0_15 = arith.constant 0 : index
      %c0_16 = arith.constant 0 : index
      %15 = vector.load %arg5[%c0_14, %c0_15, %c0_16] : memref<1x1x128xf32, #tpu.memory_space<vmem>>, vector<1x1x128xf32>
      %16 = vector.shape_cast %15 : vector<1x1x128xf32> to vector<1x128xf32>
      %17 = vector.broadcast %16 : vector<1x128xf32> to vector<128x128xf32>
      %18 = arith.addf %14, %17 : vector<128x128xf32>
      %cst_17 = arith.constant 0.000000e+00 : f32
      %19 = vector.broadcast %cst_17 : f32 to vector<128x128xf32>
      %20 = arith.cmpf ogt, %18, %19 : vector<128x128xf32>
      %cst_18 = arith.constant 2.000000e-01 : f32
      %21 = vector.broadcast %cst_18 : f32 to vector<128x128xf32>
      %22 = arith.mulf %21, %18 : vector<128x128xf32>
      %23 = arith.select %20, %18, %22 : vector<128x128xi1>, vector<128x128xf32>
      %c0_19 = arith.constant 0 : index
      %c0_20 = arith.constant 0 : index
      %c0_21 = arith.constant 0 : index
      %24 = vector.load %arg6[%c0_19, %c0_20, %c0_21] : memref<1x128x128xf32, #tpu.memory_space<vmem>>, vector<1x128x128xf32>
      %25 = vector.shape_cast %24 : vector<1x128x128xf32> to vector<128x128xf32>
      %26 = vector.shape_cast %23 : vector<128x128xf32> to vector<1x128x128xf32>
      tpu.vector_store %arg6[%c0_19, %c0_20, %c0_21], %26 {strides = array<i32>} : memref<1x128x128xf32, #tpu.memory_space<vmem>>, vector<1x128x128xf32>,
    } else {
    }
    return
  }
  func.func @transform_0(%arg0: i32, %arg1: i32, %arg2: i32) -> (i32, i32, i32) {
    %c0_i32 = arith.constant 0 : i32
    return %arg0, %arg1, %arg2 : i32, i32, i32
  }
  func.func @transform_1(%arg0: i32, %arg1: i32, %arg2: i32) -> (i32, i32, i32) {
    %c0_i32 = arith.constant 0 : i32
    %c0_i32_0 = arith.constant 0 : i32
    return %arg0, %arg2, %c0_i32 : i32, i32, i32
  }
  func.func @transform_2(%arg0: i32, %arg1: i32, %arg2: i32) -> (i32, i32, i32) {
    %c0_i32 = arith.constant 0 : i32
    %c0_i32_0 = arith.constant 0 : i32
    %c0_i32_1 = arith.constant 0 : i32
    return %arg0, %c0_i32, %c0_i32_0 : i32, i32, i32
  }
  func.func @transform_3(%arg0: i32, %arg1: i32, %arg2: i32) -> (i32, i32, i32) {
    %c0_i32 = arith.constant 0 : i32
    %c0_i32_0 = arith.constant 0 : i32
    return %arg0, %arg1, %c0_i32 : i32, i32, i32
  }
}

module attributes {stable_mosaic.version = 11 : i64} {
  func.func @_bmm_kernel(%arg0: i32, %arg1: i32, %arg2: i32, %arg3: memref<1x64x512xbf16, #tpu.memory_space<vmem>>, %arg4: memref<1x512x128xbf16, #tpu.memory_space<vmem>>, %arg5: memref<1x1x128xf32, #tpu.memory_space<vmem>>, %arg6: memref<1x64x128xf32, #tpu.memory_space<vmem>>, %arg7: memref<64x128xf32, #tpu.memory_space<vmem>>) attributes {dimension_semantics = [#tpu.dimension_semantics<parallel>, #tpu.dimension_semantics<parallel>, #tpu.dimension_semantics<arbitrary>], iteration_bounds = array<i64: 1, 2, 1>, scalar_prefetch = 0 : i64, scratch_operands = 1 : i64, tpu.core_type = #tpu.core_type<tc>, window_params = [{transform_indices = @transform_0, window_bounds = array<i64: 1, 64, 512>}, {transform_indices = @transform_1, window_bounds = array<i64: 1, 512, 128>}, {transform_indices = @transform_2, window_bounds = array<i64: 1, 1, 128>}, {transform_indices = @transform_3, window_bounds = array<i64: 1, 64, 128>}]} {
    %c0_i32 = arith.constant 0 : i32
    %0 = arith.cmpi eq, %arg2, %c0_i32 : i32
    %1 = arith.extui %0 : i1 to i32
    %c0_i32_0 = arith.constant 0 : i32
    %2 = arith.cmpi ne, %1, %c0_i32_0 : i32
    scf.if %2 {
      %cst_12 = arith.constant 0.000000e+00 : f32
      %14 = vector.broadcast %cst_12 : f32 to vector<64x128xf32>
      %c0_13 = arith.constant 0 : index
      %c0_14 = arith.constant 0 : index
      %15 = vector.load %arg7[%c0_13, %c0_14] : memref<64x128xf32, #tpu.memory_space<vmem>>, vector<64x128xf32>
      tpu.vector_store %arg7[%c0_13, %c0_14], %14 {strides = array<i32>} : memref<64x128xf32, #tpu.memory_space<vmem>>, vector<64x128xf32>,
    } else {
    }
    %c0 = arith.constant 0 : index
    %c0_1 = arith.constant 0 : index
    %3 = vector.load %arg7[%c0, %c0_1] : memref<64x128xf32, #tpu.memory_space<vmem>>, vector<64x128xf32>
    %c0_2 = arith.constant 0 : index
    %c0_3 = arith.constant 0 : index
    %c0_4 = arith.constant 0 : index
    %4 = vector.load %arg3[%c0_2, %c0_3, %c0_4] : memref<1x64x512xbf16, #tpu.memory_space<vmem>>, vector<1x64x512xbf16>
    %5 = vector.shape_cast %4 : vector<1x64x512xbf16> to vector<64x512xbf16>
    %c0_5 = arith.constant 0 : index
    %c0_6 = arith.constant 0 : index
    %c0_7 = arith.constant 0 : index
    %6 = vector.load %arg4[%c0_5, %c0_6, %c0_7] : memref<1x512x128xbf16, #tpu.memory_space<vmem>>, vector<1x512x128xbf16>
    %7 = vector.shape_cast %6 : vector<1x512x128xbf16> to vector<512x128xbf16>
    %cst = arith.constant dense<0.000000e+00> : vector<64x128xf32>
    %8 = tpu.matmul %5, %7, %cst {dimension_numbers = #tpu.dot_dimension_numbers<[1], [0], [0], [1], [0, 0, 1, 1], [], []>} : vector<64x512xbf16>, vector<512x128xbf16>, vector<64x128xf32> -> vector<64x128xf32>
    %9 = arith.addf %3, %8 : vector<64x128xf32>
    %c0_8 = arith.constant 0 : index
    %c0_9 = arith.constant 0 : index
    %10 = vector.load %arg7[%c0_8, %c0_9] : memref<64x128xf32, #tpu.memory_space<vmem>>, vector<64x128xf32>
    tpu.vector_store %arg7[%c0_8, %c0_9], %9 {strides = array<i32>} : memref<64x128xf32, #tpu.memory_space<vmem>>, vector<64x128xf32>,
    %c0_i32_10 = arith.constant 0 : i32
    %11 = arith.cmpi eq, %arg2, %c0_i32_10 : i32
    %12 = arith.extui %11 : i1 to i32
    %c0_i32_11 = arith.constant 0 : i32
    %13 = arith.cmpi ne, %12, %c0_i32_11 : i32
    scf.if %13 {
      %c0_12 = arith.constant 0 : index
      %c0_13 = arith.constant 0 : index
      %14 = vector.load %arg7[%c0_12, %c0_13] : memref<64x128xf32, #tpu.memory_space<vmem>>, vector<64x128xf32>
      %c0_14 = arith.constant 0 : index
      %c0_15 = arith.constant 0 : index
      %c0_16 = arith.constant 0 : index
      %15 = vector.load %arg5[%c0_14, %c0_15, %c0_16] : memref<1x1x128xf32, #tpu.memory_space<vmem>>, vector<1x1x128xf32>
      %16 = vector.shape_cast %15 : vector<1x1x128xf32> to vector<1x128xf32>
      %17 = vector.broadcast %16 : vector<1x128xf32> to vector<64x128xf32>
      %18 = arith.addf %14, %17 : vector<64x128xf32>
      %c0_17 = arith.constant 0 : index
      %c0_18 = arith.constant 0 : index
      %c0_19 = arith.constant 0 : index
      %19 = vector.load %arg6[%c0_17, %c0_18, %c0_19] : memref<1x64x128xf32, #tpu.memory_space<vmem>>, vector<1x64x128xf32>
      %20 = vector.shape_cast %19 : vector<1x64x128xf32> to vector<64x128xf32>
      %21 = vector.shape_cast %18 : vector<64x128xf32> to vector<1x64x128xf32>
      tpu.vector_store %arg6[%c0_17, %c0_18, %c0_19], %21 {strides = array<i32>} : memref<1x64x128xf32, #tpu.memory_space<vmem>>, vector<1x64x128xf32>,
    } else {
    }
    return
  }
  func.func @transform_0(%arg0: i32, %arg1: i32, %arg2: i32) -> (i32, i32, i32) {
    %c0_i32 = arith.constant 0 : i32
    return %arg0, %arg1, %arg2 : i32, i32, i32
  }
  func.func @transform_1(%arg0: i32, %arg1: i32, %arg2: i32) -> (i32, i32, i32) {
    %c0_i32 = arith.constant 0 : i32
    %c0_i32_0 = arith.constant 0 : i32
    return %arg0, %arg2, %c0_i32 : i32, i32, i32
  }
  func.func @transform_2(%arg0: i32, %arg1: i32, %arg2: i32) -> (i32, i32, i32) {
    %c0_i32 = arith.constant 0 : i32
    %c0_i32_0 = arith.constant 0 : i32
    %c0_i32_1 = arith.constant 0 : i32
    return %arg0, %c0_i32, %c0_i32_0 : i32, i32, i32
  }
  func.func @transform_3(%arg0: i32, %arg1: i32, %arg2: i32) -> (i32, i32, i32) {
    %c0_i32 = arith.constant 0 : i32
    %c0_i32_0 = arith.constant 0 : i32
    return %arg0, %arg1, %c0_i32 : i32, i32, i32
  }
}

module attributes {stable_mosaic.version = 11 : i64} {
  func.func @_bmm_kernel(%arg0: i32, %arg1: i32, %arg2: i32, %arg3: memref<1x16x1024xbf16, #tpu.memory_space<vmem>>, %arg4: memref<1x1024x256xbf16, #tpu.memory_space<vmem>>, %arg5: memref<1x1x256xf32, #tpu.memory_space<vmem>>, %arg6: memref<1x16x256xf32, #tpu.memory_space<vmem>>, %arg7: memref<16x256xf32, #tpu.memory_space<vmem>>) attributes {dimension_semantics = [#tpu.dimension_semantics<parallel>, #tpu.dimension_semantics<parallel>, #tpu.dimension_semantics<arbitrary>], iteration_bounds = array<i64: 1, 2, 2>, scalar_prefetch = 0 : i64, scratch_operands = 1 : i64, tpu.core_type = #tpu.core_type<tc>, window_params = [{transform_indices = @transform_0, window_bounds = array<i64: 1, 16, 1024>}, {transform_indices = @transform_1, window_bounds = array<i64: 1, 1024, 256>}, {transform_indices = @transform_2, window_bounds = array<i64: 1, 1, 256>}, {transform_indices = @transform_3, window_bounds = array<i64: 1, 16, 256>}]} {
    %c0_i32 = arith.constant 0 : i32
    %0 = arith.cmpi eq, %arg2, %c0_i32 : i32
    %1 = arith.extui %0 : i1 to i32
    %c0_i32_0 = arith.constant 0 : i32
    %2 = arith.cmpi ne, %1, %c0_i32_0 : i32
    scf.if %2 {
      %cst_11 = arith.constant 0.000000e+00 : f32
      %14 = vector.broadcast %cst_11 : f32 to vector<16x256xf32>
      %c0_12 = arith.constant 0 : index
      %c0_13 = arith.constant 0 : index
      %15 = vector.load %arg7[%c0_12, %c0_13] : memref<16x256xf32, #tpu.memory_space<vmem>>, vector<16x256xf32>
      tpu.vector_store %arg7[%c0_12, %c0_13], %14 {strides = array<i32>} : memref<16x256xf32, #tpu.memory_space<vmem>>, vector<16x256xf32>,
    } else {
    }
    %c0 = arith.constant 0 : index
    %c0_1 = arith.constant 0 : index
    %3 = vector.load %arg7[%c0, %c0_1] : memref<16x256xf32, #tpu.memory_space<vmem>>, vector<16x256xf32>
    %c0_2 = arith.constant 0 : index
    %c0_3 = arith.constant 0 : index
    %c0_4 = arith.constant 0 : index
    %4 = vector.load %arg3[%c0_2, %c0_3, %c0_4] : memref<1x16x1024xbf16, #tpu.memory_space<vmem>>, vector<1x16x1024xbf16>
    %5 = vector.shape_cast %4 : vector<1x16x1024xbf16> to vector<16x1024xbf16>
    %c0_5 = arith.constant 0 : index
    %c0_6 = arith.constant 0 : index
    %c0_7 = arith.constant 0 : index
    %6 = vector.load %arg4[%c0_5, %c0_6, %c0_7] : memref<1x1024x256xbf16, #tpu.memory_space<vmem>>, vector<1x1024x256xbf16>
    %7 = vector.shape_cast %6 : vector<1x1024x256xbf16> to vector<1024x256xbf16>
    %cst = arith.constant dense<0.000000e+00> : vector<16x256xf32>
    %8 = tpu.matmul %5, %7, %cst {dimension_numbers = #tpu.dot_dimension_numbers<[1], [0], [0], [1], [0, 0, 1, 1], [], []>} : vector<16x1024xbf16>, vector<1024x256xbf16>, vector<16x256xf32> -> vector<16x256xf32>
    %9 = arith.addf %3, %8 : vector<16x256xf32>
    %c0_8 = arith.constant 0 : index
    %c0_9 = arith.constant 0 : index
    %10 = vector.load %arg7[%c0_8, %c0_9] : memref<16x256xf32, #tpu.memory_space<vmem>>, vector<16x256xf32>
    tpu.vector_store %arg7[%c0_8, %c0_9], %9 {strides = array<i32>} : memref<16x256xf32, #tpu.memory_space<vmem>>, vector<16x256xf32>,
    %c1_i32 = arith.constant 1 : i32
    %11 = arith.cmpi eq, %arg2, %c1_i32 : i32
    %12 = arith.extui %11 : i1 to i32
    %c0_i32_10 = arith.constant 0 : i32
    %13 = arith.cmpi ne, %12, %c0_i32_10 : i32
    scf.if %13 {
      %c0_11 = arith.constant 0 : index
      %c0_12 = arith.constant 0 : index
      %14 = vector.load %arg7[%c0_11, %c0_12] : memref<16x256xf32, #tpu.memory_space<vmem>>, vector<16x256xf32>
      %c0_13 = arith.constant 0 : index
      %c0_14 = arith.constant 0 : index
      %c0_15 = arith.constant 0 : index
      %15 = vector.load %arg5[%c0_13, %c0_14, %c0_15] : memref<1x1x256xf32, #tpu.memory_space<vmem>>, vector<1x1x256xf32>
      %16 = vector.shape_cast %15 : vector<1x1x256xf32> to vector<1x256xf32>
      %17 = vector.broadcast %16 : vector<1x256xf32> to vector<16x256xf32>
      %18 = arith.addf %14, %17 : vector<16x256xf32>
      %c0_16 = arith.constant 0 : index
      %c0_17 = arith.constant 0 : index
      %c0_18 = arith.constant 0 : index
      %19 = vector.load %arg6[%c0_16, %c0_17, %c0_18] : memref<1x16x256xf32, #tpu.memory_space<vmem>>, vector<1x16x256xf32>
      %20 = vector.shape_cast %19 : vector<1x16x256xf32> to vector<16x256xf32>
      %21 = vector.shape_cast %18 : vector<16x256xf32> to vector<1x16x256xf32>
      tpu.vector_store %arg6[%c0_16, %c0_17, %c0_18], %21 {strides = array<i32>} : memref<1x16x256xf32, #tpu.memory_space<vmem>>, vector<1x16x256xf32>,
    } else {
    }
    return
  }
  func.func @transform_0(%arg0: i32, %arg1: i32, %arg2: i32) -> (i32, i32, i32) {
    %c0_i32 = arith.constant 0 : i32
    return %arg0, %arg1, %arg2 : i32, i32, i32
  }
  func.func @transform_1(%arg0: i32, %arg1: i32, %arg2: i32) -> (i32, i32, i32) {
    %c0_i32 = arith.constant 0 : i32
    %c0_i32_0 = arith.constant 0 : i32
    return %arg0, %arg2, %c0_i32 : i32, i32, i32
  }
  func.func @transform_2(%arg0: i32, %arg1: i32, %arg2: i32) -> (i32, i32, i32) {
    %c0_i32 = arith.constant 0 : i32
    %c0_i32_0 = arith.constant 0 : i32
    %c0_i32_1 = arith.constant 0 : i32
    return %arg0, %c0_i32, %c0_i32_0 : i32, i32, i32
  }
  func.func @transform_3(%arg0: i32, %arg1: i32, %arg2: i32) -> (i32, i32, i32) {
    %c0_i32 = arith.constant 0 : i32
    %c0_i32_0 = arith.constant 0 : i32
    return %arg0, %arg1, %c0_i32 : i32, i32, i32
  }
}

module attributes {stable_mosaic.version = 11 : i64} {
  func.func @_bmm_kernel(%arg0: i32, %arg1: i32, %arg2: i32, %arg3: memref<1x8x1024xbf16, #tpu.memory_space<vmem>>, %arg4: memref<1x1024x256xbf16, #tpu.memory_space<vmem>>, %arg5: memref<1x1x256xf32, #tpu.memory_space<vmem>>, %arg6: memref<1x8x256xf32, #tpu.memory_space<vmem>>, %arg7: memref<8x256xf32, #tpu.memory_space<vmem>>) attributes {dimension_semantics = [#tpu.dimension_semantics<parallel>, #tpu.dimension_semantics<parallel>, #tpu.dimension_semantics<arbitrary>], iteration_bounds = array<i64: 1, 1, 4>, scalar_prefetch = 0 : i64, scratch_operands = 1 : i64, tpu.core_type = #tpu.core_type<tc>, window_params = [{transform_indices = @transform_0, window_bounds = array<i64: 1, 8, 1024>}, {transform_indices = @transform_1, window_bounds = array<i64: 1, 1024, 256>}, {transform_indices = @transform_2, window_bounds = array<i64: 1, 1, 256>}, {transform_indices = @transform_3, window_bounds = array<i64: 1, 8, 256>}]} {
    %c0_i32 = arith.constant 0 : i32
    %0 = arith.cmpi eq, %arg2, %c0_i32 : i32
    %1 = arith.extui %0 : i1 to i32
    %c0_i32_0 = arith.constant 0 : i32
    %2 = arith.cmpi ne, %1, %c0_i32_0 : i32
    scf.if %2 {
      %cst_11 = arith.constant 0.000000e+00 : f32
      %14 = vector.broadcast %cst_11 : f32 to vector<8x256xf32>
      %c0_12 = arith.constant 0 : index
      %c0_13 = arith.constant 0 : index
      %15 = vector.load %arg7[%c0_12, %c0_13] : memref<8x256xf32, #tpu.memory_space<vmem>>, vector<8x256xf32>
      tpu.vector_store %arg7[%c0_12, %c0_13], %14 {strides = array<i32>} : memref<8x256xf32, #tpu.memory_space<vmem>>, vector<8x256xf32>,
    } else {
    }
    %c0 = arith.constant 0 : index
    %c0_1 = arith.constant 0 : index
    %3 = vector.load %arg7[%c0, %c0_1] : memref<8x256xf32, #tpu.memory_space<vmem>>, vector<8x256xf32>
    %c0_2 = arith.constant 0 : index
    %c0_3 = arith.constant 0 : index
    %c0_4 = arith.constant 0 : index
    %4 = vector.load %arg3[%c0_2, %c0_3, %c0_4] : memref<1x8x1024xbf16, #tpu.memory_space<vmem>>, vector<1x8x1024xbf16>
    %5 = vector.shape_cast %4 : vector<1x8x1024xbf16> to vector<8x1024xbf16>
    %c0_5 = arith.constant 0 : index
    %c0_6 = arith.constant 0 : index
    %c0_7 = arith.constant 0 : index
    %6 = vector.load %arg4[%c0_5, %c0_6, %c0_7] : memref<1x1024x256xbf16, #tpu.memory_space<vmem>>, vector<1x1024x256xbf16>
    %7 = vector.shape_cast %6 : vector<1x1024x256xbf16> to vector<1024x256xbf16>
    %cst = arith.constant dense<0.000000e+00> : vector<8x256xf32>
    %8 = tpu.matmul %5, %7, %cst {dimension_numbers = #tpu.dot_dimension_numbers<[1], [0], [0], [1], [0, 0, 1, 1], [], []>} : vector<8x1024xbf16>, vector<1024x256xbf16>, vector<8x256xf32> -> vector<8x256xf32>
    %9 = arith.addf %3, %8 : vector<8x256xf32>
    %c0_8 = arith.constant 0 : index
    %c0_9 = arith.constant 0 : index
    %10 = vector.load %arg7[%c0_8, %c0_9] : memref<8x256xf32, #tpu.memory_space<vmem>>, vector<8x256xf32>
    tpu.vector_store %arg7[%c0_8, %c0_9], %9 {strides = array<i32>} : memref<8x256xf32, #tpu.memory_space<vmem>>, vector<8x256xf32>,
    %c3_i32 = arith.constant 3 : i32
    %11 = arith.cmpi eq, %arg2, %c3_i32 : i32
    %12 = arith.extui %11 : i1 to i32
    %c0_i32_10 = arith.constant 0 : i32
    %13 = arith.cmpi ne, %12, %c0_i32_10 : i32
    scf.if %13 {
      %c0_11 = arith.constant 0 : index
      %c0_12 = arith.constant 0 : index
      %14 = vector.load %arg7[%c0_11, %c0_12] : memref<8x256xf32, #tpu.memory_space<vmem>>, vector<8x256xf32>
      %c0_13 = arith.constant 0 : index
      %c0_14 = arith.constant 0 : index
      %c0_15 = arith.constant 0 : index
      %15 = vector.load %arg5[%c0_13, %c0_14, %c0_15] : memref<1x1x256xf32, #tpu.memory_space<vmem>>, vector<1x1x256xf32>
      %16 = vector.shape_cast %15 : vector<1x1x256xf32> to vector<1x256xf32>
      %17 = vector.broadcast %16 : vector<1x256xf32> to vector<8x256xf32>
      %18 = arith.addf %14, %17 : vector<8x256xf32>
      %c0_16 = arith.constant 0 : index
      %c0_17 = arith.constant 0 : index
      %c0_18 = arith.constant 0 : index
      %19 = vector.load %arg6[%c0_16, %c0_17, %c0_18] : memref<1x8x256xf32, #tpu.memory_space<vmem>>, vector<1x8x256xf32>
      %20 = vector.shape_cast %19 : vector<1x8x256xf32> to vector<8x256xf32>
      %21 = vector.shape_cast %18 : vector<8x256xf32> to vector<1x8x256xf32>
      tpu.vector_store %arg6[%c0_16, %c0_17, %c0_18], %21 {strides = array<i32>} : memref<1x8x256xf32, #tpu.memory_space<vmem>>, vector<1x8x256xf32>,
    } else {
    }
    return
  }
  func.func @transform_0(%arg0: i32, %arg1: i32, %arg2: i32) -> (i32, i32, i32) {
    %c0_i32 = arith.constant 0 : i32
    return %arg0, %arg1, %arg2 : i32, i32, i32
  }
  func.func @transform_1(%arg0: i32, %arg1: i32, %arg2: i32) -> (i32, i32, i32) {
    %c0_i32 = arith.constant 0 : i32
    %c0_i32_0 = arith.constant 0 : i32
    return %arg0, %arg2, %c0_i32 : i32, i32, i32
  }
  func.func @transform_2(%arg0: i32, %arg1: i32, %arg2: i32) -> (i32, i32, i32) {
    %c0_i32 = arith.constant 0 : i32
    %c0_i32_0 = arith.constant 0 : i32
    %c0_i32_1 = arith.constant 0 : i32
    return %arg0, %c0_i32, %c0_i32_0 : i32, i32, i32
  }
  func.func @transform_3(%arg0: i32, %arg1: i32, %arg2: i32) -> (i32, i32, i32) {
    %c0_i32 = arith.constant 0 : i32
    %c0_i32_0 = arith.constant 0 : i32
    return %arg0, %arg1, %c0_i32 : i32, i32, i32
  }
}

module attributes {stable_mosaic.version = 11 : i64} {
  func.func @_bmm_kernel(%arg0: i32, %arg1: i32, %arg2: i32, %arg3: memref<1x8x1024xbf16, #tpu.memory_space<vmem>>, %arg4: memref<1x1024x256xbf16, #tpu.memory_space<vmem>>, %arg5: memref<1x1x256xf32, #tpu.memory_space<vmem>>, %arg6: memref<1x8x256xf32, #tpu.memory_space<vmem>>, %arg7: memref<8x256xf32, #tpu.memory_space<vmem>>) attributes {dimension_semantics = [#tpu.dimension_semantics<parallel>, #tpu.dimension_semantics<parallel>, #tpu.dimension_semantics<arbitrary>], iteration_bounds = array<i64: 1, 1, 4>, scalar_prefetch = 0 : i64, scratch_operands = 1 : i64, tpu.core_type = #tpu.core_type<tc>, window_params = [{transform_indices = @transform_0, window_bounds = array<i64: 1, 8, 1024>}, {transform_indices = @transform_1, window_bounds = array<i64: 1, 1024, 256>}, {transform_indices = @transform_2, window_bounds = array<i64: 1, 1, 256>}, {transform_indices = @transform_3, window_bounds = array<i64: 1, 8, 256>}]} {
    %c0_i32 = arith.constant 0 : i32
    %0 = arith.cmpi eq, %arg2, %c0_i32 : i32
    %1 = arith.extui %0 : i1 to i32
    %c0_i32_0 = arith.constant 0 : i32
    %2 = arith.cmpi ne, %1, %c0_i32_0 : i32
    scf.if %2 {
      %cst_11 = arith.constant 0.000000e+00 : f32
      %14 = vector.broadcast %cst_11 : f32 to vector<8x256xf32>
      %c0_12 = arith.constant 0 : index
      %c0_13 = arith.constant 0 : index
      %15 = vector.load %arg7[%c0_12, %c0_13] : memref<8x256xf32, #tpu.memory_space<vmem>>, vector<8x256xf32>
      tpu.vector_store %arg7[%c0_12, %c0_13], %14 {strides = array<i32>} : memref<8x256xf32, #tpu.memory_space<vmem>>, vector<8x256xf32>,
    } else {
    }
    %c0 = arith.constant 0 : index
    %c0_1 = arith.constant 0 : index
    %3 = vector.load %arg7[%c0, %c0_1] : memref<8x256xf32, #tpu.memory_space<vmem>>, vector<8x256xf32>
    %c0_2 = arith.constant 0 : index
    %c0_3 = arith.constant 0 : index
    %c0_4 = arith.constant 0 : index
    %4 = vector.load %arg3[%c0_2, %c0_3, %c0_4] : memref<1x8x1024xbf16, #tpu.memory_space<vmem>>, vector<1x8x1024xbf16>
    %5 = vector.shape_cast %4 : vector<1x8x1024xbf16> to vector<8x1024xbf16>
    %c0_5 = arith.constant 0 : index
    %c0_6 = arith.constant 0 : index
    %c0_7 = arith.constant 0 : index
    %6 = vector.load %arg4[%c0_5, %c0_6, %c0_7] : memref<1x1024x256xbf16, #tpu.memory_space<vmem>>, vector<1x1024x256xbf16>
    %7 = vector.shape_cast %6 : vector<1x1024x256xbf16> to vector<1024x256xbf16>
    %cst = arith.constant dense<0.000000e+00> : vector<8x256xf32>
    %8 = tpu.matmul %5, %7, %cst {dimension_numbers = #tpu.dot_dimension_numbers<[1], [0], [0], [1], [0, 0, 1, 1], [], []>} : vector<8x1024xbf16>, vector<1024x256xbf16>, vector<8x256xf32> -> vector<8x256xf32>
    %9 = arith.addf %3, %8 : vector<8x256xf32>
    %c0_8 = arith.constant 0 : index
    %c0_9 = arith.constant 0 : index
    %10 = vector.load %arg7[%c0_8, %c0_9] : memref<8x256xf32, #tpu.memory_space<vmem>>, vector<8x256xf32>
    tpu.vector_store %arg7[%c0_8, %c0_9], %9 {strides = array<i32>} : memref<8x256xf32, #tpu.memory_space<vmem>>, vector<8x256xf32>,
    %c3_i32 = arith.constant 3 : i32
    %11 = arith.cmpi eq, %arg2, %c3_i32 : i32
    %12 = arith.extui %11 : i1 to i32
    %c0_i32_10 = arith.constant 0 : i32
    %13 = arith.cmpi ne, %12, %c0_i32_10 : i32
    scf.if %13 {
      %c0_11 = arith.constant 0 : index
      %c0_12 = arith.constant 0 : index
      %14 = vector.load %arg7[%c0_11, %c0_12] : memref<8x256xf32, #tpu.memory_space<vmem>>, vector<8x256xf32>
      %c0_13 = arith.constant 0 : index
      %c0_14 = arith.constant 0 : index
      %c0_15 = arith.constant 0 : index
      %15 = vector.load %arg5[%c0_13, %c0_14, %c0_15] : memref<1x1x256xf32, #tpu.memory_space<vmem>>, vector<1x1x256xf32>
      %16 = vector.shape_cast %15 : vector<1x1x256xf32> to vector<1x256xf32>
      %17 = vector.broadcast %16 : vector<1x256xf32> to vector<8x256xf32>
      %18 = arith.addf %14, %17 : vector<8x256xf32>
      %cst_16 = arith.constant 0.000000e+00 : f32
      %19 = vector.broadcast %cst_16 : f32 to vector<8x256xf32>
      %20 = arith.cmpf ogt, %18, %19 : vector<8x256xf32>
      %cst_17 = arith.constant 2.000000e-01 : f32
      %21 = vector.broadcast %cst_17 : f32 to vector<8x256xf32>
      %22 = arith.mulf %21, %18 : vector<8x256xf32>
      %23 = arith.select %20, %18, %22 : vector<8x256xi1>, vector<8x256xf32>
      %c0_18 = arith.constant 0 : index
      %c0_19 = arith.constant 0 : index
      %c0_20 = arith.constant 0 : index
      %24 = vector.load %arg6[%c0_18, %c0_19, %c0_20] : memref<1x8x256xf32, #tpu.memory_space<vmem>>, vector<1x8x256xf32>
      %25 = vector.shape_cast %24 : vector<1x8x256xf32> to vector<8x256xf32>
      %26 = vector.shape_cast %23 : vector<8x256xf32> to vector<1x8x256xf32>
      tpu.vector_store %arg6[%c0_18, %c0_19, %c0_20], %26 {strides = array<i32>} : memref<1x8x256xf32, #tpu.memory_space<vmem>>, vector<1x8x256xf32>,
    } else {
    }
    return
  }
  func.func @transform_0(%arg0: i32, %arg1: i32, %arg2: i32) -> (i32, i32, i32) {
    %c0_i32 = arith.constant 0 : i32
    return %arg0, %arg1, %arg2 : i32, i32, i32
  }
  func.func @transform_1(%arg0: i32, %arg1: i32, %arg2: i32) -> (i32, i32, i32) {
    %c0_i32 = arith.constant 0 : i32
    %c0_i32_0 = arith.constant 0 : i32
    return %arg0, %arg2, %c0_i32 : i32, i32, i32
  }
  func.func @transform_2(%arg0: i32, %arg1: i32, %arg2: i32) -> (i32, i32, i32) {
    %c0_i32 = arith.constant 0 : i32
    %c0_i32_0 = arith.constant 0 : i32
    %c0_i32_1 = arith.constant 0 : i32
    return %arg0, %c0_i32, %c0_i32_0 : i32, i32, i32
  }
  func.func @transform_3(%arg0: i32, %arg1: i32, %arg2: i32) -> (i32, i32, i32) {
    %c0_i32 = arith.constant 0 : i32
    %c0_i32_0 = arith.constant 0 : i32
    return %arg0, %arg1, %c0_i32 : i32, i32, i32
  }
}

module attributes {stable_mosaic.version = 11 : i64} {
  func.func @_bmm_kernel(%arg0: i32, %arg1: i32, %arg2: i32, %arg3: memref<1x8x512xbf16, #tpu.memory_space<vmem>>, %arg4: memref<1x512x256xbf16, #tpu.memory_space<vmem>>, %arg5: memref<1x1x256xf32, #tpu.memory_space<vmem>>, %arg6: memref<1x8x256xf32, #tpu.memory_space<vmem>>, %arg7: memref<8x256xf32, #tpu.memory_space<vmem>>) attributes {dimension_semantics = [#tpu.dimension_semantics<parallel>, #tpu.dimension_semantics<parallel>, #tpu.dimension_semantics<arbitrary>], iteration_bounds = array<i64: 4, 1, 2>, scalar_prefetch = 0 : i64, scratch_operands = 1 : i64, tpu.core_type = #tpu.core_type<tc>, window_params = [{transform_indices = @transform_0, window_bounds = array<i64: 1, 8, 512>}, {transform_indices = @transform_1, window_bounds = array<i64: 1, 512, 256>}, {transform_indices = @transform_2, window_bounds = array<i64: 1, 1, 256>}, {transform_indices = @transform_3, window_bounds = array<i64: 1, 8, 256>}]} {
    %c0_i32 = arith.constant 0 : i32
    %0 = arith.cmpi eq, %arg2, %c0_i32 : i32
    %1 = arith.extui %0 : i1 to i32
    %c0_i32_0 = arith.constant 0 : i32
    %2 = arith.cmpi ne, %1, %c0_i32_0 : i32
    scf.if %2 {
      %cst_11 = arith.constant 0.000000e+00 : f32
      %14 = vector.broadcast %cst_11 : f32 to vector<8x256xf32>
      %c0_12 = arith.constant 0 : index
      %c0_13 = arith.constant 0 : index
      %15 = vector.load %arg7[%c0_12, %c0_13] : memref<8x256xf32, #tpu.memory_space<vmem>>, vector<8x256xf32>
      tpu.vector_store %arg7[%c0_12, %c0_13], %14 {strides = array<i32>} : memref<8x256xf32, #tpu.memory_space<vmem>>, vector<8x256xf32>,
    } else {
    }
    %c0 = arith.constant 0 : index
    %c0_1 = arith.constant 0 : index
    %3 = vector.load %arg7[%c0, %c0_1] : memref<8x256xf32, #tpu.memory_space<vmem>>, vector<8x256xf32>
    %c0_2 = arith.constant 0 : index
    %c0_3 = arith.constant 0 : index
    %c0_4 = arith.constant 0 : index
    %4 = vector.load %arg3[%c0_2, %c0_3, %c0_4] : memref<1x8x512xbf16, #tpu.memory_space<vmem>>, vector<1x8x512xbf16>
    %5 = vector.shape_cast %4 : vector<1x8x512xbf16> to vector<8x512xbf16>
    %c0_5 = arith.constant 0 : index
    %c0_6 = arith.constant 0 : index
    %c0_7 = arith.constant 0 : index
    %6 = vector.load %arg4[%c0_5, %c0_6, %c0_7] : memref<1x512x256xbf16, #tpu.memory_space<vmem>>, vector<1x512x256xbf16>
    %7 = vector.shape_cast %6 : vector<1x512x256xbf16> to vector<512x256xbf16>
    %cst = arith.constant dense<0.000000e+00> : vector<8x256xf32>
    %8 = tpu.matmul %5, %7, %cst {dimension_numbers = #tpu.dot_dimension_numbers<[1], [0], [0], [1], [0, 0, 1, 1], [], []>} : vector<8x512xbf16>, vector<512x256xbf16>, vector<8x256xf32> -> vector<8x256xf32>
    %9 = arith.addf %3, %8 : vector<8x256xf32>
    %c0_8 = arith.constant 0 : index
    %c0_9 = arith.constant 0 : index
    %10 = vector.load %arg7[%c0_8, %c0_9] : memref<8x256xf32, #tpu.memory_space<vmem>>, vector<8x256xf32>
    tpu.vector_store %arg7[%c0_8, %c0_9], %9 {strides = array<i32>} : memref<8x256xf32, #tpu.memory_space<vmem>>, vector<8x256xf32>,
    %c1_i32 = arith.constant 1 : i32
    %11 = arith.cmpi eq, %arg2, %c1_i32 : i32
    %12 = arith.extui %11 : i1 to i32
    %c0_i32_10 = arith.constant 0 : i32
    %13 = arith.cmpi ne, %12, %c0_i32_10 : i32
    scf.if %13 {
      %c0_11 = arith.constant 0 : index
      %c0_12 = arith.constant 0 : index
      %14 = vector.load %arg7[%c0_11, %c0_12] : memref<8x256xf32, #tpu.memory_space<vmem>>, vector<8x256xf32>
      %c0_13 = arith.constant 0 : index
      %c0_14 = arith.constant 0 : index
      %c0_15 = arith.constant 0 : index
      %15 = vector.load %arg5[%c0_13, %c0_14, %c0_15] : memref<1x1x256xf32, #tpu.memory_space<vmem>>, vector<1x1x256xf32>
      %16 = vector.shape_cast %15 : vector<1x1x256xf32> to vector<1x256xf32>
      %17 = vector.broadcast %16 : vector<1x256xf32> to vector<8x256xf32>
      %18 = arith.addf %14, %17 : vector<8x256xf32>
      %c0_16 = arith.constant 0 : index
      %c0_17 = arith.constant 0 : index
      %c0_18 = arith.constant 0 : index
      %19 = vector.load %arg6[%c0_16, %c0_17, %c0_18] : memref<1x8x256xf32, #tpu.memory_space<vmem>>, vector<1x8x256xf32>
      %20 = vector.shape_cast %19 : vector<1x8x256xf32> to vector<8x256xf32>
      %21 = vector.shape_cast %18 : vector<8x256xf32> to vector<1x8x256xf32>
      tpu.vector_store %arg6[%c0_16, %c0_17, %c0_18], %21 {strides = array<i32>} : memref<1x8x256xf32, #tpu.memory_space<vmem>>, vector<1x8x256xf32>,
    } else {
    }
    return
  }
  func.func @transform_0(%arg0: i32, %arg1: i32, %arg2: i32) -> (i32, i32, i32) {
    %c0_i32 = arith.constant 0 : i32
    return %arg0, %arg1, %arg2 : i32, i32, i32
  }
  func.func @transform_1(%arg0: i32, %arg1: i32, %arg2: i32) -> (i32, i32, i32) {
    %c0_i32 = arith.constant 0 : i32
    %c0_i32_0 = arith.constant 0 : i32
    return %arg0, %arg2, %c0_i32 : i32, i32, i32
  }
  func.func @transform_2(%arg0: i32, %arg1: i32, %arg2: i32) -> (i32, i32, i32) {
    %c0_i32 = arith.constant 0 : i32
    %c0_i32_0 = arith.constant 0 : i32
    %c0_i32_1 = arith.constant 0 : i32
    return %arg0, %c0_i32, %c0_i32_0 : i32, i32, i32
  }
  func.func @transform_3(%arg0: i32, %arg1: i32, %arg2: i32) -> (i32, i32, i32) {
    %c0_i32 = arith.constant 0 : i32
    %c0_i32_0 = arith.constant 0 : i32
    return %arg0, %arg1, %c0_i32 : i32, i32, i32
  }
}

module attributes {stable_mosaic.version = 11 : i64} {
  func.func @_bmm_kernel(%arg0: i32, %arg1: i32, %arg2: i32, %arg3: memref<1x8x1024xbf16, #tpu.memory_space<vmem>>, %arg4: memref<1x1024x256xbf16, #tpu.memory_space<vmem>>, %arg5: memref<1x1x256xf32, #tpu.memory_space<vmem>>, %arg6: memref<1x8x256xf32, #tpu.memory_space<vmem>>, %arg7: memref<8x256xf32, #tpu.memory_space<vmem>>) attributes {dimension_semantics = [#tpu.dimension_semantics<parallel>, #tpu.dimension_semantics<parallel>, #tpu.dimension_semantics<arbitrary>], iteration_bounds = array<i64: 4, 1, 2>, scalar_prefetch = 0 : i64, scratch_operands = 1 : i64, tpu.core_type = #tpu.core_type<tc>, window_params = [{transform_indices = @transform_0, window_bounds = array<i64: 1, 8, 1024>}, {transform_indices = @transform_1, window_bounds = array<i64: 1, 1024, 256>}, {transform_indices = @transform_2, window_bounds = array<i64: 1, 1, 256>}, {transform_indices = @transform_3, window_bounds = array<i64: 1, 8, 256>}]} {
    %c0_i32 = arith.constant 0 : i32
    %0 = arith.cmpi eq, %arg2, %c0_i32 : i32
    %1 = arith.extui %0 : i1 to i32
    %c0_i32_0 = arith.constant 0 : i32
    %2 = arith.cmpi ne, %1, %c0_i32_0 : i32
    scf.if %2 {
      %cst_11 = arith.constant 0.000000e+00 : f32
      %14 = vector.broadcast %cst_11 : f32 to vector<8x256xf32>
      %c0_12 = arith.constant 0 : index
      %c0_13 = arith.constant 0 : index
      %15 = vector.load %arg7[%c0_12, %c0_13] : memref<8x256xf32, #tpu.memory_space<vmem>>, vector<8x256xf32>
      tpu.vector_store %arg7[%c0_12, %c0_13], %14 {strides = array<i32>} : memref<8x256xf32, #tpu.memory_space<vmem>>, vector<8x256xf32>,
    } else {
    }
    %c0 = arith.constant 0 : index
    %c0_1 = arith.constant 0 : index
    %3 = vector.load %arg7[%c0, %c0_1] : memref<8x256xf32, #tpu.memory_space<vmem>>, vector<8x256xf32>
    %c0_2 = arith.constant 0 : index
    %c0_3 = arith.constant 0 : index
    %c0_4 = arith.constant 0 : index
    %4 = vector.load %arg3[%c0_2, %c0_3, %c0_4] : memref<1x8x1024xbf16, #tpu.memory_space<vmem>>, vector<1x8x1024xbf16>
    %5 = vector.shape_cast %4 : vector<1x8x1024xbf16> to vector<8x1024xbf16>
    %c0_5 = arith.constant 0 : index
    %c0_6 = arith.constant 0 : index
    %c0_7 = arith.constant 0 : index
    %6 = vector.load %arg4[%c0_5, %c0_6, %c0_7] : memref<1x1024x256xbf16, #tpu.memory_space<vmem>>, vector<1x1024x256xbf16>
    %7 = vector.shape_cast %6 : vector<1x1024x256xbf16> to vector<1024x256xbf16>
    %cst = arith.constant dense<0.000000e+00> : vector<8x256xf32>
    %8 = tpu.matmul %5, %7, %cst {dimension_numbers = #tpu.dot_dimension_numbers<[1], [0], [0], [1], [0, 0, 1, 1], [], []>} : vector<8x1024xbf16>, vector<1024x256xbf16>, vector<8x256xf32> -> vector<8x256xf32>
    %9 = arith.addf %3, %8 : vector<8x256xf32>
    %c0_8 = arith.constant 0 : index
    %c0_9 = arith.constant 0 : index
    %10 = vector.load %arg7[%c0_8, %c0_9] : memref<8x256xf32, #tpu.memory_space<vmem>>, vector<8x256xf32>
    tpu.vector_store %arg7[%c0_8, %c0_9], %9 {strides = array<i32>} : memref<8x256xf32, #tpu.memory_space<vmem>>, vector<8x256xf32>,
    %c1_i32 = arith.constant 1 : i32
    %11 = arith.cmpi eq, %arg2, %c1_i32 : i32
    %12 = arith.extui %11 : i1 to i32
    %c0_i32_10 = arith.constant 0 : i32
    %13 = arith.cmpi ne, %12, %c0_i32_10 : i32
    scf.if %13 {
      %c0_11 = arith.constant 0 : index
      %c0_12 = arith.constant 0 : index
      %14 = vector.load %arg7[%c0_11, %c0_12] : memref<8x256xf32, #tpu.memory_space<vmem>>, vector<8x256xf32>
      %c0_13 = arith.constant 0 : index
      %c0_14 = arith.constant 0 : index
      %c0_15 = arith.constant 0 : index
      %15 = vector.load %arg5[%c0_13, %c0_14, %c0_15] : memref<1x1x256xf32, #tpu.memory_space<vmem>>, vector<1x1x256xf32>
      %16 = vector.shape_cast %15 : vector<1x1x256xf32> to vector<1x256xf32>
      %17 = vector.broadcast %16 : vector<1x256xf32> to vector<8x256xf32>
      %18 = arith.addf %14, %17 : vector<8x256xf32>
      %c0_16 = arith.constant 0 : index
      %c0_17 = arith.constant 0 : index
      %c0_18 = arith.constant 0 : index
      %19 = vector.load %arg6[%c0_16, %c0_17, %c0_18] : memref<1x8x256xf32, #tpu.memory_space<vmem>>, vector<1x8x256xf32>
      %20 = vector.shape_cast %19 : vector<1x8x256xf32> to vector<8x256xf32>
      %21 = vector.shape_cast %18 : vector<8x256xf32> to vector<1x8x256xf32>
      tpu.vector_store %arg6[%c0_16, %c0_17, %c0_18], %21 {strides = array<i32>} : memref<1x8x256xf32, #tpu.memory_space<vmem>>, vector<1x8x256xf32>,
    } else {
    }
    return
  }
  func.func @transform_0(%arg0: i32, %arg1: i32, %arg2: i32) -> (i32, i32, i32) {
    %c0_i32 = arith.constant 0 : i32
    return %arg0, %arg1, %arg2 : i32, i32, i32
  }
  func.func @transform_1(%arg0: i32, %arg1: i32, %arg2: i32) -> (i32, i32, i32) {
    %c0_i32 = arith.constant 0 : i32
    %c0_i32_0 = arith.constant 0 : i32
    return %arg0, %arg2, %c0_i32 : i32, i32, i32
  }
  func.func @transform_2(%arg0: i32, %arg1: i32, %arg2: i32) -> (i32, i32, i32) {
    %c0_i32 = arith.constant 0 : i32
    %c0_i32_0 = arith.constant 0 : i32
    %c0_i32_1 = arith.constant 0 : i32
    return %arg0, %c0_i32, %c0_i32_0 : i32, i32, i32
  }
  func.func @transform_3(%arg0: i32, %arg1: i32, %arg2: i32) -> (i32, i32, i32) {
    %c0_i32 = arith.constant 0 : i32
    %c0_i32_0 = arith.constant 0 : i32
    return %arg0, %arg1, %c0_i32 : i32, i32, i32
  }
}

module attributes {stable_mosaic.version = 11 : i64} {
  func.func @_bmm_kernel(%arg0: i32, %arg1: i32, %arg2: i32, %arg3: memref<1x16x1024xbf16, #tpu.memory_space<vmem>>, %arg4: memref<1x1024x128xbf16, #tpu.memory_space<vmem>>, %arg5: memref<1x1x128xf32, #tpu.memory_space<vmem>>, %arg6: memref<1x16x128xf32, #tpu.memory_space<vmem>>, %arg7: memref<16x128xf32, #tpu.memory_space<vmem>>) attributes {dimension_semantics = [#tpu.dimension_semantics<parallel>, #tpu.dimension_semantics<parallel>, #tpu.dimension_semantics<arbitrary>], iteration_bounds = array<i64: 4, 2, 2>, scalar_prefetch = 0 : i64, scratch_operands = 1 : i64, tpu.core_type = #tpu.core_type<tc>, window_params = [{transform_indices = @transform_0, window_bounds = array<i64: 1, 16, 1024>}, {transform_indices = @transform_1, window_bounds = array<i64: 1, 1024, 128>}, {transform_indices = @transform_2, window_bounds = array<i64: 1, 1, 128>}, {transform_indices = @transform_3, window_bounds = array<i64: 1, 16, 128>}]} {
    %c0_i32 = arith.constant 0 : i32
    %0 = arith.cmpi eq, %arg2, %c0_i32 : i32
    %1 = arith.extui %0 : i1 to i32
    %c0_i32_0 = arith.constant 0 : i32
    %2 = arith.cmpi ne, %1, %c0_i32_0 : i32
    scf.if %2 {
      %cst_11 = arith.constant 0.000000e+00 : f32
      %14 = vector.broadcast %cst_11 : f32 to vector<16x128xf32>
      %c0_12 = arith.constant 0 : index
      %c0_13 = arith.constant 0 : index
      %15 = vector.load %arg7[%c0_12, %c0_13] : memref<16x128xf32, #tpu.memory_space<vmem>>, vector<16x128xf32>
      tpu.vector_store %arg7[%c0_12, %c0_13], %14 {strides = array<i32>} : memref<16x128xf32, #tpu.memory_space<vmem>>, vector<16x128xf32>,
    } else {
    }
    %c0 = arith.constant 0 : index
    %c0_1 = arith.constant 0 : index
    %3 = vector.load %arg7[%c0, %c0_1] : memref<16x128xf32, #tpu.memory_space<vmem>>, vector<16x128xf32>
    %c0_2 = arith.constant 0 : index
    %c0_3 = arith.constant 0 : index
    %c0_4 = arith.constant 0 : index
    %4 = vector.load %arg3[%c0_2, %c0_3, %c0_4] : memref<1x16x1024xbf16, #tpu.memory_space<vmem>>, vector<1x16x1024xbf16>
    %5 = vector.shape_cast %4 : vector<1x16x1024xbf16> to vector<16x1024xbf16>
    %c0_5 = arith.constant 0 : index
    %c0_6 = arith.constant 0 : index
    %c0_7 = arith.constant 0 : index
    %6 = vector.load %arg4[%c0_5, %c0_6, %c0_7] : memref<1x1024x128xbf16, #tpu.memory_space<vmem>>, vector<1x1024x128xbf16>
    %7 = vector.shape_cast %6 : vector<1x1024x128xbf16> to vector<1024x128xbf16>
    %cst = arith.constant dense<0.000000e+00> : vector<16x128xf32>
    %8 = tpu.matmul %5, %7, %cst {dimension_numbers = #tpu.dot_dimension_numbers<[1], [0], [0], [1], [0, 0, 1, 1], [], []>} : vector<16x1024xbf16>, vector<1024x128xbf16>, vector<16x128xf32> -> vector<16x128xf32>
    %9 = arith.addf %3, %8 : vector<16x128xf32>
    %c0_8 = arith.constant 0 : index
    %c0_9 = arith.constant 0 : index
    %10 = vector.load %arg7[%c0_8, %c0_9] : memref<16x128xf32, #tpu.memory_space<vmem>>, vector<16x128xf32>
    tpu.vector_store %arg7[%c0_8, %c0_9], %9 {strides = array<i32>} : memref<16x128xf32, #tpu.memory_space<vmem>>, vector<16x128xf32>,
    %c1_i32 = arith.constant 1 : i32
    %11 = arith.cmpi eq, %arg2, %c1_i32 : i32
    %12 = arith.extui %11 : i1 to i32
    %c0_i32_10 = arith.constant 0 : i32
    %13 = arith.cmpi ne, %12, %c0_i32_10 : i32
    scf.if %13 {
      %c0_11 = arith.constant 0 : index
      %c0_12 = arith.constant 0 : index
      %14 = vector.load %arg7[%c0_11, %c0_12] : memref<16x128xf32, #tpu.memory_space<vmem>>, vector<16x128xf32>
      %c0_13 = arith.constant 0 : index
      %c0_14 = arith.constant 0 : index
      %c0_15 = arith.constant 0 : index
      %15 = vector.load %arg5[%c0_13, %c0_14, %c0_15] : memref<1x1x128xf32, #tpu.memory_space<vmem>>, vector<1x1x128xf32>
      %16 = vector.shape_cast %15 : vector<1x1x128xf32> to vector<1x128xf32>
      %17 = vector.broadcast %16 : vector<1x128xf32> to vector<16x128xf32>
      %18 = arith.addf %14, %17 : vector<16x128xf32>
      %c0_16 = arith.constant 0 : index
      %c0_17 = arith.constant 0 : index
      %c0_18 = arith.constant 0 : index
      %19 = vector.load %arg6[%c0_16, %c0_17, %c0_18] : memref<1x16x128xf32, #tpu.memory_space<vmem>>, vector<1x16x128xf32>
      %20 = vector.shape_cast %19 : vector<1x16x128xf32> to vector<16x128xf32>
      %21 = vector.shape_cast %18 : vector<16x128xf32> to vector<1x16x128xf32>
      tpu.vector_store %arg6[%c0_16, %c0_17, %c0_18], %21 {strides = array<i32>} : memref<1x16x128xf32, #tpu.memory_space<vmem>>, vector<1x16x128xf32>,
    } else {
    }
    return
  }
  func.func @transform_0(%arg0: i32, %arg1: i32, %arg2: i32) -> (i32, i32, i32) {
    %c0_i32 = arith.constant 0 : i32
    return %arg0, %arg1, %arg2 : i32, i32, i32
  }
  func.func @transform_1(%arg0: i32, %arg1: i32, %arg2: i32) -> (i32, i32, i32) {
    %c0_i32 = arith.constant 0 : i32
    %c0_i32_0 = arith.constant 0 : i32
    return %arg0, %arg2, %c0_i32 : i32, i32, i32
  }
  func.func @transform_2(%arg0: i32, %arg1: i32, %arg2: i32) -> (i32, i32, i32) {
    %c0_i32 = arith.constant 0 : i32
    %c0_i32_0 = arith.constant 0 : i32
    %c0_i32_1 = arith.constant 0 : i32
    return %arg0, %c0_i32, %c0_i32_0 : i32, i32, i32
  }
  func.func @transform_3(%arg0: i32, %arg1: i32, %arg2: i32) -> (i32, i32, i32) {
    %c0_i32 = arith.constant 0 : i32
    %c0_i32_0 = arith.constant 0 : i32
    return %arg0, %arg1, %c0_i32 : i32, i32, i32
  }
}

module attributes {stable_mosaic.version = 11 : i64} {
  func.func @_bmm_kernel(%arg0: i32, %arg1: i32, %arg2: i32, %arg3: memref<1x64x512xbf16, #tpu.memory_space<vmem>>, %arg4: memref<1x512x128xbf16, #tpu.memory_space<vmem>>, %arg5: memref<1x1x128xf32, #tpu.memory_space<vmem>>, %arg6: memref<1x64x128xf32, #tpu.memory_space<vmem>>, %arg7: memref<64x128xf32, #tpu.memory_space<vmem>>) attributes {dimension_semantics = [#tpu.dimension_semantics<parallel>, #tpu.dimension_semantics<parallel>, #tpu.dimension_semantics<arbitrary>], iteration_bounds = array<i64: 4, 2, 2>, scalar_prefetch = 0 : i64, scratch_operands = 1 : i64, tpu.core_type = #tpu.core_type<tc>, window_params = [{transform_indices = @transform_0, window_bounds = array<i64: 1, 64, 512>}, {transform_indices = @transform_1, window_bounds = array<i64: 1, 512, 128>}, {transform_indices = @transform_2, window_bounds = array<i64: 1, 1, 128>}, {transform_indices = @transform_3, window_bounds = array<i64: 1, 64, 128>}]} {
    %c0_i32 = arith.constant 0 : i32
    %0 = arith.cmpi eq, %arg2, %c0_i32 : i32
    %1 = arith.extui %0 : i1 to i32
    %c0_i32_0 = arith.constant 0 : i32
    %2 = arith.cmpi ne, %1, %c0_i32_0 : i32
    scf.if %2 {
      %cst_11 = arith.constant 0.000000e+00 : f32
      %14 = vector.broadcast %cst_11 : f32 to vector<64x128xf32>
      %c0_12 = arith.constant 0 : index
      %c0_13 = arith.constant 0 : index
      %15 = vector.load %arg7[%c0_12, %c0_13] : memref<64x128xf32, #tpu.memory_space<vmem>>, vector<64x128xf32>
      tpu.vector_store %arg7[%c0_12, %c0_13], %14 {strides = array<i32>} : memref<64x128xf32, #tpu.memory_space<vmem>>, vector<64x128xf32>,
    } else {
    }
    %c0 = arith.constant 0 : index
    %c0_1 = arith.constant 0 : index
    %3 = vector.load %arg7[%c0, %c0_1] : memref<64x128xf32, #tpu.memory_space<vmem>>, vector<64x128xf32>
    %c0_2 = arith.constant 0 : index
    %c0_3 = arith.constant 0 : index
    %c0_4 = arith.constant 0 : index
    %4 = vector.load %arg3[%c0_2, %c0_3, %c0_4] : memref<1x64x512xbf16, #tpu.memory_space<vmem>>, vector<1x64x512xbf16>
    %5 = vector.shape_cast %4 : vector<1x64x512xbf16> to vector<64x512xbf16>
    %c0_5 = arith.constant 0 : index
    %c0_6 = arith.constant 0 : index
    %c0_7 = arith.constant 0 : index
    %6 = vector.load %arg4[%c0_5, %c0_6, %c0_7] : memref<1x512x128xbf16, #tpu.memory_space<vmem>>, vector<1x512x128xbf16>
    %7 = vector.shape_cast %6 : vector<1x512x128xbf16> to vector<512x128xbf16>
    %cst = arith.constant dense<0.000000e+00> : vector<64x128xf32>
    %8 = tpu.matmul %5, %7, %cst {dimension_numbers = #tpu.dot_dimension_numbers<[1], [0], [0], [1], [0, 0, 1, 1], [], []>} : vector<64x512xbf16>, vector<512x128xbf16>, vector<64x128xf32> -> vector<64x128xf32>
    %9 = arith.addf %3, %8 : vector<64x128xf32>
    %c0_8 = arith.constant 0 : index
    %c0_9 = arith.constant 0 : index
    %10 = vector.load %arg7[%c0_8, %c0_9] : memref<64x128xf32, #tpu.memory_space<vmem>>, vector<64x128xf32>
    tpu.vector_store %arg7[%c0_8, %c0_9], %9 {strides = array<i32>} : memref<64x128xf32, #tpu.memory_space<vmem>>, vector<64x128xf32>,
    %c1_i32 = arith.constant 1 : i32
    %11 = arith.cmpi eq, %arg2, %c1_i32 : i32
    %12 = arith.extui %11 : i1 to i32
    %c0_i32_10 = arith.constant 0 : i32
    %13 = arith.cmpi ne, %12, %c0_i32_10 : i32
    scf.if %13 {
      %c0_11 = arith.constant 0 : index
      %c0_12 = arith.constant 0 : index
      %14 = vector.load %arg7[%c0_11, %c0_12] : memref<64x128xf32, #tpu.memory_space<vmem>>, vector<64x128xf32>
      %c0_13 = arith.constant 0 : index
      %c0_14 = arith.constant 0 : index
      %c0_15 = arith.constant 0 : index
      %15 = vector.load %arg5[%c0_13, %c0_14, %c0_15] : memref<1x1x128xf32, #tpu.memory_space<vmem>>, vector<1x1x128xf32>
      %16 = vector.shape_cast %15 : vector<1x1x128xf32> to vector<1x128xf32>
      %17 = vector.broadcast %16 : vector<1x128xf32> to vector<64x128xf32>
      %18 = arith.addf %14, %17 : vector<64x128xf32>
      %c0_16 = arith.constant 0 : index
      %c0_17 = arith.constant 0 : index
      %c0_18 = arith.constant 0 : index
      %19 = vector.load %arg6[%c0_16, %c0_17, %c0_18] : memref<1x64x128xf32, #tpu.memory_space<vmem>>, vector<1x64x128xf32>
      %20 = vector.shape_cast %19 : vector<1x64x128xf32> to vector<64x128xf32>
      %21 = vector.shape_cast %18 : vector<64x128xf32> to vector<1x64x128xf32>
      tpu.vector_store %arg6[%c0_16, %c0_17, %c0_18], %21 {strides = array<i32>} : memref<1x64x128xf32, #tpu.memory_space<vmem>>, vector<1x64x128xf32>,
    } else {
    }
    return
  }
  func.func @transform_0(%arg0: i32, %arg1: i32, %arg2: i32) -> (i32, i32, i32) {
    %c0_i32 = arith.constant 0 : i32
    return %arg0, %arg1, %arg2 : i32, i32, i32
  }
  func.func @transform_1(%arg0: i32, %arg1: i32, %arg2: i32) -> (i32, i32, i32) {
    %c0_i32 = arith.constant 0 : i32
    %c0_i32_0 = arith.constant 0 : i32
    return %arg0, %arg2, %c0_i32 : i32, i32, i32
  }
  func.func @transform_2(%arg0: i32, %arg1: i32, %arg2: i32) -> (i32, i32, i32) {
    %c0_i32 = arith.constant 0 : i32
    %c0_i32_0 = arith.constant 0 : i32
    %c0_i32_1 = arith.constant 0 : i32
    return %arg0, %c0_i32, %c0_i32_0 : i32, i32, i32
  }
  func.func @transform_3(%arg0: i32, %arg1: i32, %arg2: i32) -> (i32, i32, i32) {
    %c0_i32 = arith.constant 0 : i32
    %c0_i32_0 = arith.constant 0 : i32
    return %arg0, %arg1, %c0_i32 : i32, i32, i32
  }
}

module attributes {stable_mosaic.version = 11 : i64} {
  func.func @_bmm_kernel(%arg0: i32, %arg1: i32, %arg2: i32, %arg3: memref<1x128x512xbf16, #tpu.memory_space<vmem>>, %arg4: memref<1x512x128xbf16, #tpu.memory_space<vmem>>, %arg5: memref<1x1x128xf32, #tpu.memory_space<vmem>>, %arg6: memref<1x128x128xf32, #tpu.memory_space<vmem>>, %arg7: memref<128x128xf32, #tpu.memory_space<vmem>>) attributes {dimension_semantics = [#tpu.dimension_semantics<parallel>, #tpu.dimension_semantics<parallel>, #tpu.dimension_semantics<arbitrary>], iteration_bounds = array<i64: 1, 16, 2>, scalar_prefetch = 0 : i64, scratch_operands = 1 : i64, tpu.core_type = #tpu.core_type<tc>, window_params = [{transform_indices = @transform_0, window_bounds = array<i64: 1, 128, 512>}, {transform_indices = @transform_1, window_bounds = array<i64: 1, 512, 128>}, {transform_indices = @transform_2, window_bounds = array<i64: 1, 1, 128>}, {transform_indices = @transform_3, window_bounds = array<i64: 1, 128, 128>}]} {
    %c0_i32 = arith.constant 0 : i32
    %0 = arith.cmpi eq, %arg2, %c0_i32 : i32
    %1 = arith.extui %0 : i1 to i32
    %c0_i32_0 = arith.constant 0 : i32
    %2 = arith.cmpi ne, %1, %c0_i32_0 : i32
    scf.if %2 {
      %cst_11 = arith.constant 0.000000e+00 : f32
      %14 = vector.broadcast %cst_11 : f32 to vector<128x128xf32>
      %c0_12 = arith.constant 0 : index
      %c0_13 = arith.constant 0 : index
      %15 = vector.load %arg7[%c0_12, %c0_13] : memref<128x128xf32, #tpu.memory_space<vmem>>, vector<128x128xf32>
      tpu.vector_store %arg7[%c0_12, %c0_13], %14 {strides = array<i32>} : memref<128x128xf32, #tpu.memory_space<vmem>>, vector<128x128xf32>,
    } else {
    }
    %c0 = arith.constant 0 : index
    %c0_1 = arith.constant 0 : index
    %3 = vector.load %arg7[%c0, %c0_1] : memref<128x128xf32, #tpu.memory_space<vmem>>, vector<128x128xf32>
    %c0_2 = arith.constant 0 : index
    %c0_3 = arith.constant 0 : index
    %c0_4 = arith.constant 0 : index
    %4 = vector.load %arg3[%c0_2, %c0_3, %c0_4] : memref<1x128x512xbf16, #tpu.memory_space<vmem>>, vector<1x128x512xbf16>
    %5 = vector.shape_cast %4 : vector<1x128x512xbf16> to vector<128x512xbf16>
    %c0_5 = arith.constant 0 : index
    %c0_6 = arith.constant 0 : index
    %c0_7 = arith.constant 0 : index
    %6 = vector.load %arg4[%c0_5, %c0_6, %c0_7] : memref<1x512x128xbf16, #tpu.memory_space<vmem>>, vector<1x512x128xbf16>
    %7 = vector.shape_cast %6 : vector<1x512x128xbf16> to vector<512x128xbf16>
    %cst = arith.constant dense<0.000000e+00> : vector<128x128xf32>
    %8 = tpu.matmul %5, %7, %cst {dimension_numbers = #tpu.dot_dimension_numbers<[1], [0], [0], [1], [0, 0, 1, 1], [], []>} : vector<128x512xbf16>, vector<512x128xbf16>, vector<128x128xf32> -> vector<128x128xf32>
    %9 = arith.addf %3, %8 : vector<128x128xf32>
    %c0_8 = arith.constant 0 : index
    %c0_9 = arith.constant 0 : index
    %10 = vector.load %arg7[%c0_8, %c0_9] : memref<128x128xf32, #tpu.memory_space<vmem>>, vector<128x128xf32>
    tpu.vector_store %arg7[%c0_8, %c0_9], %9 {strides = array<i32>} : memref<128x128xf32, #tpu.memory_space<vmem>>, vector<128x128xf32>,
    %c1_i32 = arith.constant 1 : i32
    %11 = arith.cmpi eq, %arg2, %c1_i32 : i32
    %12 = arith.extui %11 : i1 to i32
    %c0_i32_10 = arith.constant 0 : i32
    %13 = arith.cmpi ne, %12, %c0_i32_10 : i32
    scf.if %13 {
      %c0_11 = arith.constant 0 : index
      %c0_12 = arith.constant 0 : index
      %14 = vector.load %arg7[%c0_11, %c0_12] : memref<128x128xf32, #tpu.memory_space<vmem>>, vector<128x128xf32>
      %c0_13 = arith.constant 0 : index
      %c0_14 = arith.constant 0 : index
      %c0_15 = arith.constant 0 : index
      %15 = vector.load %arg5[%c0_13, %c0_14, %c0_15] : memref<1x1x128xf32, #tpu.memory_space<vmem>>, vector<1x1x128xf32>
      %16 = vector.shape_cast %15 : vector<1x1x128xf32> to vector<1x128xf32>
      %17 = vector.broadcast %16 : vector<1x128xf32> to vector<128x128xf32>
      %18 = arith.addf %14, %17 : vector<128x128xf32>
      %19 = math.tanh %18 : vector<128x128xf32>
      %c0_16 = arith.constant 0 : index
      %c0_17 = arith.constant 0 : index
      %c0_18 = arith.constant 0 : index
      %20 = vector.load %arg6[%c0_16, %c0_17, %c0_18] : memref<1x128x128xf32, #tpu.memory_space<vmem>>, vector<1x128x128xf32>
      %21 = vector.shape_cast %20 : vector<1x128x128xf32> to vector<128x128xf32>
      %22 = vector.shape_cast %19 : vector<128x128xf32> to vector<1x128x128xf32>
      tpu.vector_store %arg6[%c0_16, %c0_17, %c0_18], %22 {strides = array<i32>} : memref<1x128x128xf32, #tpu.memory_space<vmem>>, vector<1x128x128xf32>,
    } else {
    }
    return
  }
  func.func @transform_0(%arg0: i32, %arg1: i32, %arg2: i32) -> (i32, i32, i32) {
    %c0_i32 = arith.constant 0 : i32
    return %arg0, %arg1, %arg2 : i32, i32, i32
  }
  func.func @transform_1(%arg0: i32, %arg1: i32, %arg2: i32) -> (i32, i32, i32) {
    %c0_i32 = arith.constant 0 : i32
    %c0_i32_0 = arith.constant 0 : i32
    return %arg0, %arg2, %c0_i32 : i32, i32, i32
  }
  func.func @transform_2(%arg0: i32, %arg1: i32, %arg2: i32) -> (i32, i32, i32) {
    %c0_i32 = arith.constant 0 : i32
    %c0_i32_0 = arith.constant 0 : i32
    %c0_i32_1 = arith.constant 0 : i32
    return %arg0, %c0_i32, %c0_i32_0 : i32, i32, i32
  }
  func.func @transform_3(%arg0: i32, %arg1: i32, %arg2: i32) -> (i32, i32, i32) {
    %c0_i32 = arith.constant 0 : i32
    %c0_i32_0 = arith.constant 0 : i32
    return %arg0, %arg1, %c0_i32 : i32, i32, i32
  }
}

</mosaic_0001>

<llo_original>
// kernel: unet_forward.10
$region0: #{unet_forward.10}
  #allocation0 [shape = 'u32[]', space=smem, size = 0x4, offset = 0x4, fixed_abs, tag = 'smem constant byte address 0x4 - core index']
  #allocation1 [shape = 'u32[144,128]{1,0:T(1,128)}', space=vmem, size = 0x12000, scoped, tag = 'internal scratch']
  #allocation2 [shape = 'f32[128,128]{1,0:T(8,128)}', space=vmem, size = 0x10000, scoped, tag = 'scratch operand']
  %s0 = inlined_call_operand.vmem [shape: bf16[1,512,48], index: 0, kind: input, shape index: {}]
  %s1 = inlined_call_operand.vmem [shape: bf16[1,48,128], index: 1, kind: input, shape index: {}]
  %s2 = inlined_call_operand.vmem [shape: f32[1,1,128], index: 2, kind: input, shape index: {}]
  %s3 = inlined_call_operand.vmem [shape: f32[1,512,128], index: 3, kind: output, shape index: {}]
  %s4 = sld [smem:[#allocation0]]
  $region53: #{unet_forward.10} parent=0
    _
  %s6 = ssub.s32 1, %s4
  %s7 = scalar_select 0, %s6, %s4
  loop: start=0, step=1, limit=6
  $region2: #{unet_forward.10} parent=0 // loop_pre_header
    _
  $region3: #{unet_forward.10} parent=0 // loop_header
    %s9 = sphi 0, %s13
    %p10 = scmp.ge.s32.totalorder %s9, 6
    %s16 = sphi 0, %s35
    %s17 = sphi 0, %s31
    %s18 = sphi 0, %s27
    %s19 = sphi 0, %s16
    %s20 = sphi 0, %s17
    %s21 = sphi 0, %s18
    %s22 = sphi 0, %s19
    %s23 = sphi 0, %s20
    %s24 = sphi 0, %s21
    %s42 = sphi 0, %s44
    %s45 = sphi 0, %s42
    %s46 = sphi 0, %s45
    %s62 = sphi 0, %s46
    %s70 = sphi 0, %s72
    %s73 = sphi 0, %s70
    %s74 = sphi 0, %s73
    %s90 = sphi 0, %s74
    %s96 = sphi 0, %s98
    %s99 = sphi 0, %s96
    %s100 = sphi 0, %s99
    %s116 = sphi 0, %s100
    %s124 = sphi 0, %s126
    %s127 = sphi 0, %s124
    %s128 = sphi 0, %s127
    %s144 = sphi 0, %s128
  $region4: #{unet_forward.10} parent=0 // loop_header_branch
    %12 = sbr.rel (%p10) target = $region8
  $region5: #{unet_forward.10} parent=0 // loop_body
    %s14 = ssub.s32 %s9, 1
    %s15 = ssub.s32 %s9, 2
    %s25 = sadd.s32 1, %s18
    %p26 = scmp.ge.s32.totalorder %s25, 1
    %s27 = scalar_select %p26, 0, %s25
    %s28 = sadd.s32 1, %s17
    %s29 = scalar_select %p26, %s28, %s17
    %p30 = scmp.ge.s32.totalorder %s29, 4
    %s31 = scalar_select %p30, 0, %s29
    %s32 = sadd.s32 1, %s16
    %s33 = scalar_select %p30, %s32, %s16
    %p34 = scmp.ge.s32.totalorder %s33, 1
    %s35 = scalar_select %p34, 0, %s33
    %s36 = ssub.s32 %s16, %s35
    %s37 = ssub.s32 %s17, %s31
    %s38 = sor.u32 %s36, %s37
    %s39 = ssub.s32 %s18, %s27
    %s40 = sor.u32 %s38, %s39
    %p41 = scmp.eq.s32.totalorder %s40, 0
    %s43 = sadd.s32 %s42, 1
    %s44 = scalar_select %p41, %s42, %s43
    %p47 = pneg %p41
    %p48 = scmp.eq.s32.totalorder %s9, 3
    %p49 = por %p47, %p48
    %p50 = scmp.ne.s32.totalorder %s42, %s45
    %p51 = scmp.eq.s32.totalorder %s9, 0
    %p52 = por %p50, %p51
    %p53 = scmp.ne.s32.totalorder %s42, %s45
    %p54 = scmp.eq.s32.totalorder %s14, 3
    %p55 = por %p53, %p54
    %p56 = scmp.ne.s32.totalorder %s45, %s46
    %p57 = scmp.eq.s32.totalorder %s14, 0
    %p58 = por %p56, %p57
    %p59 = scmp.ne.s32.totalorder %s45, %s46
    %p60 = scmp.eq.s32.totalorder %s15, 3
    %p61 = por %p59, %p60
    %p63 = scmp.ne.s32.totalorder %s46, %s62
    %p64 = scmp.eq.s32.totalorder %s15, 0
    %p65 = por %p63, %p64
    %s66 = ssub.s32 %s16, %s35
    %s67 = ssub.s32 %s18, %s27
    %s68 = sor.u32 %s66, %s67
    %p69 = scmp.eq.s32.totalorder %s68, 0
    %s71 = sadd.s32 %s70, 1
    %s72 = scalar_select %p69, %s70, %s71
    %p75 = pneg %p69
    %p76 = scmp.eq.s32.totalorder %s9, 3
    %p77 = por %p75, %p76
    %p78 = scmp.ne.s32.totalorder %s70, %s73
    %p79 = scmp.eq.s32.totalorder %s9, 0
    %p80 = por %p78, %p79
    %p81 = scmp.ne.s32.totalorder %s70, %s73
    %p82 = scmp.eq.s32.totalorder %s14, 3
    %p83 = por %p81, %p82
    %p84 = scmp.ne.s32.totalorder %s73, %s74
    %p85 = scmp.eq.s32.totalorder %s14, 0
    %p86 = por %p84, %p85
    %p87 = scmp.ne.s32.totalorder %s73, %s74
    %p88 = scmp.eq.s32.totalorder %s15, 3
    %p89 = por %p87, %p88
    %p91 = scmp.ne.s32.totalorder %s74, %s90
    %p92 = scmp.eq.s32.totalorder %s15, 0
    %p93 = por %p91, %p92
    %s94 = ssub.s32 %s16, %s35
    %p95 = scmp.eq.s32.totalorder %s94, 0
    %s97 = sadd.s32 %s96, 1
    %s98 = scalar_select %p95, %s96, %s97
    %p101 = pneg %p95
    %p102 = scmp.eq.s32.totalorder %s9, 3
    %p103 = por %p101, %p102
    %p104 = scmp.ne.s32.totalorder %s96, %s99
    %p105 = scmp.eq.s32.totalorder %s9, 0
    %p106 = por %p104, %p105
    %p107 = scmp.ne.s32.totalorder %s96, %s99
    %p108 = scmp.eq.s32.totalorder %s14, 3
    %p109 = por %p107, %p108
    %p110 = scmp.ne.s32.totalorder %s99, %s100
    %p111 = scmp.eq.s32.totalorder %s14, 0
    %p112 = por %p110, %p111
    %p113 = scmp.ne.s32.totalorder %s99, %s100
    %p114 = scmp.eq.s32.totalorder %s15, 3
    %p115 = por %p113, %p114
    %p117 = scmp.ne.s32.totalorder %s100, %s116
    %p118 = scmp.eq.s32.totalorder %s15, 0
    %p119 = por %p117, %p118
    %s120 = ssub.s32 %s16, %s35
    %s121 = ssub.s32 %s17, %s31
    %s122 = sor.u32 %s120, %s121
    %p123 = scmp.eq.s32.totalorder %s122, 0
    %s125 = sadd.s32 %s124, 1
    %s126 = scalar_select %p123, %s124, %s125
    %p129 = pneg %p123
    %p130 = scmp.eq.s32.totalorder %s9, 3
    %p131 = por %p129, %p130
    %p132 = scmp.ne.s32.totalorder %s124, %s127
    %p133 = scmp.eq.s32.totalorder %s9, 0
    %p134 = por %p132, %p133
    %p135 = scmp.ne.s32.totalorder %s124, %s127
    %p136 = scmp.eq.s32.totalorder %s14, 3
    %p137 = por %p135, %p136
    %p138 = scmp.ne.s32.totalorder %s127, %s128
    %p139 = scmp.eq.s32.totalorder %s14, 0
    %p140 = por %p138, %p139
    %p141 = scmp.ne.s32.totalorder %s127, %s128
    %p142 = scmp.eq.s32.totalorder %s15, 3
    %p143 = por %p141, %p142
    %p145 = scmp.ne.s32.totalorder %s128, %s144
    %p146 = scmp.eq.s32.totalorder %s15, 0
    %p147 = por %p145, %p146
    %p148 = scmp.le.s32.totalorder 1, %s9
    %p149 = scmp.lt.s32.totalorder %s9, 5
    %p150 = pnand %p148, %p149
    %p151 = pneg %p150
    // Predicated region
    $region9: #{unet_forward.10} parent=5 // pred_check
      _
    $region10: #{unet_forward.10} parent=5 // pred_check_branch
      %153 = sbr.rel (%p150) target = $region12
    $region11: #{unet_forward.10} parent=5 // pred_region
      %s154 = ssub.s32 %s9, 1
      // Predicated region
      $region13: #{unet_forward.10} parent=11 // pred_check
        %p155 = pneg %p86
      $region14: #{unet_forward.10} parent=11 // pred_check_branch
        %157 = sbr.rel (%p155) target = $region16
      $region15: #{unet_forward.10} parent=11 // pred_region
        %s158 = smul.u32 6, %s21
        %p159 = scmp.lt.s32.totalorder %s19, 0
        %s160 = scalar_select %p159, %s19, 0
        %p161 = scmp.lt.s32.totalorder %s158, 5
        %s162 = scalar_select %p161, %s158, 5
        %s163 = smul.addr %s160, 6
        %s164 = sadd.s32 %s162, %s163
        %s165 = smul.addr %s164, 4
        %s166 = scalar_lea.vmem %s1, %s165
        %s167 = smul.u32 6, %s21
      $region16: #{unet_forward.10} parent=11 // pred_fallthru
        _
      // Predicated region
      $region17: #{unet_forward.10} parent=11 // pred_check
        %p168 = pneg %p112
      $region18: #{unet_forward.10} parent=11 // pred_check_branch
        %170 = sbr.rel (%p168) target = $region20
      $region19: #{unet_forward.10} parent=11 // pred_region
        %p171 = scmp.lt.s32.totalorder %s19, 0
        %s172 = scalar_select %p171, %s19, 0
        %s173 = scalar_lea.vmem %s2, %s172
      $region20: #{unet_forward.10} parent=11 // pred_fallthru
        _
    $region12: #{unet_forward.10} parent=5 // pred_fallthru
      _
    %p174 = scmp.lt.s32.totalorder %s9, 4
    // Predicated region
    $region21: #{unet_forward.10} parent=5 // pred_check
      %p175 = pneg %p174
    $region22: #{unet_forward.10} parent=5 // pred_check_branch
      %177 = sbr.rel (%p175) target = $region24
    $region23: #{unet_forward.10} parent=5 // pred_region
      // Predicated region
      $region25: #{unet_forward.10} parent=23 // pred_check
        %p178 = pneg %p52
      $region26: #{unet_forward.10} parent=23 // pred_check_branch
        %180 = sbr.rel (%p178) target = $region28
      $region27: #{unet_forward.10} parent=23 // pred_region
        %s181 = smul.u32 16, %s17
        %p182 = scmp.lt.s32.totalorder %s16, 0
        %s183 = scalar_select %p182, %s16, 0
        %p184 = scmp.lt.s32.totalorder %s181, 63
        %s185 = scalar_select %p184, %s181, 63
        %p186 = scmp.lt.s32.totalorder %s18, 0
        %s187 = scalar_select %p186, %s18, 0
        %s188 = sadd.s32 %s187, %s185
        %s189 = smul.addr %s183, 64
        %s190 = sadd.s32 %s188, %s189
        %s191 = smul.addr %s190, 4
        %s192 = scalar_lea.vmem %s0, %s191
        %s193 = smul.u32 16, %s17
      $region28: #{unet_forward.10} parent=23 // pred_fallthru
        _
    $region24: #{unet_forward.10} parent=5 // pred_fallthru
      _
    %p194 = scmp.le.s32.totalorder 1, %s9
    %p195 = scmp.lt.s32.totalorder %s9, 5
    %p196 = pnand %p194, %p195
    %p197 = pneg %p196
    // Predicated region
    $region29: #{unet_forward.10} parent=5 // pred_check
      _
    $region30: #{unet_forward.10} parent=5 // pred_check_branch
      %199 = sbr.rel (%p196) target = $region32
    $region31: #{unet_forward.10} parent=5 // pred_region
      %s200 = ssub.s32 %s9, 1
      %s201 = smul.u32 16, %s20
      %p202 = scmp.lt.s32.totalorder %s19, 0
      %s203 = scalar_select %p202, %s19, 0
      %p204 = scmp.lt.s32.totalorder %s201, 63
      %s205 = scalar_select %p204, %s201, 63
      %p206 = scmp.lt.s32.totalorder %s21, 0
      %s207 = scalar_select %p206, %s21, 0
      %s208 = sadd.s32 %s207, %s205
      %s209 = smul.addr %s203, 64
      %s210 = sadd.s32 %s208, %s209
      %s211 = smul.addr %s210, 4
      %s212 = scalar_lea.vmem %s0, %s211
      %p213 = pneg %p58
      %p214 = pneg %p55
      %s215 = smul.u32 6, %s21
      %p216 = scmp.lt.s32.totalorder %s19, 0
      %s217 = scalar_select %p216, %s19, 0
      %p218 = scmp.lt.s32.totalorder %s215, 5
      %s219 = scalar_select %p218, %s215, 5
      %s220 = smul.addr %s217, 6
      %s221 = sadd.s32 %s219, %s220
      %s222 = smul.addr %s221, 4
      %s223 = scalar_lea.vmem %s1, %s222
      %p224 = pneg %p86
      %p225 = pneg %p83
      %p226 = scmp.lt.s32.totalorder %s19, 0
      %s227 = scalar_select %p226, %s19, 0
      %s228 = scalar_lea.vmem %s2, %s227
      %p229 = pneg %p112
      %p230 = pneg %p109
      %p231 = pneg %p140
      %p232 = pneg %p137
      %s233 = smul.u32 16, %s20
      %p234 = scmp.lt.s32.totalorder %s19, 0
      %s235 = scalar_select %p234, %s19, 0
      %p236 = scmp.lt.s32.totalorder %s233, 63
      %s237 = scalar_select %p236, %s233, 63
      %s238 = smul.addr %s235, 64
      %s239 = sadd.s32 %s237, %s238
      %s240 = smul.addr %s239, 8
      %s241 = scalar_lea.vmem %s3, %s240
      %s242 = smul.u32 16, %s20
      %p243 = scmp.lt.s32.totalorder %s19, 0
      %s244 = scalar_select %p243, %s19, 0
      %p245 = scmp.lt.s32.totalorder %s242, 63
      %s246 = scalar_select %p245, %s242, 63
      %p247 = scmp.lt.s32.totalorder %s21, 0
      %s248 = scalar_select %p247, %s21, 0
      %s249 = sadd.s32 %s248, %s246
      %s250 = smul.addr %s244, 64
      %s251 = sadd.s32 %s249, %s250
      %s252 = smul.addr %s251, 4
      %s253 = scalar_lea.vmem %s0, %s252
      %s254 = smul.u32 16, %s20
      %s255 = smul.u32 6, %s21
      %p256 = scmp.lt.s32.totalorder %s19, 0
      %s257 = scalar_select %p256, %s19, 0
      %p258 = scmp.lt.s32.totalorder %s255, 5
      %s259 = scalar_select %p258, %s255, 5
      %s260 = smul.addr %s257, 6
      %s261 = sadd.s32 %s259, %s260
      %s262 = smul.addr %s261, 4
      %s263 = scalar_lea.vmem %s1, %s262
      %s264 = smul.u32 6, %s21
      %p265 = scmp.lt.s32.totalorder %s19, 0
      %s266 = scalar_select %p265, %s19, 0
      %s267 = scalar_lea.vmem %s2, %s266
      %s268 = smul.u32 16, %s20
      %p269 = scmp.lt.s32.totalorder %s19, 0
      %s270 = scalar_select %p269, %s19, 0
      %p271 = scmp.lt.s32.totalorder %s268, 63
      %s272 = scalar_select %p271, %s268, 63
      %s273 = smul.addr %s270, 64
      %s274 = sadd.s32 %s272, %s273
      %s275 = smul.addr %s274, 8
      %s276 = scalar_lea.vmem %s3, %s275
      %s277 = smul.u32 16, %s20
      %p279 = scmp.eq.s32.totalorder %s21, 0
      // Predicated region
      $region33: #{unet_forward.10} parent=31 // pred_check
        %p280 = pneg %p279
      $region34: #{unet_forward.10} parent=31 // pred_check_branch
        %282 = sbr.rel (%p280) target = $region36
      $region35: #{unet_forward.10} parent=31 // pred_region
        %283 = vst [vmem:[#allocation2] sm:$0xff] 0.0
        %284 = vst [vmem:[#allocation2 + $0x8] sm:$0xff] 0.0
        %285 = vst [vmem:[#allocation2 + $0x10] sm:$0xff] 0.0
        %286 = vst [vmem:[#allocation2 + $0x18] sm:$0xff] 0.0
        %287 = vst [vmem:[#allocation2 + $0x20] sm:$0xff] 0.0
        %288 = vst [vmem:[#allocation2 + $0x28] sm:$0xff] 0.0
        %289 = vst [vmem:[#allocation2 + $0x30] sm:$0xff] 0.0
        %290 = vst [vmem:[#allocation2 + $0x38] sm:$0xff] 0.0
        %291 = vst [vmem:[#allocation2 + $0x40] sm:$0xff] 0.0
        %292 = vst [vmem:[#allocation2 + $0x48] sm:$0xff] 0.0
        %293 = vst [vmem:[#allocation2 + $0x50] sm:$0xff] 0.0
        %294 = vst [vmem:[#allocation2 + $0x58] sm:$0xff] 0.0
        %295 = vst [vmem:[#allocation2 + $0x60] sm:$0xff] 0.0
        %296 = vst [vmem:[#allocation2 + $0x68] sm:$0xff] 0.0
        %297 = vst [vmem:[#allocation2 + $0x70] sm:$0xff] 0.0
        %298 = vst [vmem:[#allocation2 + $0x78] sm:$0xff] 0.0
      $region36: #{unet_forward.10} parent=31 // pred_fallthru
        _
      %v299 = vld [vmem:[#allocation2] sm:$0xff]
      %v300 = vld [vmem:[#allocation2 + $0x8] sm:$0xff]
      %v301 = vld [vmem:[#allocation2 + $0x10] sm:$0xff]
      %v302 = vld [vmem:[#allocation2 + $0x18] sm:$0xff]
      %v303 = vld [vmem:[#allocation2 + $0x20] sm:$0xff]
      %v304 = vld [vmem:[#allocation2 + $0x28] sm:$0xff]
      %v305 = vld [vmem:[#allocation2 + $0x30] sm:$0xff]
      %v306 = vld [vmem:[#allocation2 + $0x38] sm:$0xff]
      %v307 = vld [vmem:[#allocation2 + $0x40] sm:$0xff]
      %v308 = vld [vmem:[#allocation2 + $0x48] sm:$0xff]
      %v309 = vld [vmem:[#allocation2 + $0x50] sm:$0xff]
      %v310 = vld [vmem:[#allocation2 + $0x58] sm:$0xff]
      %v311 = vld [vmem:[#allocation2 + $0x60] sm:$0xff]
      %v312 = vld [vmem:[#allocation2 + $0x68] sm:$0xff]
      %v313 = vld [vmem:[#allocation2 + $0x70] sm:$0xff]
      %v314 = vld [vmem:[#allocation2 + $0x78] sm:$0xff]
      %v315 = vld [vmem:[%s253] sm:$0xf]
      %v316 = vld [vmem:[%s253 + $0x4] sm:$0xf]
      %v317 = vld [vmem:[%s253 + $0x8] sm:$0xf]
      %v318 = vld [vmem:[%s253 + $0xc] sm:$0xf]
      %v319 = vld [vmem:[%s253 + $0x10] sm:$0xf]
      %v320 = vld [vmem:[%s253 + $0x14] sm:$0xf]
      %v321 = vld [vmem:[%s253 + $0x18] sm:$0xf]
      %v322 = vld [vmem:[%s253 + $0x1c] sm:$0xf]
      %v323 = vld [vmem:[%s253 + $0x20] sm:$0xf]
      %v324 = vld [vmem:[%s253 + $0x24] sm:$0xf]
      %v325 = vld [vmem:[%s253 + $0x28] sm:$0xf]
      %v326 = vld [vmem:[%s253 + $0x2c] sm:$0xf]
      %v327 = vld [vmem:[%s253 + $0x30] sm:$0xf]
      %v328 = vld [vmem:[%s253 + $0x34] sm:$0xf]
      %v329 = vld [vmem:[%s253 + $0x38] sm:$0xf]
      %v330 = vld [vmem:[%s253 + $0x3c] sm:$0xf]
      %v331 = vld [vmem:[%s263] sm:$0xf]
      %v332 = vld [vmem:[%s263 + $0x4] sm:$0xf]
      %v333 = vld [vmem:[%s263 + $0x8] sm:$0xf]
      %v334 = vld [vmem:[%s263 + $0xc] sm:$0xf]
      %v335 = vld [vmem:[%s263 + $0x10] sm:$0xf]
      %v336 = vld [vmem:[%s263 + $0x14] sm:$0xf]
      %v353 = vunpack.c.l.b16 %v315
      %v354 = vunpack.c.l.b16 %v316
      %v355 = vunpack.c.l.b16 %v317
      %v356 = vunpack.c.l.b16 %v318
      %v357 = vunpack.c.l.b16 %v319
      %v358 = vunpack.c.l.b16 %v320
      %v359 = vunpack.c.l.b16 %v321
      %v360 = vunpack.c.l.b16 %v322
      %v361 = vunpack.c.l.b16 %v323
      %v362 = vunpack.c.l.b16 %v324
      %v363 = vunpack.c.l.b16 %v325
      %v364 = vunpack.c.l.b16 %v326
      %v365 = vunpack.c.l.b16 %v327
      %v366 = vunpack.c.l.b16 %v328
      %v367 = vunpack.c.l.b16 %v329
      %v368 = vunpack.c.l.b16 %v330
      %v369 = vpack.c.b16 %v354, %v353
      %v370 = vpack.c.b16 %v356, %v355
      %v371 = vpack.c.b16 %v358, %v357
      %v372 = vpack.c.b16 %v360, %v359
      %v373 = vpack.c.b16 %v362, %v361
      %v374 = vpack.c.b16 %v364, %v363
      %v375 = vpack.c.b16 %v366, %v365
      %v376 = vpack.c.b16 %v368, %v367
      %v383 = vunpack.c.l.b16 %v331
      %v384 = vunpack.c.l.b16 %v332
      %v385 = vunpack.c.l.b16 %v333
      %v386 = vunpack.c.l.b16 %v334
      %v387 = vunpack.c.l.b16 %v335
      %v388 = vunpack.c.l.b16 %v336
      %v389 = vpack.c.b16 %v384, %v383
      %v390 = vpack.c.b16 %v386, %v385
      %v391 = vpack.c.b16 %v388, %v387
      %vm395 = vcmask 392192
      %v397 = vsel %vm395, %v369, 0
      %v400 = vsel %vm395, %v370, 0
      %v403 = vsel %vm395, %v371, 0
      %v406 = vsel %vm395, %v372, 0
      %v409 = vsel %vm395, %v373, 0
      %v412 = vsel %vm395, %v374, 0
      %v415 = vsel %vm395, %v375, 0
      %v418 = vsel %vm395, %v376, 0
      %420 = vmatprep.subr.bf16.mxu0 0
      %421 = vmatpush1.bf16.msra.mxu0 %v389
      %422 = vmatprep.subr.bf16.mxu0 0
      %423 = vmatpush1.bf16.msra.mxu0 %v390
      %424 = vmatprep.subr.bf16.mxu0 0
      %425 = vmatpush1.bf16.msra.mxu0 %v391
      %426 = vmatprep.subr.bf16.mxu0 0
      %427 = vmatpush1.bf16.msra.mxu0 0
      %428 = vmatprep.subr.bf16.mxu0 0
      %429 = vmatpush1.bf16.msra.mxu0 0
      %430 = vmatprep.subr.bf16.mxu0 0
      %431 = vmatpush1.bf16.msra.mxu0 0
      %432 = vmatprep.subr.bf16.mxu0 0
      %433 = vmatpush1.bf16.msra.mxu0 0
      %434 = vmatprep.subr.bf16.mxu0 0
      %435 = vmatpush1.bf16.msra.mxu0 0
      %436 = vmatprep.subr.bf16.mxu0 0
      %437 = vmatpush1.bf16.msra.mxu0 0
      %438 = vmatprep.subr.bf16.mxu0 0
      %439 = vmatpush1.bf16.msra.mxu0 0
      %440 = vmatprep.subr.bf16.mxu0 0
      %441 = vmatpush1.bf16.msra.mxu0 0
      %442 = vmatprep.subr.bf16.mxu0 0
      %443 = vmatpush1.bf16.msra.mxu0 0
      %444 = vmatprep.subr.bf16.mxu0 0
      %445 = vmatpush1.bf16.msra.mxu0 0
      %446 = vmatprep.subr.bf16.mxu0 0
      %447 = vmatpush1.bf16.msra.mxu0 0
      %448 = vmatprep.subr.bf16.mxu0 0
      %449 = vmatpush1.bf16.msra.mxu0 0
      %450 = vmatprep.subr.bf16.mxu0 0
      %451 = vmatpush1.bf16.msra.mxu0 0
      %452 = vmatprep.mubr.bf16.mxu0 0
      %453 = vmatmul.mubr.bf16.gmra.mrb[0].mxu0 %v397
      %v454 = vpop.f32.mrb[0].mxu0
      %v455 = vadd.f32 0.0, %v454
      %v456 = vpop.f32.mrb[0].mxu0
      %v457 = vpop.f32.mrb[0].mxu0
      %v458 = vadd.f32 0.0, %v457
      %v459 = vpop.f32.mrb[0].mxu0
      %460 = vmatprep.mubr.bf16.mxu0 0
      %461 = vmatmul.mubr.bf16.gmra.mrb[0].mxu0 %v400
      %v462 = vpop.f32.mrb[0].mxu0
      %v463 = vadd.f32 0.0, %v462
      %v464 = vpop.f32.mrb[0].mxu0
      %v465 = vpop.f32.mrb[0].mxu0
      %v466 = vadd.f32 0.0, %v465
      %v467 = vpop.f32.mrb[0].mxu0
      %468 = vmatprep.mubr.bf16.mxu0 0
      %469 = vmatmul.mubr.bf16.gmra.mrb[0].mxu0 %v403
      %v470 = vpop.f32.mrb[0].mxu0
      %v471 = vadd.f32 0.0, %v470
      %v472 = vpop.f32.mrb[0].mxu0
      %v473 = vpop.f32.mrb[0].mxu0
      %v474 = vadd.f32 0.0, %v473
      %v475 = vpop.f32.mrb[0].mxu0
      %476 = vmatprep.mubr.bf16.mxu0 0
      %477 = vmatmul.mubr.bf16.gmra.mrb[0].mxu0 %v406
      %v478 = vpop.f32.mrb[0].mxu0
      %v479 = vadd.f32 0.0, %v478
      %v480 = vpop.f32.mrb[0].mxu0
      %v481 = vpop.f32.mrb[0].mxu0
      %v482 = vadd.f32 0.0, %v481
      %v483 = vpop.f32.mrb[0].mxu0
      %484 = vmatprep.mubr.bf16.mxu0 0
      %485 = vmatmul.mubr.bf16.gmra.mrb[0].mxu0 %v409
      %v486 = vpop.f32.mrb[0].mxu0
      %v487 = vadd.f32 0.0, %v486
      %v488 = vpop.f32.mrb[0].mxu0
      %v489 = vpop.f32.mrb[0].mxu0
      %v490 = vadd.f32 0.0, %v489
      %v491 = vpop.f32.mrb[0].mxu0
      %492 = vmatprep.mubr.bf16.mxu0 0
      %493 = vmatmul.mubr.bf16.gmra.mrb[0].mxu0 %v412
      %v494 = vpop.f32.mrb[0].mxu0
      %v495 = vadd.f32 0.0, %v494
      %v496 = vpop.f32.mrb[0].mxu0
      %v497 = vpop.f32.mrb[0].mxu0
      %v498 = vadd.f32 0.0, %v497
      %v499 = vpop.f32.mrb[0].mxu0
      %500 = vmatprep.mubr.bf16.mxu0 0
      %501 = vmatmul.mubr.bf16.gmra.mrb[0].mxu0 %v415
      %v502 = vpop.f32.mrb[0].mxu0
      %v503 = vadd.f32 0.0, %v502
      %v504 = vpop.f32.mrb[0].mxu0
      %v505 = vpop.f32.mrb[0].mxu0
      %v506 = vadd.f32 0.0, %v505
      %v507 = vpop.f32.mrb[0].mxu0
      %508 = vmatprep.mubr.bf16.mxu0 0
      %509 = vmatmul.mubr.bf16.gmra.mrb[0].mxu0 %v418
      %v510 = vpop.f32.mrb[0].mxu0
      %v511 = vadd.f32 0.0, %v510
      %v512 = vpop.f32.mrb[0].mxu0
      %v513 = vpop.f32.mrb[0].mxu0
      %v514 = vadd.f32 0.0, %v513
      %v515 = vpop.f32.mrb[0].mxu0
      %516 = vdwg.mxu0
      %v517 = vadd.f32 %v299, %v455
      %v518 = vadd.f32 %v300, %v458
      %v519 = vadd.f32 %v301, %v463
      %v520 = vadd.f32 %v302, %v466
      %v521 = vadd.f32 %v303, %v471
      %v522 = vadd.f32 %v304, %v474
      %v523 = vadd.f32 %v305, %v479
      %v524 = vadd.f32 %v306, %v482
      %v525 = vadd.f32 %v307, %v487
      %v526 = vadd.f32 %v308, %v490
      %v527 = vadd.f32 %v309, %v495
      %v528 = vadd.f32 %v310, %v498
      %v529 = vadd.f32 %v311, %v503
      %v530 = vadd.f32 %v312, %v506
      %v531 = vadd.f32 %v313, %v511
      %v532 = vadd.f32 %v314, %v514
      %533 = vst [vmem:[#allocation2] sm:$0xff] %v517
      %534 = vst [vmem:[#allocation2 + $0x8] sm:$0xff] %v518
      %535 = vst [vmem:[#allocation2 + $0x10] sm:$0xff] %v519
      %536 = vst [vmem:[#allocation2 + $0x18] sm:$0xff] %v520
      %537 = vst [vmem:[#allocation2 + $0x20] sm:$0xff] %v521
      %538 = vst [vmem:[#allocation2 + $0x28] sm:$0xff] %v522
      %539 = vst [vmem:[#allocation2 + $0x30] sm:$0xff] %v523
      %540 = vst [vmem:[#allocation2 + $0x38] sm:$0xff] %v524
      %541 = vst [vmem:[#allocation2 + $0x40] sm:$0xff] %v525
      %542 = vst [vmem:[#allocation2 + $0x48] sm:$0xff] %v526
      %543 = vst [vmem:[#allocation2 + $0x50] sm:$0xff] %v527
      %544 = vst [vmem:[#allocation2 + $0x58] sm:$0xff] %v528
      %545 = vst [vmem:[#allocation2 + $0x60] sm:$0xff] %v529
      %546 = vst [vmem:[#allocation2 + $0x68] sm:$0xff] %v530
      %547 = vst [vmem:[#allocation2 + $0x70] sm:$0xff] %v531
      %548 = vst [vmem:[#allocation2 + $0x78] sm:$0xff] %v532
      // Predicated region
      $region37: #{unet_forward.10} parent=31 // pred_check
        %p549 = pneg %p279
      $region38: #{unet_forward.10} parent=31 // pred_check_branch
        %551 = sbr.rel (%p549) target = $region40
      $region39: #{unet_forward.10} parent=31 // pred_region
        %v552 = vld [vmem:[#allocation2] sm:$0xff]
        %v553 = vld [vmem:[#allocation2 + $0x8] sm:$0xff]
        %v554 = vld [vmem:[#allocation2 + $0x10] sm:$0xff]
        %v555 = vld [vmem:[#allocation2 + $0x18] sm:$0xff]
        %v556 = vld [vmem:[#allocation2 + $0x20] sm:$0xff]
        %v557 = vld [vmem:[#allocation2 + $0x28] sm:$0xff]
        %v558 = vld [vmem:[#allocation2 + $0x30] sm:$0xff]
        %v559 = vld [vmem:[#allocation2 + $0x38] sm:$0xff]
        %v560 = vld [vmem:[#allocation2 + $0x40] sm:$0xff]
        %v561 = vld [vmem:[#allocation2 + $0x48] sm:$0xff]
        %v562 = vld [vmem:[#allocation2 + $0x50] sm:$0xff]
        %v563 = vld [vmem:[#allocation2 + $0x58] sm:$0xff]
        %v564 = vld [vmem:[#allocation2 + $0x60] sm:$0xff]
        %v565 = vld [vmem:[#allocation2 + $0x68] sm:$0xff]
        %v566 = vld [vmem:[#allocation2 + $0x70] sm:$0xff]
        %v567 = vld [vmem:[#allocation2 + $0x78] sm:$0xff]
        %v568 = vld [vmem:[%s267] sm:$0x1]
        %v570 = vlaneseq
        %v571 = vshrl.u32 %v570, 7
        %v572 = vsub.s32 0, %v571
        %v573 = vrot.slane %v568, %v572
        %v575 = vadd.f32 %v552, %v573
        %v576 = vadd.f32 %v553, %v573
        %v577 = vadd.f32 %v554, %v573
        %v578 = vadd.f32 %v555, %v573
        %v579 = vadd.f32 %v556, %v573
        %v580 = vadd.f32 %v557, %v573
        %v581 = vadd.f32 %v558, %v573
        %v582 = vadd.f32 %v559, %v573
        %v583 = vadd.f32 %v560, %v573
        %v584 = vadd.f32 %v561, %v573
        %v585 = vadd.f32 %v562, %v573
        %v586 = vadd.f32 %v563, %v573
        %v587 = vadd.f32 %v564, %v573
        %v588 = vadd.f32 %v565, %v573
        %v589 = vadd.f32 %v566, %v573
        %v590 = vadd.f32 %v567, %v573
        %vm591 = vcmp.gt.f32.partialorder %v575, 0.0
        %vm592 = vcmp.gt.f32.partialorder %v576, 0.0
        %vm593 = vcmp.gt.f32.partialorder %v577, 0.0
        %vm594 = vcmp.gt.f32.partialorder %v578, 0.0
        %vm595 = vcmp.gt.f32.partialorder %v579, 0.0
        %vm596 = vcmp.gt.f32.partialorder %v580, 0.0
        %vm597 = vcmp.gt.f32.partialorder %v581, 0.0
        %vm598 = vcmp.gt.f32.partialorder %v582, 0.0
        %vm599 = vcmp.gt.f32.partialorder %v583, 0.0
        %vm600 = vcmp.gt.f32.partialorder %v584, 0.0
        %vm601 = vcmp.gt.f32.partialorder %v585, 0.0
        %vm602 = vcmp.gt.f32.partialorder %v586, 0.0
        %vm603 = vcmp.gt.f32.partialorder %v587, 0.0
        %vm604 = vcmp.gt.f32.partialorder %v588, 0.0
        %vm605 = vcmp.gt.f32.partialorder %v589, 0.0
        %vm606 = vcmp.gt.f32.partialorder %v590, 0.0
        %v607 = vmul.f32 %v575, 0.2
        %v608 = vmul.f32 %v576, 0.2
        %v609 = vmul.f32 %v577, 0.2
        %v610 = vmul.f32 %v578, 0.2
        %v611 = vmul.f32 %v579, 0.2
        %v612 = vmul.f32 %v580, 0.2
        %v613 = vmul.f32 %v581, 0.2
        %v614 = vmul.f32 %v582, 0.2
        %v615 = vmul.f32 %v583, 0.2
        %v616 = vmul.f32 %v584, 0.2
        %v617 = vmul.f32 %v585, 0.2
        %v618 = vmul.f32 %v586, 0.2
        %v619 = vmul.f32 %v587, 0.2
        %v620 = vmul.f32 %v588, 0.2
        %v621 = vmul.f32 %v589, 0.2
        %v622 = vmul.f32 %v590, 0.2
        %v623 = vsel %vm591, %v575, %v607
        %v624 = vsel %vm592, %v576, %v608
        %v625 = vsel %vm593, %v577, %v609
        %v626 = vsel %vm594, %v578, %v610
        %v627 = vsel %vm595, %v579, %v611
        %v628 = vsel %vm596, %v580, %v612
        %v629 = vsel %vm597, %v581, %v613
        %v630 = vsel %vm598, %v582, %v614
        %v631 = vsel %vm599, %v583, %v615
        %v632 = vsel %vm600, %v584, %v616
        %v633 = vsel %vm601, %v585, %v617
        %v634 = vsel %vm602, %v586, %v618
        %v635 = vsel %vm603, %v587, %v619
        %v636 = vsel %vm604, %v588, %v620
        %v637 = vsel %vm605, %v589, %v621
        %v638 = vsel %vm606, %v590, %v622
        %639 = vst [vmem:[%s276] sm:$0xff] %v623
        %640 = vst [vmem:[%s276 + $0x8] sm:$0xff] %v624
        %641 = vst [vmem:[%s276 + $0x10] sm:$0xff] %v625
        %642 = vst [vmem:[%s276 + $0x18] sm:$0xff] %v626
        %643 = vst [vmem:[%s276 + $0x20] sm:$0xff] %v627
        %644 = vst [vmem:[%s276 + $0x28] sm:$0xff] %v628
        %645 = vst [vmem:[%s276 + $0x30] sm:$0xff] %v629
        %646 = vst [vmem:[%s276 + $0x38] sm:$0xff] %v630
        %647 = vst [vmem:[%s276 + $0x40] sm:$0xff] %v631
        %648 = vst [vmem:[%s276 + $0x48] sm:$0xff] %v632
        %649 = vst [vmem:[%s276 + $0x50] sm:$0xff] %v633
        %650 = vst [vmem:[%s276 + $0x58] sm:$0xff] %v634
        %651 = vst [vmem:[%s276 + $0x60] sm:$0xff] %v635
        %652 = vst [vmem:[%s276 + $0x68] sm:$0xff] %v636
        %653 = vst [vmem:[%s276 + $0x70] sm:$0xff] %v637
        %654 = vst [vmem:[%s276 + $0x78] sm:$0xff] %v638
      $region40: #{unet_forward.10} parent=31 // pred_fallthru
        _
      %s655 = smul.u32 16, %s20
      %p656 = scmp.lt.s32.totalorder %s19, 0
      %s657 = scalar_select %p656, %s19, 0
      %p658 = scmp.lt.s32.totalorder %s655, 63
      %s659 = scalar_select %p658, %s655, 63
      %s660 = smul.addr %s657, 64
      %s661 = sadd.s32 %s659, %s660
      %s662 = smul.addr %s661, 8
      %s663 = scalar_lea.vmem %s3, %s662
      // Predicated region
      $region41: #{unet_forward.10} parent=31 // pred_check
        %p664 = pneg %p137
      $region42: #{unet_forward.10} parent=31 // pred_check_branch
        %666 = sbr.rel (%p664) target = $region44
      $region43: #{unet_forward.10} parent=31 // pred_region
        %s667 = smul.u32 16, %s20
      $region44: #{unet_forward.10} parent=31 // pred_fallthru
        _
    $region32: #{unet_forward.10} parent=5 // pred_fallthru
      _
    %p668 = scmp.le.s32.totalorder 2, %s9
    // Predicated region
    $region45: #{unet_forward.10} parent=5 // pred_check
      %p669 = pneg %p668
    $region46: #{unet_forward.10} parent=5 // pred_check_branch
      %671 = sbr.rel (%p669) target = $region48
    $region47: #{unet_forward.10} parent=5 // pred_region
      %s672 = ssub.s32 %s9, 2
      // Predicated region
      $region49: #{unet_forward.10} parent=47 // pred_check
        %p673 = pneg %p143
      $region50: #{unet_forward.10} parent=47 // pred_check_branch
        %675 = sbr.rel (%p673) target = $region52
      $region51: #{unet_forward.10} parent=47 // pred_region
        %s676 = smul.u32 16, %s23
        %p677 = scmp.lt.s32.totalorder %s22, 0
        %s678 = scalar_select %p677, %s22, 0
        %p679 = scmp.lt.s32.totalorder %s676, 63
        %s680 = scalar_select %p679, %s676, 63
        %s681 = smul.addr %s678, 64
        %s682 = sadd.s32 %s680, %s681
        %s683 = smul.addr %s682, 8
        %s684 = scalar_lea.vmem %s3, %s683
      $region52: #{unet_forward.10} parent=47 // pred_fallthru
        _
    $region48: #{unet_forward.10} parent=5 // pred_fallthru
      _
  $region6: #{unet_forward.10} parent=0 // loop_footer
    %s13 = sadd.s32 1, %s9
  $region7: #{unet_forward.10} parent=0 // loop_footer_branch
    %8 = sbr.rel target = $region3
  $region8: #{unet_forward.10} parent=0 // loop_exit
    _

// kernel: unet_forward.11
$region0: #{unet_forward.11}
  #allocation0 [shape = 'u32[]', space=smem, size = 0x4, offset = 0x4, fixed_abs, tag = 'smem constant byte address 0x4 - core index']
  #allocation1 [shape = 'u32[144,128]{1,0:T(1,128)}', space=vmem, size = 0x12000, scoped, tag = 'internal scratch']
  #allocation2 [shape = 'f32[64,128]{1,0:T(8,128)}', space=vmem, size = 0x8000, scoped, tag = 'scratch operand']
  %s0 = inlined_call_operand.vmem [shape: bf16[1,128,512], index: 0, kind: input, shape index: {}]
  %s1 = inlined_call_operand.vmem [shape: bf16[1,512,128], index: 1, kind: input, shape index: {}]
  %s2 = inlined_call_operand.vmem [shape: f32[1,1,128], index: 2, kind: input, shape index: {}]
  %s3 = inlined_call_operand.vmem [shape: f32[1,128,128], index: 3, kind: output, shape index: {}]
  %s4 = sld [smem:[#allocation0]]
  $region53: #{unet_forward.11} parent=0
    _
  %s6 = ssub.s32 1, %s4
  %s7 = scalar_select 0, %s6, %s4
  loop: start=0, step=1, limit=4
  $region2: #{unet_forward.11} parent=0 // loop_pre_header
    _
  $region3: #{unet_forward.11} parent=0 // loop_header
    %s9 = sphi 0, %s13
    %p10 = scmp.ge.s32.totalorder %s9, 4
    %s16 = sphi 0, %s35
    %s17 = sphi 0, %s31
    %s18 = sphi 0, %s27
    %s19 = sphi 0, %s16
    %s20 = sphi 0, %s17
    %s21 = sphi 0, %s18
    %s22 = sphi 0, %s19
    %s23 = sphi 0, %s20
    %s24 = sphi 0, %s21
    %s42 = sphi 0, %s44
    %s45 = sphi 0, %s42
    %s46 = sphi 0, %s45
    %s62 = sphi 0, %s46
    %s70 = sphi 0, %s72
    %s73 = sphi 0, %s70
    %s74 = sphi 0, %s73
    %s90 = sphi 0, %s74
    %s96 = sphi 0, %s98
    %s99 = sphi 0, %s96
    %s100 = sphi 0, %s99
    %s116 = sphi 0, %s100
    %s124 = sphi 0, %s126
    %s127 = sphi 0, %s124
    %s128 = sphi 0, %s127
    %s144 = sphi 0, %s128
  $region4: #{unet_forward.11} parent=0 // loop_header_branch
    %12 = sbr.rel (%p10) target = $region8
  $region5: #{unet_forward.11} parent=0 // loop_body
    %s14 = ssub.s32 %s9, 1
    %s15 = ssub.s32 %s9, 2
    %s25 = sadd.s32 1, %s18
    %p26 = scmp.ge.s32.totalorder %s25, 1
    %s27 = scalar_select %p26, 0, %s25
    %s28 = sadd.s32 1, %s17
    %s29 = scalar_select %p26, %s28, %s17
    %p30 = scmp.ge.s32.totalorder %s29, 2
    %s31 = scalar_select %p30, 0, %s29
    %s32 = sadd.s32 1, %s16
    %s33 = scalar_select %p30, %s32, %s16
    %p34 = scmp.ge.s32.totalorder %s33, 1
    %s35 = scalar_select %p34, 0, %s33
    %s36 = ssub.s32 %s16, %s35
    %s37 = ssub.s32 %s17, %s31
    %s38 = sor.u32 %s36, %s37
    %s39 = ssub.s32 %s18, %s27
    %s40 = sor.u32 %s38, %s39
    %p41 = scmp.eq.s32.totalorder %s40, 0
    %s43 = sadd.s32 %s42, 1
    %s44 = scalar_select %p41, %s42, %s43
    %p47 = pneg %p41
    %p48 = scmp.eq.s32.totalorder %s9, 1
    %p49 = por %p47, %p48
    %p50 = scmp.ne.s32.totalorder %s42, %s45
    %p51 = scmp.eq.s32.totalorder %s9, 0
    %p52 = por %p50, %p51
    %p53 = scmp.ne.s32.totalorder %s42, %s45
    %p54 = scmp.eq.s32.totalorder %s14, 1
    %p55 = por %p53, %p54
    %p56 = scmp.ne.s32.totalorder %s45, %s46
    %p57 = scmp.eq.s32.totalorder %s14, 0
    %p58 = por %p56, %p57
    %p59 = scmp.ne.s32.totalorder %s45, %s46
    %p60 = scmp.eq.s32.totalorder %s15, 1
    %p61 = por %p59, %p60
    %p63 = scmp.ne.s32.totalorder %s46, %s62
    %p64 = scmp.eq.s32.totalorder %s15, 0
    %p65 = por %p63, %p64
    %s66 = ssub.s32 %s16, %s35
    %s67 = ssub.s32 %s18, %s27
    %s68 = sor.u32 %s66, %s67
    %p69 = scmp.eq.s32.totalorder %s68, 0
    %s71 = sadd.s32 %s70, 1
    %s72 = scalar_select %p69, %s70, %s71
    %p75 = pneg %p69
    %p76 = scmp.eq.s32.totalorder %s9, 1
    %p77 = por %p75, %p76
    %p78 = scmp.ne.s32.totalorder %s70, %s73
    %p79 = scmp.eq.s32.totalorder %s9, 0
    %p80 = por %p78, %p79
    %p81 = scmp.ne.s32.totalorder %s70, %s73
    %p82 = scmp.eq.s32.totalorder %s14, 1
    %p83 = por %p81, %p82
    %p84 = scmp.ne.s32.totalorder %s73, %s74
    %p85 = scmp.eq.s32.totalorder %s14, 0
    %p86 = por %p84, %p85
    %p87 = scmp.ne.s32.totalorder %s73, %s74
    %p88 = scmp.eq.s32.totalorder %s15, 1
    %p89 = por %p87, %p88
    %p91 = scmp.ne.s32.totalorder %s74, %s90
    %p92 = scmp.eq.s32.totalorder %s15, 0
    %p93 = por %p91, %p92
    %s94 = ssub.s32 %s16, %s35
    %p95 = scmp.eq.s32.totalorder %s94, 0
    %s97 = sadd.s32 %s96, 1
    %s98 = scalar_select %p95, %s96, %s97
    %p101 = pneg %p95
    %p102 = scmp.eq.s32.totalorder %s9, 1
    %p103 = por %p101, %p102
    %p104 = scmp.ne.s32.totalorder %s96, %s99
    %p105 = scmp.eq.s32.totalorder %s9, 0
    %p106 = por %p104, %p105
    %p107 = scmp.ne.s32.totalorder %s96, %s99
    %p108 = scmp.eq.s32.totalorder %s14, 1
    %p109 = por %p107, %p108
    %p110 = scmp.ne.s32.totalorder %s99, %s100
    %p111 = scmp.eq.s32.totalorder %s14, 0
    %p112 = por %p110, %p111
    %p113 = scmp.ne.s32.totalorder %s99, %s100
    %p114 = scmp.eq.s32.totalorder %s15, 1
    %p115 = por %p113, %p114
    %p117 = scmp.ne.s32.totalorder %s100, %s116
    %p118 = scmp.eq.s32.totalorder %s15, 0
    %p119 = por %p117, %p118
    %s120 = ssub.s32 %s16, %s35
    %s121 = ssub.s32 %s17, %s31
    %s122 = sor.u32 %s120, %s121
    %p123 = scmp.eq.s32.totalorder %s122, 0
    %s125 = sadd.s32 %s124, 1
    %s126 = scalar_select %p123, %s124, %s125
    %p129 = pneg %p123
    %p130 = scmp.eq.s32.totalorder %s9, 1
    %p131 = por %p129, %p130
    %p132 = scmp.ne.s32.totalorder %s124, %s127
    %p133 = scmp.eq.s32.totalorder %s9, 0
    %p134 = por %p132, %p133
    %p135 = scmp.ne.s32.totalorder %s124, %s127
    %p136 = scmp.eq.s32.totalorder %s14, 1
    %p137 = por %p135, %p136
    %p138 = scmp.ne.s32.totalorder %s127, %s128
    %p139 = scmp.eq.s32.totalorder %s14, 0
    %p140 = por %p138, %p139
    %p141 = scmp.ne.s32.totalorder %s127, %s128
    %p142 = scmp.eq.s32.totalorder %s15, 1
    %p143 = por %p141, %p142
    %p145 = scmp.ne.s32.totalorder %s128, %s144
    %p146 = scmp.eq.s32.totalorder %s15, 0
    %p147 = por %p145, %p146
    %p148 = scmp.le.s32.totalorder 1, %s9
    %p149 = scmp.lt.s32.totalorder %s9, 3
    %p150 = pnand %p148, %p149
    %p151 = pneg %p150
    // Predicated region
    $region9: #{unet_forward.11} parent=5 // pred_check
      _
    $region10: #{unet_forward.11} parent=5 // pred_check_branch
      %153 = sbr.rel (%p150) target = $region12
    $region11: #{unet_forward.11} parent=5 // pred_region
      %s154 = ssub.s32 %s9, 1
      // Predicated region
      $region13: #{unet_forward.11} parent=11 // pred_check
        %p155 = pneg %p86
      $region14: #{unet_forward.11} parent=11 // pred_check_branch
        %157 = sbr.rel (%p155) target = $region16
      $region15: #{unet_forward.11} parent=11 // pred_region
        %s158 = smul.u32 64, %s21
        %p159 = scmp.lt.s32.totalorder %s19, 0
        %s160 = scalar_select %p159, %s19, 0
        %p161 = scmp.lt.s32.totalorder %s158, 63
        %s162 = scalar_select %p161, %s158, 63
        %s163 = smul.addr %s160, 64
        %s164 = sadd.s32 %s162, %s163
        %s165 = smul.addr %s164, 4
        %s166 = scalar_lea.vmem %s1, %s165
        %s167 = smul.u32 64, %s21
      $region16: #{unet_forward.11} parent=11 // pred_fallthru
        _
      // Predicated region
      $region17: #{unet_forward.11} parent=11 // pred_check
        %p168 = pneg %p112
      $region18: #{unet_forward.11} parent=11 // pred_check_branch
        %170 = sbr.rel (%p168) target = $region20
      $region19: #{unet_forward.11} parent=11 // pred_region
        %p171 = scmp.lt.s32.totalorder %s19, 0
        %s172 = scalar_select %p171, %s19, 0
        %s173 = scalar_lea.vmem %s2, %s172
      $region20: #{unet_forward.11} parent=11 // pred_fallthru
        _
    $region12: #{unet_forward.11} parent=5 // pred_fallthru
      _
    %p174 = scmp.lt.s32.totalorder %s9, 2
    // Predicated region
    $region21: #{unet_forward.11} parent=5 // pred_check
      %p175 = pneg %p174
    $region22: #{unet_forward.11} parent=5 // pred_check_branch
      %177 = sbr.rel (%p175) target = $region24
    $region23: #{unet_forward.11} parent=5 // pred_region
      // Predicated region
      $region25: #{unet_forward.11} parent=23 // pred_check
        %p178 = pneg %p52
      $region26: #{unet_forward.11} parent=23 // pred_check_branch
        %180 = sbr.rel (%p178) target = $region28
      $region27: #{unet_forward.11} parent=23 // pred_region
        %s181 = smul.u32 8, %s17
        %s182 = smul.u32 4, %s18
        %p183 = scmp.lt.s32.totalorder %s16, 0
        %s184 = scalar_select %p183, %s16, 0
        %p185 = scmp.lt.s32.totalorder %s181, 15
        %s186 = scalar_select %p185, %s181, 15
        %p187 = scmp.lt.s32.totalorder %s182, 3
        %s188 = scalar_select %p187, %s182, 3
        %s189 = smul.addr %s186, 4
        %s190 = sadd.s32 %s188, %s189
        %s191 = smul.addr %s184, 64
        %s192 = sadd.s32 %s190, %s191
        %s193 = smul.addr %s192, 4
        %s194 = scalar_lea.vmem %s0, %s193
        %s195 = smul.u32 8, %s17
        %s196 = smul.u32 4, %s18
      $region28: #{unet_forward.11} parent=23 // pred_fallthru
        _
    $region24: #{unet_forward.11} parent=5 // pred_fallthru
      _
    %p197 = scmp.le.s32.totalorder 1, %s9
    %p198 = scmp.lt.s32.totalorder %s9, 3
    %p199 = pnand %p197, %p198
    %p200 = pneg %p199
    // Predicated region
    $region29: #{unet_forward.11} parent=5 // pred_check
      _
    $region30: #{unet_forward.11} parent=5 // pred_check_branch
      %202 = sbr.rel (%p199) target = $region32
    $region31: #{unet_forward.11} parent=5 // pred_region
      %s203 = ssub.s32 %s9, 1
      %s204 = smul.u32 8, %s20
      %s205 = smul.u32 4, %s21
      %p206 = scmp.lt.s32.totalorder %s19, 0
      %s207 = scalar_select %p206, %s19, 0
      %p208 = scmp.lt.s32.totalorder %s204, 15
      %s209 = scalar_select %p208, %s204, 15
      %p210 = scmp.lt.s32.totalorder %s205, 3
      %s211 = scalar_select %p210, %s205, 3
      %s212 = smul.addr %s209, 4
      %s213 = sadd.s32 %s211, %s212
      %s214 = smul.addr %s207, 64
      %s215 = sadd.s32 %s213, %s214
      %s216 = smul.addr %s215, 4
      %s217 = scalar_lea.vmem %s0, %s216
      %p218 = pneg %p58
      %p219 = pneg %p55
      %s220 = smul.u32 64, %s21
      %p221 = scmp.lt.s32.totalorder %s19, 0
      %s222 = scalar_select %p221, %s19, 0
      %p223 = scmp.lt.s32.totalorder %s220, 63
      %s224 = scalar_select %p223, %s220, 63
      %s225 = smul.addr %s222, 64
      %s226 = sadd.s32 %s224, %s225
      %s227 = smul.addr %s226, 4
      %s228 = scalar_lea.vmem %s1, %s227
      %p229 = pneg %p86
      %p230 = pneg %p83
      %p231 = scmp.lt.s32.totalorder %s19, 0
      %s232 = scalar_select %p231, %s19, 0
      %s233 = scalar_lea.vmem %s2, %s232
      %p234 = pneg %p112
      %p235 = pneg %p109
      %p236 = pneg %p140
      %p237 = pneg %p137
      %s238 = smul.u32 8, %s20
      %p239 = scmp.lt.s32.totalorder %s19, 0
      %s240 = scalar_select %p239, %s19, 0
      %p241 = scmp.lt.s32.totalorder %s238, 15
      %s242 = scalar_select %p241, %s238, 15
      %s243 = smul.addr %s240, 16
      %s244 = sadd.s32 %s242, %s243
      %s245 = smul.addr %s244, 8
      %s246 = scalar_lea.vmem %s3, %s245
      %s247 = smul.u32 8, %s20
      %s248 = smul.u32 4, %s21
      %p249 = scmp.lt.s32.totalorder %s19, 0
      %s250 = scalar_select %p249, %s19, 0
      %p251 = scmp.lt.s32.totalorder %s247, 15
      %s252 = scalar_select %p251, %s247, 15
      %p253 = scmp.lt.s32.totalorder %s248, 3
      %s254 = scalar_select %p253, %s248, 3
      %s255 = smul.addr %s252, 4
      %s256 = sadd.s32 %s254, %s255
      %s257 = smul.addr %s250, 64
      %s258 = sadd.s32 %s256, %s257
      %s259 = smul.addr %s258, 4
      %s260 = scalar_lea.vmem %s0, %s259
      %s261 = smul.u32 8, %s20
      %s262 = smul.u32 4, %s21
      %s263 = smul.u32 64, %s21
      %p264 = scmp.lt.s32.totalorder %s19, 0
      %s265 = scalar_select %p264, %s19, 0
      %p266 = scmp.lt.s32.totalorder %s263, 63
      %s267 = scalar_select %p266, %s263, 63
      %s268 = smul.addr %s265, 64
      %s269 = sadd.s32 %s267, %s268
      %s270 = smul.addr %s269, 4
      %s271 = scalar_lea.vmem %s1, %s270
      %s272 = smul.u32 64, %s21
      %p273 = scmp.lt.s32.totalorder %s19, 0
      %s274 = scalar_select %p273, %s19, 0
      %s275 = scalar_lea.vmem %s2, %s274
      %s276 = smul.u32 8, %s20
      %p277 = scmp.lt.s32.totalorder %s19, 0
      %s278 = scalar_select %p277, %s19, 0
      %p279 = scmp.lt.s32.totalorder %s276, 15
      %s280 = scalar_select %p279, %s276, 15
      %s281 = smul.addr %s278, 16
      %s282 = sadd.s32 %s280, %s281
      %s283 = smul.addr %s282, 8
      %s284 = scalar_lea.vmem %s3, %s283
      %s285 = smul.u32 8, %s20
      %p287 = scmp.eq.s32.totalorder %s21, 0
      // Predicated region
      $region33: #{unet_forward.11} parent=31 // pred_check
        %p288 = pneg %p287
      $region34: #{unet_forward.11} parent=31 // pred_check_branch
        %290 = sbr.rel (%p288) target = $region36
      $region35: #{unet_forward.11} parent=31 // pred_region
        %291 = vst [vmem:[#allocation2] sm:$0xff] 0.0
        %292 = vst [vmem:[#allocation2 + $0x8] sm:$0xff] 0.0
        %293 = vst [vmem:[#allocation2 + $0x10] sm:$0xff] 0.0
        %294 = vst [vmem:[#allocation2 + $0x18] sm:$0xff] 0.0
        %295 = vst [vmem:[#allocation2 + $0x20] sm:$0xff] 0.0
        %296 = vst [vmem:[#allocation2 + $0x28] sm:$0xff] 0.0
        %297 = vst [vmem:[#allocation2 + $0x30] sm:$0xff] 0.0
        %298 = vst [vmem:[#allocation2 + $0x38] sm:$0xff] 0.0
      $region36: #{unet_forward.11} parent=31 // pred_fallthru
        _
      %v299 = vld [vmem:[#allocation2] sm:$0xff]
      %v300 = vld [vmem:[#allocation2 + $0x8] sm:$0xff]
      %v301 = vld [vmem:[#allocation2 + $0x10] sm:$0xff]
      %v302 = vld [vmem:[#allocation2 + $0x18] sm:$0xff]
      %v303 = vld [vmem:[#allocation2 + $0x20] sm:$0xff]
      %v304 = vld [vmem:[#allocation2 + $0x28] sm:$0xff]
      %v305 = vld [vmem:[#allocation2 + $0x30] sm:$0xff]
      %v306 = vld [vmem:[#allocation2 + $0x38] sm:$0xff]
      %v307 = vld [vmem:[%s260] sm:$0xff]
      %v308 = vld [vmem:[%s260 + $0x8] sm:$0xff]
      %v309 = vld [vmem:[%s260 + $0x10] sm:$0xff]
      %v310 = vld [vmem:[%s260 + $0x18] sm:$0xff]
      %v311 = vld [vmem:[%s260 + $0x20] sm:$0xff]
      %v312 = vld [vmem:[%s260 + $0x28] sm:$0xff]
      %v313 = vld [vmem:[%s260 + $0x30] sm:$0xff]
      %v314 = vld [vmem:[%s260 + $0x38] sm:$0xff]
      %v315 = vld [vmem:[%s260 + $0x40] sm:$0xff]
      %v316 = vld [vmem:[%s260 + $0x48] sm:$0xff]
      %v317 = vld [vmem:[%s260 + $0x50] sm:$0xff]
      %v318 = vld [vmem:[%s260 + $0x58] sm:$0xff]
      %v319 = vld [vmem:[%s260 + $0x60] sm:$0xff]
      %v320 = vld [vmem:[%s260 + $0x68] sm:$0xff]
      %v321 = vld [vmem:[%s260 + $0x70] sm:$0xff]
      %v322 = vld [vmem:[%s260 + $0x78] sm:$0xff]
      %v323 = vld [vmem:[%s271] sm:$0xf]
      %v324 = vld [vmem:[%s271 + $0x4] sm:$0xf]
      %v325 = vld [vmem:[%s271 + $0x8] sm:$0xf]
      %v326 = vld [vmem:[%s271 + $0xc] sm:$0xf]
      %v327 = vld [vmem:[%s271 + $0x10] sm:$0xf]
      %v328 = vld [vmem:[%s271 + $0x14] sm:$0xf]
      %v329 = vld [vmem:[%s271 + $0x18] sm:$0xf]
      %v330 = vld [vmem:[%s271 + $0x1c] sm:$0xf]
      %v331 = vld [vmem:[%s271 + $0x20] sm:$0xf]
      %v332 = vld [vmem:[%s271 + $0x24] sm:$0xf]
      %v333 = vld [vmem:[%s271 + $0x28] sm:$0xf]
      %v334 = vld [vmem:[%s271 + $0x2c] sm:$0xf]
      %v335 = vld [vmem:[%s271 + $0x30] sm:$0xf]
      %v336 = vld [vmem:[%s271 + $0x34] sm:$0xf]
      %v337 = vld [vmem:[%s271 + $0x38] sm:$0xf]
      %v338 = vld [vmem:[%s271 + $0x3c] sm:$0xf]
      %v339 = vld [vmem:[%s271 + $0x40] sm:$0xf]
      %v340 = vld [vmem:[%s271 + $0x44] sm:$0xf]
      %v341 = vld [vmem:[%s271 + $0x48] sm:$0xf]
      %v342 = vld [vmem:[%s271 + $0x4c] sm:$0xf]
      %v343 = vld [vmem:[%s271 + $0x50] sm:$0xf]
      %v344 = vld [vmem:[%s271 + $0x54] sm:$0xf]
      %v345 = vld [vmem:[%s271 + $0x58] sm:$0xf]
      %v346 = vld [vmem:[%s271 + $0x5c] sm:$0xf]
      %v347 = vld [vmem:[%s271 + $0x60] sm:$0xf]
      %v348 = vld [vmem:[%s271 + $0x64] sm:$0xf]
      %v349 = vld [vmem:[%s271 + $0x68] sm:$0xf]
      %v350 = vld [vmem:[%s271 + $0x6c] sm:$0xf]
      %v351 = vld [vmem:[%s271 + $0x70] sm:$0xf]
      %v352 = vld [vmem:[%s271 + $0x74] sm:$0xf]
      %v353 = vld [vmem:[%s271 + $0x78] sm:$0xf]
      %v354 = vld [vmem:[%s271 + $0x7c] sm:$0xf]
      %v355 = vld [vmem:[%s271 + $0x80] sm:$0xf]
      %v356 = vld [vmem:[%s271 + $0x84] sm:$0xf]
      %v357 = vld [vmem:[%s271 + $0x88] sm:$0xf]
      %v358 = vld [vmem:[%s271 + $0x8c] sm:$0xf]
      %v359 = vld [vmem:[%s271 + $0x90] sm:$0xf]
      %v360 = vld [vmem:[%s271 + $0x94] sm:$0xf]
      %v361 = vld [vmem:[%s271 + $0x98] sm:$0xf]
      %v362 = vld [vmem:[%s271 + $0x9c] sm:$0xf]
      %v363 = vld [vmem:[%s271 + $0xa0] sm:$0xf]
      %v364 = vld [vmem:[%s271 + $0xa4] sm:$0xf]
      %v365 = vld [vmem:[%s271 + $0xa8] sm:$0xf]
      %v366 = vld [vmem:[%s271 + $0xac] sm:$0xf]
      %v367 = vld [vmem:[%s271 + $0xb0] sm:$0xf]
      %v368 = vld [vmem:[%s271 + $0xb4] sm:$0xf]
      %v369 = vld [vmem:[%s271 + $0xb8] sm:$0xf]
      %v370 = vld [vmem:[%s271 + $0xbc] sm:$0xf]
      %v371 = vld [vmem:[%s271 + $0xc0] sm:$0xf]
      %v372 = vld [vmem:[%s271 + $0xc4] sm:$0xf]
      %v373 = vld [vmem:[%s271 + $0xc8] sm:$0xf]
      %v374 = vld [vmem:[%s271 + $0xcc] sm:$0xf]
      %v375 = vld [vmem:[%s271 + $0xd0] sm:$0xf]
      %v376 = vld [vmem:[%s271 + $0xd4] sm:$0xf]
      %v377 = vld [vmem:[%s271 + $0xd8] sm:$0xf]
      %v378 = vld [vmem:[%s271 + $0xdc] sm:$0xf]
      %v379 = vld [vmem:[%s271 + $0xe0] sm:$0xf]
      %v380 = vld [vmem:[%s271 + $0xe4] sm:$0xf]
      %v381 = vld [vmem:[%s271 + $0xe8] sm:$0xf]
      %v382 = vld [vmem:[%s271 + $0xec] sm:$0xf]
      %v383 = vld [vmem:[%s271 + $0xf0] sm:$0xf]
      %v384 = vld [vmem:[%s271 + $0xf4] sm:$0xf]
      %v385 = vld [vmem:[%s271 + $0xf8] sm:$0xf]
      %v386 = vld [vmem:[%s271 + $0xfc] sm:$0xf]
      %v403 = vunpack.c.l.b16 %v307
      %v404 = vunpack.c.h.b16 %v307
      %v405 = vunpack.c.l.b16 %v308
      %v406 = vunpack.c.h.b16 %v308
      %v407 = vunpack.c.l.b16 %v309
      %v408 = vunpack.c.h.b16 %v309
      %v409 = vunpack.c.l.b16 %v310
      %v410 = vunpack.c.h.b16 %v310
      %v411 = vunpack.c.l.b16 %v311
      %v412 = vunpack.c.h.b16 %v311
      %v413 = vunpack.c.l.b16 %v312
      %v414 = vunpack.c.h.b16 %v312
      %v415 = vunpack.c.l.b16 %v313
      %v416 = vunpack.c.h.b16 %v313
      %v417 = vunpack.c.l.b16 %v314
      %v418 = vunpack.c.h.b16 %v314
      %v419 = vunpack.c.l.b16 %v315
      %v420 = vunpack.c.h.b16 %v315
      %v421 = vunpack.c.l.b16 %v316
      %v422 = vunpack.c.h.b16 %v316
      %v423 = vunpack.c.l.b16 %v317
      %v424 = vunpack.c.h.b16 %v317
      %v425 = vunpack.c.l.b16 %v318
      %v426 = vunpack.c.h.b16 %v318
      %v427 = vunpack.c.l.b16 %v319
      %v428 = vunpack.c.h.b16 %v319
      %v429 = vunpack.c.l.b16 %v320
      %v430 = vunpack.c.h.b16 %v320
      %v431 = vunpack.c.l.b16 %v321
      %v432 = vunpack.c.h.b16 %v321
      %v433 = vunpack.c.l.b16 %v322
      %v434 = vunpack.c.h.b16 %v322
      %v435 = vpack.c.b16 %v407, %v403
      %v436 = vpack.c.b16 %v408, %v404
      %v437 = vpack.c.b16 %v409, %v405
      %v438 = vpack.c.b16 %v410, %v406
      %v439 = vpack.c.b16 %v415, %v411
      %v440 = vpack.c.b16 %v416, %v412
      %v441 = vpack.c.b16 %v417, %v413
      %v442 = vpack.c.b16 %v418, %v414
      %v443 = vpack.c.b16 %v423, %v419
      %v444 = vpack.c.b16 %v424, %v420
      %v445 = vpack.c.b16 %v425, %v421
      %v446 = vpack.c.b16 %v426, %v422
      %v447 = vpack.c.b16 %v431, %v427
      %v448 = vpack.c.b16 %v432, %v428
      %v449 = vpack.c.b16 %v433, %v429
      %v450 = vpack.c.b16 %v434, %v430
      %v531 = vunpack.c.l.b16 %v323
      %v532 = vunpack.c.l.b16 %v324
      %v533 = vunpack.c.l.b16 %v325
      %v534 = vunpack.c.l.b16 %v326
      %v535 = vunpack.c.l.b16 %v327
      %v536 = vunpack.c.l.b16 %v328
      %v537 = vunpack.c.l.b16 %v329
      %v538 = vunpack.c.l.b16 %v330
      %v539 = vunpack.c.l.b16 %v331
      %v540 = vunpack.c.l.b16 %v332
      %v541 = vunpack.c.l.b16 %v333
      %v542 = vunpack.c.l.b16 %v334
      %v543 = vunpack.c.l.b16 %v335
      %v544 = vunpack.c.l.b16 %v336
      %v545 = vunpack.c.l.b16 %v337
      %v546 = vunpack.c.l.b16 %v338
      %v547 = vunpack.c.l.b16 %v339
      %v548 = vunpack.c.l.b16 %v340
      %v549 = vunpack.c.l.b16 %v341
      %v550 = vunpack.c.l.b16 %v342
      %v551 = vunpack.c.l.b16 %v343
      %v552 = vunpack.c.l.b16 %v344
      %v553 = vunpack.c.l.b16 %v345
      %v554 = vunpack.c.l.b16 %v346
      %v555 = vunpack.c.l.b16 %v347
      %v556 = vunpack.c.l.b16 %v348
      %v557 = vunpack.c.l.b16 %v349
      %v558 = vunpack.c.l.b16 %v350
      %v559 = vunpack.c.l.b16 %v351
      %v560 = vunpack.c.l.b16 %v352
      %v561 = vunpack.c.l.b16 %v353
      %v562 = vunpack.c.l.b16 %v354
      %v563 = vunpack.c.l.b16 %v355
      %v564 = vunpack.c.l.b16 %v356
      %v565 = vunpack.c.l.b16 %v357
      %v566 = vunpack.c.l.b16 %v358
      %v567 = vunpack.c.l.b16 %v359
      %v568 = vunpack.c.l.b16 %v360
      %v569 = vunpack.c.l.b16 %v361
      %v570 = vunpack.c.l.b16 %v362
      %v571 = vunpack.c.l.b16 %v363
      %v572 = vunpack.c.l.b16 %v364
      %v573 = vunpack.c.l.b16 %v365
      %v574 = vunpack.c.l.b16 %v366
      %v575 = vunpack.c.l.b16 %v367
      %v576 = vunpack.c.l.b16 %v368
      %v577 = vunpack.c.l.b16 %v369
      %v578 = vunpack.c.l.b16 %v370
      %v579 = vunpack.c.l.b16 %v371
      %v580 = vunpack.c.l.b16 %v372
      %v581 = vunpack.c.l.b16 %v373
      %v582 = vunpack.c.l.b16 %v374
      %v583 = vunpack.c.l.b16 %v375
      %v584 = vunpack.c.l.b16 %v376
      %v585 = vunpack.c.l.b16 %v377
      %v586 = vunpack.c.l.b16 %v378
      %v587 = vunpack.c.l.b16 %v379
      %v588 = vunpack.c.l.b16 %v380
      %v589 = vunpack.c.l.b16 %v381
      %v590 = vunpack.c.l.b16 %v382
      %v591 = vunpack.c.l.b16 %v383
      %v592 = vunpack.c.l.b16 %v384
      %v593 = vunpack.c.l.b16 %v385
      %v594 = vunpack.c.l.b16 %v386
      %v595 = vpack.c.b16 %v532, %v531
      %v596 = vpack.c.b16 %v534, %v533
      %v597 = vpack.c.b16 %v536, %v535
      %v598 = vpack.c.b16 %v538, %v537
      %v599 = vpack.c.b16 %v540, %v539
      %v600 = vpack.c.b16 %v542, %v541
      %v601 = vpack.c.b16 %v544, %v543
      %v602 = vpack.c.b16 %v546, %v545
      %v603 = vpack.c.b16 %v548, %v547
      %v604 = vpack.c.b16 %v550, %v549
      %v605 = vpack.c.b16 %v552, %v551
      %v606 = vpack.c.b16 %v554, %v553
      %v607 = vpack.c.b16 %v556, %v555
      %v608 = vpack.c.b16 %v558, %v557
      %v609 = vpack.c.b16 %v560, %v559
      %v610 = vpack.c.b16 %v562, %v561
      %v611 = vpack.c.b16 %v564, %v563
      %v612 = vpack.c.b16 %v566, %v565
      %v613 = vpack.c.b16 %v568, %v567
      %v614 = vpack.c.b16 %v570, %v569
      %v615 = vpack.c.b16 %v572, %v571
      %v616 = vpack.c.b16 %v574, %v573
      %v617 = vpack.c.b16 %v576, %v575
      %v618 = vpack.c.b16 %v578, %v577
      %v619 = vpack.c.b16 %v580, %v579
      %v620 = vpack.c.b16 %v582, %v581
      %v621 = vpack.c.b16 %v584, %v583
      %v622 = vpack.c.b16 %v586, %v585
      %v623 = vpack.c.b16 %v588, %v587
      %v624 = vpack.c.b16 %v590, %v589
      %v625 = vpack.c.b16 %v592, %v591
      %v626 = vpack.c.b16 %v594, %v593
      %659 = vmatprep.subr.bf16.mxu0 0
      %660 = vmatpush1.bf16.msra.mxu0 %v595
      %661 = vmatprep.subr.bf16.mxu0 0
      %662 = vmatpush1.bf16.msra.mxu0 %v596
      %663 = vmatprep.subr.bf16.mxu0 0
      %664 = vmatpush1.bf16.msra.mxu0 %v597
      %665 = vmatprep.subr.bf16.mxu0 0
      %666 = vmatpush1.bf16.msra.mxu0 %v598
      %667 = vmatprep.subr.bf16.mxu0 0
      %668 = vmatpush1.bf16.msra.mxu0 %v599
      %669 = vmatprep.subr.bf16.mxu0 0
      %670 = vmatpush1.bf16.msra.mxu0 %v600
      %671 = vmatprep.subr.bf16.mxu0 0
      %672 = vmatpush1.bf16.msra.mxu0 %v601
      %673 = vmatprep.subr.bf16.mxu0 0
      %674 = vmatpush1.bf16.msra.mxu0 %v602
      %675 = vmatprep.subr.bf16.mxu0 0
      %676 = vmatpush1.bf16.msra.mxu0 %v603
      %677 = vmatprep.subr.bf16.mxu0 0
      %678 = vmatpush1.bf16.msra.mxu0 %v604
      %679 = vmatprep.subr.bf16.mxu0 0
      %680 = vmatpush1.bf16.msra.mxu0 %v605
      %681 = vmatprep.subr.bf16.mxu0 0
      %682 = vmatpush1.bf16.msra.mxu0 %v606
      %683 = vmatprep.subr.bf16.mxu0 0
      %684 = vmatpush1.bf16.msra.mxu0 %v607
      %685 = vmatprep.subr.bf16.mxu0 0
      %686 = vmatpush1.bf16.msra.mxu0 %v608
      %687 = vmatprep.subr.bf16.mxu0 0
      %688 = vmatpush1.bf16.msra.mxu0 %v609
      %689 = vmatprep.subr.bf16.mxu0 0
      %690 = vmatpush1.bf16.msra.mxu0 %v610
      %691 = vmatprep.mubr.bf16.mxu0 %v436
      %692 = vmatmul.mubr.bf16.gmra.mrb[0].mxu0 %v435
      %v693 = vpop.f32.mrb[0].mxu0
      %v694 = vadd.f32 0.0, %v693
      %v695 = vpop.f32.mrb[0].mxu0
      %v696 = vpop.f32.mrb[0].mxu0
      %v697 = vadd.f32 0.0, %v696
      %v698 = vpop.f32.mrb[0].mxu0
      %699 = vmatprep.mubr.bf16.mxu0 %v440
      %700 = vmatmul.mubr.bf16.gmra.mrb[0].mxu0 %v439
      %v701 = vpop.f32.mrb[0].mxu0
      %v702 = vadd.f32 0.0, %v701
      %v703 = vpop.f32.mrb[0].mxu0
      %v704 = vpop.f32.mrb[0].mxu0
      %v705 = vadd.f32 0.0, %v704
      %v706 = vpop.f32.mrb[0].mxu0
      %707 = vmatprep.mubr.bf16.mxu0 %v444
      %708 = vmatmul.mubr.bf16.gmra.mrb[0].mxu0 %v443
      %v709 = vpop.f32.mrb[0].mxu0
      %v710 = vadd.f32 0.0, %v709
      %v711 = vpop.f32.mrb[0].mxu0
      %v712 = vpop.f32.mrb[0].mxu0
      %v713 = vadd.f32 0.0, %v712
      %v714 = vpop.f32.mrb[0].mxu0
      %715 = vmatprep.mubr.bf16.mxu0 %v448
      %716 = vmatmul.mubr.bf16.gmra.mrb[0].mxu0 %v447
      %v717 = vpop.f32.mrb[0].mxu0
      %v718 = vadd.f32 0.0, %v717
      %v719 = vpop.f32.mrb[0].mxu0
      %v720 = vpop.f32.mrb[0].mxu0
      %v721 = vadd.f32 0.0, %v720
      %v722 = vpop.f32.mrb[0].mxu0
      %723 = vdwg.mxu0
      %724 = vmatprep.subr.bf16.mxu0 0
      %725 = vmatpush1.bf16.msra.mxu0 %v611
      %726 = vmatprep.subr.bf16.mxu0 0
      %727 = vmatpush1.bf16.msra.mxu0 %v612
      %728 = vmatprep.subr.bf16.mxu0 0
      %729 = vmatpush1.bf16.msra.mxu0 %v613
      %730 = vmatprep.subr.bf16.mxu0 0
      %731 = vmatpush1.bf16.msra.mxu0 %v614
      %732 = vmatprep.subr.bf16.mxu0 0
      %733 = vmatpush1.bf16.msra.mxu0 %v615
      %734 = vmatprep.subr.bf16.mxu0 0
      %735 = vmatpush1.bf16.msra.mxu0 %v616
      %736 = vmatprep.subr.bf16.mxu0 0
      %737 = vmatpush1.bf16.msra.mxu0 %v617
      %738 = vmatprep.subr.bf16.mxu0 0
      %739 = vmatpush1.bf16.msra.mxu0 %v618
      %740 = vmatprep.subr.bf16.mxu0 0
      %741 = vmatpush1.bf16.msra.mxu0 %v619
      %742 = vmatprep.subr.bf16.mxu0 0
      %743 = vmatpush1.bf16.msra.mxu0 %v620
      %744 = vmatprep.subr.bf16.mxu0 0
      %745 = vmatpush1.bf16.msra.mxu0 %v621
      %746 = vmatprep.subr.bf16.mxu0 0
      %747 = vmatpush1.bf16.msra.mxu0 %v622
      %748 = vmatprep.subr.bf16.mxu0 0
      %749 = vmatpush1.bf16.msra.mxu0 %v623
      %750 = vmatprep.subr.bf16.mxu0 0
      %751 = vmatpush1.bf16.msra.mxu0 %v624
      %752 = vmatprep.subr.bf16.mxu0 0
      %753 = vmatpush1.bf16.msra.mxu0 %v625
      %754 = vmatprep.subr.bf16.mxu0 0
      %755 = vmatpush1.bf16.msra.mxu0 %v626
      %756 = vmatprep.mubr.bf16.mxu0 %v438
      %757 = vmatmul.mubr.bf16.gmra.mrb[0].mxu0 %v437
      %v758 = vpop.f32.mrb[0].mxu0
      %v759 = vadd.f32 %v694, %v758
      %v760 = vpop.f32.mrb[0].mxu0
      %v761 = vpop.f32.mrb[0].mxu0
      %v762 = vadd.f32 %v697, %v761
      %v763 = vpop.f32.mrb[0].mxu0
      %764 = vmatprep.mubr.bf16.mxu0 %v442
      %765 = vmatmul.mubr.bf16.gmra.mrb[0].mxu0 %v441
      %v766 = vpop.f32.mrb[0].mxu0
      %v767 = vadd.f32 %v702, %v766
      %v768 = vpop.f32.mrb[0].mxu0
      %v769 = vpop.f32.mrb[0].mxu0
      %v770 = vadd.f32 %v705, %v769
      %v771 = vpop.f32.mrb[0].mxu0
      %772 = vmatprep.mubr.bf16.mxu0 %v446
      %773 = vmatmul.mubr.bf16.gmra.mrb[0].mxu0 %v445
      %v774 = vpop.f32.mrb[0].mxu0
      %v775 = vadd.f32 %v710, %v774
      %v776 = vpop.f32.mrb[0].mxu0
      %v777 = vpop.f32.mrb[0].mxu0
      %v778 = vadd.f32 %v713, %v777
      %v779 = vpop.f32.mrb[0].mxu0
      %780 = vmatprep.mubr.bf16.mxu0 %v450
      %781 = vmatmul.mubr.bf16.gmra.mrb[0].mxu0 %v449
      %v782 = vpop.f32.mrb[0].mxu0
      %v783 = vadd.f32 %v718, %v782
      %v784 = vpop.f32.mrb[0].mxu0
      %v785 = vpop.f32.mrb[0].mxu0
      %v786 = vadd.f32 %v721, %v785
      %v787 = vpop.f32.mrb[0].mxu0
      %788 = vdwg.mxu0
      %v789 = vadd.f32 %v299, %v759
      %v790 = vadd.f32 %v300, %v762
      %v791 = vadd.f32 %v301, %v767
      %v792 = vadd.f32 %v302, %v770
      %v793 = vadd.f32 %v303, %v775
      %v794 = vadd.f32 %v304, %v778
      %v795 = vadd.f32 %v305, %v783
      %v796 = vadd.f32 %v306, %v786
      %797 = vst [vmem:[#allocation2] sm:$0xff] %v789
      %798 = vst [vmem:[#allocation2 + $0x8] sm:$0xff] %v790
      %799 = vst [vmem:[#allocation2 + $0x10] sm:$0xff] %v791
      %800 = vst [vmem:[#allocation2 + $0x18] sm:$0xff] %v792
      %801 = vst [vmem:[#allocation2 + $0x20] sm:$0xff] %v793
      %802 = vst [vmem:[#allocation2 + $0x28] sm:$0xff] %v794
      %803 = vst [vmem:[#allocation2 + $0x30] sm:$0xff] %v795
      %804 = vst [vmem:[#allocation2 + $0x38] sm:$0xff] %v796
      // Predicated region
      $region37: #{unet_forward.11} parent=31 // pred_check
        %p805 = pneg %p287
      $region38: #{unet_forward.11} parent=31 // pred_check_branch
        %807 = sbr.rel (%p805) target = $region40
      $region39: #{unet_forward.11} parent=31 // pred_region
        %v808 = vld [vmem:[#allocation2] sm:$0xff]
        %v809 = vld [vmem:[#allocation2 + $0x8] sm:$0xff]
        %v810 = vld [vmem:[#allocation2 + $0x10] sm:$0xff]
        %v811 = vld [vmem:[#allocation2 + $0x18] sm:$0xff]
        %v812 = vld [vmem:[#allocation2 + $0x20] sm:$0xff]
        %v813 = vld [vmem:[#allocation2 + $0x28] sm:$0xff]
        %v814 = vld [vmem:[#allocation2 + $0x30] sm:$0xff]
        %v815 = vld [vmem:[#allocation2 + $0x38] sm:$0xff]
        %v816 = vld [vmem:[%s275] sm:$0x1]
        %v818 = vlaneseq
        %v819 = vshrl.u32 %v818, 7
        %v820 = vsub.s32 0, %v819
        %v821 = vrot.slane %v816, %v820
        %v823 = vadd.f32 %v808, %v821
        %v824 = vadd.f32 %v809, %v821
        %v825 = vadd.f32 %v810, %v821
        %v826 = vadd.f32 %v811, %v821
        %v827 = vadd.f32 %v812, %v821
        %v828 = vadd.f32 %v813, %v821
        %v829 = vadd.f32 %v814, %v821
        %v830 = vadd.f32 %v815, %v821
        %831 = vst [vmem:[%s284] sm:$0xff] %v823
        %832 = vst [vmem:[%s284 + $0x8] sm:$0xff] %v824
        %833 = vst [vmem:[%s284 + $0x10] sm:$0xff] %v825
        %834 = vst [vmem:[%s284 + $0x18] sm:$0xff] %v826
        %835 = vst [vmem:[%s284 + $0x20] sm:$0xff] %v827
        %836 = vst [vmem:[%s284 + $0x28] sm:$0xff] %v828
        %837 = vst [vmem:[%s284 + $0x30] sm:$0xff] %v829
        %838 = vst [vmem:[%s284 + $0x38] sm:$0xff] %v830
      $region40: #{unet_forward.11} parent=31 // pred_fallthru
        _
      %s839 = smul.u32 8, %s20
      %p840 = scmp.lt.s32.totalorder %s19, 0
      %s841 = scalar_select %p840, %s19, 0
      %p842 = scmp.lt.s32.totalorder %s839, 15
      %s843 = scalar_select %p842, %s839, 15
      %s844 = smul.addr %s841, 16
      %s845 = sadd.s32 %s843, %s844
      %s846 = smul.addr %s845, 8
      %s847 = scalar_lea.vmem %s3, %s846
      // Predicated region
      $region41: #{unet_forward.11} parent=31 // pred_check
        %p848 = pneg %p137
      $region42: #{unet_forward.11} parent=31 // pred_check_branch
        %850 = sbr.rel (%p848) target = $region44
      $region43: #{unet_forward.11} parent=31 // pred_region
        %s851 = smul.u32 8, %s20
      $region44: #{unet_forward.11} parent=31 // pred_fallthru
        _
    $region32: #{unet_forward.11} parent=5 // pred_fallthru
      _
    %p852 = scmp.le.s32.totalorder 2, %s9
    // Predicated region
    $region45: #{unet_forward.11} parent=5 // pred_check
      %p853 = pneg %p852
    $region46: #{unet_forward.11} parent=5 // pred_check_branch
      %855 = sbr.rel (%p853) target = $region48
    $region47: #{unet_forward.11} parent=5 // pred_region
      %s856 = ssub.s32 %s9, 2
      // Predicated region
      $region49: #{unet_forward.11} parent=47 // pred_check
        %p857 = pneg %p143
      $region50: #{unet_forward.11} parent=47 // pred_check_branch
        %859 = sbr.rel (%p857) target = $region52
      $region51: #{unet_forward.11} parent=47 // pred_region
        %s860 = smul.u32 8, %s23
        %p861 = scmp.lt.s32.totalorder %s22, 0
        %s862 = scalar_select %p861, %s22, 0
        %p863 = scmp.lt.s32.totalorder %s860, 15
        %s864 = scalar_select %p863, %s860, 15
        %s865 = smul.addr %s862, 16
        %s866 = sadd.s32 %s864, %s865
        %s867 = smul.addr %s866, 8
        %s868 = scalar_lea.vmem %s3, %s867
      $region52: #{unet_forward.11} parent=47 // pred_fallthru
        _
    $region48: #{unet_forward.11} parent=5 // pred_fallthru
      _
  $region6: #{unet_forward.11} parent=0 // loop_footer
    %s13 = sadd.s32 1, %s9
  $region7: #{unet_forward.11} parent=0 // loop_footer_branch
    %8 = sbr.rel target = $region3
  $region8: #{unet_forward.11} parent=0 // loop_exit
    _

// kernel: squeeze.8
$region0: #{squeeze.8}
  %s0 = inlined_call_operand.vmem [shape: f32[1,32,256], index: 0, kind: input, shape index: {}]
  %s1 = inlined_call_operand.vmem [shape: f32[2,4,4,256], index: 1, kind: output, shape index: {}]
  $region1: #{squeeze.8} parent=0
    #allocation0 [shape = 'u8[65536]{0}', space=vmem, size = 0x10000, scoped, tag = 'scoped mem for output reshape']
    %v2 = vld [vmem:[%s0] sm:$0xff]
    %3 = vst [vmem:[#allocation0] sm:$0xf] %v2
    %s4 = scalar_lea.vmem [#allocation0], 12
    %5 = vst [vmem:[%s4] sm:$0xf0] %v2
    %s6 = scalar_lea.vmem %s0, 8
    %v7 = vld [vmem:[%s6] sm:$0xff]
    %s8 = scalar_lea.vmem [#allocation0], 8
    %9 = vst [vmem:[%s8] sm:$0xf] %v7
    %s10 = scalar_lea.vmem [#allocation0], 20
    %11 = vst [vmem:[%s10] sm:$0xf0] %v7
    %s12 = scalar_lea.vmem %s0, 16
    %v13 = vld [vmem:[%s12] sm:$0xff]
    %s14 = scalar_lea.vmem [#allocation0], 32
    %15 = vst [vmem:[%s14] sm:$0xf] %v13
    %s16 = scalar_lea.vmem [#allocation0], 44
    %17 = vst [vmem:[%s16] sm:$0xf0] %v13
    %s18 = scalar_lea.vmem %s0, 24
    %v19 = vld [vmem:[%s18] sm:$0xff]
    %s20 = scalar_lea.vmem [#allocation0], 40
    %21 = vst [vmem:[%s20] sm:$0xf] %v19
    %s22 = scalar_lea.vmem [#allocation0], 52
    %23 = vst [vmem:[%s22] sm:$0xf0] %v19
    %s24 = scalar_lea.vmem %s0, 32
    %v25 = vld [vmem:[%s24] sm:$0xff]
    %s26 = scalar_lea.vmem [#allocation0], 64
    %27 = vst [vmem:[%s26] sm:$0xf] %v25
    %s28 = scalar_lea.vmem [#allocation0], 76
    %29 = vst [vmem:[%s28] sm:$0xf0] %v25
    %s30 = scalar_lea.vmem %s0, 40
    %v31 = vld [vmem:[%s30] sm:$0xff]
    %s32 = scalar_lea.vmem [#allocation0], 72
    %33 = vst [vmem:[%s32] sm:$0xf] %v31
    %s34 = scalar_lea.vmem [#allocation0], 84
    %35 = vst [vmem:[%s34] sm:$0xf0] %v31
    %s36 = scalar_lea.vmem %s0, 48
    %v37 = vld [vmem:[%s36] sm:$0xff]
    %s38 = scalar_lea.vmem [#allocation0], 96
    %39 = vst [vmem:[%s38] sm:$0xf] %v37
    %s40 = scalar_lea.vmem [#allocation0], 108
    %41 = vst [vmem:[%s40] sm:$0xf0] %v37
    %s42 = scalar_lea.vmem %s0, 56
    %v43 = vld [vmem:[%s42] sm:$0xff]
    %s44 = scalar_lea.vmem [#allocation0], 104
    %45 = vst [vmem:[%s44] sm:$0xf] %v43
    %s46 = scalar_lea.vmem [#allocation0], 116
    %47 = vst [vmem:[%s46] sm:$0xf0] %v43
    %s49 = sshllo.u32 0, 4
    %v51 = vld [vmem:[#allocation0] sm:%s49]
    %s52 = sshllo.u32 0, 4
    %53 = vst [vmem:[%s1] sm:%s52] %v51
    %s54 = scalar_lea.vmem [#allocation0], 8
    %v55 = vld [vmem:[%s54] sm:%s49]
    %s56 = sshllo.u32 0, 4
    %s57 = scalar_lea.vmem %s1, 4
    %58 = vst [vmem:[%s57] sm:%s56] %v55
    %s59 = scalar_lea.vmem [#allocation0], 16
    %v60 = vld [vmem:[%s59] sm:%s49]
    %s61 = sshllo.u32 0, 4
    %s62 = smul.addr 4, 2
    %s63 = scalar_lea.vmem %s1, %s62
    %64 = vst [vmem:[%s63] sm:%s61] %v60
    %s65 = scalar_lea.vmem [#allocation0], 24
    %v66 = vld [vmem:[%s65] sm:%s49]
    %s67 = sshllo.u32 0, 4
    %s68 = smul.addr 4, 3
    %s69 = scalar_lea.vmem %s1, %s68
    %70 = vst [vmem:[%s69] sm:%s67] %v66
    %s71 = scalar_lea.vmem [#allocation0], 32
    %v72 = vld [vmem:[%s71] sm:%s49]
    %s73 = sshllo.u32 0, 4
    %s74 = smul.addr 4, 4
    %s75 = scalar_lea.vmem %s1, %s74
    %76 = vst [vmem:[%s75] sm:%s73] %v72
    %s77 = scalar_lea.vmem [#allocation0], 40
    %v78 = vld [vmem:[%s77] sm:%s49]
    %s79 = sshllo.u32 0, 4
    %s80 = smul.addr 4, 5
    %s81 = scalar_lea.vmem %s1, %s80
    %82 = vst [vmem:[%s81] sm:%s79] %v78
    %s83 = scalar_lea.vmem [#allocation0], 48
    %v84 = vld [vmem:[%s83] sm:%s49]
    %s85 = sshllo.u32 0, 4
    %s86 = smul.addr 4, 6
    %s87 = scalar_lea.vmem %s1, %s86
    %88 = vst [vmem:[%s87] sm:%s85] %v84
    %s89 = scalar_lea.vmem [#allocation0], 56
    %v90 = vld [vmem:[%s89] sm:%s49]
    %s91 = sshllo.u32 0, 4
    %s92 = smul.addr 4, 7
    %s93 = scalar_lea.vmem %s1, %s92
    %94 = vst [vmem:[%s93] sm:%s91] %v90
    %s95 = scalar_lea.vmem [#allocation0], 64
    %v96 = vld [vmem:[%s95] sm:%s49]
    %s97 = sshllo.u32 0, 4
    %s98 = smul.addr 4, 8
    %s99 = scalar_lea.vmem %s1, %s98
    %100 = vst [vmem:[%s99] sm:%s97] %v96
    %s101 = scalar_lea.vmem [#allocation0], 72
    %v102 = vld [vmem:[%s101] sm:%s49]
    %s103 = sshllo.u32 0, 4
    %s104 = smul.addr 4, 9
    %s105 = scalar_lea.vmem %s1, %s104
    %106 = vst [vmem:[%s105] sm:%s103] %v102
    %s107 = scalar_lea.vmem [#allocation0], 80
    %v108 = vld [vmem:[%s107] sm:%s49]
    %s109 = sshllo.u32 0, 4
    %s110 = smul.addr 4, 10
    %s111 = scalar_lea.vmem %s1, %s110
    %112 = vst [vmem:[%s111] sm:%s109] %v108
    %s113 = scalar_lea.vmem [#allocation0], 88
    %v114 = vld [vmem:[%s113] sm:%s49]
    %s115 = sshllo.u32 0, 4
    %s116 = smul.addr 4, 11
    %s117 = scalar_lea.vmem %s1, %s116
    %118 = vst [vmem:[%s117] sm:%s115] %v114
    %s119 = scalar_lea.vmem [#allocation0], 96
    %v120 = vld [vmem:[%s119] sm:%s49]
    %s121 = sshllo.u32 0, 4
    %s122 = smul.addr 4, 12
    %s123 = scalar_lea.vmem %s1, %s122
    %124 = vst [vmem:[%s123] sm:%s121] %v120
    %s125 = scalar_lea.vmem [#allocation0], 104
    %v126 = vld [vmem:[%s125] sm:%s49]
    %s127 = sshllo.u32 0, 4
    %s128 = smul.addr 4, 13
    %s129 = scalar_lea.vmem %s1, %s128
    %130 = vst [vmem:[%s129] sm:%s127] %v126
    %s131 = scalar_lea.vmem [#allocation0], 112
    %v132 = vld [vmem:[%s131] sm:%s49]
    %s133 = sshllo.u32 0, 4
    %s134 = smul.addr 4, 14
    %s135 = scalar_lea.vmem %s1, %s134
    %136 = vst [vmem:[%s135] sm:%s133] %v132
    %s137 = scalar_lea.vmem [#allocation0], 120
    %v138 = vld [vmem:[%s137] sm:%s49]
    %s139 = sshllo.u32 0, 4
    %s140 = smul.addr 4, 15
    %s141 = scalar_lea.vmem %s1, %s140
    %142 = vst [vmem:[%s141] sm:%s139] %v138

// kernel: unet_forward.12
$region0: #{unet_forward.12}
  #allocation0 [shape = 'u32[]', space=smem, size = 0x4, offset = 0x4, fixed_abs, tag = 'smem constant byte address 0x4 - core index']
  #allocation1 [shape = 'u32[144,128]{1,0:T(1,128)}', space=vmem, size = 0x12000, scoped, tag = 'internal scratch']
  #allocation2 [shape = 'f32[16,256]{1,0:T(8,128)}', space=vmem, size = 0x4000, scoped, tag = 'scratch operand']
  %s0 = inlined_call_operand.vmem [shape: bf16[1,32,2048], index: 0, kind: input, shape index: {}]
  %s1 = inlined_call_operand.vmem [shape: bf16[1,2048,256], index: 1, kind: input, shape index: {}]
  %s2 = inlined_call_operand.vmem [shape: f32[1,1,256], index: 2, kind: input, shape index: {}]
  %s3 = inlined_call_operand.vmem [shape: f32[1,32,256], index: 3, kind: output, shape index: {}]
  %s4 = sld [smem:[#allocation0]]
  $region76: #{unet_forward.12} parent=0
    _
  %s6 = ssub.s32 1, %s4
  %s7 = scalar_select 0, %s6, %s4
  $region1: #{unet_forward.12} parent=0
    #allocation3 [shape = 'u8[65536]{0}', space=vmem, size = 0x10000, scoped, tag = 'input window, operand 0']
    loop: start=0, step=1, limit=6
    $region2: #{unet_forward.12} parent=1 // loop_pre_header
      _
    $region3: #{unet_forward.12} parent=1 // loop_header
      %s9 = sphi 0, %s13
      %p10 = scmp.ge.s32.totalorder %s9, 6
      %s16 = sphi 0, %s35
      %s17 = sphi 0, %s31
      %s18 = sphi 0, %s27
      %s19 = sphi 0, %s16
      %s20 = sphi 0, %s17
      %s21 = sphi 0, %s18
      %s22 = sphi 0, %s19
      %s23 = sphi 0, %s20
      %s24 = sphi 0, %s21
      %s42 = sphi 0, %s44
      %s45 = sphi 0, %s42
      %s46 = sphi 0, %s45
      %s62 = sphi 0, %s46
      %s70 = sphi 0, %s72
      %s73 = sphi 0, %s70
      %s74 = sphi 0, %s73
      %s90 = sphi 0, %s74
      %s96 = sphi 0, %s98
      %s99 = sphi 0, %s96
      %s100 = sphi 0, %s99
      %s116 = sphi 0, %s100
      %s124 = sphi 0, %s126
      %s127 = sphi 0, %s124
      %s128 = sphi 0, %s127
      %s144 = sphi 0, %s128
    $region4: #{unet_forward.12} parent=1 // loop_header_branch
      %12 = sbr.rel (%p10) target = $region8
    $region5: #{unet_forward.12} parent=1 // loop_body
      %s14 = ssub.s32 %s9, 1
      %s15 = ssub.s32 %s9, 2
      %s25 = sadd.s32 1, %s18
      %p26 = scmp.ge.s32.totalorder %s25, 2
      %s27 = scalar_select %p26, 0, %s25
      %s28 = sadd.s32 1, %s17
      %s29 = scalar_select %p26, %s28, %s17
      %p30 = scmp.ge.s32.totalorder %s29, 2
      %s31 = scalar_select %p30, 0, %s29
      %s32 = sadd.s32 1, %s16
      %s33 = scalar_select %p30, %s32, %s16
      %p34 = scmp.ge.s32.totalorder %s33, 1
      %s35 = scalar_select %p34, 0, %s33
      %s36 = ssub.s32 %s16, %s35
      %s37 = ssub.s32 %s17, %s31
      %s38 = sor.u32 %s36, %s37
      %s39 = ssub.s32 %s18, %s27
      %s40 = sor.u32 %s38, %s39
      %p41 = scmp.eq.s32.totalorder %s40, 0
      %s43 = sadd.s32 %s42, 1
      %s44 = scalar_select %p41, %s42, %s43
      %p47 = pneg %p41
      %p48 = scmp.eq.s32.totalorder %s9, 3
      %p49 = por %p47, %p48
      %p50 = scmp.ne.s32.totalorder %s42, %s45
      %p51 = scmp.eq.s32.totalorder %s9, 0
      %p52 = por %p50, %p51
      %p53 = scmp.ne.s32.totalorder %s42, %s45
      %p54 = scmp.eq.s32.totalorder %s14, 3
      %p55 = por %p53, %p54
      %p56 = scmp.ne.s32.totalorder %s45, %s46
      %p57 = scmp.eq.s32.totalorder %s14, 0
      %p58 = por %p56, %p57
      %p59 = scmp.ne.s32.totalorder %s45, %s46
      %p60 = scmp.eq.s32.totalorder %s15, 3
      %p61 = por %p59, %p60
      %p63 = scmp.ne.s32.totalorder %s46, %s62
      %p64 = scmp.eq.s32.totalorder %s15, 0
      %p65 = por %p63, %p64
      %s66 = ssub.s32 %s16, %s35
      %s67 = ssub.s32 %s18, %s27
      %s68 = sor.u32 %s66, %s67
      %p69 = scmp.eq.s32.totalorder %s68, 0
      %s71 = sadd.s32 %s70, 1
      %s72 = scalar_select %p69, %s70, %s71
      %p75 = pneg %p69
      %p76 = scmp.eq.s32.totalorder %s9, 3
      %p77 = por %p75, %p76
      %p78 = scmp.ne.s32.totalorder %s70, %s73
      %p79 = scmp.eq.s32.totalorder %s9, 0
      %p80 = por %p78, %p79
      %p81 = scmp.ne.s32.totalorder %s70, %s73
      %p82 = scmp.eq.s32.totalorder %s14, 3
      %p83 = por %p81, %p82
      %p84 = scmp.ne.s32.totalorder %s73, %s74
      %p85 = scmp.eq.s32.totalorder %s14, 0
      %p86 = por %p84, %p85
      %p87 = scmp.ne.s32.totalorder %s73, %s74
      %p88 = scmp.eq.s32.totalorder %s15, 3
      %p89 = por %p87, %p88
      %p91 = scmp.ne.s32.totalorder %s74, %s90
      %p92 = scmp.eq.s32.totalorder %s15, 0
      %p93 = por %p91, %p92
      %s94 = ssub.s32 %s16, %s35
      %p95 = scmp.eq.s32.totalorder %s94, 0
      %s97 = sadd.s32 %s96, 1
      %s98 = scalar_select %p95, %s96, %s97
      %p101 = pneg %p95
      %p102 = scmp.eq.s32.totalorder %s9, 3
      %p103 = por %p101, %p102
      %p104 = scmp.ne.s32.totalorder %s96, %s99
      %p105 = scmp.eq.s32.totalorder %s9, 0
      %p106 = por %p104, %p105
      %p107 = scmp.ne.s32.totalorder %s96, %s99
      %p108 = scmp.eq.s32.totalorder %s14, 3
      %p109 = por %p107, %p108
      %p110 = scmp.ne.s32.totalorder %s99, %s100
      %p111 = scmp.eq.s32.totalorder %s14, 0
      %p112 = por %p110, %p111
      %p113 = scmp.ne.s32.totalorder %s99, %s100
      %p114 = scmp.eq.s32.totalorder %s15, 3
      %p115 = por %p113, %p114
      %p117 = scmp.ne.s32.totalorder %s100, %s116
      %p118 = scmp.eq.s32.totalorder %s15, 0
      %p119 = por %p117, %p118
      %s120 = ssub.s32 %s16, %s35
      %s121 = ssub.s32 %s17, %s31
      %s122 = sor.u32 %s120, %s121
      %p123 = scmp.eq.s32.totalorder %s122, 0
      %s125 = sadd.s32 %s124, 1
      %s126 = scalar_select %p123, %s124, %s125
      %p129 = pneg %p123
      %p130 = scmp.eq.s32.totalorder %s9, 3
      %p131 = por %p129, %p130
      %p132 = scmp.ne.s32.totalorder %s124, %s127
      %p133 = scmp.eq.s32.totalorder %s9, 0
      %p134 = por %p132, %p133
      %p135 = scmp.ne.s32.totalorder %s124, %s127
      %p136 = scmp.eq.s32.totalorder %s14, 3
      %p137 = por %p135, %p136
      %p138 = scmp.ne.s32.totalorder %s127, %s128
      %p139 = scmp.eq.s32.totalorder %s14, 0
      %p140 = por %p138, %p139
      %p141 = scmp.ne.s32.totalorder %s127, %s128
      %p142 = scmp.eq.s32.totalorder %s15, 3
      %p143 = por %p141, %p142
      %p145 = scmp.ne.s32.totalorder %s128, %s144
      %p146 = scmp.eq.s32.totalorder %s15, 0
      %p147 = por %p145, %p146
      %p148 = scmp.le.s32.totalorder 1, %s9
      %p149 = scmp.lt.s32.totalorder %s9, 5
      %p150 = pnand %p148, %p149
      %p151 = pneg %p150
      // Predicated region
      $region9: #{unet_forward.12} parent=5 // pred_check
        _
      $region10: #{unet_forward.12} parent=5 // pred_check_branch
        %153 = sbr.rel (%p150) target = $region12
      $region11: #{unet_forward.12} parent=5 // pred_region
        %s154 = ssub.s32 %s9, 1
        // Predicated region
        $region13: #{unet_forward.12} parent=11 // pred_check
          %p155 = pneg %p112
        $region14: #{unet_forward.12} parent=11 // pred_check_branch
          %157 = sbr.rel (%p155) target = $region16
        $region15: #{unet_forward.12} parent=11 // pred_region
          %p158 = scmp.lt.s32.totalorder %s19, 0
          %s159 = scalar_select %p158, %s19, 0
          %s160 = smul.addr %s159, 2
          %s161 = scalar_lea.vmem %s2, %s160
        $region16: #{unet_forward.12} parent=11 // pred_fallthru
          _
      $region12: #{unet_forward.12} parent=5 // pred_fallthru
        _
      %p162 = scmp.lt.s32.totalorder %s9, 4
      // Predicated region
      $region17: #{unet_forward.12} parent=5 // pred_check
        %p163 = pneg %p162
      $region18: #{unet_forward.12} parent=5 // pred_check_branch
        %165 = sbr.rel (%p163) target = $region20
      $region19: #{unet_forward.12} parent=5 // pred_region
        // Predicated region
        $region21: #{unet_forward.12} parent=19 // pred_check
          %p166 = pneg %p52
        $region22: #{unet_forward.12} parent=19 // pred_check_branch
          %168 = sbr.rel (%p166) target = $region24
        $region23: #{unet_forward.12} parent=19 // pred_region
          %s169 = sand.u32 %s42, 1
          %s170 = sand.u32 %s42, 1
          %s171 = smul.addr %s170, 64
          %s172 = scalar_lea.vmem [#allocation3], %s171
          %s173 = smul.u32 2, %s17
          %s174 = smul.u32 8, %s18
          %s175 = smul.addr %s173, 16
          %s176 = sadd.s32 %s174, %s175
          %s177 = smul.addr %s16, 64
          %s178 = sadd.s32 %s176, %s177
          %s179 = smul.addr %s178, 4
          %s180 = scalar_lea.vmem %s0, %s179
          // Predicated region
          $region25: #{unet_forward.12} parent=23 // pred_check
            _
          $region26: #{unet_forward.12} parent=23 // pred_check_branch
            %182 = sbr.rel (0) target = $region28
          $region27: #{unet_forward.12} parent=23 // pred_region
            // Predicated region
            $region29: #{unet_forward.12} parent=27 // pred_check
              _
            $region30: #{unet_forward.12} parent=27 // pred_check_branch
              %184 = sbr.rel (0) target = $region32
            $region31: #{unet_forward.12} parent=27 // pred_region
              loop: start=0, step=1, limit=1
              $region33: #{unet_forward.12} parent=31 // loop_pre_header
                _
              $region34: #{unet_forward.12} parent=31 // loop_header
                %s186 = sphi 0, %s190
                %p187 = scmp.ge.s32.totalorder %s186, 1
                %s191 = sphi %s180, %s180
                %s192 = sphi %s172, %s172
              $region35: #{unet_forward.12} parent=31 // loop_header_branch
                %189 = sbr.rel (%p187) target = $region39
              $region36: #{unet_forward.12} parent=31 // loop_body
                %v193 = vld [vmem:[%s191] sm:$0xff]
                %194 = vst [vmem:[%s192] sm:$0xff] %v193
                %v195 = vld [vmem:[%s191 + $0x8] sm:$0xff]
                %196 = vst [vmem:[%s192 + $0x8] sm:$0xff] %v195
                %v197 = vld [vmem:[%s191 + $0x10] sm:$0xff]
                %198 = vst [vmem:[%s192 + $0x10] sm:$0xff] %v197
                %v199 = vld [vmem:[%s191 + $0x18] sm:$0xff]
                %200 = vst [vmem:[%s192 + $0x18] sm:$0xff] %v199
                %v201 = vld [vmem:[%s191 + $0x40] sm:$0xff]
                %202 = vst [vmem:[%s192 + $0x20] sm:$0xff] %v201
                %v203 = vld [vmem:[%s191 + $0x48] sm:$0xff]
                %204 = vst [vmem:[%s192 + $0x28] sm:$0xff] %v203
                %v205 = vld [vmem:[%s191 + $0x50] sm:$0xff]
                %206 = vst [vmem:[%s192 + $0x30] sm:$0xff] %v205
                %v207 = vld [vmem:[%s191 + $0x58] sm:$0xff]
                %208 = vst [vmem:[%s192 + $0x38] sm:$0xff] %v207
              $region37: #{unet_forward.12} parent=31 // loop_footer
                %s190 = sadd.s32 1, %s186
              $region38: #{unet_forward.12} parent=31 // loop_footer_branch
                %185 = sbr.rel target = $region34
              $region39: #{unet_forward.12} parent=31 // loop_exit
                _
            $region32: #{unet_forward.12} parent=27 // pred_fallthru
              _
            // Predicated region
            $region40: #{unet_forward.12} parent=27 // pred_check
              _
            $region41: #{unet_forward.12} parent=27 // pred_check_branch
              %210 = sbr.rel target = $region43
            $region42: #{unet_forward.12} parent=27 // pred_region
              _
            $region43: #{unet_forward.12} parent=27 // pred_fallthru
              _
          $region28: #{unet_forward.12} parent=23 // pred_fallthru
            _
          %211 = vnop
        $region24: #{unet_forward.12} parent=19 // pred_fallthru
          _
        // Predicated region
        $region44: #{unet_forward.12} parent=19 // pred_check
          %p212 = pneg %p80
        $region45: #{unet_forward.12} parent=19 // pred_check_branch
          %214 = sbr.rel (%p212) target = $region47
        $region46: #{unet_forward.12} parent=19 // pred_region
          %s215 = smul.u32 128, %s18
          %p216 = scmp.lt.s32.totalorder %s16, 0
          %s217 = scalar_select %p216, %s16, 0
          %p218 = scmp.lt.s32.totalorder %s215, 255
          %s219 = scalar_select %p218, %s215, 255
          %s220 = smul.addr %s219, 2
          %s221 = smul.addr %s217, 512
          %s222 = sadd.s32 %s220, %s221
          %s223 = smul.addr %s222, 4
          %s224 = scalar_lea.vmem %s1, %s223
          %s225 = smul.u32 128, %s18
        $region47: #{unet_forward.12} parent=19 // pred_fallthru
          _
      $region20: #{unet_forward.12} parent=5 // pred_fallthru
        _
      %p226 = scmp.le.s32.totalorder 1, %s9
      %p227 = scmp.lt.s32.totalorder %s9, 5
      %p228 = pnand %p226, %p227
      %p229 = pneg %p228
      // Predicated region
      $region48: #{unet_forward.12} parent=5 // pred_check
        _
      $region49: #{unet_forward.12} parent=5 // pred_check_branch
        %231 = sbr.rel (%p228) target = $region51
      $region50: #{unet_forward.12} parent=5 // pred_region
        %s232 = ssub.s32 %s9, 1
        %s233 = sand.u32 %s45, 1
        %s234 = sand.u32 %s45, 1
        %s235 = smul.addr %s234, 64
        %s236 = scalar_lea.vmem [#allocation3], %s235
        // Predicated region
        $region52: #{unet_forward.12} parent=50 // pred_check
          %p237 = pneg %p58
        $region53: #{unet_forward.12} parent=50 // pred_check_branch
          %239 = sbr.rel (%p237) target = $region55
        $region54: #{unet_forward.12} parent=50 // pred_region
          _
        $region55: #{unet_forward.12} parent=50 // pred_fallthru
          _
        %s240 = sand.u32 %s45, 1
        %s241 = sand.u32 %s45, 1
        %s242 = smul.addr %s241, 64
        %s243 = scalar_lea.vmem [#allocation3], %s242
        %p244 = pneg %p58
        %p245 = pneg %p55
        %s246 = smul.u32 128, %s21
        %p247 = scmp.lt.s32.totalorder %s19, 0
        %s248 = scalar_select %p247, %s19, 0
        %p249 = scmp.lt.s32.totalorder %s246, 255
        %s250 = scalar_select %p249, %s246, 255
        %s251 = smul.addr %s250, 2
        %s252 = smul.addr %s248, 512
        %s253 = sadd.s32 %s251, %s252
        %s254 = smul.addr %s253, 4
        %s255 = scalar_lea.vmem %s1, %s254
        %p256 = pneg %p86
        %p257 = pneg %p83
        %p258 = scmp.lt.s32.totalorder %s19, 0
        %s259 = scalar_select %p258, %s19, 0
        %s260 = smul.addr %s259, 2
        %s261 = scalar_lea.vmem %s2, %s260
        %p262 = pneg %p112
        %p263 = pneg %p109
        %p264 = pneg %p140
        %p265 = pneg %p137
        %s266 = smul.u32 2, %s20
        %p267 = scmp.lt.s32.totalorder %s19, 0
        %s268 = scalar_select %p267, %s19, 0
        %p269 = scmp.lt.s32.totalorder %s266, 3
        %s270 = scalar_select %p269, %s266, 3
        %s271 = smul.addr %s270, 2
        %s272 = smul.addr %s268, 8
        %s273 = sadd.s32 %s271, %s272
        %s274 = smul.addr %s273, 8
        %s275 = scalar_lea.vmem %s3, %s274
        %s276 = smul.u32 2, %s20
        %s277 = smul.u32 8, %s21
        %s278 = smul.u32 128, %s21
        %p279 = scmp.lt.s32.totalorder %s19, 0
        %s280 = scalar_select %p279, %s19, 0
        %p281 = scmp.lt.s32.totalorder %s278, 255
        %s282 = scalar_select %p281, %s278, 255
        %s283 = smul.addr %s282, 2
        %s284 = smul.addr %s280, 512
        %s285 = sadd.s32 %s283, %s284
        %s286 = smul.addr %s285, 4
        %s287 = scalar_lea.vmem %s1, %s286
        %s288 = smul.u32 128, %s21
        %p289 = scmp.lt.s32.totalorder %s19, 0
        %s290 = scalar_select %p289, %s19, 0
        %s291 = smul.addr %s290, 2
        %s292 = scalar_lea.vmem %s2, %s291
        %s293 = smul.u32 2, %s20
        %p294 = scmp.lt.s32.totalorder %s19, 0
        %s295 = scalar_select %p294, %s19, 0
        %p296 = scmp.lt.s32.totalorder %s293, 3
        %s297 = scalar_select %p296, %s293, 3
        %s298 = smul.addr %s297, 2
        %s299 = smul.addr %s295, 8
        %s300 = sadd.s32 %s298, %s299
        %s301 = smul.addr %s300, 8
        %s302 = scalar_lea.vmem %s3, %s301
        %s303 = smul.u32 2, %s20
        %p304 = scmp.eq.s32.totalorder %s21, 0
        // Predicated region
        $region56: #{unet_forward.12} parent=50 // pred_check
          %p305 = pneg %p304
        $region57: #{unet_forward.12} parent=50 // pred_check_branch
          %307 = sbr.rel (%p305) target = $region59
        $region58: #{unet_forward.12} parent=50 // pred_region
          %308 = vst [vmem:[#allocation2] sm:$0xff] 0.0
          %309 = vst [vmem:[#allocation2 + $0x8] sm:$0xff] 0.0
          %310 = vst [vmem:[#allocation2 + $0x10] sm:$0xff] 0.0
          %311 = vst [vmem:[#allocation2 + $0x18] sm:$0xff] 0.0
        $region59: #{unet_forward.12} parent=50 // pred_fallthru
          _
        %v312 = vld [vmem:[#allocation2] sm:$0xff]
        %v313 = vld [vmem:[#allocation2 + $0x8] sm:$0xff]
        %v314 = vld [vmem:[#allocation2 + $0x10] sm:$0xff]
        %v315 = vld [vmem:[#allocation2 + $0x18] sm:$0xff]
        %v316 = vld [vmem:[%s236] sm:$0xff]
        %v317 = vld [vmem:[%s236 + $0x8] sm:$0xff]
        %v318 = vld [vmem:[%s236 + $0x10] sm:$0xff]
        %v319 = vld [vmem:[%s236 + $0x18] sm:$0xff]
        %v320 = vld [vmem:[%s236 + $0x20] sm:$0xff]
        %v321 = vld [vmem:[%s236 + $0x28] sm:$0xff]
        %v322 = vld [vmem:[%s236 + $0x30] sm:$0xff]
        %v323 = vld [vmem:[%s236 + $0x38] sm:$0xff]
        %v324 = vld [vmem:[%s287] sm:$0xff]
        %v325 = vld [vmem:[%s287 + $0x8] sm:$0xff]
        %v326 = vld [vmem:[%s287 + $0x10] sm:$0xff]
        %v327 = vld [vmem:[%s287 + $0x18] sm:$0xff]
        %v328 = vld [vmem:[%s287 + $0x20] sm:$0xff]
        %v329 = vld [vmem:[%s287 + $0x28] sm:$0xff]
        %v330 = vld [vmem:[%s287 + $0x30] sm:$0xff]
        %v331 = vld [vmem:[%s287 + $0x38] sm:$0xff]
        %v332 = vld [vmem:[%s287 + $0x40] sm:$0xff]
        %v333 = vld [vmem:[%s287 + $0x48] sm:$0xff]
        %v334 = vld [vmem:[%s287 + $0x50] sm:$0xff]
        %v335 = vld [vmem:[%s287 + $0x58] sm:$0xff]
        %v336 = vld [vmem:[%s287 + $0x60] sm:$0xff]
        %v337 = vld [vmem:[%s287 + $0x68] sm:$0xff]
        %v338 = vld [vmem:[%s287 + $0x70] sm:$0xff]
        %v339 = vld [vmem:[%s287 + $0x78] sm:$0xff]
        %v340 = vld [vmem:[%s287 + $0x80] sm:$0xff]
        %v341 = vld [vmem:[%s287 + $0x88] sm:$0xff]
        %v342 = vld [vmem:[%s287 + $0x90] sm:$0xff]
        %v343 = vld [vmem:[%s287 + $0x98] sm:$0xff]
        %v344 = vld [vmem:[%s287 + $0xa0] sm:$0xff]
        %v345 = vld [vmem:[%s287 + $0xa8] sm:$0xff]
        %v346 = vld [vmem:[%s287 + $0xb0] sm:$0xff]
        %v347 = vld [vmem:[%s287 + $0xb8] sm:$0xff]
        %v348 = vld [vmem:[%s287 + $0xc0] sm:$0xff]
        %v349 = vld [vmem:[%s287 + $0xc8] sm:$0xff]
        %v350 = vld [vmem:[%s287 + $0xd0] sm:$0xff]
        %v351 = vld [vmem:[%s287 + $0xd8] sm:$0xff]
        %v352 = vld [vmem:[%s287 + $0xe0] sm:$0xff]
        %v353 = vld [vmem:[%s287 + $0xe8] sm:$0xff]
        %v354 = vld [vmem:[%s287 + $0xf0] sm:$0xff]
        %v355 = vld [vmem:[%s287 + $0xf8] sm:$0xff]
        %v356 = vld [vmem:[%s287 + $0x100] sm:$0xff]
        %v357 = vld [vmem:[%s287 + $0x108] sm:$0xff]
        %v358 = vld [vmem:[%s287 + $0x110] sm:$0xff]
        %v359 = vld [vmem:[%s287 + $0x118] sm:$0xff]
        %v360 = vld [vmem:[%s287 + $0x120] sm:$0xff]
        %v361 = vld [vmem:[%s287 + $0x128] sm:$0xff]
        %v362 = vld [vmem:[%s287 + $0x130] sm:$0xff]
        %v363 = vld [vmem:[%s287 + $0x138] sm:$0xff]
        %v364 = vld [vmem:[%s287 + $0x140] sm:$0xff]
        %v365 = vld [vmem:[%s287 + $0x148] sm:$0xff]
        %v366 = vld [vmem:[%s287 + $0x150] sm:$0xff]
        %v367 = vld [vmem:[%s287 + $0x158] sm:$0xff]
        %v368 = vld [vmem:[%s287 + $0x160] sm:$0xff]
        %v369 = vld [vmem:[%s287 + $0x168] sm:$0xff]
        %v370 = vld [vmem:[%s287 + $0x170] sm:$0xff]
        %v371 = vld [vmem:[%s287 + $0x178] sm:$0xff]
        %v372 = vld [vmem:[%s287 + $0x180] sm:$0xff]
        %v373 = vld [vmem:[%s287 + $0x188] sm:$0xff]
        %v374 = vld [vmem:[%s287 + $0x190] sm:$0xff]
        %v375 = vld [vmem:[%s287 + $0x198] sm:$0xff]
        %v376 = vld [vmem:[%s287 + $0x1a0] sm:$0xff]
        %v377 = vld [vmem:[%s287 + $0x1a8] sm:$0xff]
        %v378 = vld [vmem:[%s287 + $0x1b0] sm:$0xff]
        %v379 = vld [vmem:[%s287 + $0x1b8] sm:$0xff]
        %v380 = vld [vmem:[%s287 + $0x1c0] sm:$0xff]
        %v381 = vld [vmem:[%s287 + $0x1c8] sm:$0xff]
        %v382 = vld [vmem:[%s287 + $0x1d0] sm:$0xff]
        %v383 = vld [vmem:[%s287 + $0x1d8] sm:$0xff]
        %v384 = vld [vmem:[%s287 + $0x1e0] sm:$0xff]
        %v385 = vld [vmem:[%s287 + $0x1e8] sm:$0xff]
        %v386 = vld [vmem:[%s287 + $0x1f0] sm:$0xff]
        %v387 = vld [vmem:[%s287 + $0x1f8] sm:$0xff]
        %v388 = vld [vmem:[%s287 + $0x200] sm:$0xff]
        %v389 = vld [vmem:[%s287 + $0x208] sm:$0xff]
        %v390 = vld [vmem:[%s287 + $0x210] sm:$0xff]
        %v391 = vld [vmem:[%s287 + $0x218] sm:$0xff]
        %v392 = vld [vmem:[%s287 + $0x220] sm:$0xff]
        %v393 = vld [vmem:[%s287 + $0x228] sm:$0xff]
        %v394 = vld [vmem:[%s287 + $0x230] sm:$0xff]
        %v395 = vld [vmem:[%s287 + $0x238] sm:$0xff]
        %v396 = vld [vmem:[%s287 + $0x240] sm:$0xff]
        %v397 = vld [vmem:[%s287 + $0x248] sm:$0xff]
        %v398 = vld [vmem:[%s287 + $0x250] sm:$0xff]
        %v399 = vld [vmem:[%s287 + $0x258] sm:$0xff]
        %v400 = vld [vmem:[%s287 + $0x260] sm:$0xff]
        %v401 = vld [vmem:[%s287 + $0x268] sm:$0xff]
        %v402 = vld [vmem:[%s287 + $0x270] sm:$0xff]
        %v403 = vld [vmem:[%s287 + $0x278] sm:$0xff]
        %v404 = vld [vmem:[%s287 + $0x280] sm:$0xff]
        %v405 = vld [vmem:[%s287 + $0x288] sm:$0xff]
        %v406 = vld [vmem:[%s287 + $0x290] sm:$0xff]
        %v407 = vld [vmem:[%s287 + $0x298] sm:$0xff]
        %v408 = vld [vmem:[%s287 + $0x2a0] sm:$0xff]
        %v409 = vld [vmem:[%s287 + $0x2a8] sm:$0xff]
        %v410 = vld [vmem:[%s287 + $0x2b0] sm:$0xff]
        %v411 = vld [vmem:[%s287 + $0x2b8] sm:$0xff]
        %v412 = vld [vmem:[%s287 + $0x2c0] sm:$0xff]
        %v413 = vld [vmem:[%s287 + $0x2c8] sm:$0xff]
        %v414 = vld [vmem:[%s287 + $0x2d0] sm:$0xff]
        %v415 = vld [vmem:[%s287 + $0x2d8] sm:$0xff]
        %v416 = vld [vmem:[%s287 + $0x2e0] sm:$0xff]
        %v417 = vld [vmem:[%s287 + $0x2e8] sm:$0xff]
        %v418 = vld [vmem:[%s287 + $0x2f0] sm:$0xff]
        %v419 = vld [vmem:[%s287 + $0x2f8] sm:$0xff]
        %v420 = vld [vmem:[%s287 + $0x300] sm:$0xff]
        %v421 = vld [vmem:[%s287 + $0x308] sm:$0xff]
        %v422 = vld [vmem:[%s287 + $0x310] sm:$0xff]
        %v423 = vld [vmem:[%s287 + $0x318] sm:$0xff]
        %v424 = vld [vmem:[%s287 + $0x320] sm:$0xff]
        %v425 = vld [vmem:[%s287 + $0x328] sm:$0xff]
        %v426 = vld [vmem:[%s287 + $0x330] sm:$0xff]
        %v427 = vld [vmem:[%s287 + $0x338] sm:$0xff]
        %v428 = vld [vmem:[%s287 + $0x340] sm:$0xff]
        %v429 = vld [vmem:[%s287 + $0x348] sm:$0xff]
        %v430 = vld [vmem:[%s287 + $0x350] sm:$0xff]
        %v431 = vld [vmem:[%s287 + $0x358] sm:$0xff]
        %v432 = vld [vmem:[%s287 + $0x360] sm:$0xff]
        %v433 = vld [vmem:[%s287 + $0x368] sm:$0xff]
        %v434 = vld [vmem:[%s287 + $0x370] sm:$0xff]
        %v435 = vld [vmem:[%s287 + $0x378] sm:$0xff]
        %v436 = vld [vmem:[%s287 + $0x380] sm:$0xff]
        %v437 = vld [vmem:[%s287 + $0x388] sm:$0xff]
        %v438 = vld [vmem:[%s287 + $0x390] sm:$0xff]
        %v439 = vld [vmem:[%s287 + $0x398] sm:$0xff]
        %v440 = vld [vmem:[%s287 + $0x3a0] sm:$0xff]
        %v441 = vld [vmem:[%s287 + $0x3a8] sm:$0xff]
        %v442 = vld [vmem:[%s287 + $0x3b0] sm:$0xff]
        %v443 = vld [vmem:[%s287 + $0x3b8] sm:$0xff]
        %v444 = vld [vmem:[%s287 + $0x3c0] sm:$0xff]
        %v445 = vld [vmem:[%s287 + $0x3c8] sm:$0xff]
        %v446 = vld [vmem:[%s287 + $0x3d0] sm:$0xff]
        %v447 = vld [vmem:[%s287 + $0x3d8] sm:$0xff]
        %v448 = vld [vmem:[%s287 + $0x3e0] sm:$0xff]
        %v449 = vld [vmem:[%s287 + $0x3e8] sm:$0xff]
        %v450 = vld [vmem:[%s287 + $0x3f0] sm:$0xff]
        %v451 = vld [vmem:[%s287 + $0x3f8] sm:$0xff]
        %v460 = vunpack.c.l.b16 %v316
        %v461 = vunpack.c.h.b16 %v316
        %v462 = vunpack.c.l.b16 %v317
        %v463 = vunpack.c.h.b16 %v317
        %v464 = vunpack.c.l.b16 %v318
        %v465 = vunpack.c.h.b16 %v318
        %v466 = vunpack.c.l.b16 %v319
        %v467 = vunpack.c.h.b16 %v319
        %v468 = vunpack.c.l.b16 %v320
        %v469 = vunpack.c.h.b16 %v320
        %v470 = vunpack.c.l.b16 %v321
        %v471 = vunpack.c.h.b16 %v321
        %v472 = vunpack.c.l.b16 %v322
        %v473 = vunpack.c.h.b16 %v322
        %v474 = vunpack.c.l.b16 %v323
        %v475 = vunpack.c.h.b16 %v323
        %v476 = vpack.c.b16 %v468, %v460
        %v477 = vpack.c.b16 %v469, %v461
        %v478 = vpack.c.b16 %v470, %v462
        %v479 = vpack.c.b16 %v471, %v463
        %v480 = vpack.c.b16 %v472, %v464
        %v481 = vpack.c.b16 %v473, %v465
        %v482 = vpack.c.b16 %v474, %v466
        %v483 = vpack.c.b16 %v475, %v467
        %v620 = vunpack.c.l.b16 %v324
        %v621 = vunpack.c.h.b16 %v324
        %v622 = vunpack.c.l.b16 %v325
        %v623 = vunpack.c.h.b16 %v325
        %v624 = vunpack.c.l.b16 %v326
        %v625 = vunpack.c.h.b16 %v326
        %v626 = vunpack.c.l.b16 %v327
        %v627 = vunpack.c.h.b16 %v327
        %v628 = vunpack.c.l.b16 %v328
        %v629 = vunpack.c.h.b16 %v328
        %v630 = vunpack.c.l.b16 %v329
        %v631 = vunpack.c.h.b16 %v329
        %v632 = vunpack.c.l.b16 %v330
        %v633 = vunpack.c.h.b16 %v330
        %v634 = vunpack.c.l.b16 %v331
        %v635 = vunpack.c.h.b16 %v331
        %v636 = vunpack.c.l.b16 %v332
        %v637 = vunpack.c.h.b16 %v332
        %v638 = vunpack.c.l.b16 %v333
        %v639 = vunpack.c.h.b16 %v333
        %v640 = vunpack.c.l.b16 %v334
        %v641 = vunpack.c.h.b16 %v334
        %v642 = vunpack.c.l.b16 %v335
        %v643 = vunpack.c.h.b16 %v335
        %v644 = vunpack.c.l.b16 %v336
        %v645 = vunpack.c.h.b16 %v336
        %v646 = vunpack.c.l.b16 %v337
        %v647 = vunpack.c.h.b16 %v337
        %v648 = vunpack.c.l.b16 %v338
        %v649 = vunpack.c.h.b16 %v338
        %v650 = vunpack.c.l.b16 %v339
        %v651 = vunpack.c.h.b16 %v339
        %v652 = vunpack.c.l.b16 %v340
        %v653 = vunpack.c.h.b16 %v340
        %v654 = vunpack.c.l.b16 %v341
        %v655 = vunpack.c.h.b16 %v341
        %v656 = vunpack.c.l.b16 %v342
        %v657 = vunpack.c.h.b16 %v342
        %v658 = vunpack.c.l.b16 %v343
        %v659 = vunpack.c.h.b16 %v343
        %v660 = vunpack.c.l.b16 %v344
        %v661 = vunpack.c.h.b16 %v344
        %v662 = vunpack.c.l.b16 %v345
        %v663 = vunpack.c.h.b16 %v345
        %v664 = vunpack.c.l.b16 %v346
        %v665 = vunpack.c.h.b16 %v346
        %v666 = vunpack.c.l.b16 %v347
        %v667 = vunpack.c.h.b16 %v347
        %v668 = vunpack.c.l.b16 %v348
        %v669 = vunpack.c.h.b16 %v348
        %v670 = vunpack.c.l.b16 %v349
        %v671 = vunpack.c.h.b16 %v349
        %v672 = vunpack.c.l.b16 %v350
        %v673 = vunpack.c.h.b16 %v350
        %v674 = vunpack.c.l.b16 %v351
        %v675 = vunpack.c.h.b16 %v351
        %v676 = vunpack.c.l.b16 %v352
        %v677 = vunpack.c.h.b16 %v352
        %v678 = vunpack.c.l.b16 %v353
        %v679 = vunpack.c.h.b16 %v353
        %v680 = vunpack.c.l.b16 %v354
        %v681 = vunpack.c.h.b16 %v354
        %v682 = vunpack.c.l.b16 %v355
        %v683 = vunpack.c.h.b16 %v355
        %v684 = vunpack.c.l.b16 %v356
        %v685 = vunpack.c.h.b16 %v356
        %v686 = vunpack.c.l.b16 %v357
        %v687 = vunpack.c.h.b16 %v357
        %v688 = vunpack.c.l.b16 %v358
        %v689 = vunpack.c.h.b16 %v358
        %v690 = vunpack.c.l.b16 %v359
        %v691 = vunpack.c.h.b16 %v359
        %v692 = vunpack.c.l.b16 %v360
        %v693 = vunpack.c.h.b16 %v360
        %v694 = vunpack.c.l.b16 %v361
        %v695 = vunpack.c.h.b16 %v361
        %v696 = vunpack.c.l.b16 %v362
        %v697 = vunpack.c.h.b16 %v362
        %v698 = vunpack.c.l.b16 %v363
        %v699 = vunpack.c.h.b16 %v363
        %v700 = vunpack.c.l.b16 %v364
        %v701 = vunpack.c.h.b16 %v364
        %v702 = vunpack.c.l.b16 %v365
        %v703 = vunpack.c.h.b16 %v365
        %v704 = vunpack.c.l.b16 %v366
        %v705 = vunpack.c.h.b16 %v366
        %v706 = vunpack.c.l.b16 %v367
        %v707 = vunpack.c.h.b16 %v367
        %v708 = vunpack.c.l.b16 %v368
        %v709 = vunpack.c.h.b16 %v368
        %v710 = vunpack.c.l.b16 %v369
        %v711 = vunpack.c.h.b16 %v369
        %v712 = vunpack.c.l.b16 %v370
        %v713 = vunpack.c.h.b16 %v370
        %v714 = vunpack.c.l.b16 %v371
        %v715 = vunpack.c.h.b16 %v371
        %v716 = vunpack.c.l.b16 %v372
        %v717 = vunpack.c.h.b16 %v372
        %v718 = vunpack.c.l.b16 %v373
        %v719 = vunpack.c.h.b16 %v373
        %v720 = vunpack.c.l.b16 %v374
        %v721 = vunpack.c.h.b16 %v374
        %v722 = vunpack.c.l.b16 %v375
        %v723 = vunpack.c.h.b16 %v375
        %v724 = vunpack.c.l.b16 %v376
        %v725 = vunpack.c.h.b16 %v376
        %v726 = vunpack.c.l.b16 %v377
        %v727 = vunpack.c.h.b16 %v377
        %v728 = vunpack.c.l.b16 %v378
        %v729 = vunpack.c.h.b16 %v378
        %v730 = vunpack.c.l.b16 %v379
        %v731 = vunpack.c.h.b16 %v379
        %v732 = vunpack.c.l.b16 %v380
        %v733 = vunpack.c.h.b16 %v380
        %v734 = vunpack.c.l.b16 %v381
        %v735 = vunpack.c.h.b16 %v381
        %v736 = vunpack.c.l.b16 %v382
        %v737 = vunpack.c.h.b16 %v382
        %v738 = vunpack.c.l.b16 %v383
        %v739 = vunpack.c.h.b16 %v383
        %v740 = vunpack.c.l.b16 %v384
        %v741 = vunpack.c.h.b16 %v384
        %v742 = vunpack.c.l.b16 %v385
        %v743 = vunpack.c.h.b16 %v385
        %v744 = vunpack.c.l.b16 %v386
        %v745 = vunpack.c.h.b16 %v386
        %v746 = vunpack.c.l.b16 %v387
        %v747 = vunpack.c.h.b16 %v387
        %v748 = vunpack.c.l.b16 %v388
        %v749 = vunpack.c.h.b16 %v388
        %v750 = vunpack.c.l.b16 %v389
        %v751 = vunpack.c.h.b16 %v389
        %v752 = vunpack.c.l.b16 %v390
        %v753 = vunpack.c.h.b16 %v390
        %v754 = vunpack.c.l.b16 %v391
        %v755 = vunpack.c.h.b16 %v391
        %v756 = vunpack.c.l.b16 %v392
        %v757 = vunpack.c.h.b16 %v392
        %v758 = vunpack.c.l.b16 %v393
        %v759 = vunpack.c.h.b16 %v393
        %v760 = vunpack.c.l.b16 %v394
        %v761 = vunpack.c.h.b16 %v394
        %v762 = vunpack.c.l.b16 %v395
        %v763 = vunpack.c.h.b16 %v395
        %v764 = vunpack.c.l.b16 %v396
        %v765 = vunpack.c.h.b16 %v396
        %v766 = vunpack.c.l.b16 %v397
        %v767 = vunpack.c.h.b16 %v397
        %v768 = vunpack.c.l.b16 %v398
        %v769 = vunpack.c.h.b16 %v398
        %v770 = vunpack.c.l.b16 %v399
        %v771 = vunpack.c.h.b16 %v399
        %v772 = vunpack.c.l.b16 %v400
        %v773 = vunpack.c.h.b16 %v400
        %v774 = vunpack.c.l.b16 %v401
        %v775 = vunpack.c.h.b16 %v401
        %v776 = vunpack.c.l.b16 %v402
        %v777 = vunpack.c.h.b16 %v402
        %v778 = vunpack.c.l.b16 %v403
        %v779 = vunpack.c.h.b16 %v403
        %v780 = vunpack.c.l.b16 %v404
        %v781 = vunpack.c.h.b16 %v404
        %v782 = vunpack.c.l.b16 %v405
        %v783 = vunpack.c.h.b16 %v405
        %v784 = vunpack.c.l.b16 %v406
        %v785 = vunpack.c.h.b16 %v406
        %v786 = vunpack.c.l.b16 %v407
        %v787 = vunpack.c.h.b16 %v407
        %v788 = vunpack.c.l.b16 %v408
        %v789 = vunpack.c.h.b16 %v408
        %v790 = vunpack.c.l.b16 %v409
        %v791 = vunpack.c.h.b16 %v409
        %v792 = vunpack.c.l.b16 %v410
        %v793 = vunpack.c.h.b16 %v410
        %v794 = vunpack.c.l.b16 %v411
        %v795 = vunpack.c.h.b16 %v411
        %v796 = vunpack.c.l.b16 %v412
        %v797 = vunpack.c.h.b16 %v412
        %v798 = vunpack.c.l.b16 %v413
        %v799 = vunpack.c.h.b16 %v413
        %v800 = vunpack.c.l.b16 %v414
        %v801 = vunpack.c.h.b16 %v414
        %v802 = vunpack.c.l.b16 %v415
        %v803 = vunpack.c.h.b16 %v415
        %v804 = vunpack.c.l.b16 %v416
        %v805 = vunpack.c.h.b16 %v416
        %v806 = vunpack.c.l.b16 %v417
        %v807 = vunpack.c.h.b16 %v417
        %v808 = vunpack.c.l.b16 %v418
        %v809 = vunpack.c.h.b16 %v418
        %v810 = vunpack.c.l.b16 %v419
        %v811 = vunpack.c.h.b16 %v419
        %v812 = vunpack.c.l.b16 %v420
        %v813 = vunpack.c.h.b16 %v420
        %v814 = vunpack.c.l.b16 %v421
        %v815 = vunpack.c.h.b16 %v421
        %v816 = vunpack.c.l.b16 %v422
        %v817 = vunpack.c.h.b16 %v422
        %v818 = vunpack.c.l.b16 %v423
        %v819 = vunpack.c.h.b16 %v423
        %v820 = vunpack.c.l.b16 %v424
        %v821 = vunpack.c.h.b16 %v424
        %v822 = vunpack.c.l.b16 %v425
        %v823 = vunpack.c.h.b16 %v425
        %v824 = vunpack.c.l.b16 %v426
        %v825 = vunpack.c.h.b16 %v426
        %v826 = vunpack.c.l.b16 %v427
        %v827 = vunpack.c.h.b16 %v427
        %v828 = vunpack.c.l.b16 %v428
        %v829 = vunpack.c.h.b16 %v428
        %v830 = vunpack.c.l.b16 %v429
        %v831 = vunpack.c.h.b16 %v429
        %v832 = vunpack.c.l.b16 %v430
        %v833 = vunpack.c.h.b16 %v430
        %v834 = vunpack.c.l.b16 %v431
        %v835 = vunpack.c.h.b16 %v431
        %v836 = vunpack.c.l.b16 %v432
        %v837 = vunpack.c.h.b16 %v432
        %v838 = vunpack.c.l.b16 %v433
        %v839 = vunpack.c.h.b16 %v433
        %v840 = vunpack.c.l.b16 %v434
        %v841 = vunpack.c.h.b16 %v434
        %v842 = vunpack.c.l.b16 %v435
        %v843 = vunpack.c.h.b16 %v435
        %v844 = vunpack.c.l.b16 %v436
        %v845 = vunpack.c.h.b16 %v436
        %v846 = vunpack.c.l.b16 %v437
        %v847 = vunpack.c.h.b16 %v437
        %v848 = vunpack.c.l.b16 %v438
        %v849 = vunpack.c.h.b16 %v438
        %v850 = vunpack.c.l.b16 %v439
        %v851 = vunpack.c.h.b16 %v439
        %v852 = vunpack.c.l.b16 %v440
        %v853 = vunpack.c.h.b16 %v440
        %v854 = vunpack.c.l.b16 %v441
        %v855 = vunpack.c.h.b16 %v441
        %v856 = vunpack.c.l.b16 %v442
        %v857 = vunpack.c.h.b16 %v442
        %v858 = vunpack.c.l.b16 %v443
        %v859 = vunpack.c.h.b16 %v443
        %v860 = vunpack.c.l.b16 %v444
        %v861 = vunpack.c.h.b16 %v444
        %v862 = vunpack.c.l.b16 %v445
        %v863 = vunpack.c.h.b16 %v445
        %v864 = vunpack.c.l.b16 %v446
        %v865 = vunpack.c.h.b16 %v446
        %v866 = vunpack.c.l.b16 %v447
        %v867 = vunpack.c.h.b16 %v447
        %v868 = vunpack.c.l.b16 %v448
        %v869 = vunpack.c.h.b16 %v448
        %v870 = vunpack.c.l.b16 %v449
        %v871 = vunpack.c.h.b16 %v449
        %v872 = vunpack.c.l.b16 %v450
        %v873 = vunpack.c.h.b16 %v450
        %v874 = vunpack.c.l.b16 %v451
        %v875 = vunpack.c.h.b16 %v451
        %v876 = vpack.c.b16 %v622, %v620
        %v877 = vpack.c.b16 %v623, %v621
        %v878 = vpack.c.b16 %v626, %v624
        %v879 = vpack.c.b16 %v627, %v625
        %v880 = vpack.c.b16 %v630, %v628
        %v881 = vpack.c.b16 %v631, %v629
        %v882 = vpack.c.b16 %v634, %v632
        %v883 = vpack.c.b16 %v635, %v633
        %v884 = vpack.c.b16 %v638, %v636
        %v885 = vpack.c.b16 %v639, %v637
        %v886 = vpack.c.b16 %v642, %v640
        %v887 = vpack.c.b16 %v643, %v641
        %v888 = vpack.c.b16 %v646, %v644
        %v889 = vpack.c.b16 %v647, %v645
        %v890 = vpack.c.b16 %v650, %v648
        %v891 = vpack.c.b16 %v651, %v649
        %v892 = vpack.c.b16 %v654, %v652
        %v893 = vpack.c.b16 %v655, %v653
        %v894 = vpack.c.b16 %v658, %v656
        %v895 = vpack.c.b16 %v659, %v657
        %v896 = vpack.c.b16 %v662, %v660
        %v897 = vpack.c.b16 %v663, %v661
        %v898 = vpack.c.b16 %v666, %v664
        %v899 = vpack.c.b16 %v667, %v665
        %v900 = vpack.c.b16 %v670, %v668
        %v901 = vpack.c.b16 %v671, %v669
        %v902 = vpack.c.b16 %v674, %v672
        %v903 = vpack.c.b16 %v675, %v673
        %v904 = vpack.c.b16 %v678, %v676
        %v905 = vpack.c.b16 %v679, %v677
        %v906 = vpack.c.b16 %v682, %v680
        %v907 = vpack.c.b16 %v683, %v681
        %v908 = vpack.c.b16 %v686, %v684
        %v909 = vpack.c.b16 %v687, %v685
        %v910 = vpack.c.b16 %v690, %v688
        %v911 = vpack.c.b16 %v691, %v689
        %v912 = vpack.c.b16 %v694, %v692
        %v913 = vpack.c.b16 %v695, %v693
        %v914 = vpack.c.b16 %v698, %v696
        %v915 = vpack.c.b16 %v699, %v697
        %v916 = vpack.c.b16 %v702, %v700
        %v917 = vpack.c.b16 %v703, %v701
        %v918 = vpack.c.b16 %v706, %v704
        %v919 = vpack.c.b16 %v707, %v705
        %v920 = vpack.c.b16 %v710, %v708
        %v921 = vpack.c.b16 %v711, %v709
        %v922 = vpack.c.b16 %v714, %v712
        %v923 = vpack.c.b16 %v715, %v713
        %v924 = vpack.c.b16 %v718, %v716
        %v925 = vpack.c.b16 %v719, %v717
        %v926 = vpack.c.b16 %v722, %v720
        %v927 = vpack.c.b16 %v723, %v721
        %v928 = vpack.c.b16 %v726, %v724
        %v929 = vpack.c.b16 %v727, %v725
        %v930 = vpack.c.b16 %v730, %v728
        %v931 = vpack.c.b16 %v731, %v729
        %v932 = vpack.c.b16 %v734, %v732
        %v933 = vpack.c.b16 %v735, %v733
        %v934 = vpack.c.b16 %v738, %v736
        %v935 = vpack.c.b16 %v739, %v737
        %v936 = vpack.c.b16 %v742, %v740
        %v937 = vpack.c.b16 %v743, %v741
        %v938 = vpack.c.b16 %v746, %v744
        %v939 = vpack.c.b16 %v747, %v745
        %v940 = vpack.c.b16 %v750, %v748
        %v941 = vpack.c.b16 %v751, %v749
        %v942 = vpack.c.b16 %v754, %v752
        %v943 = vpack.c.b16 %v755, %v753
        %v944 = vpack.c.b16 %v758, %v756
        %v945 = vpack.c.b16 %v759, %v757
        %v946 = vpack.c.b16 %v762, %v760
        %v947 = vpack.c.b16 %v763, %v761
        %v948 = vpack.c.b16 %v766, %v764
        %v949 = vpack.c.b16 %v767, %v765
        %v950 = vpack.c.b16 %v770, %v768
        %v951 = vpack.c.b16 %v771, %v769
        %v952 = vpack.c.b16 %v774, %v772
        %v953 = vpack.c.b16 %v775, %v773
        %v954 = vpack.c.b16 %v778, %v776
        %v955 = vpack.c.b16 %v779, %v777
        %v956 = vpack.c.b16 %v782, %v780
        %v957 = vpack.c.b16 %v783, %v781
        %v958 = vpack.c.b16 %v786, %v784
        %v959 = vpack.c.b16 %v787, %v785
        %v960 = vpack.c.b16 %v790, %v788
        %v961 = vpack.c.b16 %v791, %v789
        %v962 = vpack.c.b16 %v794, %v792
        %v963 = vpack.c.b16 %v795, %v793
        %v964 = vpack.c.b16 %v798, %v796
        %v965 = vpack.c.b16 %v799, %v797
        %v966 = vpack.c.b16 %v802, %v800
        %v967 = vpack.c.b16 %v803, %v801
        %v968 = vpack.c.b16 %v806, %v804
        %v969 = vpack.c.b16 %v807, %v805
        %v970 = vpack.c.b16 %v810, %v808
        %v971 = vpack.c.b16 %v811, %v809
        %v972 = vpack.c.b16 %v814, %v812
        %v973 = vpack.c.b16 %v815, %v813
        %v974 = vpack.c.b16 %v818, %v816
        %v975 = vpack.c.b16 %v819, %v817
        %v976 = vpack.c.b16 %v822, %v820
        %v977 = vpack.c.b16 %v823, %v821
        %v978 = vpack.c.b16 %v826, %v824
        %v979 = vpack.c.b16 %v827, %v825
        %v980 = vpack.c.b16 %v830, %v828
        %v981 = vpack.c.b16 %v831, %v829
        %v982 = vpack.c.b16 %v834, %v832
        %v983 = vpack.c.b16 %v835, %v833
        %v984 = vpack.c.b16 %v838, %v836
        %v985 = vpack.c.b16 %v839, %v837
        %v986 = vpack.c.b16 %v842, %v840
        %v987 = vpack.c.b16 %v843, %v841
        %v988 = vpack.c.b16 %v846, %v844
        %v989 = vpack.c.b16 %v847, %v845
        %v990 = vpack.c.b16 %v850, %v848
        %v991 = vpack.c.b16 %v851, %v849
        %v992 = vpack.c.b16 %v854, %v852
        %v993 = vpack.c.b16 %v855, %v853
        %v994 = vpack.c.b16 %v858, %v856
        %v995 = vpack.c.b16 %v859, %v857
        %v996 = vpack.c.b16 %v862, %v860
        %v997 = vpack.c.b16 %v863, %v861
        %v998 = vpack.c.b16 %v866, %v864
        %v999 = vpack.c.b16 %v867, %v865
        %v1000 = vpack.c.b16 %v870, %v868
        %v1001 = vpack.c.b16 %v871, %v869
        %v1002 = vpack.c.b16 %v874, %v872
        %v1003 = vpack.c.b16 %v875, %v873
        %1132 = vmatprep.subr.bf16.mxu0 %v877
        %1133 = vmatpush1.bf16.msra.mxu0 %v876
        %1134 = vmatprep.subr.bf16.mxu0 %v879
        %1135 = vmatpush1.bf16.msra.mxu0 %v878
        %1136 = vmatprep.subr.bf16.mxu0 %v881
        %1137 = vmatpush1.bf16.msra.mxu0 %v880
        %1138 = vmatprep.subr.bf16.mxu0 %v883
        %1139 = vmatpush1.bf16.msra.mxu0 %v882
        %1140 = vmatprep.subr.bf16.mxu0 %v885
        %1141 = vmatpush1.bf16.msra.mxu0 %v884
        %1142 = vmatprep.subr.bf16.mxu0 %v887
        %1143 = vmatpush1.bf16.msra.mxu0 %v886
        %1144 = vmatprep.subr.bf16.mxu0 %v889
        %1145 = vmatpush1.bf16.msra.mxu0 %v888
        %1146 = vmatprep.subr.bf16.mxu0 %v891
        %1147 = vmatpush1.bf16.msra.mxu0 %v890
        %1148 = vmatprep.subr.bf16.mxu0 %v893
        %1149 = vmatpush1.bf16.msra.mxu0 %v892
        %1150 = vmatprep.subr.bf16.mxu0 %v895
        %1151 = vmatpush1.bf16.msra.mxu0 %v894
        %1152 = vmatprep.subr.bf16.mxu0 %v897
        %1153 = vmatpush1.bf16.msra.mxu0 %v896
        %1154 = vmatprep.subr.bf16.mxu0 %v899
        %1155 = vmatpush1.bf16.msra.mxu0 %v898
        %1156 = vmatprep.subr.bf16.mxu0 %v901
        %1157 = vmatpush1.bf16.msra.mxu0 %v900
        %1158 = vmatprep.subr.bf16.mxu0 %v903
        %1159 = vmatpush1.bf16.msra.mxu0 %v902
        %1160 = vmatprep.subr.bf16.mxu0 %v905
        %1161 = vmatpush1.bf16.msra.mxu0 %v904
        %1162 = vmatprep.subr.bf16.mxu0 %v907
        %1163 = vmatpush1.bf16.msra.mxu0 %v906
        %1164 = vmatprep.mubr.bf16.mxu0 %v477
        %1165 = vmatmul.mubr.bf16.gmra.mrb[0].mxu0 %v476
        %v1166 = vpop.f32.mrb[0].mxu0
        %v1167 = vadd.f32 0.0, %v1166
        %v1168 = vpop.f32.mrb[0].mxu0
        %v1169 = vadd.f32 0.0, %v1168
        %v1170 = vpop.f32.mrb[0].mxu0
        %v1171 = vadd.f32 0.0, %v1170
        %v1172 = vpop.f32.mrb[0].mxu0
        %v1173 = vadd.f32 0.0, %v1172
        %1174 = vdwg.mxu0
        %1175 = vmatprep.subr.bf16.mxu0 %v909
        %1176 = vmatpush1.bf16.msra.mxu0 %v908
        %1177 = vmatprep.subr.bf16.mxu0 %v911
        %1178 = vmatpush1.bf16.msra.mxu0 %v910
        %1179 = vmatprep.subr.bf16.mxu0 %v913
        %1180 = vmatpush1.bf16.msra.mxu0 %v912
        %1181 = vmatprep.subr.bf16.mxu0 %v915
        %1182 = vmatpush1.bf16.msra.mxu0 %v914
        %1183 = vmatprep.subr.bf16.mxu0 %v917
        %1184 = vmatpush1.bf16.msra.mxu0 %v916
        %1185 = vmatprep.subr.bf16.mxu0 %v919
        %1186 = vmatpush1.bf16.msra.mxu0 %v918
        %1187 = vmatprep.subr.bf16.mxu0 %v921
        %1188 = vmatpush1.bf16.msra.mxu0 %v920
        %1189 = vmatprep.subr.bf16.mxu0 %v923
        %1190 = vmatpush1.bf16.msra.mxu0 %v922
        %1191 = vmatprep.subr.bf16.mxu0 %v925
        %1192 = vmatpush1.bf16.msra.mxu0 %v924
        %1193 = vmatprep.subr.bf16.mxu0 %v927
        %1194 = vmatpush1.bf16.msra.mxu0 %v926
        %1195 = vmatprep.subr.bf16.mxu0 %v929
        %1196 = vmatpush1.bf16.msra.mxu0 %v928
        %1197 = vmatprep.subr.bf16.mxu0 %v931
        %1198 = vmatpush1.bf16.msra.mxu0 %v930
        %1199 = vmatprep.subr.bf16.mxu0 %v933
        %1200 = vmatpush1.bf16.msra.mxu0 %v932
        %1201 = vmatprep.subr.bf16.mxu0 %v935
        %1202 = vmatpush1.bf16.msra.mxu0 %v934
        %1203 = vmatprep.subr.bf16.mxu0 %v937
        %1204 = vmatpush1.bf16.msra.mxu0 %v936
        %1205 = vmatprep.subr.bf16.mxu0 %v939
        %1206 = vmatpush1.bf16.msra.mxu0 %v938
        %1207 = vmatprep.mubr.bf16.mxu0 %v479
        %1208 = vmatmul.mubr.bf16.gmra.mrb[0].mxu0 %v478
        %v1209 = vpop.f32.mrb[0].mxu0
        %v1210 = vadd.f32 %v1167, %v1209
        %v1211 = vpop.f32.mrb[0].mxu0
        %v1212 = vadd.f32 %v1169, %v1211
        %v1213 = vpop.f32.mrb[0].mxu0
        %v1214 = vadd.f32 %v1171, %v1213
        %v1215 = vpop.f32.mrb[0].mxu0
        %v1216 = vadd.f32 %v1173, %v1215
        %1217 = vdwg.mxu0
        %1218 = vmatprep.subr.bf16.mxu0 %v941
        %1219 = vmatpush1.bf16.msra.mxu0 %v940
        %1220 = vmatprep.subr.bf16.mxu0 %v943
        %1221 = vmatpush1.bf16.msra.mxu0 %v942
        %1222 = vmatprep.subr.bf16.mxu0 %v945
        %1223 = vmatpush1.bf16.msra.mxu0 %v944
        %1224 = vmatprep.subr.bf16.mxu0 %v947
        %1225 = vmatpush1.bf16.msra.mxu0 %v946
        %1226 = vmatprep.subr.bf16.mxu0 %v949
        %1227 = vmatpush1.bf16.msra.mxu0 %v948
        %1228 = vmatprep.subr.bf16.mxu0 %v951
        %1229 = vmatpush1.bf16.msra.mxu0 %v950
        %1230 = vmatprep.subr.bf16.mxu0 %v953
        %1231 = vmatpush1.bf16.msra.mxu0 %v952
        %1232 = vmatprep.subr.bf16.mxu0 %v955
        %1233 = vmatpush1.bf16.msra.mxu0 %v954
        %1234 = vmatprep.subr.bf16.mxu0 %v957
        %1235 = vmatpush1.bf16.msra.mxu0 %v956
        %1236 = vmatprep.subr.bf16.mxu0 %v959
        %1237 = vmatpush1.bf16.msra.mxu0 %v958
        %1238 = vmatprep.subr.bf16.mxu0 %v961
        %1239 = vmatpush1.bf16.msra.mxu0 %v960
        %1240 = vmatprep.subr.bf16.mxu0 %v963
        %1241 = vmatpush1.bf16.msra.mxu0 %v962
        %1242 = vmatprep.subr.bf16.mxu0 %v965
        %1243 = vmatpush1.bf16.msra.mxu0 %v964
        %1244 = vmatprep.subr.bf16.mxu0 %v967
        %1245 = vmatpush1.bf16.msra.mxu0 %v966
        %1246 = vmatprep.subr.bf16.mxu0 %v969
        %1247 = vmatpush1.bf16.msra.mxu0 %v968
        %1248 = vmatprep.subr.bf16.mxu0 %v971
        %1249 = vmatpush1.bf16.msra.mxu0 %v970
        %1250 = vmatprep.mubr.bf16.mxu0 %v481
        %1251 = vmatmul.mubr.bf16.gmra.mrb[0].mxu0 %v480
        %v1252 = vpop.f32.mrb[0].mxu0
        %v1253 = vadd.f32 %v1210, %v1252
        %v1254 = vpop.f32.mrb[0].mxu0
        %v1255 = vadd.f32 %v1212, %v1254
        %v1256 = vpop.f32.mrb[0].mxu0
        %v1257 = vadd.f32 %v1214, %v1256
        %v1258 = vpop.f32.mrb[0].mxu0
        %v1259 = vadd.f32 %v1216, %v1258
        %1260 = vdwg.mxu0
        %1261 = vmatprep.subr.bf16.mxu0 %v973
        %1262 = vmatpush1.bf16.msra.mxu0 %v972
        %1263 = vmatprep.subr.bf16.mxu0 %v975
        %1264 = vmatpush1.bf16.msra.mxu0 %v974
        %1265 = vmatprep.subr.bf16.mxu0 %v977
        %1266 = vmatpush1.bf16.msra.mxu0 %v976
        %1267 = vmatprep.subr.bf16.mxu0 %v979
        %1268 = vmatpush1.bf16.msra.mxu0 %v978
        %1269 = vmatprep.subr.bf16.mxu0 %v981
        %1270 = vmatpush1.bf16.msra.mxu0 %v980
        %1271 = vmatprep.subr.bf16.mxu0 %v983
        %1272 = vmatpush1.bf16.msra.mxu0 %v982
        %1273 = vmatprep.subr.bf16.mxu0 %v985
        %1274 = vmatpush1.bf16.msra.mxu0 %v984
        %1275 = vmatprep.subr.bf16.mxu0 %v987
        %1276 = vmatpush1.bf16.msra.mxu0 %v986
        %1277 = vmatprep.subr.bf16.mxu0 %v989
        %1278 = vmatpush1.bf16.msra.mxu0 %v988
        %1279 = vmatprep.subr.bf16.mxu0 %v991
        %1280 = vmatpush1.bf16.msra.mxu0 %v990
        %1281 = vmatprep.subr.bf16.mxu0 %v993
        %1282 = vmatpush1.bf16.msra.mxu0 %v992
        %1283 = vmatprep.subr.bf16.mxu0 %v995
        %1284 = vmatpush1.bf16.msra.mxu0 %v994
        %1285 = vmatprep.subr.bf16.mxu0 %v997
        %1286 = vmatpush1.bf16.msra.mxu0 %v996
        %1287 = vmatprep.subr.bf16.mxu0 %v999
        %1288 = vmatpush1.bf16.msra.mxu0 %v998
        %1289 = vmatprep.subr.bf16.mxu0 %v1001
        %1290 = vmatpush1.bf16.msra.mxu0 %v1000
        %1291 = vmatprep.subr.bf16.mxu0 %v1003
        %1292 = vmatpush1.bf16.msra.mxu0 %v1002
        %1293 = vmatprep.mubr.bf16.mxu0 %v483
        %1294 = vmatmul.mubr.bf16.gmra.mrb[0].mxu0 %v482
        %v1295 = vpop.f32.mrb[0].mxu0
        %v1296 = vadd.f32 %v1253, %v1295
        %v1297 = vpop.f32.mrb[0].mxu0
        %v1298 = vadd.f32 %v1255, %v1297
        %v1299 = vpop.f32.mrb[0].mxu0
        %v1300 = vadd.f32 %v1257, %v1299
        %v1301 = vpop.f32.mrb[0].mxu0
        %v1302 = vadd.f32 %v1259, %v1301
        %1303 = vdwg.mxu0
        %v1304 = vadd.f32 %v312, %v1296
        %v1305 = vadd.f32 %v313, %v1298
        %v1306 = vadd.f32 %v314, %v1300
        %v1307 = vadd.f32 %v315, %v1302
        %1308 = vst [vmem:[#allocation2] sm:$0xff] %v1304
        %1309 = vst [vmem:[#allocation2 + $0x8] sm:$0xff] %v1305
        %1310 = vst [vmem:[#allocation2 + $0x10] sm:$0xff] %v1306
        %1311 = vst [vmem:[#allocation2 + $0x18] sm:$0xff] %v1307
        %p1312 = scmp.eq.s32.totalorder %s21, 1
        // Predicated region
        $region60: #{unet_forward.12} parent=50 // pred_check
          %p1313 = pneg %p1312
        $region61: #{unet_forward.12} parent=50 // pred_check_branch
          %1315 = sbr.rel (%p1313) target = $region63
        $region62: #{unet_forward.12} parent=50 // pred_region
          %v1316 = vld [vmem:[#allocation2] sm:$0xff]
          %v1317 = vld [vmem:[#allocation2 + $0x8] sm:$0xff]
          %v1318 = vld [vmem:[#allocation2 + $0x10] sm:$0xff]
          %v1319 = vld [vmem:[#allocation2 + $0x18] sm:$0xff]
          %v1320 = vld [vmem:[%s292] sm:$0x3]
          %v1322 = vlaneseq
          %v1323 = vshrl.u32 %v1322, 7
          %v1324 = vsub.s32 0, %v1323
          %v1325 = vrot.slane %v1320, %v1324
          %v1326 = vlaneseq
          %v1327 = vshrl.u32 %v1326, 7
          %v1328 = vsub.s32 1, %v1327
          %v1329 = vrot.slane %v1320, %v1328
          %v1332 = vadd.f32 %v1316, %v1325
          %v1333 = vadd.f32 %v1317, %v1329
          %v1334 = vadd.f32 %v1318, %v1325
          %v1335 = vadd.f32 %v1319, %v1329
          %1336 = vst [vmem:[%s302] sm:$0xff] %v1332
          %1337 = vst [vmem:[%s302 + $0x8] sm:$0xff] %v1333
          %1338 = vst [vmem:[%s302 + $0x10] sm:$0xff] %v1334
          %1339 = vst [vmem:[%s302 + $0x18] sm:$0xff] %v1335
        $region63: #{unet_forward.12} parent=50 // pred_fallthru
          _
        %s1340 = smul.u32 2, %s20
        %p1341 = scmp.lt.s32.totalorder %s19, 0
        %s1342 = scalar_select %p1341, %s19, 0
        %p1343 = scmp.lt.s32.totalorder %s1340, 3
        %s1344 = scalar_select %p1343, %s1340, 3
        %s1345 = smul.addr %s1344, 2
        %s1346 = smul.addr %s1342, 8
        %s1347 = sadd.s32 %s1345, %s1346
        %s1348 = smul.addr %s1347, 8
        %s1349 = scalar_lea.vmem %s3, %s1348
        // Predicated region
        $region64: #{unet_forward.12} parent=50 // pred_check
          %p1350 = pneg %p137
        $region65: #{unet_forward.12} parent=50 // pred_check_branch
          %1352 = sbr.rel (%p1350) target = $region67
        $region66: #{unet_forward.12} parent=50 // pred_region
          %s1353 = smul.u32 2, %s20
        $region67: #{unet_forward.12} parent=50 // pred_fallthru
          _
      $region51: #{unet_forward.12} parent=5 // pred_fallthru
        _
      %p1354 = scmp.le.s32.totalorder 2, %s9
      // Predicated region
      $region68: #{unet_forward.12} parent=5 // pred_check
        %p1355 = pneg %p1354
      $region69: #{unet_forward.12} parent=5 // pred_check_branch
        %1357 = sbr.rel (%p1355) target = $region71
      $region70: #{unet_forward.12} parent=5 // pred_region
        %s1358 = ssub.s32 %s9, 2
        // Predicated region
        $region72: #{unet_forward.12} parent=70 // pred_check
          %p1359 = pneg %p143
        $region73: #{unet_forward.12} parent=70 // pred_check_branch
          %1361 = sbr.rel (%p1359) target = $region75
        $region74: #{unet_forward.12} parent=70 // pred_region
          %s1362 = smul.u32 2, %s23
          %p1363 = scmp.lt.s32.totalorder %s22, 0
          %s1364 = scalar_select %p1363, %s22, 0
          %p1365 = scmp.lt.s32.totalorder %s1362, 3
          %s1366 = scalar_select %p1365, %s1362, 3
          %s1367 = smul.addr %s1366, 2
          %s1368 = smul.addr %s1364, 8
          %s1369 = sadd.s32 %s1367, %s1368
          %s1370 = smul.addr %s1369, 8
          %s1371 = scalar_lea.vmem %s3, %s1370
        $region75: #{unet_forward.12} parent=70 // pred_fallthru
          _
      $region71: #{unet_forward.12} parent=5 // pred_fallthru
        _
    $region6: #{unet_forward.12} parent=1 // loop_footer
      %s13 = sadd.s32 1, %s9
    $region7: #{unet_forward.12} parent=1 // loop_footer_branch
      %8 = sbr.rel target = $region3
    $region8: #{unet_forward.12} parent=1 // loop_exit
      _

// kernel: squeeze.9
$region0: #{squeeze.9}
  %s0 = inlined_call_operand.vmem [shape: f32[1,8,256], index: 0, kind: input, shape index: {}]
  %s1 = inlined_call_operand.vmem [shape: f32[2,2,2,256], index: 1, kind: output, shape index: {}]
  $region1: #{squeeze.9} parent=0
    #allocation0 [shape = 'u8[32768]{0}', space=vmem, size = 0x8000, scoped, tag = 'scoped mem for output reshape']
    %v2 = vld [vmem:[%s0] sm:$0xff]
    %3 = vst [vmem:[#allocation0] sm:$0x3] %v2
    %s4 = scalar_lea.vmem [#allocation0], 14
    %5 = vst [vmem:[%s4] sm:$0xc] %v2
    %s6 = scalar_lea.vmem [#allocation0], 28
    %7 = vst [vmem:[%s6] sm:$0x30] %v2
    %s8 = scalar_lea.vmem [#allocation0], 42
    %9 = vst [vmem:[%s8] sm:$0xc0] %v2
    %s10 = scalar_lea.vmem %s0, 8
    %v11 = vld [vmem:[%s10] sm:$0xff]
    %s12 = scalar_lea.vmem [#allocation0], 8
    %13 = vst [vmem:[%s12] sm:$0x3] %v11
    %s14 = scalar_lea.vmem [#allocation0], 22
    %15 = vst [vmem:[%s14] sm:$0xc] %v11
    %s16 = scalar_lea.vmem [#allocation0], 36
    %17 = vst [vmem:[%s16] sm:$0x30] %v11
    %s18 = scalar_lea.vmem [#allocation0], 50
    %19 = vst [vmem:[%s18] sm:$0xc0] %v11
    %s21 = sshllo.u32 0, 2
    %v23 = vld [vmem:[#allocation0] sm:%s21]
    %s24 = sshllo.u32 0, 2
    %25 = vst [vmem:[%s1] sm:%s24] %v23
    %s26 = scalar_lea.vmem [#allocation0], 8
    %v27 = vld [vmem:[%s26] sm:%s21]
    %s28 = sshllo.u32 0, 2
    %s29 = scalar_lea.vmem %s1, 2
    %30 = vst [vmem:[%s29] sm:%s28] %v27
    %s31 = scalar_lea.vmem [#allocation0], 16
    %v32 = vld [vmem:[%s31] sm:%s21]
    %s33 = sshllo.u32 0, 2
    %s34 = smul.addr 2, 2
    %s35 = scalar_lea.vmem %s1, %s34
    %36 = vst [vmem:[%s35] sm:%s33] %v32
    %s37 = scalar_lea.vmem [#allocation0], 24
    %v38 = vld [vmem:[%s37] sm:%s21]
    %s39 = sshllo.u32 0, 2
    %s40 = smul.addr 2, 3
    %s41 = scalar_lea.vmem %s1, %s40
    %42 = vst [vmem:[%s41] sm:%s39] %v38
    %s43 = scalar_lea.vmem [#allocation0], 32
    %v44 = vld [vmem:[%s43] sm:%s21]
    %s45 = sshllo.u32 0, 2
    %s46 = smul.addr 2, 4
    %s47 = scalar_lea.vmem %s1, %s46
    %48 = vst [vmem:[%s47] sm:%s45] %v44
    %s49 = scalar_lea.vmem [#allocation0], 40
    %v50 = vld [vmem:[%s49] sm:%s21]
    %s51 = sshllo.u32 0, 2
    %s52 = smul.addr 2, 5
    %s53 = scalar_lea.vmem %s1, %s52
    %54 = vst [vmem:[%s53] sm:%s51] %v50
    %s55 = scalar_lea.vmem [#allocation0], 48
    %v56 = vld [vmem:[%s55] sm:%s21]
    %s57 = sshllo.u32 0, 2
    %s58 = smul.addr 2, 6
    %s59 = scalar_lea.vmem %s1, %s58
    %60 = vst [vmem:[%s59] sm:%s57] %v56
    %s61 = scalar_lea.vmem [#allocation0], 56
    %v62 = vld [vmem:[%s61] sm:%s21]
    %s63 = sshllo.u32 0, 2
    %s64 = smul.addr 2, 7
    %s65 = scalar_lea.vmem %s1, %s64
    %66 = vst [vmem:[%s65] sm:%s63] %v62

// kernel: unet_forward.13
$region0: #{unet_forward.13}
  #allocation0 [shape = 'u32[]', space=smem, size = 0x4, offset = 0x4, fixed_abs, tag = 'smem constant byte address 0x4 - core index']
  #allocation1 [shape = 'u32[144,128]{1,0:T(1,128)}', space=vmem, size = 0x12000, scoped, tag = 'internal scratch']
  #allocation2 [shape = 'f32[8,256]{1,0:T(8,128)}', space=vmem, size = 0x2000, scoped, tag = 'scratch operand']
  %s0 = inlined_call_operand.vmem [shape: bf16[1,8,4096], index: 0, kind: input, shape index: {}]
  %s1 = inlined_call_operand.vmem [shape: bf16[1,4096,256], index: 1, kind: input, shape index: {}]
  %s2 = inlined_call_operand.vmem [shape: f32[1,1,256], index: 2, kind: input, shape index: {}]
  %s3 = inlined_call_operand.vmem [shape: f32[1,8,256], index: 3, kind: output, shape index: {}]
  %s4 = sld [smem:[#allocation0]]
  $region53: #{unet_forward.13} parent=0
    _
  %s6 = ssub.s32 1, %s4
  %s7 = scalar_select 0, %s6, %s4
  loop: start=0, step=1, limit=6
  $region2: #{unet_forward.13} parent=0 // loop_pre_header
    _
  $region3: #{unet_forward.13} parent=0 // loop_header
    %s9 = sphi 0, %s13
    %p10 = scmp.ge.s32.totalorder %s9, 6
    %s16 = sphi 0, %s35
    %s17 = sphi 0, %s31
    %s18 = sphi 0, %s27
    %s19 = sphi 0, %s16
    %s20 = sphi 0, %s17
    %s21 = sphi 0, %s18
    %s22 = sphi 0, %s19
    %s23 = sphi 0, %s20
    %s24 = sphi 0, %s21
    %s42 = sphi 0, %s44
    %s45 = sphi 0, %s42
    %s46 = sphi 0, %s45
    %s62 = sphi 0, %s46
    %s70 = sphi 0, %s72
    %s73 = sphi 0, %s70
    %s74 = sphi 0, %s73
    %s90 = sphi 0, %s74
    %s96 = sphi 0, %s98
    %s99 = sphi 0, %s96
    %s100 = sphi 0, %s99
    %s116 = sphi 0, %s100
    %s124 = sphi 0, %s126
    %s127 = sphi 0, %s124
    %s128 = sphi 0, %s127
    %s144 = sphi 0, %s128
  $region4: #{unet_forward.13} parent=0 // loop_header_branch
    %12 = sbr.rel (%p10) target = $region8
  $region5: #{unet_forward.13} parent=0 // loop_body
    %s14 = ssub.s32 %s9, 1
    %s15 = ssub.s32 %s9, 2
    %s25 = sadd.s32 1, %s18
    %p26 = scmp.ge.s32.totalorder %s25, 4
    %s27 = scalar_select %p26, 0, %s25
    %s28 = sadd.s32 1, %s17
    %s29 = scalar_select %p26, %s28, %s17
    %p30 = scmp.ge.s32.totalorder %s29, 1
    %s31 = scalar_select %p30, 0, %s29
    %s32 = sadd.s32 1, %s16
    %s33 = scalar_select %p30, %s32, %s16
    %p34 = scmp.ge.s32.totalorder %s33, 1
    %s35 = scalar_select %p34, 0, %s33
    %s36 = ssub.s32 %s16, %s35
    %s37 = ssub.s32 %s17, %s31
    %s38 = sor.u32 %s36, %s37
    %s39 = ssub.s32 %s18, %s27
    %s40 = sor.u32 %s38, %s39
    %p41 = scmp.eq.s32.totalorder %s40, 0
    %s43 = sadd.s32 %s42, 1
    %s44 = scalar_select %p41, %s42, %s43
    %p47 = pneg %p41
    %p48 = scmp.eq.s32.totalorder %s9, 3
    %p49 = por %p47, %p48
    %p50 = scmp.ne.s32.totalorder %s42, %s45
    %p51 = scmp.eq.s32.totalorder %s9, 0
    %p52 = por %p50, %p51
    %p53 = scmp.ne.s32.totalorder %s42, %s45
    %p54 = scmp.eq.s32.totalorder %s14, 3
    %p55 = por %p53, %p54
    %p56 = scmp.ne.s32.totalorder %s45, %s46
    %p57 = scmp.eq.s32.totalorder %s14, 0
    %p58 = por %p56, %p57
    %p59 = scmp.ne.s32.totalorder %s45, %s46
    %p60 = scmp.eq.s32.totalorder %s15, 3
    %p61 = por %p59, %p60
    %p63 = scmp.ne.s32.totalorder %s46, %s62
    %p64 = scmp.eq.s32.totalorder %s15, 0
    %p65 = por %p63, %p64
    %s66 = ssub.s32 %s16, %s35
    %s67 = ssub.s32 %s18, %s27
    %s68 = sor.u32 %s66, %s67
    %p69 = scmp.eq.s32.totalorder %s68, 0
    %s71 = sadd.s32 %s70, 1
    %s72 = scalar_select %p69, %s70, %s71
    %p75 = pneg %p69
    %p76 = scmp.eq.s32.totalorder %s9, 3
    %p77 = por %p75, %p76
    %p78 = scmp.ne.s32.totalorder %s70, %s73
    %p79 = scmp.eq.s32.totalorder %s9, 0
    %p80 = por %p78, %p79
    %p81 = scmp.ne.s32.totalorder %s70, %s73
    %p82 = scmp.eq.s32.totalorder %s14, 3
    %p83 = por %p81, %p82
    %p84 = scmp.ne.s32.totalorder %s73, %s74
    %p85 = scmp.eq.s32.totalorder %s14, 0
    %p86 = por %p84, %p85
    %p87 = scmp.ne.s32.totalorder %s73, %s74
    %p88 = scmp.eq.s32.totalorder %s15, 3
    %p89 = por %p87, %p88
    %p91 = scmp.ne.s32.totalorder %s74, %s90
    %p92 = scmp.eq.s32.totalorder %s15, 0
    %p93 = por %p91, %p92
    %s94 = ssub.s32 %s16, %s35
    %p95 = scmp.eq.s32.totalorder %s94, 0
    %s97 = sadd.s32 %s96, 1
    %s98 = scalar_select %p95, %s96, %s97
    %p101 = pneg %p95
    %p102 = scmp.eq.s32.totalorder %s9, 3
    %p103 = por %p101, %p102
    %p104 = scmp.ne.s32.totalorder %s96, %s99
    %p105 = scmp.eq.s32.totalorder %s9, 0
    %p106 = por %p104, %p105
    %p107 = scmp.ne.s32.totalorder %s96, %s99
    %p108 = scmp.eq.s32.totalorder %s14, 3
    %p109 = por %p107, %p108
    %p110 = scmp.ne.s32.totalorder %s99, %s100
    %p111 = scmp.eq.s32.totalorder %s14, 0
    %p112 = por %p110, %p111
    %p113 = scmp.ne.s32.totalorder %s99, %s100
    %p114 = scmp.eq.s32.totalorder %s15, 3
    %p115 = por %p113, %p114
    %p117 = scmp.ne.s32.totalorder %s100, %s116
    %p118 = scmp.eq.s32.totalorder %s15, 0
    %p119 = por %p117, %p118
    %s120 = ssub.s32 %s16, %s35
    %s121 = ssub.s32 %s17, %s31
    %s122 = sor.u32 %s120, %s121
    %p123 = scmp.eq.s32.totalorder %s122, 0
    %s125 = sadd.s32 %s124, 1
    %s126 = scalar_select %p123, %s124, %s125
    %p129 = pneg %p123
    %p130 = scmp.eq.s32.totalorder %s9, 3
    %p131 = por %p129, %p130
    %p132 = scmp.ne.s32.totalorder %s124, %s127
    %p133 = scmp.eq.s32.totalorder %s9, 0
    %p134 = por %p132, %p133
    %p135 = scmp.ne.s32.totalorder %s124, %s127
    %p136 = scmp.eq.s32.totalorder %s14, 3
    %p137 = por %p135, %p136
    %p138 = scmp.ne.s32.totalorder %s127, %s128
    %p139 = scmp.eq.s32.totalorder %s14, 0
    %p140 = por %p138, %p139
    %p141 = scmp.ne.s32.totalorder %s127, %s128
    %p142 = scmp.eq.s32.totalorder %s15, 3
    %p143 = por %p141, %p142
    %p145 = scmp.ne.s32.totalorder %s128, %s144
    %p146 = scmp.eq.s32.totalorder %s15, 0
    %p147 = por %p145, %p146
    %p148 = scmp.le.s32.totalorder 1, %s9
    %p149 = scmp.lt.s32.totalorder %s9, 5
    %p150 = pnand %p148, %p149
    %p151 = pneg %p150
    // Predicated region
    $region9: #{unet_forward.13} parent=5 // pred_check
      _
    $region10: #{unet_forward.13} parent=5 // pred_check_branch
      %153 = sbr.rel (%p150) target = $region12
    $region11: #{unet_forward.13} parent=5 // pred_region
      %s154 = ssub.s32 %s9, 1
      // Predicated region
      $region13: #{unet_forward.13} parent=11 // pred_check
        %p155 = pneg %p112
      $region14: #{unet_forward.13} parent=11 // pred_check_branch
        %157 = sbr.rel (%p155) target = $region16
      $region15: #{unet_forward.13} parent=11 // pred_region
        %p158 = scmp.lt.s32.totalorder %s19, 0
        %s159 = scalar_select %p158, %s19, 0
        %s160 = smul.addr %s159, 2
        %s161 = scalar_lea.vmem %s2, %s160
      $region16: #{unet_forward.13} parent=11 // pred_fallthru
        _
    $region12: #{unet_forward.13} parent=5 // pred_fallthru
      _
    %p162 = scmp.lt.s32.totalorder %s9, 4
    // Predicated region
    $region17: #{unet_forward.13} parent=5 // pred_check
      %p163 = pneg %p162
    $region18: #{unet_forward.13} parent=5 // pred_check_branch
      %165 = sbr.rel (%p163) target = $region20
    $region19: #{unet_forward.13} parent=5 // pred_region
      // Predicated region
      $region21: #{unet_forward.13} parent=19 // pred_check
        %p166 = pneg %p52
      $region22: #{unet_forward.13} parent=19 // pred_check_branch
        %168 = sbr.rel (%p166) target = $region24
      $region23: #{unet_forward.13} parent=19 // pred_region
        %s169 = smul.u32 8, %s18
        %p170 = scmp.lt.s32.totalorder %s16, 0
        %s171 = scalar_select %p170, %s16, 0
        %p172 = scmp.lt.s32.totalorder %s17, 0
        %s173 = scalar_select %p172, %s17, 0
        %p174 = scmp.lt.s32.totalorder %s169, 31
        %s175 = scalar_select %p174, %s169, 31
        %s176 = smul.addr %s173, 32
        %s177 = sadd.s32 %s175, %s176
        %s178 = smul.addr %s171, 32
        %s179 = sadd.s32 %s177, %s178
        %s180 = smul.addr %s179, 4
        %s181 = scalar_lea.vmem %s0, %s180
        %s182 = smul.u32 8, %s18
      $region24: #{unet_forward.13} parent=19 // pred_fallthru
        _
      // Predicated region
      $region25: #{unet_forward.13} parent=19 // pred_check
        %p183 = pneg %p80
      $region26: #{unet_forward.13} parent=19 // pred_check_branch
        %185 = sbr.rel (%p183) target = $region28
      $region27: #{unet_forward.13} parent=19 // pred_region
        %s186 = smul.u32 128, %s18
        %p187 = scmp.lt.s32.totalorder %s16, 0
        %s188 = scalar_select %p187, %s16, 0
        %p189 = scmp.lt.s32.totalorder %s186, 511
        %s190 = scalar_select %p189, %s186, 511
        %s191 = smul.addr %s190, 2
        %s192 = smul.addr %s188, 1024
        %s193 = sadd.s32 %s191, %s192
        %s194 = smul.addr %s193, 4
        %s195 = scalar_lea.vmem %s1, %s194
        %s196 = smul.u32 128, %s18
      $region28: #{unet_forward.13} parent=19 // pred_fallthru
        _
    $region20: #{unet_forward.13} parent=5 // pred_fallthru
      _
    %p197 = scmp.le.s32.totalorder 1, %s9
    %p198 = scmp.lt.s32.totalorder %s9, 5
    %p199 = pnand %p197, %p198
    %p200 = pneg %p199
    // Predicated region
    $region29: #{unet_forward.13} parent=5 // pred_check
      _
    $region30: #{unet_forward.13} parent=5 // pred_check_branch
      %202 = sbr.rel (%p199) target = $region32
    $region31: #{unet_forward.13} parent=5 // pred_region
      %s203 = ssub.s32 %s9, 1
      %s204 = smul.u32 8, %s21
      %p205 = scmp.lt.s32.totalorder %s19, 0
      %s206 = scalar_select %p205, %s19, 0
      %p207 = scmp.lt.s32.totalorder %s20, 0
      %s208 = scalar_select %p207, %s20, 0
      %p209 = scmp.lt.s32.totalorder %s204, 31
      %s210 = scalar_select %p209, %s204, 31
      %s211 = smul.addr %s208, 32
      %s212 = sadd.s32 %s210, %s211
      %s213 = smul.addr %s206, 32
      %s214 = sadd.s32 %s212, %s213
      %s215 = smul.addr %s214, 4
      %s216 = scalar_lea.vmem %s0, %s215
      %p217 = pneg %p58
      %p218 = pneg %p55
      %s219 = smul.u32 128, %s21
      %p220 = scmp.lt.s32.totalorder %s19, 0
      %s221 = scalar_select %p220, %s19, 0
      %p222 = scmp.lt.s32.totalorder %s219, 511
      %s223 = scalar_select %p222, %s219, 511
      %s224 = smul.addr %s223, 2
      %s225 = smul.addr %s221, 1024
      %s226 = sadd.s32 %s224, %s225
      %s227 = smul.addr %s226, 4
      %s228 = scalar_lea.vmem %s1, %s227
      %p229 = pneg %p86
      %p230 = pneg %p83
      %p231 = scmp.lt.s32.totalorder %s19, 0
      %s232 = scalar_select %p231, %s19, 0
      %s233 = smul.addr %s232, 2
      %s234 = scalar_lea.vmem %s2, %s233
      %p235 = pneg %p112
      %p236 = pneg %p109
      %p237 = pneg %p140
      %p238 = pneg %p137
      %p239 = scmp.lt.s32.totalorder %s19, 0
      %s240 = scalar_select %p239, %s19, 0
      %p241 = scmp.lt.s32.totalorder %s20, 0
      %s242 = scalar_select %p241, %s20, 0
      %s243 = smul.addr %s242, 2
      %s244 = smul.addr %s240, 2
      %s245 = sadd.s32 %s243, %s244
      %s246 = smul.addr %s245, 8
      %s247 = scalar_lea.vmem %s3, %s246
      %s248 = smul.u32 8, %s21
      %p249 = scmp.lt.s32.totalorder %s19, 0
      %s250 = scalar_select %p249, %s19, 0
      %p251 = scmp.lt.s32.totalorder %s20, 0
      %s252 = scalar_select %p251, %s20, 0
      %p253 = scmp.lt.s32.totalorder %s248, 31
      %s254 = scalar_select %p253, %s248, 31
      %s255 = smul.addr %s252, 32
      %s256 = sadd.s32 %s254, %s255
      %s257 = smul.addr %s250, 32
      %s258 = sadd.s32 %s256, %s257
      %s259 = smul.addr %s258, 4
      %s260 = scalar_lea.vmem %s0, %s259
      %s261 = smul.u32 8, %s21
      %s262 = smul.u32 128, %s21
      %p263 = scmp.lt.s32.totalorder %s19, 0
      %s264 = scalar_select %p263, %s19, 0
      %p265 = scmp.lt.s32.totalorder %s262, 511
      %s266 = scalar_select %p265, %s262, 511
      %s267 = smul.addr %s266, 2
      %s268 = smul.addr %s264, 1024
      %s269 = sadd.s32 %s267, %s268
      %s270 = smul.addr %s269, 4
      %s271 = scalar_lea.vmem %s1, %s270
      %s272 = smul.u32 128, %s21
      %p273 = scmp.lt.s32.totalorder %s19, 0
      %s274 = scalar_select %p273, %s19, 0
      %s275 = smul.addr %s274, 2
      %s276 = scalar_lea.vmem %s2, %s275
      %p277 = scmp.lt.s32.totalorder %s19, 0
      %s278 = scalar_select %p277, %s19, 0
      %p279 = scmp.lt.s32.totalorder %s20, 0
      %s280 = scalar_select %p279, %s20, 0
      %s281 = smul.addr %s280, 2
      %s282 = smul.addr %s278, 2
      %s283 = sadd.s32 %s281, %s282
      %s284 = smul.addr %s283, 8
      %s285 = scalar_lea.vmem %s3, %s284
      %p286 = scmp.eq.s32.totalorder %s21, 0
      // Predicated region
      $region33: #{unet_forward.13} parent=31 // pred_check
        %p287 = pneg %p286
      $region34: #{unet_forward.13} parent=31 // pred_check_branch
        %289 = sbr.rel (%p287) target = $region36
      $region35: #{unet_forward.13} parent=31 // pred_region
        %290 = vst [vmem:[#allocation2] sm:$0xff] 0.0
        %291 = vst [vmem:[#allocation2 + $0x8] sm:$0xff] 0.0
      $region36: #{unet_forward.13} parent=31 // pred_fallthru
        _
      %v292 = vld [vmem:[#allocation2] sm:$0xff]
      %v293 = vld [vmem:[#allocation2 + $0x8] sm:$0xff]
      %v294 = vld [vmem:[%s260] sm:$0xff]
      %v295 = vld [vmem:[%s260 + $0x8] sm:$0xff]
      %v296 = vld [vmem:[%s260 + $0x10] sm:$0xff]
      %v297 = vld [vmem:[%s260 + $0x18] sm:$0xff]
      %v298 = vld [vmem:[%s271] sm:$0xff]
      %v299 = vld [vmem:[%s271 + $0x8] sm:$0xff]
      %v300 = vld [vmem:[%s271 + $0x10] sm:$0xff]
      %v301 = vld [vmem:[%s271 + $0x18] sm:$0xff]
      %v302 = vld [vmem:[%s271 + $0x20] sm:$0xff]
      %v303 = vld [vmem:[%s271 + $0x28] sm:$0xff]
      %v304 = vld [vmem:[%s271 + $0x30] sm:$0xff]
      %v305 = vld [vmem:[%s271 + $0x38] sm:$0xff]
      %v306 = vld [vmem:[%s271 + $0x40] sm:$0xff]
      %v307 = vld [vmem:[%s271 + $0x48] sm:$0xff]
      %v308 = vld [vmem:[%s271 + $0x50] sm:$0xff]
      %v309 = vld [vmem:[%s271 + $0x58] sm:$0xff]
      %v310 = vld [vmem:[%s271 + $0x60] sm:$0xff]
      %v311 = vld [vmem:[%s271 + $0x68] sm:$0xff]
      %v312 = vld [vmem:[%s271 + $0x70] sm:$0xff]
      %v313 = vld [vmem:[%s271 + $0x78] sm:$0xff]
      %v314 = vld [vmem:[%s271 + $0x80] sm:$0xff]
      %v315 = vld [vmem:[%s271 + $0x88] sm:$0xff]
      %v316 = vld [vmem:[%s271 + $0x90] sm:$0xff]
      %v317 = vld [vmem:[%s271 + $0x98] sm:$0xff]
      %v318 = vld [vmem:[%s271 + $0xa0] sm:$0xff]
      %v319 = vld [vmem:[%s271 + $0xa8] sm:$0xff]
      %v320 = vld [vmem:[%s271 + $0xb0] sm:$0xff]
      %v321 = vld [vmem:[%s271 + $0xb8] sm:$0xff]
      %v322 = vld [vmem:[%s271 + $0xc0] sm:$0xff]
      %v323 = vld [vmem:[%s271 + $0xc8] sm:$0xff]
      %v324 = vld [vmem:[%s271 + $0xd0] sm:$0xff]
      %v325 = vld [vmem:[%s271 + $0xd8] sm:$0xff]
      %v326 = vld [vmem:[%s271 + $0xe0] sm:$0xff]
      %v327 = vld [vmem:[%s271 + $0xe8] sm:$0xff]
      %v328 = vld [vmem:[%s271 + $0xf0] sm:$0xff]
      %v329 = vld [vmem:[%s271 + $0xf8] sm:$0xff]
      %v330 = vld [vmem:[%s271 + $0x100] sm:$0xff]
      %v331 = vld [vmem:[%s271 + $0x108] sm:$0xff]
      %v332 = vld [vmem:[%s271 + $0x110] sm:$0xff]
      %v333 = vld [vmem:[%s271 + $0x118] sm:$0xff]
      %v334 = vld [vmem:[%s271 + $0x120] sm:$0xff]
      %v335 = vld [vmem:[%s271 + $0x128] sm:$0xff]
      %v336 = vld [vmem:[%s271 + $0x130] sm:$0xff]
      %v337 = vld [vmem:[%s271 + $0x138] sm:$0xff]
      %v338 = vld [vmem:[%s271 + $0x140] sm:$0xff]
      %v339 = vld [vmem:[%s271 + $0x148] sm:$0xff]
      %v340 = vld [vmem:[%s271 + $0x150] sm:$0xff]
      %v341 = vld [vmem:[%s271 + $0x158] sm:$0xff]
      %v342 = vld [vmem:[%s271 + $0x160] sm:$0xff]
      %v343 = vld [vmem:[%s271 + $0x168] sm:$0xff]
      %v344 = vld [vmem:[%s271 + $0x170] sm:$0xff]
      %v345 = vld [vmem:[%s271 + $0x178] sm:$0xff]
      %v346 = vld [vmem:[%s271 + $0x180] sm:$0xff]
      %v347 = vld [vmem:[%s271 + $0x188] sm:$0xff]
      %v348 = vld [vmem:[%s271 + $0x190] sm:$0xff]
      %v349 = vld [vmem:[%s271 + $0x198] sm:$0xff]
      %v350 = vld [vmem:[%s271 + $0x1a0] sm:$0xff]
      %v351 = vld [vmem:[%s271 + $0x1a8] sm:$0xff]
      %v352 = vld [vmem:[%s271 + $0x1b0] sm:$0xff]
      %v353 = vld [vmem:[%s271 + $0x1b8] sm:$0xff]
      %v354 = vld [vmem:[%s271 + $0x1c0] sm:$0xff]
      %v355 = vld [vmem:[%s271 + $0x1c8] sm:$0xff]
      %v356 = vld [vmem:[%s271 + $0x1d0] sm:$0xff]
      %v357 = vld [vmem:[%s271 + $0x1d8] sm:$0xff]
      %v358 = vld [vmem:[%s271 + $0x1e0] sm:$0xff]
      %v359 = vld [vmem:[%s271 + $0x1e8] sm:$0xff]
      %v360 = vld [vmem:[%s271 + $0x1f0] sm:$0xff]
      %v361 = vld [vmem:[%s271 + $0x1f8] sm:$0xff]
      %v362 = vld [vmem:[%s271 + $0x200] sm:$0xff]
      %v363 = vld [vmem:[%s271 + $0x208] sm:$0xff]
      %v364 = vld [vmem:[%s271 + $0x210] sm:$0xff]
      %v365 = vld [vmem:[%s271 + $0x218] sm:$0xff]
      %v366 = vld [vmem:[%s271 + $0x220] sm:$0xff]
      %v367 = vld [vmem:[%s271 + $0x228] sm:$0xff]
      %v368 = vld [vmem:[%s271 + $0x230] sm:$0xff]
      %v369 = vld [vmem:[%s271 + $0x238] sm:$0xff]
      %v370 = vld [vmem:[%s271 + $0x240] sm:$0xff]
      %v371 = vld [vmem:[%s271 + $0x248] sm:$0xff]
      %v372 = vld [vmem:[%s271 + $0x250] sm:$0xff]
      %v373 = vld [vmem:[%s271 + $0x258] sm:$0xff]
      %v374 = vld [vmem:[%s271 + $0x260] sm:$0xff]
      %v375 = vld [vmem:[%s271 + $0x268] sm:$0xff]
      %v376 = vld [vmem:[%s271 + $0x270] sm:$0xff]
      %v377 = vld [vmem:[%s271 + $0x278] sm:$0xff]
      %v378 = vld [vmem:[%s271 + $0x280] sm:$0xff]
      %v379 = vld [vmem:[%s271 + $0x288] sm:$0xff]
      %v380 = vld [vmem:[%s271 + $0x290] sm:$0xff]
      %v381 = vld [vmem:[%s271 + $0x298] sm:$0xff]
      %v382 = vld [vmem:[%s271 + $0x2a0] sm:$0xff]
      %v383 = vld [vmem:[%s271 + $0x2a8] sm:$0xff]
      %v384 = vld [vmem:[%s271 + $0x2b0] sm:$0xff]
      %v385 = vld [vmem:[%s271 + $0x2b8] sm:$0xff]
      %v386 = vld [vmem:[%s271 + $0x2c0] sm:$0xff]
      %v387 = vld [vmem:[%s271 + $0x2c8] sm:$0xff]
      %v388 = vld [vmem:[%s271 + $0x2d0] sm:$0xff]
      %v389 = vld [vmem:[%s271 + $0x2d8] sm:$0xff]
      %v390 = vld [vmem:[%s271 + $0x2e0] sm:$0xff]
      %v391 = vld [vmem:[%s271 + $0x2e8] sm:$0xff]
      %v392 = vld [vmem:[%s271 + $0x2f0] sm:$0xff]
      %v393 = vld [vmem:[%s271 + $0x2f8] sm:$0xff]
      %v394 = vld [vmem:[%s271 + $0x300] sm:$0xff]
      %v395 = vld [vmem:[%s271 + $0x308] sm:$0xff]
      %v396 = vld [vmem:[%s271 + $0x310] sm:$0xff]
      %v397 = vld [vmem:[%s271 + $0x318] sm:$0xff]
      %v398 = vld [vmem:[%s271 + $0x320] sm:$0xff]
      %v399 = vld [vmem:[%s271 + $0x328] sm:$0xff]
      %v400 = vld [vmem:[%s271 + $0x330] sm:$0xff]
      %v401 = vld [vmem:[%s271 + $0x338] sm:$0xff]
      %v402 = vld [vmem:[%s271 + $0x340] sm:$0xff]
      %v403 = vld [vmem:[%s271 + $0x348] sm:$0xff]
      %v404 = vld [vmem:[%s271 + $0x350] sm:$0xff]
      %v405 = vld [vmem:[%s271 + $0x358] sm:$0xff]
      %v406 = vld [vmem:[%s271 + $0x360] sm:$0xff]
      %v407 = vld [vmem:[%s271 + $0x368] sm:$0xff]
      %v408 = vld [vmem:[%s271 + $0x370] sm:$0xff]
      %v409 = vld [vmem:[%s271 + $0x378] sm:$0xff]
      %v410 = vld [vmem:[%s271 + $0x380] sm:$0xff]
      %v411 = vld [vmem:[%s271 + $0x388] sm:$0xff]
      %v412 = vld [vmem:[%s271 + $0x390] sm:$0xff]
      %v413 = vld [vmem:[%s271 + $0x398] sm:$0xff]
      %v414 = vld [vmem:[%s271 + $0x3a0] sm:$0xff]
      %v415 = vld [vmem:[%s271 + $0x3a8] sm:$0xff]
      %v416 = vld [vmem:[%s271 + $0x3b0] sm:$0xff]
      %v417 = vld [vmem:[%s271 + $0x3b8] sm:$0xff]
      %v418 = vld [vmem:[%s271 + $0x3c0] sm:$0xff]
      %v419 = vld [vmem:[%s271 + $0x3c8] sm:$0xff]
      %v420 = vld [vmem:[%s271 + $0x3d0] sm:$0xff]
      %v421 = vld [vmem:[%s271 + $0x3d8] sm:$0xff]
      %v422 = vld [vmem:[%s271 + $0x3e0] sm:$0xff]
      %v423 = vld [vmem:[%s271 + $0x3e8] sm:$0xff]
      %v424 = vld [vmem:[%s271 + $0x3f0] sm:$0xff]
      %v425 = vld [vmem:[%s271 + $0x3f8] sm:$0xff]
      %v430 = vunpack.c.l.b16 %v294
      %v431 = vunpack.c.h.b16 %v294
      %v432 = vunpack.c.l.b16 %v295
      %v433 = vunpack.c.h.b16 %v295
      %v434 = vunpack.c.l.b16 %v296
      %v435 = vunpack.c.h.b16 %v296
      %v436 = vunpack.c.l.b16 %v297
      %v437 = vunpack.c.h.b16 %v297
      %v438 = vpack.c.b16 %v430, %v430
      %v439 = vpack.c.b16 %v431, %v431
      %v440 = vpack.c.b16 %v432, %v432
      %v441 = vpack.c.b16 %v433, %v433
      %v442 = vpack.c.b16 %v434, %v434
      %v443 = vpack.c.b16 %v435, %v435
      %v444 = vpack.c.b16 %v436, %v436
      %v445 = vpack.c.b16 %v437, %v437
      %v582 = vunpack.c.l.b16 %v298
      %v583 = vunpack.c.h.b16 %v298
      %v584 = vunpack.c.l.b16 %v299
      %v585 = vunpack.c.h.b16 %v299
      %v586 = vunpack.c.l.b16 %v300
      %v587 = vunpack.c.h.b16 %v300
      %v588 = vunpack.c.l.b16 %v301
      %v589 = vunpack.c.h.b16 %v301
      %v590 = vunpack.c.l.b16 %v302
      %v591 = vunpack.c.h.b16 %v302
      %v592 = vunpack.c.l.b16 %v303
      %v593 = vunpack.c.h.b16 %v303
      %v594 = vunpack.c.l.b16 %v304
      %v595 = vunpack.c.h.b16 %v304
      %v596 = vunpack.c.l.b16 %v305
      %v597 = vunpack.c.h.b16 %v305
      %v598 = vunpack.c.l.b16 %v306
      %v599 = vunpack.c.h.b16 %v306
      %v600 = vunpack.c.l.b16 %v307
      %v601 = vunpack.c.h.b16 %v307
      %v602 = vunpack.c.l.b16 %v308
      %v603 = vunpack.c.h.b16 %v308
      %v604 = vunpack.c.l.b16 %v309
      %v605 = vunpack.c.h.b16 %v309
      %v606 = vunpack.c.l.b16 %v310
      %v607 = vunpack.c.h.b16 %v310
      %v608 = vunpack.c.l.b16 %v311
      %v609 = vunpack.c.h.b16 %v311
      %v610 = vunpack.c.l.b16 %v312
      %v611 = vunpack.c.h.b16 %v312
      %v612 = vunpack.c.l.b16 %v313
      %v613 = vunpack.c.h.b16 %v313
      %v614 = vunpack.c.l.b16 %v314
      %v615 = vunpack.c.h.b16 %v314
      %v616 = vunpack.c.l.b16 %v315
      %v617 = vunpack.c.h.b16 %v315
      %v618 = vunpack.c.l.b16 %v316
      %v619 = vunpack.c.h.b16 %v316
      %v620 = vunpack.c.l.b16 %v317
      %v621 = vunpack.c.h.b16 %v317
      %v622 = vunpack.c.l.b16 %v318
      %v623 = vunpack.c.h.b16 %v318
      %v624 = vunpack.c.l.b16 %v319
      %v625 = vunpack.c.h.b16 %v319
      %v626 = vunpack.c.l.b16 %v320
      %v627 = vunpack.c.h.b16 %v320
      %v628 = vunpack.c.l.b16 %v321
      %v629 = vunpack.c.h.b16 %v321
      %v630 = vunpack.c.l.b16 %v322
      %v631 = vunpack.c.h.b16 %v322
      %v632 = vunpack.c.l.b16 %v323
      %v633 = vunpack.c.h.b16 %v323
      %v634 = vunpack.c.l.b16 %v324
      %v635 = vunpack.c.h.b16 %v324
      %v636 = vunpack.c.l.b16 %v325
      %v637 = vunpack.c.h.b16 %v325
      %v638 = vunpack.c.l.b16 %v326
      %v639 = vunpack.c.h.b16 %v326
      %v640 = vunpack.c.l.b16 %v327
      %v641 = vunpack.c.h.b16 %v327
      %v642 = vunpack.c.l.b16 %v328
      %v643 = vunpack.c.h.b16 %v328
      %v644 = vunpack.c.l.b16 %v329
      %v645 = vunpack.c.h.b16 %v329
      %v646 = vunpack.c.l.b16 %v330
      %v647 = vunpack.c.h.b16 %v330
      %v648 = vunpack.c.l.b16 %v331
      %v649 = vunpack.c.h.b16 %v331
      %v650 = vunpack.c.l.b16 %v332
      %v651 = vunpack.c.h.b16 %v332
      %v652 = vunpack.c.l.b16 %v333
      %v653 = vunpack.c.h.b16 %v333
      %v654 = vunpack.c.l.b16 %v334
      %v655 = vunpack.c.h.b16 %v334
      %v656 = vunpack.c.l.b16 %v335
      %v657 = vunpack.c.h.b16 %v335
      %v658 = vunpack.c.l.b16 %v336
      %v659 = vunpack.c.h.b16 %v336
      %v660 = vunpack.c.l.b16 %v337
      %v661 = vunpack.c.h.b16 %v337
      %v662 = vunpack.c.l.b16 %v338
      %v663 = vunpack.c.h.b16 %v338
      %v664 = vunpack.c.l.b16 %v339
      %v665 = vunpack.c.h.b16 %v339
      %v666 = vunpack.c.l.b16 %v340
      %v667 = vunpack.c.h.b16 %v340
      %v668 = vunpack.c.l.b16 %v341
      %v669 = vunpack.c.h.b16 %v341
      %v670 = vunpack.c.l.b16 %v342
      %v671 = vunpack.c.h.b16 %v342
      %v672 = vunpack.c.l.b16 %v343
      %v673 = vunpack.c.h.b16 %v343
      %v674 = vunpack.c.l.b16 %v344
      %v675 = vunpack.c.h.b16 %v344
      %v676 = vunpack.c.l.b16 %v345
      %v677 = vunpack.c.h.b16 %v345
      %v678 = vunpack.c.l.b16 %v346
      %v679 = vunpack.c.h.b16 %v346
      %v680 = vunpack.c.l.b16 %v347
      %v681 = vunpack.c.h.b16 %v347
      %v682 = vunpack.c.l.b16 %v348
      %v683 = vunpack.c.h.b16 %v348
      %v684 = vunpack.c.l.b16 %v349
      %v685 = vunpack.c.h.b16 %v349
      %v686 = vunpack.c.l.b16 %v350
      %v687 = vunpack.c.h.b16 %v350
      %v688 = vunpack.c.l.b16 %v351
      %v689 = vunpack.c.h.b16 %v351
      %v690 = vunpack.c.l.b16 %v352
      %v691 = vunpack.c.h.b16 %v352
      %v692 = vunpack.c.l.b16 %v353
      %v693 = vunpack.c.h.b16 %v353
      %v694 = vunpack.c.l.b16 %v354
      %v695 = vunpack.c.h.b16 %v354
      %v696 = vunpack.c.l.b16 %v355
      %v697 = vunpack.c.h.b16 %v355
      %v698 = vunpack.c.l.b16 %v356
      %v699 = vunpack.c.h.b16 %v356
      %v700 = vunpack.c.l.b16 %v357
      %v701 = vunpack.c.h.b16 %v357
      %v702 = vunpack.c.l.b16 %v358
      %v703 = vunpack.c.h.b16 %v358
      %v704 = vunpack.c.l.b16 %v359
      %v705 = vunpack.c.h.b16 %v359
      %v706 = vunpack.c.l.b16 %v360
      %v707 = vunpack.c.h.b16 %v360
      %v708 = vunpack.c.l.b16 %v361
      %v709 = vunpack.c.h.b16 %v361
      %v710 = vunpack.c.l.b16 %v362
      %v711 = vunpack.c.h.b16 %v362
      %v712 = vunpack.c.l.b16 %v363
      %v713 = vunpack.c.h.b16 %v363
      %v714 = vunpack.c.l.b16 %v364
      %v715 = vunpack.c.h.b16 %v364
      %v716 = vunpack.c.l.b16 %v365
      %v717 = vunpack.c.h.b16 %v365
      %v718 = vunpack.c.l.b16 %v366
      %v719 = vunpack.c.h.b16 %v366
      %v720 = vunpack.c.l.b16 %v367
      %v721 = vunpack.c.h.b16 %v367
      %v722 = vunpack.c.l.b16 %v368
      %v723 = vunpack.c.h.b16 %v368
      %v724 = vunpack.c.l.b16 %v369
      %v725 = vunpack.c.h.b16 %v369
      %v726 = vunpack.c.l.b16 %v370
      %v727 = vunpack.c.h.b16 %v370
      %v728 = vunpack.c.l.b16 %v371
      %v729 = vunpack.c.h.b16 %v371
      %v730 = vunpack.c.l.b16 %v372
      %v731 = vunpack.c.h.b16 %v372
      %v732 = vunpack.c.l.b16 %v373
      %v733 = vunpack.c.h.b16 %v373
      %v734 = vunpack.c.l.b16 %v374
      %v735 = vunpack.c.h.b16 %v374
      %v736 = vunpack.c.l.b16 %v375
      %v737 = vunpack.c.h.b16 %v375
      %v738 = vunpack.c.l.b16 %v376
      %v739 = vunpack.c.h.b16 %v376
      %v740 = vunpack.c.l.b16 %v377
      %v741 = vunpack.c.h.b16 %v377
      %v742 = vunpack.c.l.b16 %v378
      %v743 = vunpack.c.h.b16 %v378
      %v744 = vunpack.c.l.b16 %v379
      %v745 = vunpack.c.h.b16 %v379
      %v746 = vunpack.c.l.b16 %v380
      %v747 = vunpack.c.h.b16 %v380
      %v748 = vunpack.c.l.b16 %v381
      %v749 = vunpack.c.h.b16 %v381
      %v750 = vunpack.c.l.b16 %v382
      %v751 = vunpack.c.h.b16 %v382
      %v752 = vunpack.c.l.b16 %v383
      %v753 = vunpack.c.h.b16 %v383
      %v754 = vunpack.c.l.b16 %v384
      %v755 = vunpack.c.h.b16 %v384
      %v756 = vunpack.c.l.b16 %v385
      %v757 = vunpack.c.h.b16 %v385
      %v758 = vunpack.c.l.b16 %v386
      %v759 = vunpack.c.h.b16 %v386
      %v760 = vunpack.c.l.b16 %v387
      %v761 = vunpack.c.h.b16 %v387
      %v762 = vunpack.c.l.b16 %v388
      %v763 = vunpack.c.h.b16 %v388
      %v764 = vunpack.c.l.b16 %v389
      %v765 = vunpack.c.h.b16 %v389
      %v766 = vunpack.c.l.b16 %v390
      %v767 = vunpack.c.h.b16 %v390
      %v768 = vunpack.c.l.b16 %v391
      %v769 = vunpack.c.h.b16 %v391
      %v770 = vunpack.c.l.b16 %v392
      %v771 = vunpack.c.h.b16 %v392
      %v772 = vunpack.c.l.b16 %v393
      %v773 = vunpack.c.h.b16 %v393
      %v774 = vunpack.c.l.b16 %v394
      %v775 = vunpack.c.h.b16 %v394
      %v776 = vunpack.c.l.b16 %v395
      %v777 = vunpack.c.h.b16 %v395
      %v778 = vunpack.c.l.b16 %v396
      %v779 = vunpack.c.h.b16 %v396
      %v780 = vunpack.c.l.b16 %v397
      %v781 = vunpack.c.h.b16 %v397
      %v782 = vunpack.c.l.b16 %v398
      %v783 = vunpack.c.h.b16 %v398
      %v784 = vunpack.c.l.b16 %v399
      %v785 = vunpack.c.h.b16 %v399
      %v786 = vunpack.c.l.b16 %v400
      %v787 = vunpack.c.h.b16 %v400
      %v788 = vunpack.c.l.b16 %v401
      %v789 = vunpack.c.h.b16 %v401
      %v790 = vunpack.c.l.b16 %v402
      %v791 = vunpack.c.h.b16 %v402
      %v792 = vunpack.c.l.b16 %v403
      %v793 = vunpack.c.h.b16 %v403
      %v794 = vunpack.c.l.b16 %v404
      %v795 = vunpack.c.h.b16 %v404
      %v796 = vunpack.c.l.b16 %v405
      %v797 = vunpack.c.h.b16 %v405
      %v798 = vunpack.c.l.b16 %v406
      %v799 = vunpack.c.h.b16 %v406
      %v800 = vunpack.c.l.b16 %v407
      %v801 = vunpack.c.h.b16 %v407
      %v802 = vunpack.c.l.b16 %v408
      %v803 = vunpack.c.h.b16 %v408
      %v804 = vunpack.c.l.b16 %v409
      %v805 = vunpack.c.h.b16 %v409
      %v806 = vunpack.c.l.b16 %v410
      %v807 = vunpack.c.h.b16 %v410
      %v808 = vunpack.c.l.b16 %v411
      %v809 = vunpack.c.h.b16 %v411
      %v810 = vunpack.c.l.b16 %v412
      %v811 = vunpack.c.h.b16 %v412
      %v812 = vunpack.c.l.b16 %v413
      %v813 = vunpack.c.h.b16 %v413
      %v814 = vunpack.c.l.b16 %v414
      %v815 = vunpack.c.h.b16 %v414
      %v816 = vunpack.c.l.b16 %v415
      %v817 = vunpack.c.h.b16 %v415
      %v818 = vunpack.c.l.b16 %v416
      %v819 = vunpack.c.h.b16 %v416
      %v820 = vunpack.c.l.b16 %v417
      %v821 = vunpack.c.h.b16 %v417
      %v822 = vunpack.c.l.b16 %v418
      %v823 = vunpack.c.h.b16 %v418
      %v824 = vunpack.c.l.b16 %v419
      %v825 = vunpack.c.h.b16 %v419
      %v826 = vunpack.c.l.b16 %v420
      %v827 = vunpack.c.h.b16 %v420
      %v828 = vunpack.c.l.b16 %v421
      %v829 = vunpack.c.h.b16 %v421
      %v830 = vunpack.c.l.b16 %v422
      %v831 = vunpack.c.h.b16 %v422
      %v832 = vunpack.c.l.b16 %v423
      %v833 = vunpack.c.h.b16 %v423
      %v834 = vunpack.c.l.b16 %v424
      %v835 = vunpack.c.h.b16 %v424
      %v836 = vunpack.c.l.b16 %v425
      %v837 = vunpack.c.h.b16 %v425
      %v838 = vpack.c.b16 %v584, %v582
      %v839 = vpack.c.b16 %v585, %v583
      %v840 = vpack.c.b16 %v588, %v586
      %v841 = vpack.c.b16 %v589, %v587
      %v842 = vpack.c.b16 %v592, %v590
      %v843 = vpack.c.b16 %v593, %v591
      %v844 = vpack.c.b16 %v596, %v594
      %v845 = vpack.c.b16 %v597, %v595
      %v846 = vpack.c.b16 %v600, %v598
      %v847 = vpack.c.b16 %v601, %v599
      %v848 = vpack.c.b16 %v604, %v602
      %v849 = vpack.c.b16 %v605, %v603
      %v850 = vpack.c.b16 %v608, %v606
      %v851 = vpack.c.b16 %v609, %v607
      %v852 = vpack.c.b16 %v612, %v610
      %v853 = vpack.c.b16 %v613, %v611
      %v854 = vpack.c.b16 %v616, %v614
      %v855 = vpack.c.b16 %v617, %v615
      %v856 = vpack.c.b16 %v620, %v618
      %v857 = vpack.c.b16 %v621, %v619
      %v858 = vpack.c.b16 %v624, %v622
      %v859 = vpack.c.b16 %v625, %v623
      %v860 = vpack.c.b16 %v628, %v626
      %v861 = vpack.c.b16 %v629, %v627
      %v862 = vpack.c.b16 %v632, %v630
      %v863 = vpack.c.b16 %v633, %v631
      %v864 = vpack.c.b16 %v636, %v634
      %v865 = vpack.c.b16 %v637, %v635
      %v866 = vpack.c.b16 %v640, %v638
      %v867 = vpack.c.b16 %v641, %v639
      %v868 = vpack.c.b16 %v644, %v642
      %v869 = vpack.c.b16 %v645, %v643
      %v870 = vpack.c.b16 %v648, %v646
      %v871 = vpack.c.b16 %v649, %v647
      %v872 = vpack.c.b16 %v652, %v650
      %v873 = vpack.c.b16 %v653, %v651
      %v874 = vpack.c.b16 %v656, %v654
      %v875 = vpack.c.b16 %v657, %v655
      %v876 = vpack.c.b16 %v660, %v658
      %v877 = vpack.c.b16 %v661, %v659
      %v878 = vpack.c.b16 %v664, %v662
      %v879 = vpack.c.b16 %v665, %v663
      %v880 = vpack.c.b16 %v668, %v666
      %v881 = vpack.c.b16 %v669, %v667
      %v882 = vpack.c.b16 %v672, %v670
      %v883 = vpack.c.b16 %v673, %v671
      %v884 = vpack.c.b16 %v676, %v674
      %v885 = vpack.c.b16 %v677, %v675
      %v886 = vpack.c.b16 %v680, %v678
      %v887 = vpack.c.b16 %v681, %v679
      %v888 = vpack.c.b16 %v684, %v682
      %v889 = vpack.c.b16 %v685, %v683
      %v890 = vpack.c.b16 %v688, %v686
      %v891 = vpack.c.b16 %v689, %v687
      %v892 = vpack.c.b16 %v692, %v690
      %v893 = vpack.c.b16 %v693, %v691
      %v894 = vpack.c.b16 %v696, %v694
      %v895 = vpack.c.b16 %v697, %v695
      %v896 = vpack.c.b16 %v700, %v698
      %v897 = vpack.c.b16 %v701, %v699
      %v898 = vpack.c.b16 %v704, %v702
      %v899 = vpack.c.b16 %v705, %v703
      %v900 = vpack.c.b16 %v708, %v706
      %v901 = vpack.c.b16 %v709, %v707
      %v902 = vpack.c.b16 %v712, %v710
      %v903 = vpack.c.b16 %v713, %v711
      %v904 = vpack.c.b16 %v716, %v714
      %v905 = vpack.c.b16 %v717, %v715
      %v906 = vpack.c.b16 %v720, %v718
      %v907 = vpack.c.b16 %v721, %v719
      %v908 = vpack.c.b16 %v724, %v722
      %v909 = vpack.c.b16 %v725, %v723
      %v910 = vpack.c.b16 %v728, %v726
      %v911 = vpack.c.b16 %v729, %v727
      %v912 = vpack.c.b16 %v732, %v730
      %v913 = vpack.c.b16 %v733, %v731
      %v914 = vpack.c.b16 %v736, %v734
      %v915 = vpack.c.b16 %v737, %v735
      %v916 = vpack.c.b16 %v740, %v738
      %v917 = vpack.c.b16 %v741, %v739
      %v918 = vpack.c.b16 %v744, %v742
      %v919 = vpack.c.b16 %v745, %v743
      %v920 = vpack.c.b16 %v748, %v746
      %v921 = vpack.c.b16 %v749, %v747
      %v922 = vpack.c.b16 %v752, %v750
      %v923 = vpack.c.b16 %v753, %v751
      %v924 = vpack.c.b16 %v756, %v754
      %v925 = vpack.c.b16 %v757, %v755
      %v926 = vpack.c.b16 %v760, %v758
      %v927 = vpack.c.b16 %v761, %v759
      %v928 = vpack.c.b16 %v764, %v762
      %v929 = vpack.c.b16 %v765, %v763
      %v930 = vpack.c.b16 %v768, %v766
      %v931 = vpack.c.b16 %v769, %v767
      %v932 = vpack.c.b16 %v772, %v770
      %v933 = vpack.c.b16 %v773, %v771
      %v934 = vpack.c.b16 %v776, %v774
      %v935 = vpack.c.b16 %v777, %v775
      %v936 = vpack.c.b16 %v780, %v778
      %v937 = vpack.c.b16 %v781, %v779
      %v938 = vpack.c.b16 %v784, %v782
      %v939 = vpack.c.b16 %v785, %v783
      %v940 = vpack.c.b16 %v788, %v786
      %v941 = vpack.c.b16 %v789, %v787
      %v942 = vpack.c.b16 %v792, %v790
      %v943 = vpack.c.b16 %v793, %v791
      %v944 = vpack.c.b16 %v796, %v794
      %v945 = vpack.c.b16 %v797, %v795
      %v946 = vpack.c.b16 %v800, %v798
      %v947 = vpack.c.b16 %v801, %v799
      %v948 = vpack.c.b16 %v804, %v802
      %v949 = vpack.c.b16 %v805, %v803
      %v950 = vpack.c.b16 %v808, %v806
      %v951 = vpack.c.b16 %v809, %v807
      %v952 = vpack.c.b16 %v812, %v810
      %v953 = vpack.c.b16 %v813, %v811
      %v954 = vpack.c.b16 %v816, %v814
      %v955 = vpack.c.b16 %v817, %v815
      %v956 = vpack.c.b16 %v820, %v818
      %v957 = vpack.c.b16 %v821, %v819
      %v958 = vpack.c.b16 %v824, %v822
      %v959 = vpack.c.b16 %v825, %v823
      %v960 = vpack.c.b16 %v828, %v826
      %v961 = vpack.c.b16 %v829, %v827
      %v962 = vpack.c.b16 %v832, %v830
      %v963 = vpack.c.b16 %v833, %v831
      %v964 = vpack.c.b16 %v836, %v834
      %v965 = vpack.c.b16 %v837, %v835
      %1094 = vmatprep.subr.bf16.mxu0 %v839
      %1095 = vmatpush1.bf16.msra.mxu0 %v838
      %1096 = vmatprep.subr.bf16.mxu0 %v841
      %1097 = vmatpush1.bf16.msra.mxu0 %v840
      %1098 = vmatprep.subr.bf16.mxu0 %v843
      %1099 = vmatpush1.bf16.msra.mxu0 %v842
      %1100 = vmatprep.subr.bf16.mxu0 %v845
      %1101 = vmatpush1.bf16.msra.mxu0 %v844
      %1102 = vmatprep.subr.bf16.mxu0 %v847
      %1103 = vmatpush1.bf16.msra.mxu0 %v846
      %1104 = vmatprep.subr.bf16.mxu0 %v849
      %1105 = vmatpush1.bf16.msra.mxu0 %v848
      %1106 = vmatprep.subr.bf16.mxu0 %v851
      %1107 = vmatpush1.bf16.msra.mxu0 %v850
      %1108 = vmatprep.subr.bf16.mxu0 %v853
      %1109 = vmatpush1.bf16.msra.mxu0 %v852
      %1110 = vmatprep.subr.bf16.mxu0 %v855
      %1111 = vmatpush1.bf16.msra.mxu0 %v854
      %1112 = vmatprep.subr.bf16.mxu0 %v857
      %1113 = vmatpush1.bf16.msra.mxu0 %v856
      %1114 = vmatprep.subr.bf16.mxu0 %v859
      %1115 = vmatpush1.bf16.msra.mxu0 %v858
      %1116 = vmatprep.subr.bf16.mxu0 %v861
      %1117 = vmatpush1.bf16.msra.mxu0 %v860
      %1118 = vmatprep.subr.bf16.mxu0 %v863
      %1119 = vmatpush1.bf16.msra.mxu0 %v862
      %1120 = vmatprep.subr.bf16.mxu0 %v865
      %1121 = vmatpush1.bf16.msra.mxu0 %v864
      %1122 = vmatprep.subr.bf16.mxu0 %v867
      %1123 = vmatpush1.bf16.msra.mxu0 %v866
      %1124 = vmatprep.subr.bf16.mxu0 %v869
      %1125 = vmatpush1.bf16.msra.mxu0 %v868
      %1126 = vmatprep.mubr.bf16.mxu0 %v439
      %1127 = vmatmul.mubr.bf16.gmra.mrb[0].mxu0 %v438
      %v1128 = vpop.f32.mrb[0].mxu0
      %v1129 = vadd.f32 0.0, %v1128
      %v1130 = vpop.f32.mrb[0].mxu0
      %v1131 = vadd.f32 0.0, %v1130
      %v1132 = vpop.f32.mrb[0].mxu0
      %v1133 = vpop.f32.mrb[0].mxu0
      %1134 = vdwg.mxu0
      %1135 = vmatprep.subr.bf16.mxu0 %v871
      %1136 = vmatpush1.bf16.msra.mxu0 %v870
      %1137 = vmatprep.subr.bf16.mxu0 %v873
      %1138 = vmatpush1.bf16.msra.mxu0 %v872
      %1139 = vmatprep.subr.bf16.mxu0 %v875
      %1140 = vmatpush1.bf16.msra.mxu0 %v874
      %1141 = vmatprep.subr.bf16.mxu0 %v877
      %1142 = vmatpush1.bf16.msra.mxu0 %v876
      %1143 = vmatprep.subr.bf16.mxu0 %v879
      %1144 = vmatpush1.bf16.msra.mxu0 %v878
      %1145 = vmatprep.subr.bf16.mxu0 %v881
      %1146 = vmatpush1.bf16.msra.mxu0 %v880
      %1147 = vmatprep.subr.bf16.mxu0 %v883
      %1148 = vmatpush1.bf16.msra.mxu0 %v882
      %1149 = vmatprep.subr.bf16.mxu0 %v885
      %1150 = vmatpush1.bf16.msra.mxu0 %v884
      %1151 = vmatprep.subr.bf16.mxu0 %v887
      %1152 = vmatpush1.bf16.msra.mxu0 %v886
      %1153 = vmatprep.subr.bf16.mxu0 %v889
      %1154 = vmatpush1.bf16.msra.mxu0 %v888
      %1155 = vmatprep.subr.bf16.mxu0 %v891
      %1156 = vmatpush1.bf16.msra.mxu0 %v890
      %1157 = vmatprep.subr.bf16.mxu0 %v893
      %1158 = vmatpush1.bf16.msra.mxu0 %v892
      %1159 = vmatprep.subr.bf16.mxu0 %v895
      %1160 = vmatpush1.bf16.msra.mxu0 %v894
      %1161 = vmatprep.subr.bf16.mxu0 %v897
      %1162 = vmatpush1.bf16.msra.mxu0 %v896
      %1163 = vmatprep.subr.bf16.mxu0 %v899
      %1164 = vmatpush1.bf16.msra.mxu0 %v898
      %1165 = vmatprep.subr.bf16.mxu0 %v901
      %1166 = vmatpush1.bf16.msra.mxu0 %v900
      %1167 = vmatprep.mubr.bf16.mxu0 %v441
      %1168 = vmatmul.mubr.bf16.gmra.mrb[0].mxu0 %v440
      %v1169 = vpop.f32.mrb[0].mxu0
      %v1170 = vadd.f32 %v1129, %v1169
      %v1171 = vpop.f32.mrb[0].mxu0
      %v1172 = vadd.f32 %v1131, %v1171
      %v1173 = vpop.f32.mrb[0].mxu0
      %v1174 = vpop.f32.mrb[0].mxu0
      %1175 = vdwg.mxu0
      %1176 = vmatprep.subr.bf16.mxu0 %v903
      %1177 = vmatpush1.bf16.msra.mxu0 %v902
      %1178 = vmatprep.subr.bf16.mxu0 %v905
      %1179 = vmatpush1.bf16.msra.mxu0 %v904
      %1180 = vmatprep.subr.bf16.mxu0 %v907
      %1181 = vmatpush1.bf16.msra.mxu0 %v906
      %1182 = vmatprep.subr.bf16.mxu0 %v909
      %1183 = vmatpush1.bf16.msra.mxu0 %v908
      %1184 = vmatprep.subr.bf16.mxu0 %v911
      %1185 = vmatpush1.bf16.msra.mxu0 %v910
      %1186 = vmatprep.subr.bf16.mxu0 %v913
      %1187 = vmatpush1.bf16.msra.mxu0 %v912
      %1188 = vmatprep.subr.bf16.mxu0 %v915
      %1189 = vmatpush1.bf16.msra.mxu0 %v914
      %1190 = vmatprep.subr.bf16.mxu0 %v917
      %1191 = vmatpush1.bf16.msra.mxu0 %v916
      %1192 = vmatprep.subr.bf16.mxu0 %v919
      %1193 = vmatpush1.bf16.msra.mxu0 %v918
      %1194 = vmatprep.subr.bf16.mxu0 %v921
      %1195 = vmatpush1.bf16.msra.mxu0 %v920
      %1196 = vmatprep.subr.bf16.mxu0 %v923
      %1197 = vmatpush1.bf16.msra.mxu0 %v922
      %1198 = vmatprep.subr.bf16.mxu0 %v925
      %1199 = vmatpush1.bf16.msra.mxu0 %v924
      %1200 = vmatprep.subr.bf16.mxu0 %v927
      %1201 = vmatpush1.bf16.msra.mxu0 %v926
      %1202 = vmatprep.subr.bf16.mxu0 %v929
      %1203 = vmatpush1.bf16.msra.mxu0 %v928
      %1204 = vmatprep.subr.bf16.mxu0 %v931
      %1205 = vmatpush1.bf16.msra.mxu0 %v930
      %1206 = vmatprep.subr.bf16.mxu0 %v933
      %1207 = vmatpush1.bf16.msra.mxu0 %v932
      %1208 = vmatprep.mubr.bf16.mxu0 %v443
      %1209 = vmatmul.mubr.bf16.gmra.mrb[0].mxu0 %v442
      %v1210 = vpop.f32.mrb[0].mxu0
      %v1211 = vadd.f32 %v1170, %v1210
      %v1212 = vpop.f32.mrb[0].mxu0
      %v1213 = vadd.f32 %v1172, %v1212
      %v1214 = vpop.f32.mrb[0].mxu0
      %v1215 = vpop.f32.mrb[0].mxu0
      %1216 = vdwg.mxu0
      %1217 = vmatprep.subr.bf16.mxu0 %v935
      %1218 = vmatpush1.bf16.msra.mxu0 %v934
      %1219 = vmatprep.subr.bf16.mxu0 %v937
      %1220 = vmatpush1.bf16.msra.mxu0 %v936
      %1221 = vmatprep.subr.bf16.mxu0 %v939
      %1222 = vmatpush1.bf16.msra.mxu0 %v938
      %1223 = vmatprep.subr.bf16.mxu0 %v941
      %1224 = vmatpush1.bf16.msra.mxu0 %v940
      %1225 = vmatprep.subr.bf16.mxu0 %v943
      %1226 = vmatpush1.bf16.msra.mxu0 %v942
      %1227 = vmatprep.subr.bf16.mxu0 %v945
      %1228 = vmatpush1.bf16.msra.mxu0 %v944
      %1229 = vmatprep.subr.bf16.mxu0 %v947
      %1230 = vmatpush1.bf16.msra.mxu0 %v946
      %1231 = vmatprep.subr.bf16.mxu0 %v949
      %1232 = vmatpush1.bf16.msra.mxu0 %v948
      %1233 = vmatprep.subr.bf16.mxu0 %v951
      %1234 = vmatpush1.bf16.msra.mxu0 %v950
      %1235 = vmatprep.subr.bf16.mxu0 %v953
      %1236 = vmatpush1.bf16.msra.mxu0 %v952
      %1237 = vmatprep.subr.bf16.mxu0 %v955
      %1238 = vmatpush1.bf16.msra.mxu0 %v954
      %1239 = vmatprep.subr.bf16.mxu0 %v957
      %1240 = vmatpush1.bf16.msra.mxu0 %v956
      %1241 = vmatprep.subr.bf16.mxu0 %v959
      %1242 = vmatpush1.bf16.msra.mxu0 %v958
      %1243 = vmatprep.subr.bf16.mxu0 %v961
      %1244 = vmatpush1.bf16.msra.mxu0 %v960
      %1245 = vmatprep.subr.bf16.mxu0 %v963
      %1246 = vmatpush1.bf16.msra.mxu0 %v962
      %1247 = vmatprep.subr.bf16.mxu0 %v965
      %1248 = vmatpush1.bf16.msra.mxu0 %v964
      %1249 = vmatprep.mubr.bf16.mxu0 %v445
      %1250 = vmatmul.mubr.bf16.gmra.mrb[0].mxu0 %v444
      %v1251 = vpop.f32.mrb[0].mxu0
      %v1252 = vadd.f32 %v1211, %v1251
      %v1253 = vpop.f32.mrb[0].mxu0
      %v1254 = vadd.f32 %v1213, %v1253
      %v1255 = vpop.f32.mrb[0].mxu0
      %v1256 = vpop.f32.mrb[0].mxu0
      %1257 = vdwg.mxu0
      %v1258 = vadd.f32 %v292, %v1252
      %v1259 = vadd.f32 %v293, %v1254
      %1260 = vst [vmem:[#allocation2] sm:$0xff] %v1258
      %1261 = vst [vmem:[#allocation2 + $0x8] sm:$0xff] %v1259
      %p1262 = scmp.eq.s32.totalorder %s21, 3
      // Predicated region
      $region37: #{unet_forward.13} parent=31 // pred_check
        %p1263 = pneg %p1262
      $region38: #{unet_forward.13} parent=31 // pred_check_branch
        %1265 = sbr.rel (%p1263) target = $region40
      $region39: #{unet_forward.13} parent=31 // pred_region
        %v1266 = vld [vmem:[#allocation2] sm:$0xff]
        %v1267 = vld [vmem:[#allocation2 + $0x8] sm:$0xff]
        %v1268 = vld [vmem:[%s276] sm:$0x3]
        %v1270 = vlaneseq
        %v1271 = vshrl.u32 %v1270, 7
        %v1272 = vsub.s32 0, %v1271
        %v1273 = vrot.slane %v1268, %v1272
        %v1274 = vlaneseq
        %v1275 = vshrl.u32 %v1274, 7
        %v1276 = vsub.s32 1, %v1275
        %v1277 = vrot.slane %v1268, %v1276
        %v1280 = vadd.f32 %v1266, %v1273
        %v1281 = vadd.f32 %v1267, %v1277
        %1282 = vst [vmem:[%s285] sm:$0xff] %v1280
        %1283 = vst [vmem:[%s285 + $0x8] sm:$0xff] %v1281
      $region40: #{unet_forward.13} parent=31 // pred_fallthru
        _
      %p1284 = scmp.lt.s32.totalorder %s19, 0
      %s1285 = scalar_select %p1284, %s19, 0
      %p1286 = scmp.lt.s32.totalorder %s20, 0
      %s1287 = scalar_select %p1286, %s20, 0
      %s1288 = smul.addr %s1287, 2
      %s1289 = smul.addr %s1285, 2
      %s1290 = sadd.s32 %s1288, %s1289
      %s1291 = smul.addr %s1290, 8
      %s1292 = scalar_lea.vmem %s3, %s1291
      // Predicated region
      $region41: #{unet_forward.13} parent=31 // pred_check
        %p1293 = pneg %p137
      $region42: #{unet_forward.13} parent=31 // pred_check_branch
        %1295 = sbr.rel (%p1293) target = $region44
      $region43: #{unet_forward.13} parent=31 // pred_region
        _
      $region44: #{unet_forward.13} parent=31 // pred_fallthru
        _
      // Predicated region
      $region45: #{unet_forward.13} parent=31 // pred_check
        %p1296 = pneg %p137
      $region46: #{unet_forward.13} parent=31 // pred_check_branch
        %1298 = sbr.rel (%p1296) target = $region48
      $region47: #{unet_forward.13} parent=31 // pred_region
        %p1299 = scmp.lt.s32.totalorder %s19, 0
        %s1300 = scalar_select %p1299, %s19, 0
        %p1301 = scmp.lt.s32.totalorder %s20, 0
        %s1302 = scalar_select %p1301, %s20, 0
        %s1303 = smul.addr %s1302, 2
        %s1304 = smul.addr %s1300, 2
        %s1305 = sadd.s32 %s1303, %s1304
        %s1306 = smul.addr %s1305, 8
        %s1307 = scalar_lea.vmem %s3, %s1306
      $region48: #{unet_forward.13} parent=31 // pred_fallthru
        _
    $region32: #{unet_forward.13} parent=5 // pred_fallthru
      _
    %p1308 = scmp.le.s32.totalorder 2, %s9
    // Predicated region
    $region49: #{unet_forward.13} parent=5 // pred_check
      %p1309 = pneg %p1308
    $region50: #{unet_forward.13} parent=5 // pred_check_branch
      %1311 = sbr.rel (%p1309) target = $region52
    $region51: #{unet_forward.13} parent=5 // pred_region
      %s1312 = ssub.s32 %s9, 2
    $region52: #{unet_forward.13} parent=5 // pred_fallthru
      _
  $region6: #{unet_forward.13} parent=0 // loop_footer
    %s13 = sadd.s32 1, %s9
  $region7: #{unet_forward.13} parent=0 // loop_footer_branch
    %8 = sbr.rel target = $region3
  $region8: #{unet_forward.13} parent=0 // loop_exit
    _

// kernel: unet_forward.14
$region0: #{unet_forward.14}
  #allocation0 [shape = 'u32[]', space=smem, size = 0x4, offset = 0x4, fixed_abs, tag = 'smem constant byte address 0x4 - core index']
  #allocation1 [shape = 'u32[144,128]{1,0:T(1,128)}', space=vmem, size = 0x12000, scoped, tag = 'internal scratch']
  #allocation2 [shape = 'f32[8,256]{1,0:T(8,128)}', space=vmem, size = 0x2000, scoped, tag = 'scratch operand']
  %s0 = inlined_call_operand.vmem [shape: bf16[1,8,4096], index: 0, kind: input, shape index: {}]
  %s1 = inlined_call_operand.vmem [shape: bf16[1,4096,256], index: 1, kind: input, shape index: {}]
  %s2 = inlined_call_operand.vmem [shape: f32[1,1,256], index: 2, kind: input, shape index: {}]
  %s3 = inlined_call_operand.vmem [shape: f32[1,8,256], index: 3, kind: output, shape index: {}]
  %s4 = sld [smem:[#allocation0]]
  $region53: #{unet_forward.14} parent=0
    _
  %s6 = ssub.s32 1, %s4
  %s7 = scalar_select 0, %s6, %s4
  loop: start=0, step=1, limit=6
  $region2: #{unet_forward.14} parent=0 // loop_pre_header
    _
  $region3: #{unet_forward.14} parent=0 // loop_header
    %s9 = sphi 0, %s13
    %p10 = scmp.ge.s32.totalorder %s9, 6
    %s16 = sphi 0, %s35
    %s17 = sphi 0, %s31
    %s18 = sphi 0, %s27
    %s19 = sphi 0, %s16
    %s20 = sphi 0, %s17
    %s21 = sphi 0, %s18
    %s22 = sphi 0, %s19
    %s23 = sphi 0, %s20
    %s24 = sphi 0, %s21
    %s42 = sphi 0, %s44
    %s45 = sphi 0, %s42
    %s46 = sphi 0, %s45
    %s62 = sphi 0, %s46
    %s70 = sphi 0, %s72
    %s73 = sphi 0, %s70
    %s74 = sphi 0, %s73
    %s90 = sphi 0, %s74
    %s96 = sphi 0, %s98
    %s99 = sphi 0, %s96
    %s100 = sphi 0, %s99
    %s116 = sphi 0, %s100
    %s124 = sphi 0, %s126
    %s127 = sphi 0, %s124
    %s128 = sphi 0, %s127
    %s144 = sphi 0, %s128
  $region4: #{unet_forward.14} parent=0 // loop_header_branch
    %12 = sbr.rel (%p10) target = $region8
  $region5: #{unet_forward.14} parent=0 // loop_body
    %s14 = ssub.s32 %s9, 1
    %s15 = ssub.s32 %s9, 2
    %s25 = sadd.s32 1, %s18
    %p26 = scmp.ge.s32.totalorder %s25, 4
    %s27 = scalar_select %p26, 0, %s25
    %s28 = sadd.s32 1, %s17
    %s29 = scalar_select %p26, %s28, %s17
    %p30 = scmp.ge.s32.totalorder %s29, 1
    %s31 = scalar_select %p30, 0, %s29
    %s32 = sadd.s32 1, %s16
    %s33 = scalar_select %p30, %s32, %s16
    %p34 = scmp.ge.s32.totalorder %s33, 1
    %s35 = scalar_select %p34, 0, %s33
    %s36 = ssub.s32 %s16, %s35
    %s37 = ssub.s32 %s17, %s31
    %s38 = sor.u32 %s36, %s37
    %s39 = ssub.s32 %s18, %s27
    %s40 = sor.u32 %s38, %s39
    %p41 = scmp.eq.s32.totalorder %s40, 0
    %s43 = sadd.s32 %s42, 1
    %s44 = scalar_select %p41, %s42, %s43
    %p47 = pneg %p41
    %p48 = scmp.eq.s32.totalorder %s9, 3
    %p49 = por %p47, %p48
    %p50 = scmp.ne.s32.totalorder %s42, %s45
    %p51 = scmp.eq.s32.totalorder %s9, 0
    %p52 = por %p50, %p51
    %p53 = scmp.ne.s32.totalorder %s42, %s45
    %p54 = scmp.eq.s32.totalorder %s14, 3
    %p55 = por %p53, %p54
    %p56 = scmp.ne.s32.totalorder %s45, %s46
    %p57 = scmp.eq.s32.totalorder %s14, 0
    %p58 = por %p56, %p57
    %p59 = scmp.ne.s32.totalorder %s45, %s46
    %p60 = scmp.eq.s32.totalorder %s15, 3
    %p61 = por %p59, %p60
    %p63 = scmp.ne.s32.totalorder %s46, %s62
    %p64 = scmp.eq.s32.totalorder %s15, 0
    %p65 = por %p63, %p64
    %s66 = ssub.s32 %s16, %s35
    %s67 = ssub.s32 %s18, %s27
    %s68 = sor.u32 %s66, %s67
    %p69 = scmp.eq.s32.totalorder %s68, 0
    %s71 = sadd.s32 %s70, 1
    %s72 = scalar_select %p69, %s70, %s71
    %p75 = pneg %p69
    %p76 = scmp.eq.s32.totalorder %s9, 3
    %p77 = por %p75, %p76
    %p78 = scmp.ne.s32.totalorder %s70, %s73
    %p79 = scmp.eq.s32.totalorder %s9, 0
    %p80 = por %p78, %p79
    %p81 = scmp.ne.s32.totalorder %s70, %s73
    %p82 = scmp.eq.s32.totalorder %s14, 3
    %p83 = por %p81, %p82
    %p84 = scmp.ne.s32.totalorder %s73, %s74
    %p85 = scmp.eq.s32.totalorder %s14, 0
    %p86 = por %p84, %p85
    %p87 = scmp.ne.s32.totalorder %s73, %s74
    %p88 = scmp.eq.s32.totalorder %s15, 3
    %p89 = por %p87, %p88
    %p91 = scmp.ne.s32.totalorder %s74, %s90
    %p92 = scmp.eq.s32.totalorder %s15, 0
    %p93 = por %p91, %p92
    %s94 = ssub.s32 %s16, %s35
    %p95 = scmp.eq.s32.totalorder %s94, 0
    %s97 = sadd.s32 %s96, 1
    %s98 = scalar_select %p95, %s96, %s97
    %p101 = pneg %p95
    %p102 = scmp.eq.s32.totalorder %s9, 3
    %p103 = por %p101, %p102
    %p104 = scmp.ne.s32.totalorder %s96, %s99
    %p105 = scmp.eq.s32.totalorder %s9, 0
    %p106 = por %p104, %p105
    %p107 = scmp.ne.s32.totalorder %s96, %s99
    %p108 = scmp.eq.s32.totalorder %s14, 3
    %p109 = por %p107, %p108
    %p110 = scmp.ne.s32.totalorder %s99, %s100
    %p111 = scmp.eq.s32.totalorder %s14, 0
    %p112 = por %p110, %p111
    %p113 = scmp.ne.s32.totalorder %s99, %s100
    %p114 = scmp.eq.s32.totalorder %s15, 3
    %p115 = por %p113, %p114
    %p117 = scmp.ne.s32.totalorder %s100, %s116
    %p118 = scmp.eq.s32.totalorder %s15, 0
    %p119 = por %p117, %p118
    %s120 = ssub.s32 %s16, %s35
    %s121 = ssub.s32 %s17, %s31
    %s122 = sor.u32 %s120, %s121
    %p123 = scmp.eq.s32.totalorder %s122, 0
    %s125 = sadd.s32 %s124, 1
    %s126 = scalar_select %p123, %s124, %s125
    %p129 = pneg %p123
    %p130 = scmp.eq.s32.totalorder %s9, 3
    %p131 = por %p129, %p130
    %p132 = scmp.ne.s32.totalorder %s124, %s127
    %p133 = scmp.eq.s32.totalorder %s9, 0
    %p134 = por %p132, %p133
    %p135 = scmp.ne.s32.totalorder %s124, %s127
    %p136 = scmp.eq.s32.totalorder %s14, 3
    %p137 = por %p135, %p136
    %p138 = scmp.ne.s32.totalorder %s127, %s128
    %p139 = scmp.eq.s32.totalorder %s14, 0
    %p140 = por %p138, %p139
    %p141 = scmp.ne.s32.totalorder %s127, %s128
    %p142 = scmp.eq.s32.totalorder %s15, 3
    %p143 = por %p141, %p142
    %p145 = scmp.ne.s32.totalorder %s128, %s144
    %p146 = scmp.eq.s32.totalorder %s15, 0
    %p147 = por %p145, %p146
    %p148 = scmp.le.s32.totalorder 1, %s9
    %p149 = scmp.lt.s32.totalorder %s9, 5
    %p150 = pnand %p148, %p149
    %p151 = pneg %p150
    // Predicated region
    $region9: #{unet_forward.14} parent=5 // pred_check
      _
    $region10: #{unet_forward.14} parent=5 // pred_check_branch
      %153 = sbr.rel (%p150) target = $region12
    $region11: #{unet_forward.14} parent=5 // pred_region
      %s154 = ssub.s32 %s9, 1
      // Predicated region
      $region13: #{unet_forward.14} parent=11 // pred_check
        %p155 = pneg %p112
      $region14: #{unet_forward.14} parent=11 // pred_check_branch
        %157 = sbr.rel (%p155) target = $region16
      $region15: #{unet_forward.14} parent=11 // pred_region
        %p158 = scmp.lt.s32.totalorder %s19, 0
        %s159 = scalar_select %p158, %s19, 0
        %s160 = smul.addr %s159, 2
        %s161 = scalar_lea.vmem %s2, %s160
      $region16: #{unet_forward.14} parent=11 // pred_fallthru
        _
    $region12: #{unet_forward.14} parent=5 // pred_fallthru
      _
    %p162 = scmp.lt.s32.totalorder %s9, 4
    // Predicated region
    $region17: #{unet_forward.14} parent=5 // pred_check
      %p163 = pneg %p162
    $region18: #{unet_forward.14} parent=5 // pred_check_branch
      %165 = sbr.rel (%p163) target = $region20
    $region19: #{unet_forward.14} parent=5 // pred_region
      // Predicated region
      $region21: #{unet_forward.14} parent=19 // pred_check
        %p166 = pneg %p52
      $region22: #{unet_forward.14} parent=19 // pred_check_branch
        %168 = sbr.rel (%p166) target = $region24
      $region23: #{unet_forward.14} parent=19 // pred_region
        %s169 = smul.u32 8, %s18
        %p170 = scmp.lt.s32.totalorder %s16, 0
        %s171 = scalar_select %p170, %s16, 0
        %p172 = scmp.lt.s32.totalorder %s17, 0
        %s173 = scalar_select %p172, %s17, 0
        %p174 = scmp.lt.s32.totalorder %s169, 31
        %s175 = scalar_select %p174, %s169, 31
        %s176 = smul.addr %s173, 32
        %s177 = sadd.s32 %s175, %s176
        %s178 = smul.addr %s171, 32
        %s179 = sadd.s32 %s177, %s178
        %s180 = smul.addr %s179, 4
        %s181 = scalar_lea.vmem %s0, %s180
        %s182 = smul.u32 8, %s18
      $region24: #{unet_forward.14} parent=19 // pred_fallthru
        _
      // Predicated region
      $region25: #{unet_forward.14} parent=19 // pred_check
        %p183 = pneg %p80
      $region26: #{unet_forward.14} parent=19 // pred_check_branch
        %185 = sbr.rel (%p183) target = $region28
      $region27: #{unet_forward.14} parent=19 // pred_region
        %s186 = smul.u32 128, %s18
        %p187 = scmp.lt.s32.totalorder %s16, 0
        %s188 = scalar_select %p187, %s16, 0
        %p189 = scmp.lt.s32.totalorder %s186, 511
        %s190 = scalar_select %p189, %s186, 511
        %s191 = smul.addr %s190, 2
        %s192 = smul.addr %s188, 1024
        %s193 = sadd.s32 %s191, %s192
        %s194 = smul.addr %s193, 4
        %s195 = scalar_lea.vmem %s1, %s194
        %s196 = smul.u32 128, %s18
      $region28: #{unet_forward.14} parent=19 // pred_fallthru
        _
    $region20: #{unet_forward.14} parent=5 // pred_fallthru
      _
    %p197 = scmp.le.s32.totalorder 1, %s9
    %p198 = scmp.lt.s32.totalorder %s9, 5
    %p199 = pnand %p197, %p198
    %p200 = pneg %p199
    // Predicated region
    $region29: #{unet_forward.14} parent=5 // pred_check
      _
    $region30: #{unet_forward.14} parent=5 // pred_check_branch
      %202 = sbr.rel (%p199) target = $region32
    $region31: #{unet_forward.14} parent=5 // pred_region
      %s203 = ssub.s32 %s9, 1
      %s204 = smul.u32 8, %s21
      %p205 = scmp.lt.s32.totalorder %s19, 0
      %s206 = scalar_select %p205, %s19, 0
      %p207 = scmp.lt.s32.totalorder %s20, 0
      %s208 = scalar_select %p207, %s20, 0
      %p209 = scmp.lt.s32.totalorder %s204, 31
      %s210 = scalar_select %p209, %s204, 31
      %s211 = smul.addr %s208, 32
      %s212 = sadd.s32 %s210, %s211
      %s213 = smul.addr %s206, 32
      %s214 = sadd.s32 %s212, %s213
      %s215 = smul.addr %s214, 4
      %s216 = scalar_lea.vmem %s0, %s215
      %p217 = pneg %p58
      %p218 = pneg %p55
      %s219 = smul.u32 128, %s21
      %p220 = scmp.lt.s32.totalorder %s19, 0
      %s221 = scalar_select %p220, %s19, 0
      %p222 = scmp.lt.s32.totalorder %s219, 511
      %s223 = scalar_select %p222, %s219, 511
      %s224 = smul.addr %s223, 2
      %s225 = smul.addr %s221, 1024
      %s226 = sadd.s32 %s224, %s225
      %s227 = smul.addr %s226, 4
      %s228 = scalar_lea.vmem %s1, %s227
      %p229 = pneg %p86
      %p230 = pneg %p83
      %p231 = scmp.lt.s32.totalorder %s19, 0
      %s232 = scalar_select %p231, %s19, 0
      %s233 = smul.addr %s232, 2
      %s234 = scalar_lea.vmem %s2, %s233
      %p235 = pneg %p112
      %p236 = pneg %p109
      %p237 = pneg %p140
      %p238 = pneg %p137
      %p239 = scmp.lt.s32.totalorder %s19, 0
      %s240 = scalar_select %p239, %s19, 0
      %p241 = scmp.lt.s32.totalorder %s20, 0
      %s242 = scalar_select %p241, %s20, 0
      %s243 = smul.addr %s242, 2
      %s244 = smul.addr %s240, 2
      %s245 = sadd.s32 %s243, %s244
      %s246 = smul.addr %s245, 8
      %s247 = scalar_lea.vmem %s3, %s246
      %s248 = smul.u32 8, %s21
      %p249 = scmp.lt.s32.totalorder %s19, 0
      %s250 = scalar_select %p249, %s19, 0
      %p251 = scmp.lt.s32.totalorder %s20, 0
      %s252 = scalar_select %p251, %s20, 0
      %p253 = scmp.lt.s32.totalorder %s248, 31
      %s254 = scalar_select %p253, %s248, 31
      %s255 = smul.addr %s252, 32
      %s256 = sadd.s32 %s254, %s255
      %s257 = smul.addr %s250, 32
      %s258 = sadd.s32 %s256, %s257
      %s259 = smul.addr %s258, 4
      %s260 = scalar_lea.vmem %s0, %s259
      %s261 = smul.u32 8, %s21
      %s262 = smul.u32 128, %s21
      %p263 = scmp.lt.s32.totalorder %s19, 0
      %s264 = scalar_select %p263, %s19, 0
      %p265 = scmp.lt.s32.totalorder %s262, 511
      %s266 = scalar_select %p265, %s262, 511
      %s267 = smul.addr %s266, 2
      %s268 = smul.addr %s264, 1024
      %s269 = sadd.s32 %s267, %s268
      %s270 = smul.addr %s269, 4
      %s271 = scalar_lea.vmem %s1, %s270
      %s272 = smul.u32 128, %s21
      %p273 = scmp.lt.s32.totalorder %s19, 0
      %s274 = scalar_select %p273, %s19, 0
      %s275 = smul.addr %s274, 2
      %s276 = scalar_lea.vmem %s2, %s275
      %p277 = scmp.lt.s32.totalorder %s19, 0
      %s278 = scalar_select %p277, %s19, 0
      %p279 = scmp.lt.s32.totalorder %s20, 0
      %s280 = scalar_select %p279, %s20, 0
      %s281 = smul.addr %s280, 2
      %s282 = smul.addr %s278, 2
      %s283 = sadd.s32 %s281, %s282
      %s284 = smul.addr %s283, 8
      %s285 = scalar_lea.vmem %s3, %s284
      %p286 = scmp.eq.s32.totalorder %s21, 0
      // Predicated region
      $region33: #{unet_forward.14} parent=31 // pred_check
        %p287 = pneg %p286
      $region34: #{unet_forward.14} parent=31 // pred_check_branch
        %289 = sbr.rel (%p287) target = $region36
      $region35: #{unet_forward.14} parent=31 // pred_region
        %290 = vst [vmem:[#allocation2] sm:$0xff] 0.0
        %291 = vst [vmem:[#allocation2 + $0x8] sm:$0xff] 0.0
      $region36: #{unet_forward.14} parent=31 // pred_fallthru
        _
      %v292 = vld [vmem:[#allocation2] sm:$0xff]
      %v293 = vld [vmem:[#allocation2 + $0x8] sm:$0xff]
      %v294 = vld [vmem:[%s260] sm:$0xff]
      %v295 = vld [vmem:[%s260 + $0x8] sm:$0xff]
      %v296 = vld [vmem:[%s260 + $0x10] sm:$0xff]
      %v297 = vld [vmem:[%s260 + $0x18] sm:$0xff]
      %v298 = vld [vmem:[%s271] sm:$0xff]
      %v299 = vld [vmem:[%s271 + $0x8] sm:$0xff]
      %v300 = vld [vmem:[%s271 + $0x10] sm:$0xff]
      %v301 = vld [vmem:[%s271 + $0x18] sm:$0xff]
      %v302 = vld [vmem:[%s271 + $0x20] sm:$0xff]
      %v303 = vld [vmem:[%s271 + $0x28] sm:$0xff]
      %v304 = vld [vmem:[%s271 + $0x30] sm:$0xff]
      %v305 = vld [vmem:[%s271 + $0x38] sm:$0xff]
      %v306 = vld [vmem:[%s271 + $0x40] sm:$0xff]
      %v307 = vld [vmem:[%s271 + $0x48] sm:$0xff]
      %v308 = vld [vmem:[%s271 + $0x50] sm:$0xff]
      %v309 = vld [vmem:[%s271 + $0x58] sm:$0xff]
      %v310 = vld [vmem:[%s271 + $0x60] sm:$0xff]
      %v311 = vld [vmem:[%s271 + $0x68] sm:$0xff]
      %v312 = vld [vmem:[%s271 + $0x70] sm:$0xff]
      %v313 = vld [vmem:[%s271 + $0x78] sm:$0xff]
      %v314 = vld [vmem:[%s271 + $0x80] sm:$0xff]
      %v315 = vld [vmem:[%s271 + $0x88] sm:$0xff]
      %v316 = vld [vmem:[%s271 + $0x90] sm:$0xff]
      %v317 = vld [vmem:[%s271 + $0x98] sm:$0xff]
      %v318 = vld [vmem:[%s271 + $0xa0] sm:$0xff]
      %v319 = vld [vmem:[%s271 + $0xa8] sm:$0xff]
      %v320 = vld [vmem:[%s271 + $0xb0] sm:$0xff]
      %v321 = vld [vmem:[%s271 + $0xb8] sm:$0xff]
      %v322 = vld [vmem:[%s271 + $0xc0] sm:$0xff]
      %v323 = vld [vmem:[%s271 + $0xc8] sm:$0xff]
      %v324 = vld [vmem:[%s271 + $0xd0] sm:$0xff]
      %v325 = vld [vmem:[%s271 + $0xd8] sm:$0xff]
      %v326 = vld [vmem:[%s271 + $0xe0] sm:$0xff]
      %v327 = vld [vmem:[%s271 + $0xe8] sm:$0xff]
      %v328 = vld [vmem:[%s271 + $0xf0] sm:$0xff]
      %v329 = vld [vmem:[%s271 + $0xf8] sm:$0xff]
      %v330 = vld [vmem:[%s271 + $0x100] sm:$0xff]
      %v331 = vld [vmem:[%s271 + $0x108] sm:$0xff]
      %v332 = vld [vmem:[%s271 + $0x110] sm:$0xff]
      %v333 = vld [vmem:[%s271 + $0x118] sm:$0xff]
      %v334 = vld [vmem:[%s271 + $0x120] sm:$0xff]
      %v335 = vld [vmem:[%s271 + $0x128] sm:$0xff]
      %v336 = vld [vmem:[%s271 + $0x130] sm:$0xff]
      %v337 = vld [vmem:[%s271 + $0x138] sm:$0xff]
      %v338 = vld [vmem:[%s271 + $0x140] sm:$0xff]
      %v339 = vld [vmem:[%s271 + $0x148] sm:$0xff]
      %v340 = vld [vmem:[%s271 + $0x150] sm:$0xff]
      %v341 = vld [vmem:[%s271 + $0x158] sm:$0xff]
      %v342 = vld [vmem:[%s271 + $0x160] sm:$0xff]
      %v343 = vld [vmem:[%s271 + $0x168] sm:$0xff]
      %v344 = vld [vmem:[%s271 + $0x170] sm:$0xff]
      %v345 = vld [vmem:[%s271 + $0x178] sm:$0xff]
      %v346 = vld [vmem:[%s271 + $0x180] sm:$0xff]
      %v347 = vld [vmem:[%s271 + $0x188] sm:$0xff]
      %v348 = vld [vmem:[%s271 + $0x190] sm:$0xff]
      %v349 = vld [vmem:[%s271 + $0x198] sm:$0xff]
      %v350 = vld [vmem:[%s271 + $0x1a0] sm:$0xff]
      %v351 = vld [vmem:[%s271 + $0x1a8] sm:$0xff]
      %v352 = vld [vmem:[%s271 + $0x1b0] sm:$0xff]
      %v353 = vld [vmem:[%s271 + $0x1b8] sm:$0xff]
      %v354 = vld [vmem:[%s271 + $0x1c0] sm:$0xff]
      %v355 = vld [vmem:[%s271 + $0x1c8] sm:$0xff]
      %v356 = vld [vmem:[%s271 + $0x1d0] sm:$0xff]
      %v357 = vld [vmem:[%s271 + $0x1d8] sm:$0xff]
      %v358 = vld [vmem:[%s271 + $0x1e0] sm:$0xff]
      %v359 = vld [vmem:[%s271 + $0x1e8] sm:$0xff]
      %v360 = vld [vmem:[%s271 + $0x1f0] sm:$0xff]
      %v361 = vld [vmem:[%s271 + $0x1f8] sm:$0xff]
      %v362 = vld [vmem:[%s271 + $0x200] sm:$0xff]
      %v363 = vld [vmem:[%s271 + $0x208] sm:$0xff]
      %v364 = vld [vmem:[%s271 + $0x210] sm:$0xff]
      %v365 = vld [vmem:[%s271 + $0x218] sm:$0xff]
      %v366 = vld [vmem:[%s271 + $0x220] sm:$0xff]
      %v367 = vld [vmem:[%s271 + $0x228] sm:$0xff]
      %v368 = vld [vmem:[%s271 + $0x230] sm:$0xff]
      %v369 = vld [vmem:[%s271 + $0x238] sm:$0xff]
      %v370 = vld [vmem:[%s271 + $0x240] sm:$0xff]
      %v371 = vld [vmem:[%s271 + $0x248] sm:$0xff]
      %v372 = vld [vmem:[%s271 + $0x250] sm:$0xff]
      %v373 = vld [vmem:[%s271 + $0x258] sm:$0xff]
      %v374 = vld [vmem:[%s271 + $0x260] sm:$0xff]
      %v375 = vld [vmem:[%s271 + $0x268] sm:$0xff]
      %v376 = vld [vmem:[%s271 + $0x270] sm:$0xff]
      %v377 = vld [vmem:[%s271 + $0x278] sm:$0xff]
      %v378 = vld [vmem:[%s271 + $0x280] sm:$0xff]
      %v379 = vld [vmem:[%s271 + $0x288] sm:$0xff]
      %v380 = vld [vmem:[%s271 + $0x290] sm:$0xff]
      %v381 = vld [vmem:[%s271 + $0x298] sm:$0xff]
      %v382 = vld [vmem:[%s271 + $0x2a0] sm:$0xff]
      %v383 = vld [vmem:[%s271 + $0x2a8] sm:$0xff]
      %v384 = vld [vmem:[%s271 + $0x2b0] sm:$0xff]
      %v385 = vld [vmem:[%s271 + $0x2b8] sm:$0xff]
      %v386 = vld [vmem:[%s271 + $0x2c0] sm:$0xff]
      %v387 = vld [vmem:[%s271 + $0x2c8] sm:$0xff]
      %v388 = vld [vmem:[%s271 + $0x2d0] sm:$0xff]
      %v389 = vld [vmem:[%s271 + $0x2d8] sm:$0xff]
      %v390 = vld [vmem:[%s271 + $0x2e0] sm:$0xff]
      %v391 = vld [vmem:[%s271 + $0x2e8] sm:$0xff]
      %v392 = vld [vmem:[%s271 + $0x2f0] sm:$0xff]
      %v393 = vld [vmem:[%s271 + $0x2f8] sm:$0xff]
      %v394 = vld [vmem:[%s271 + $0x300] sm:$0xff]
      %v395 = vld [vmem:[%s271 + $0x308] sm:$0xff]
      %v396 = vld [vmem:[%s271 + $0x310] sm:$0xff]
      %v397 = vld [vmem:[%s271 + $0x318] sm:$0xff]
      %v398 = vld [vmem:[%s271 + $0x320] sm:$0xff]
      %v399 = vld [vmem:[%s271 + $0x328] sm:$0xff]
      %v400 = vld [vmem:[%s271 + $0x330] sm:$0xff]
      %v401 = vld [vmem:[%s271 + $0x338] sm:$0xff]
      %v402 = vld [vmem:[%s271 + $0x340] sm:$0xff]
      %v403 = vld [vmem:[%s271 + $0x348] sm:$0xff]
      %v404 = vld [vmem:[%s271 + $0x350] sm:$0xff]
      %v405 = vld [vmem:[%s271 + $0x358] sm:$0xff]
      %v406 = vld [vmem:[%s271 + $0x360] sm:$0xff]
      %v407 = vld [vmem:[%s271 + $0x368] sm:$0xff]
      %v408 = vld [vmem:[%s271 + $0x370] sm:$0xff]
      %v409 = vld [vmem:[%s271 + $0x378] sm:$0xff]
      %v410 = vld [vmem:[%s271 + $0x380] sm:$0xff]
      %v411 = vld [vmem:[%s271 + $0x388] sm:$0xff]
      %v412 = vld [vmem:[%s271 + $0x390] sm:$0xff]
      %v413 = vld [vmem:[%s271 + $0x398] sm:$0xff]
      %v414 = vld [vmem:[%s271 + $0x3a0] sm:$0xff]
      %v415 = vld [vmem:[%s271 + $0x3a8] sm:$0xff]
      %v416 = vld [vmem:[%s271 + $0x3b0] sm:$0xff]
      %v417 = vld [vmem:[%s271 + $0x3b8] sm:$0xff]
      %v418 = vld [vmem:[%s271 + $0x3c0] sm:$0xff]
      %v419 = vld [vmem:[%s271 + $0x3c8] sm:$0xff]
      %v420 = vld [vmem:[%s271 + $0x3d0] sm:$0xff]
      %v421 = vld [vmem:[%s271 + $0x3d8] sm:$0xff]
      %v422 = vld [vmem:[%s271 + $0x3e0] sm:$0xff]
      %v423 = vld [vmem:[%s271 + $0x3e8] sm:$0xff]
      %v424 = vld [vmem:[%s271 + $0x3f0] sm:$0xff]
      %v425 = vld [vmem:[%s271 + $0x3f8] sm:$0xff]
      %v430 = vunpack.c.l.b16 %v294
      %v431 = vunpack.c.h.b16 %v294
      %v432 = vunpack.c.l.b16 %v295
      %v433 = vunpack.c.h.b16 %v295
      %v434 = vunpack.c.l.b16 %v296
      %v435 = vunpack.c.h.b16 %v296
      %v436 = vunpack.c.l.b16 %v297
      %v437 = vunpack.c.h.b16 %v297
      %v438 = vpack.c.b16 %v430, %v430
      %v439 = vpack.c.b16 %v431, %v431
      %v440 = vpack.c.b16 %v432, %v432
      %v441 = vpack.c.b16 %v433, %v433
      %v442 = vpack.c.b16 %v434, %v434
      %v443 = vpack.c.b16 %v435, %v435
      %v444 = vpack.c.b16 %v436, %v436
      %v445 = vpack.c.b16 %v437, %v437
      %v582 = vunpack.c.l.b16 %v298
      %v583 = vunpack.c.h.b16 %v298
      %v584 = vunpack.c.l.b16 %v299
      %v585 = vunpack.c.h.b16 %v299
      %v586 = vunpack.c.l.b16 %v300
      %v587 = vunpack.c.h.b16 %v300
      %v588 = vunpack.c.l.b16 %v301
      %v589 = vunpack.c.h.b16 %v301
      %v590 = vunpack.c.l.b16 %v302
      %v591 = vunpack.c.h.b16 %v302
      %v592 = vunpack.c.l.b16 %v303
      %v593 = vunpack.c.h.b16 %v303
      %v594 = vunpack.c.l.b16 %v304
      %v595 = vunpack.c.h.b16 %v304
      %v596 = vunpack.c.l.b16 %v305
      %v597 = vunpack.c.h.b16 %v305
      %v598 = vunpack.c.l.b16 %v306
      %v599 = vunpack.c.h.b16 %v306
      %v600 = vunpack.c.l.b16 %v307
      %v601 = vunpack.c.h.b16 %v307
      %v602 = vunpack.c.l.b16 %v308
      %v603 = vunpack.c.h.b16 %v308
      %v604 = vunpack.c.l.b16 %v309
      %v605 = vunpack.c.h.b16 %v309
      %v606 = vunpack.c.l.b16 %v310
      %v607 = vunpack.c.h.b16 %v310
      %v608 = vunpack.c.l.b16 %v311
      %v609 = vunpack.c.h.b16 %v311
      %v610 = vunpack.c.l.b16 %v312
      %v611 = vunpack.c.h.b16 %v312
      %v612 = vunpack.c.l.b16 %v313
      %v613 = vunpack.c.h.b16 %v313
      %v614 = vunpack.c.l.b16 %v314
      %v615 = vunpack.c.h.b16 %v314
      %v616 = vunpack.c.l.b16 %v315
      %v617 = vunpack.c.h.b16 %v315
      %v618 = vunpack.c.l.b16 %v316
      %v619 = vunpack.c.h.b16 %v316
      %v620 = vunpack.c.l.b16 %v317
      %v621 = vunpack.c.h.b16 %v317
      %v622 = vunpack.c.l.b16 %v318
      %v623 = vunpack.c.h.b16 %v318
      %v624 = vunpack.c.l.b16 %v319
      %v625 = vunpack.c.h.b16 %v319
      %v626 = vunpack.c.l.b16 %v320
      %v627 = vunpack.c.h.b16 %v320
      %v628 = vunpack.c.l.b16 %v321
      %v629 = vunpack.c.h.b16 %v321
      %v630 = vunpack.c.l.b16 %v322
      %v631 = vunpack.c.h.b16 %v322
      %v632 = vunpack.c.l.b16 %v323
      %v633 = vunpack.c.h.b16 %v323
      %v634 = vunpack.c.l.b16 %v324
      %v635 = vunpack.c.h.b16 %v324
      %v636 = vunpack.c.l.b16 %v325
      %v637 = vunpack.c.h.b16 %v325
      %v638 = vunpack.c.l.b16 %v326
      %v639 = vunpack.c.h.b16 %v326
      %v640 = vunpack.c.l.b16 %v327
      %v641 = vunpack.c.h.b16 %v327
      %v642 = vunpack.c.l.b16 %v328
      %v643 = vunpack.c.h.b16 %v328
      %v644 = vunpack.c.l.b16 %v329
      %v645 = vunpack.c.h.b16 %v329
      %v646 = vunpack.c.l.b16 %v330
      %v647 = vunpack.c.h.b16 %v330
      %v648 = vunpack.c.l.b16 %v331
      %v649 = vunpack.c.h.b16 %v331
      %v650 = vunpack.c.l.b16 %v332
      %v651 = vunpack.c.h.b16 %v332
      %v652 = vunpack.c.l.b16 %v333
      %v653 = vunpack.c.h.b16 %v333
      %v654 = vunpack.c.l.b16 %v334
      %v655 = vunpack.c.h.b16 %v334
      %v656 = vunpack.c.l.b16 %v335
      %v657 = vunpack.c.h.b16 %v335
      %v658 = vunpack.c.l.b16 %v336
      %v659 = vunpack.c.h.b16 %v336
      %v660 = vunpack.c.l.b16 %v337
      %v661 = vunpack.c.h.b16 %v337
      %v662 = vunpack.c.l.b16 %v338
      %v663 = vunpack.c.h.b16 %v338
      %v664 = vunpack.c.l.b16 %v339
      %v665 = vunpack.c.h.b16 %v339
      %v666 = vunpack.c.l.b16 %v340
      %v667 = vunpack.c.h.b16 %v340
      %v668 = vunpack.c.l.b16 %v341
      %v669 = vunpack.c.h.b16 %v341
      %v670 = vunpack.c.l.b16 %v342
      %v671 = vunpack.c.h.b16 %v342
      %v672 = vunpack.c.l.b16 %v343
      %v673 = vunpack.c.h.b16 %v343
      %v674 = vunpack.c.l.b16 %v344
      %v675 = vunpack.c.h.b16 %v344
      %v676 = vunpack.c.l.b16 %v345
      %v677 = vunpack.c.h.b16 %v345
      %v678 = vunpack.c.l.b16 %v346
      %v679 = vunpack.c.h.b16 %v346
      %v680 = vunpack.c.l.b16 %v347
      %v681 = vunpack.c.h.b16 %v347
      %v682 = vunpack.c.l.b16 %v348
      %v683 = vunpack.c.h.b16 %v348
      %v684 = vunpack.c.l.b16 %v349
      %v685 = vunpack.c.h.b16 %v349
      %v686 = vunpack.c.l.b16 %v350
      %v687 = vunpack.c.h.b16 %v350
      %v688 = vunpack.c.l.b16 %v351
      %v689 = vunpack.c.h.b16 %v351
      %v690 = vunpack.c.l.b16 %v352
      %v691 = vunpack.c.h.b16 %v352
      %v692 = vunpack.c.l.b16 %v353
      %v693 = vunpack.c.h.b16 %v353
      %v694 = vunpack.c.l.b16 %v354
      %v695 = vunpack.c.h.b16 %v354
      %v696 = vunpack.c.l.b16 %v355
      %v697 = vunpack.c.h.b16 %v355
      %v698 = vunpack.c.l.b16 %v356
      %v699 = vunpack.c.h.b16 %v356
      %v700 = vunpack.c.l.b16 %v357
      %v701 = vunpack.c.h.b16 %v357
      %v702 = vunpack.c.l.b16 %v358
      %v703 = vunpack.c.h.b16 %v358
      %v704 = vunpack.c.l.b16 %v359
      %v705 = vunpack.c.h.b16 %v359
      %v706 = vunpack.c.l.b16 %v360
      %v707 = vunpack.c.h.b16 %v360
      %v708 = vunpack.c.l.b16 %v361
      %v709 = vunpack.c.h.b16 %v361
      %v710 = vunpack.c.l.b16 %v362
      %v711 = vunpack.c.h.b16 %v362
      %v712 = vunpack.c.l.b16 %v363
      %v713 = vunpack.c.h.b16 %v363
      %v714 = vunpack.c.l.b16 %v364
      %v715 = vunpack.c.h.b16 %v364
      %v716 = vunpack.c.l.b16 %v365
      %v717 = vunpack.c.h.b16 %v365
      %v718 = vunpack.c.l.b16 %v366
      %v719 = vunpack.c.h.b16 %v366
      %v720 = vunpack.c.l.b16 %v367
      %v721 = vunpack.c.h.b16 %v367
      %v722 = vunpack.c.l.b16 %v368
      %v723 = vunpack.c.h.b16 %v368
      %v724 = vunpack.c.l.b16 %v369
      %v725 = vunpack.c.h.b16 %v369
      %v726 = vunpack.c.l.b16 %v370
      %v727 = vunpack.c.h.b16 %v370
      %v728 = vunpack.c.l.b16 %v371
      %v729 = vunpack.c.h.b16 %v371
      %v730 = vunpack.c.l.b16 %v372
      %v731 = vunpack.c.h.b16 %v372
      %v732 = vunpack.c.l.b16 %v373
      %v733 = vunpack.c.h.b16 %v373
      %v734 = vunpack.c.l.b16 %v374
      %v735 = vunpack.c.h.b16 %v374
      %v736 = vunpack.c.l.b16 %v375
      %v737 = vunpack.c.h.b16 %v375
      %v738 = vunpack.c.l.b16 %v376
      %v739 = vunpack.c.h.b16 %v376
      %v740 = vunpack.c.l.b16 %v377
      %v741 = vunpack.c.h.b16 %v377
      %v742 = vunpack.c.l.b16 %v378
      %v743 = vunpack.c.h.b16 %v378
      %v744 = vunpack.c.l.b16 %v379
      %v745 = vunpack.c.h.b16 %v379
      %v746 = vunpack.c.l.b16 %v380
      %v747 = vunpack.c.h.b16 %v380
      %v748 = vunpack.c.l.b16 %v381
      %v749 = vunpack.c.h.b16 %v381
      %v750 = vunpack.c.l.b16 %v382
      %v751 = vunpack.c.h.b16 %v382
      %v752 = vunpack.c.l.b16 %v383
      %v753 = vunpack.c.h.b16 %v383
      %v754 = vunpack.c.l.b16 %v384
      %v755 = vunpack.c.h.b16 %v384
      %v756 = vunpack.c.l.b16 %v385
      %v757 = vunpack.c.h.b16 %v385
      %v758 = vunpack.c.l.b16 %v386
      %v759 = vunpack.c.h.b16 %v386
      %v760 = vunpack.c.l.b16 %v387
      %v761 = vunpack.c.h.b16 %v387
      %v762 = vunpack.c.l.b16 %v388
      %v763 = vunpack.c.h.b16 %v388
      %v764 = vunpack.c.l.b16 %v389
      %v765 = vunpack.c.h.b16 %v389
      %v766 = vunpack.c.l.b16 %v390
      %v767 = vunpack.c.h.b16 %v390
      %v768 = vunpack.c.l.b16 %v391
      %v769 = vunpack.c.h.b16 %v391
      %v770 = vunpack.c.l.b16 %v392
      %v771 = vunpack.c.h.b16 %v392
      %v772 = vunpack.c.l.b16 %v393
      %v773 = vunpack.c.h.b16 %v393
      %v774 = vunpack.c.l.b16 %v394
      %v775 = vunpack.c.h.b16 %v394
      %v776 = vunpack.c.l.b16 %v395
      %v777 = vunpack.c.h.b16 %v395
      %v778 = vunpack.c.l.b16 %v396
      %v779 = vunpack.c.h.b16 %v396
      %v780 = vunpack.c.l.b16 %v397
      %v781 = vunpack.c.h.b16 %v397
      %v782 = vunpack.c.l.b16 %v398
      %v783 = vunpack.c.h.b16 %v398
      %v784 = vunpack.c.l.b16 %v399
      %v785 = vunpack.c.h.b16 %v399
      %v786 = vunpack.c.l.b16 %v400
      %v787 = vunpack.c.h.b16 %v400
      %v788 = vunpack.c.l.b16 %v401
      %v789 = vunpack.c.h.b16 %v401
      %v790 = vunpack.c.l.b16 %v402
      %v791 = vunpack.c.h.b16 %v402
      %v792 = vunpack.c.l.b16 %v403
      %v793 = vunpack.c.h.b16 %v403
      %v794 = vunpack.c.l.b16 %v404
      %v795 = vunpack.c.h.b16 %v404
      %v796 = vunpack.c.l.b16 %v405
      %v797 = vunpack.c.h.b16 %v405
      %v798 = vunpack.c.l.b16 %v406
      %v799 = vunpack.c.h.b16 %v406
      %v800 = vunpack.c.l.b16 %v407
      %v801 = vunpack.c.h.b16 %v407
      %v802 = vunpack.c.l.b16 %v408
      %v803 = vunpack.c.h.b16 %v408
      %v804 = vunpack.c.l.b16 %v409
      %v805 = vunpack.c.h.b16 %v409
      %v806 = vunpack.c.l.b16 %v410
      %v807 = vunpack.c.h.b16 %v410
      %v808 = vunpack.c.l.b16 %v411
      %v809 = vunpack.c.h.b16 %v411
      %v810 = vunpack.c.l.b16 %v412
      %v811 = vunpack.c.h.b16 %v412
      %v812 = vunpack.c.l.b16 %v413
      %v813 = vunpack.c.h.b16 %v413
      %v814 = vunpack.c.l.b16 %v414
      %v815 = vunpack.c.h.b16 %v414
      %v816 = vunpack.c.l.b16 %v415
      %v817 = vunpack.c.h.b16 %v415
      %v818 = vunpack.c.l.b16 %v416
      %v819 = vunpack.c.h.b16 %v416
      %v820 = vunpack.c.l.b16 %v417
      %v821 = vunpack.c.h.b16 %v417
      %v822 = vunpack.c.l.b16 %v418
      %v823 = vunpack.c.h.b16 %v418
      %v824 = vunpack.c.l.b16 %v419
      %v825 = vunpack.c.h.b16 %v419
      %v826 = vunpack.c.l.b16 %v420
      %v827 = vunpack.c.h.b16 %v420
      %v828 = vunpack.c.l.b16 %v421
      %v829 = vunpack.c.h.b16 %v421
      %v830 = vunpack.c.l.b16 %v422
      %v831 = vunpack.c.h.b16 %v422
      %v832 = vunpack.c.l.b16 %v423
      %v833 = vunpack.c.h.b16 %v423
      %v834 = vunpack.c.l.b16 %v424
      %v835 = vunpack.c.h.b16 %v424
      %v836 = vunpack.c.l.b16 %v425
      %v837 = vunpack.c.h.b16 %v425
      %v838 = vpack.c.b16 %v584, %v582
      %v839 = vpack.c.b16 %v585, %v583
      %v840 = vpack.c.b16 %v588, %v586
      %v841 = vpack.c.b16 %v589, %v587
      %v842 = vpack.c.b16 %v592, %v590
      %v843 = vpack.c.b16 %v593, %v591
      %v844 = vpack.c.b16 %v596, %v594
      %v845 = vpack.c.b16 %v597, %v595
      %v846 = vpack.c.b16 %v600, %v598
      %v847 = vpack.c.b16 %v601, %v599
      %v848 = vpack.c.b16 %v604, %v602
      %v849 = vpack.c.b16 %v605, %v603
      %v850 = vpack.c.b16 %v608, %v606
      %v851 = vpack.c.b16 %v609, %v607
      %v852 = vpack.c.b16 %v612, %v610
      %v853 = vpack.c.b16 %v613, %v611
      %v854 = vpack.c.b16 %v616, %v614
      %v855 = vpack.c.b16 %v617, %v615
      %v856 = vpack.c.b16 %v620, %v618
      %v857 = vpack.c.b16 %v621, %v619
      %v858 = vpack.c.b16 %v624, %v622
      %v859 = vpack.c.b16 %v625, %v623
      %v860 = vpack.c.b16 %v628, %v626
      %v861 = vpack.c.b16 %v629, %v627
      %v862 = vpack.c.b16 %v632, %v630
      %v863 = vpack.c.b16 %v633, %v631
      %v864 = vpack.c.b16 %v636, %v634
      %v865 = vpack.c.b16 %v637, %v635
      %v866 = vpack.c.b16 %v640, %v638
      %v867 = vpack.c.b16 %v641, %v639
      %v868 = vpack.c.b16 %v644, %v642
      %v869 = vpack.c.b16 %v645, %v643
      %v870 = vpack.c.b16 %v648, %v646
      %v871 = vpack.c.b16 %v649, %v647
      %v872 = vpack.c.b16 %v652, %v650
      %v873 = vpack.c.b16 %v653, %v651
      %v874 = vpack.c.b16 %v656, %v654
      %v875 = vpack.c.b16 %v657, %v655
      %v876 = vpack.c.b16 %v660, %v658
      %v877 = vpack.c.b16 %v661, %v659
      %v878 = vpack.c.b16 %v664, %v662
      %v879 = vpack.c.b16 %v665, %v663
      %v880 = vpack.c.b16 %v668, %v666
      %v881 = vpack.c.b16 %v669, %v667
      %v882 = vpack.c.b16 %v672, %v670
      %v883 = vpack.c.b16 %v673, %v671
      %v884 = vpack.c.b16 %v676, %v674
      %v885 = vpack.c.b16 %v677, %v675
      %v886 = vpack.c.b16 %v680, %v678
      %v887 = vpack.c.b16 %v681, %v679
      %v888 = vpack.c.b16 %v684, %v682
      %v889 = vpack.c.b16 %v685, %v683
      %v890 = vpack.c.b16 %v688, %v686
      %v891 = vpack.c.b16 %v689, %v687
      %v892 = vpack.c.b16 %v692, %v690
      %v893 = vpack.c.b16 %v693, %v691
      %v894 = vpack.c.b16 %v696, %v694
      %v895 = vpack.c.b16 %v697, %v695
      %v896 = vpack.c.b16 %v700, %v698
      %v897 = vpack.c.b16 %v701, %v699
      %v898 = vpack.c.b16 %v704, %v702
      %v899 = vpack.c.b16 %v705, %v703
      %v900 = vpack.c.b16 %v708, %v706
      %v901 = vpack.c.b16 %v709, %v707
      %v902 = vpack.c.b16 %v712, %v710
      %v903 = vpack.c.b16 %v713, %v711
      %v904 = vpack.c.b16 %v716, %v714
      %v905 = vpack.c.b16 %v717, %v715
      %v906 = vpack.c.b16 %v720, %v718
      %v907 = vpack.c.b16 %v721, %v719
      %v908 = vpack.c.b16 %v724, %v722
      %v909 = vpack.c.b16 %v725, %v723
      %v910 = vpack.c.b16 %v728, %v726
      %v911 = vpack.c.b16 %v729, %v727
      %v912 = vpack.c.b16 %v732, %v730
      %v913 = vpack.c.b16 %v733, %v731
      %v914 = vpack.c.b16 %v736, %v734
      %v915 = vpack.c.b16 %v737, %v735
      %v916 = vpack.c.b16 %v740, %v738
      %v917 = vpack.c.b16 %v741, %v739
      %v918 = vpack.c.b16 %v744, %v742
      %v919 = vpack.c.b16 %v745, %v743
      %v920 = vpack.c.b16 %v748, %v746
      %v921 = vpack.c.b16 %v749, %v747
      %v922 = vpack.c.b16 %v752, %v750
      %v923 = vpack.c.b16 %v753, %v751
      %v924 = vpack.c.b16 %v756, %v754
      %v925 = vpack.c.b16 %v757, %v755
      %v926 = vpack.c.b16 %v760, %v758
      %v927 = vpack.c.b16 %v761, %v759
      %v928 = vpack.c.b16 %v764, %v762
      %v929 = vpack.c.b16 %v765, %v763
      %v930 = vpack.c.b16 %v768, %v766
      %v931 = vpack.c.b16 %v769, %v767
      %v932 = vpack.c.b16 %v772, %v770
      %v933 = vpack.c.b16 %v773, %v771
      %v934 = vpack.c.b16 %v776, %v774
      %v935 = vpack.c.b16 %v777, %v775
      %v936 = vpack.c.b16 %v780, %v778
      %v937 = vpack.c.b16 %v781, %v779
      %v938 = vpack.c.b16 %v784, %v782
      %v939 = vpack.c.b16 %v785, %v783
      %v940 = vpack.c.b16 %v788, %v786
      %v941 = vpack.c.b16 %v789, %v787
      %v942 = vpack.c.b16 %v792, %v790
      %v943 = vpack.c.b16 %v793, %v791
      %v944 = vpack.c.b16 %v796, %v794
      %v945 = vpack.c.b16 %v797, %v795
      %v946 = vpack.c.b16 %v800, %v798
      %v947 = vpack.c.b16 %v801, %v799
      %v948 = vpack.c.b16 %v804, %v802
      %v949 = vpack.c.b16 %v805, %v803
      %v950 = vpack.c.b16 %v808, %v806
      %v951 = vpack.c.b16 %v809, %v807
      %v952 = vpack.c.b16 %v812, %v810
      %v953 = vpack.c.b16 %v813, %v811
      %v954 = vpack.c.b16 %v816, %v814
      %v955 = vpack.c.b16 %v817, %v815
      %v956 = vpack.c.b16 %v820, %v818
      %v957 = vpack.c.b16 %v821, %v819
      %v958 = vpack.c.b16 %v824, %v822
      %v959 = vpack.c.b16 %v825, %v823
      %v960 = vpack.c.b16 %v828, %v826
      %v961 = vpack.c.b16 %v829, %v827
      %v962 = vpack.c.b16 %v832, %v830
      %v963 = vpack.c.b16 %v833, %v831
      %v964 = vpack.c.b16 %v836, %v834
      %v965 = vpack.c.b16 %v837, %v835
      %1094 = vmatprep.subr.bf16.mxu0 %v839
      %1095 = vmatpush1.bf16.msra.mxu0 %v838
      %1096 = vmatprep.subr.bf16.mxu0 %v841
      %1097 = vmatpush1.bf16.msra.mxu0 %v840
      %1098 = vmatprep.subr.bf16.mxu0 %v843
      %1099 = vmatpush1.bf16.msra.mxu0 %v842
      %1100 = vmatprep.subr.bf16.mxu0 %v845
      %1101 = vmatpush1.bf16.msra.mxu0 %v844
      %1102 = vmatprep.subr.bf16.mxu0 %v847
      %1103 = vmatpush1.bf16.msra.mxu0 %v846
      %1104 = vmatprep.subr.bf16.mxu0 %v849
      %1105 = vmatpush1.bf16.msra.mxu0 %v848
      %1106 = vmatprep.subr.bf16.mxu0 %v851
      %1107 = vmatpush1.bf16.msra.mxu0 %v850
      %1108 = vmatprep.subr.bf16.mxu0 %v853
      %1109 = vmatpush1.bf16.msra.mxu0 %v852
      %1110 = vmatprep.subr.bf16.mxu0 %v855
      %1111 = vmatpush1.bf16.msra.mxu0 %v854
      %1112 = vmatprep.subr.bf16.mxu0 %v857
      %1113 = vmatpush1.bf16.msra.mxu0 %v856
      %1114 = vmatprep.subr.bf16.mxu0 %v859
      %1115 = vmatpush1.bf16.msra.mxu0 %v858
      %1116 = vmatprep.subr.bf16.mxu0 %v861
      %1117 = vmatpush1.bf16.msra.mxu0 %v860
      %1118 = vmatprep.subr.bf16.mxu0 %v863
      %1119 = vmatpush1.bf16.msra.mxu0 %v862
      %1120 = vmatprep.subr.bf16.mxu0 %v865
      %1121 = vmatpush1.bf16.msra.mxu0 %v864
      %1122 = vmatprep.subr.bf16.mxu0 %v867
      %1123 = vmatpush1.bf16.msra.mxu0 %v866
      %1124 = vmatprep.subr.bf16.mxu0 %v869
      %1125 = vmatpush1.bf16.msra.mxu0 %v868
      %1126 = vmatprep.mubr.bf16.mxu0 %v439
      %1127 = vmatmul.mubr.bf16.gmra.mrb[0].mxu0 %v438
      %v1128 = vpop.f32.mrb[0].mxu0
      %v1129 = vadd.f32 0.0, %v1128
      %v1130 = vpop.f32.mrb[0].mxu0
      %v1131 = vadd.f32 0.0, %v1130
      %v1132 = vpop.f32.mrb[0].mxu0
      %v1133 = vpop.f32.mrb[0].mxu0
      %1134 = vdwg.mxu0
      %1135 = vmatprep.subr.bf16.mxu0 %v871
      %1136 = vmatpush1.bf16.msra.mxu0 %v870
      %1137 = vmatprep.subr.bf16.mxu0 %v873
      %1138 = vmatpush1.bf16.msra.mxu0 %v872
      %1139 = vmatprep.subr.bf16.mxu0 %v875
      %1140 = vmatpush1.bf16.msra.mxu0 %v874
      %1141 = vmatprep.subr.bf16.mxu0 %v877
      %1142 = vmatpush1.bf16.msra.mxu0 %v876
      %1143 = vmatprep.subr.bf16.mxu0 %v879
      %1144 = vmatpush1.bf16.msra.mxu0 %v878
      %1145 = vmatprep.subr.bf16.mxu0 %v881
      %1146 = vmatpush1.bf16.msra.mxu0 %v880
      %1147 = vmatprep.subr.bf16.mxu0 %v883
      %1148 = vmatpush1.bf16.msra.mxu0 %v882
      %1149 = vmatprep.subr.bf16.mxu0 %v885
      %1150 = vmatpush1.bf16.msra.mxu0 %v884
      %1151 = vmatprep.subr.bf16.mxu0 %v887
      %1152 = vmatpush1.bf16.msra.mxu0 %v886
      %1153 = vmatprep.subr.bf16.mxu0 %v889
      %1154 = vmatpush1.bf16.msra.mxu0 %v888
      %1155 = vmatprep.subr.bf16.mxu0 %v891
      %1156 = vmatpush1.bf16.msra.mxu0 %v890
      %1157 = vmatprep.subr.bf16.mxu0 %v893
      %1158 = vmatpush1.bf16.msra.mxu0 %v892
      %1159 = vmatprep.subr.bf16.mxu0 %v895
      %1160 = vmatpush1.bf16.msra.mxu0 %v894
      %1161 = vmatprep.subr.bf16.mxu0 %v897
      %1162 = vmatpush1.bf16.msra.mxu0 %v896
      %1163 = vmatprep.subr.bf16.mxu0 %v899
      %1164 = vmatpush1.bf16.msra.mxu0 %v898
      %1165 = vmatprep.subr.bf16.mxu0 %v901
      %1166 = vmatpush1.bf16.msra.mxu0 %v900
      %1167 = vmatprep.mubr.bf16.mxu0 %v441
      %1168 = vmatmul.mubr.bf16.gmra.mrb[0].mxu0 %v440
      %v1169 = vpop.f32.mrb[0].mxu0
      %v1170 = vadd.f32 %v1129, %v1169
      %v1171 = vpop.f32.mrb[0].mxu0
      %v1172 = vadd.f32 %v1131, %v1171
      %v1173 = vpop.f32.mrb[0].mxu0
      %v1174 = vpop.f32.mrb[0].mxu0
      %1175 = vdwg.mxu0
      %1176 = vmatprep.subr.bf16.mxu0 %v903
      %1177 = vmatpush1.bf16.msra.mxu0 %v902
      %1178 = vmatprep.subr.bf16.mxu0 %v905
      %1179 = vmatpush1.bf16.msra.mxu0 %v904
      %1180 = vmatprep.subr.bf16.mxu0 %v907
      %1181 = vmatpush1.bf16.msra.mxu0 %v906
      %1182 = vmatprep.subr.bf16.mxu0 %v909
      %1183 = vmatpush1.bf16.msra.mxu0 %v908
      %1184 = vmatprep.subr.bf16.mxu0 %v911
      %1185 = vmatpush1.bf16.msra.mxu0 %v910
      %1186 = vmatprep.subr.bf16.mxu0 %v913
      %1187 = vmatpush1.bf16.msra.mxu0 %v912
      %1188 = vmatprep.subr.bf16.mxu0 %v915
      %1189 = vmatpush1.bf16.msra.mxu0 %v914
      %1190 = vmatprep.subr.bf16.mxu0 %v917
      %1191 = vmatpush1.bf16.msra.mxu0 %v916
      %1192 = vmatprep.subr.bf16.mxu0 %v919
      %1193 = vmatpush1.bf16.msra.mxu0 %v918
      %1194 = vmatprep.subr.bf16.mxu0 %v921
      %1195 = vmatpush1.bf16.msra.mxu0 %v920
      %1196 = vmatprep.subr.bf16.mxu0 %v923
      %1197 = vmatpush1.bf16.msra.mxu0 %v922
      %1198 = vmatprep.subr.bf16.mxu0 %v925
      %1199 = vmatpush1.bf16.msra.mxu0 %v924
      %1200 = vmatprep.subr.bf16.mxu0 %v927
      %1201 = vmatpush1.bf16.msra.mxu0 %v926
      %1202 = vmatprep.subr.bf16.mxu0 %v929
      %1203 = vmatpush1.bf16.msra.mxu0 %v928
      %1204 = vmatprep.subr.bf16.mxu0 %v931
      %1205 = vmatpush1.bf16.msra.mxu0 %v930
      %1206 = vmatprep.subr.bf16.mxu0 %v933
      %1207 = vmatpush1.bf16.msra.mxu0 %v932
      %1208 = vmatprep.mubr.bf16.mxu0 %v443
      %1209 = vmatmul.mubr.bf16.gmra.mrb[0].mxu0 %v442
      %v1210 = vpop.f32.mrb[0].mxu0
      %v1211 = vadd.f32 %v1170, %v1210
      %v1212 = vpop.f32.mrb[0].mxu0
      %v1213 = vadd.f32 %v1172, %v1212
      %v1214 = vpop.f32.mrb[0].mxu0
      %v1215 = vpop.f32.mrb[0].mxu0
      %1216 = vdwg.mxu0
      %1217 = vmatprep.subr.bf16.mxu0 %v935
      %1218 = vmatpush1.bf16.msra.mxu0 %v934
      %1219 = vmatprep.subr.bf16.mxu0 %v937
      %1220 = vmatpush1.bf16.msra.mxu0 %v936
      %1221 = vmatprep.subr.bf16.mxu0 %v939
      %1222 = vmatpush1.bf16.msra.mxu0 %v938
      %1223 = vmatprep.subr.bf16.mxu0 %v941
      %1224 = vmatpush1.bf16.msra.mxu0 %v940
      %1225 = vmatprep.subr.bf16.mxu0 %v943
      %1226 = vmatpush1.bf16.msra.mxu0 %v942
      %1227 = vmatprep.subr.bf16.mxu0 %v945
      %1228 = vmatpush1.bf16.msra.mxu0 %v944
      %1229 = vmatprep.subr.bf16.mxu0 %v947
      %1230 = vmatpush1.bf16.msra.mxu0 %v946
      %1231 = vmatprep.subr.bf16.mxu0 %v949
      %1232 = vmatpush1.bf16.msra.mxu0 %v948
      %1233 = vmatprep.subr.bf16.mxu0 %v951
      %1234 = vmatpush1.bf16.msra.mxu0 %v950
      %1235 = vmatprep.subr.bf16.mxu0 %v953
      %1236 = vmatpush1.bf16.msra.mxu0 %v952
      %1237 = vmatprep.subr.bf16.mxu0 %v955
      %1238 = vmatpush1.bf16.msra.mxu0 %v954
      %1239 = vmatprep.subr.bf16.mxu0 %v957
      %1240 = vmatpush1.bf16.msra.mxu0 %v956
      %1241 = vmatprep.subr.bf16.mxu0 %v959
      %1242 = vmatpush1.bf16.msra.mxu0 %v958
      %1243 = vmatprep.subr.bf16.mxu0 %v961
      %1244 = vmatpush1.bf16.msra.mxu0 %v960
      %1245 = vmatprep.subr.bf16.mxu0 %v963
      %1246 = vmatpush1.bf16.msra.mxu0 %v962
      %1247 = vmatprep.subr.bf16.mxu0 %v965
      %1248 = vmatpush1.bf16.msra.mxu0 %v964
      %1249 = vmatprep.mubr.bf16.mxu0 %v445
      %1250 = vmatmul.mubr.bf16.gmra.mrb[0].mxu0 %v444
      %v1251 = vpop.f32.mrb[0].mxu0
      %v1252 = vadd.f32 %v1211, %v1251
      %v1253 = vpop.f32.mrb[0].mxu0
      %v1254 = vadd.f32 %v1213, %v1253
      %v1255 = vpop.f32.mrb[0].mxu0
      %v1256 = vpop.f32.mrb[0].mxu0
      %1257 = vdwg.mxu0
      %v1258 = vadd.f32 %v292, %v1252
      %v1259 = vadd.f32 %v293, %v1254
      %1260 = vst [vmem:[#allocation2] sm:$0xff] %v1258
      %1261 = vst [vmem:[#allocation2 + $0x8] sm:$0xff] %v1259
      %p1262 = scmp.eq.s32.totalorder %s21, 3
      // Predicated region
      $region37: #{unet_forward.14} parent=31 // pred_check
        %p1263 = pneg %p1262
      $region38: #{unet_forward.14} parent=31 // pred_check_branch
        %1265 = sbr.rel (%p1263) target = $region40
      $region39: #{unet_forward.14} parent=31 // pred_region
        %v1266 = vld [vmem:[#allocation2] sm:$0xff]
        %v1267 = vld [vmem:[#allocation2 + $0x8] sm:$0xff]
        %v1268 = vld [vmem:[%s276] sm:$0x3]
        %v1270 = vlaneseq
        %v1271 = vshrl.u32 %v1270, 7
        %v1272 = vsub.s32 0, %v1271
        %v1273 = vrot.slane %v1268, %v1272
        %v1274 = vlaneseq
        %v1275 = vshrl.u32 %v1274, 7
        %v1276 = vsub.s32 1, %v1275
        %v1277 = vrot.slane %v1268, %v1276
        %v1280 = vadd.f32 %v1266, %v1273
        %v1281 = vadd.f32 %v1267, %v1277
        %vm1282 = vcmp.gt.f32.partialorder %v1280, 0.0
        %vm1283 = vcmp.gt.f32.partialorder %v1281, 0.0
        %v1284 = vmul.f32 %v1280, 0.2
        %v1285 = vmul.f32 %v1281, 0.2
        %v1286 = vsel %vm1282, %v1280, %v1284
        %v1287 = vsel %vm1283, %v1281, %v1285
        %1288 = vst [vmem:[%s285] sm:$0xff] %v1286
        %1289 = vst [vmem:[%s285 + $0x8] sm:$0xff] %v1287
      $region40: #{unet_forward.14} parent=31 // pred_fallthru
        _
      %p1290 = scmp.lt.s32.totalorder %s19, 0
      %s1291 = scalar_select %p1290, %s19, 0
      %p1292 = scmp.lt.s32.totalorder %s20, 0
      %s1293 = scalar_select %p1292, %s20, 0
      %s1294 = smul.addr %s1293, 2
      %s1295 = smul.addr %s1291, 2
      %s1296 = sadd.s32 %s1294, %s1295
      %s1297 = smul.addr %s1296, 8
      %s1298 = scalar_lea.vmem %s3, %s1297
      // Predicated region
      $region41: #{unet_forward.14} parent=31 // pred_check
        %p1299 = pneg %p137
      $region42: #{unet_forward.14} parent=31 // pred_check_branch
        %1301 = sbr.rel (%p1299) target = $region44
      $region43: #{unet_forward.14} parent=31 // pred_region
        _
      $region44: #{unet_forward.14} parent=31 // pred_fallthru
        _
      // Predicated region
      $region45: #{unet_forward.14} parent=31 // pred_check
        %p1302 = pneg %p137
      $region46: #{unet_forward.14} parent=31 // pred_check_branch
        %1304 = sbr.rel (%p1302) target = $region48
      $region47: #{unet_forward.14} parent=31 // pred_region
        %p1305 = scmp.lt.s32.totalorder %s19, 0
        %s1306 = scalar_select %p1305, %s19, 0
        %p1307 = scmp.lt.s32.totalorder %s20, 0
        %s1308 = scalar_select %p1307, %s20, 0
        %s1309 = smul.addr %s1308, 2
        %s1310 = smul.addr %s1306, 2
        %s1311 = sadd.s32 %s1309, %s1310
        %s1312 = smul.addr %s1311, 8
        %s1313 = scalar_lea.vmem %s3, %s1312
      $region48: #{unet_forward.14} parent=31 // pred_fallthru
        _
    $region32: #{unet_forward.14} parent=5 // pred_fallthru
      _
    %p1314 = scmp.le.s32.totalorder 2, %s9
    // Predicated region
    $region49: #{unet_forward.14} parent=5 // pred_check
      %p1315 = pneg %p1314
    $region50: #{unet_forward.14} parent=5 // pred_check_branch
      %1317 = sbr.rel (%p1315) target = $region52
    $region51: #{unet_forward.14} parent=5 // pred_region
      %s1318 = ssub.s32 %s9, 2
    $region52: #{unet_forward.14} parent=5 // pred_fallthru
      _
  $region6: #{unet_forward.14} parent=0 // loop_footer
    %s13 = sadd.s32 1, %s9
  $region7: #{unet_forward.14} parent=0 // loop_footer_branch
    %8 = sbr.rel target = $region3
  $region8: #{unet_forward.14} parent=0 // loop_exit
    _

// kernel: unet_forward.15
$region0: #{unet_forward.15}
  #allocation0 [shape = 'u32[]', space=smem, size = 0x4, offset = 0x4, fixed_abs, tag = 'smem constant byte address 0x4 - core index']
  #allocation1 [shape = 'u32[144,128]{1,0:T(1,128)}', space=vmem, size = 0x12000, scoped, tag = 'internal scratch']
  #allocation2 [shape = 'f32[8,256]{1,0:T(8,128)}', space=vmem, size = 0x2000, scoped, tag = 'scratch operand']
  %s0 = inlined_call_operand.vmem [shape: bf16[4,8,1024], index: 0, kind: input, shape index: {}]
  %s1 = inlined_call_operand.vmem [shape: bf16[4,1024,256], index: 1, kind: input, shape index: {}]
  %s2 = inlined_call_operand.vmem [shape: f32[4,1,256], index: 2, kind: input, shape index: {}]
  %s3 = inlined_call_operand.vmem [shape: f32[4,8,256], index: 3, kind: output, shape index: {}]
  %s4 = sld [smem:[#allocation0]]
  $region53: #{unet_forward.15} parent=0
    _
  %s6 = ssub.s32 1, %s4
  %s7 = scalar_select 0, %s6, %s4
  loop: start=0, step=1, limit=10
  $region2: #{unet_forward.15} parent=0 // loop_pre_header
    _
  $region3: #{unet_forward.15} parent=0 // loop_header
    %s9 = sphi 0, %s13
    %p10 = scmp.ge.s32.totalorder %s9, 10
    %s16 = sphi 0, %s35
    %s17 = sphi 0, %s31
    %s18 = sphi 0, %s27
    %s19 = sphi 0, %s16
    %s20 = sphi 0, %s17
    %s21 = sphi 0, %s18
    %s22 = sphi 0, %s19
    %s23 = sphi 0, %s20
    %s24 = sphi 0, %s21
    %s42 = sphi 0, %s44
    %s45 = sphi 0, %s42
    %s46 = sphi 0, %s45
    %s62 = sphi 0, %s46
    %s70 = sphi 0, %s72
    %s73 = sphi 0, %s70
    %s74 = sphi 0, %s73
    %s90 = sphi 0, %s74
    %s96 = sphi 0, %s98
    %s99 = sphi 0, %s96
    %s100 = sphi 0, %s99
    %s116 = sphi 0, %s100
    %s124 = sphi 0, %s126
    %s127 = sphi 0, %s124
    %s128 = sphi 0, %s127
    %s144 = sphi 0, %s128
  $region4: #{unet_forward.15} parent=0 // loop_header_branch
    %12 = sbr.rel (%p10) target = $region8
  $region5: #{unet_forward.15} parent=0 // loop_body
    %s14 = ssub.s32 %s9, 1
    %s15 = ssub.s32 %s9, 2
    %s25 = sadd.s32 1, %s18
    %p26 = scmp.ge.s32.totalorder %s25, 2
    %s27 = scalar_select %p26, 0, %s25
    %s28 = sadd.s32 1, %s17
    %s29 = scalar_select %p26, %s28, %s17
    %p30 = scmp.ge.s32.totalorder %s29, 1
    %s31 = scalar_select %p30, 0, %s29
    %s32 = sadd.s32 1, %s16
    %s33 = scalar_select %p30, %s32, %s16
    %p34 = scmp.ge.s32.totalorder %s33, 4
    %s35 = scalar_select %p34, 0, %s33
    %s36 = ssub.s32 %s16, %s35
    %s37 = ssub.s32 %s17, %s31
    %s38 = sor.u32 %s36, %s37
    %s39 = ssub.s32 %s18, %s27
    %s40 = sor.u32 %s38, %s39
    %p41 = scmp.eq.s32.totalorder %s40, 0
    %s43 = sadd.s32 %s42, 1
    %s44 = scalar_select %p41, %s42, %s43
    %p47 = pneg %p41
    %p48 = scmp.eq.s32.totalorder %s9, 7
    %p49 = por %p47, %p48
    %p50 = scmp.ne.s32.totalorder %s42, %s45
    %p51 = scmp.eq.s32.totalorder %s9, 0
    %p52 = por %p50, %p51
    %p53 = scmp.ne.s32.totalorder %s42, %s45
    %p54 = scmp.eq.s32.totalorder %s14, 7
    %p55 = por %p53, %p54
    %p56 = scmp.ne.s32.totalorder %s45, %s46
    %p57 = scmp.eq.s32.totalorder %s14, 0
    %p58 = por %p56, %p57
    %p59 = scmp.ne.s32.totalorder %s45, %s46
    %p60 = scmp.eq.s32.totalorder %s15, 7
    %p61 = por %p59, %p60
    %p63 = scmp.ne.s32.totalorder %s46, %s62
    %p64 = scmp.eq.s32.totalorder %s15, 0
    %p65 = por %p63, %p64
    %s66 = ssub.s32 %s16, %s35
    %s67 = ssub.s32 %s18, %s27
    %s68 = sor.u32 %s66, %s67
    %p69 = scmp.eq.s32.totalorder %s68, 0
    %s71 = sadd.s32 %s70, 1
    %s72 = scalar_select %p69, %s70, %s71
    %p75 = pneg %p69
    %p76 = scmp.eq.s32.totalorder %s9, 7
    %p77 = por %p75, %p76
    %p78 = scmp.ne.s32.totalorder %s70, %s73
    %p79 = scmp.eq.s32.totalorder %s9, 0
    %p80 = por %p78, %p79
    %p81 = scmp.ne.s32.totalorder %s70, %s73
    %p82 = scmp.eq.s32.totalorder %s14, 7
    %p83 = por %p81, %p82
    %p84 = scmp.ne.s32.totalorder %s73, %s74
    %p85 = scmp.eq.s32.totalorder %s14, 0
    %p86 = por %p84, %p85
    %p87 = scmp.ne.s32.totalorder %s73, %s74
    %p88 = scmp.eq.s32.totalorder %s15, 7
    %p89 = por %p87, %p88
    %p91 = scmp.ne.s32.totalorder %s74, %s90
    %p92 = scmp.eq.s32.totalorder %s15, 0
    %p93 = por %p91, %p92
    %s94 = ssub.s32 %s16, %s35
    %p95 = scmp.eq.s32.totalorder %s94, 0
    %s97 = sadd.s32 %s96, 1
    %s98 = scalar_select %p95, %s96, %s97
    %p101 = pneg %p95
    %p102 = scmp.eq.s32.totalorder %s9, 7
    %p103 = por %p101, %p102
    %p104 = scmp.ne.s32.totalorder %s96, %s99
    %p105 = scmp.eq.s32.totalorder %s9, 0
    %p106 = por %p104, %p105
    %p107 = scmp.ne.s32.totalorder %s96, %s99
    %p108 = scmp.eq.s32.totalorder %s14, 7
    %p109 = por %p107, %p108
    %p110 = scmp.ne.s32.totalorder %s99, %s100
    %p111 = scmp.eq.s32.totalorder %s14, 0
    %p112 = por %p110, %p111
    %p113 = scmp.ne.s32.totalorder %s99, %s100
    %p114 = scmp.eq.s32.totalorder %s15, 7
    %p115 = por %p113, %p114
    %p117 = scmp.ne.s32.totalorder %s100, %s116
    %p118 = scmp.eq.s32.totalorder %s15, 0
    %p119 = por %p117, %p118
    %s120 = ssub.s32 %s16, %s35
    %s121 = ssub.s32 %s17, %s31
    %s122 = sor.u32 %s120, %s121
    %p123 = scmp.eq.s32.totalorder %s122, 0
    %s125 = sadd.s32 %s124, 1
    %s126 = scalar_select %p123, %s124, %s125
    %p129 = pneg %p123
    %p130 = scmp.eq.s32.totalorder %s9, 7
    %p131 = por %p129, %p130
    %p132 = scmp.ne.s32.totalorder %s124, %s127
    %p133 = scmp.eq.s32.totalorder %s9, 0
    %p134 = por %p132, %p133
    %p135 = scmp.ne.s32.totalorder %s124, %s127
    %p136 = scmp.eq.s32.totalorder %s14, 7
    %p137 = por %p135, %p136
    %p138 = scmp.ne.s32.totalorder %s127, %s128
    %p139 = scmp.eq.s32.totalorder %s14, 0
    %p140 = por %p138, %p139
    %p141 = scmp.ne.s32.totalorder %s127, %s128
    %p142 = scmp.eq.s32.totalorder %s15, 7
    %p143 = por %p141, %p142
    %p145 = scmp.ne.s32.totalorder %s128, %s144
    %p146 = scmp.eq.s32.totalorder %s15, 0
    %p147 = por %p145, %p146
    %p148 = scmp.le.s32.totalorder 1, %s9
    %p149 = scmp.lt.s32.totalorder %s9, 9
    %p150 = pnand %p148, %p149
    %p151 = pneg %p150
    // Predicated region
    $region9: #{unet_forward.15} parent=5 // pred_check
      _
    $region10: #{unet_forward.15} parent=5 // pred_check_branch
      %153 = sbr.rel (%p150) target = $region12
    $region11: #{unet_forward.15} parent=5 // pred_region
      %s154 = ssub.s32 %s9, 1
    $region12: #{unet_forward.15} parent=5 // pred_fallthru
      _
    %p155 = scmp.lt.s32.totalorder %s9, 8
    // Predicated region
    $region13: #{unet_forward.15} parent=5 // pred_check
      %p156 = pneg %p155
    $region14: #{unet_forward.15} parent=5 // pred_check_branch
      %158 = sbr.rel (%p156) target = $region16
    $region15: #{unet_forward.15} parent=5 // pred_region
      // Predicated region
      $region17: #{unet_forward.15} parent=15 // pred_check
        %p159 = pneg %p52
      $region18: #{unet_forward.15} parent=15 // pred_check_branch
        %161 = sbr.rel (%p159) target = $region20
      $region19: #{unet_forward.15} parent=15 // pred_region
        %s162 = smul.u32 4, %s18
        %p163 = scmp.lt.s32.totalorder %s16, 3
        %s164 = scalar_select %p163, %s16, 3
        %p165 = scmp.lt.s32.totalorder %s17, 0
        %s166 = scalar_select %p165, %s17, 0
        %p167 = scmp.lt.s32.totalorder %s162, 7
        %s168 = scalar_select %p167, %s162, 7
        %s169 = smul.addr %s166, 8
        %s170 = sadd.s32 %s168, %s169
        %s171 = smul.addr %s164, 8
        %s172 = sadd.s32 %s170, %s171
        %s173 = smul.addr %s172, 4
        %s174 = scalar_lea.vmem %s0, %s173
        %s175 = smul.u32 4, %s18
      $region20: #{unet_forward.15} parent=15 // pred_fallthru
        _
      // Predicated region
      $region21: #{unet_forward.15} parent=15 // pred_check
        %p176 = pneg %p80
      $region22: #{unet_forward.15} parent=15 // pred_check_branch
        %178 = sbr.rel (%p176) target = $region24
      $region23: #{unet_forward.15} parent=15 // pred_region
        %s179 = smul.u32 64, %s18
        %p180 = scmp.lt.s32.totalorder %s16, 3
        %s181 = scalar_select %p180, %s16, 3
        %p182 = scmp.lt.s32.totalorder %s179, 127
        %s183 = scalar_select %p182, %s179, 127
        %s184 = smul.addr %s183, 2
        %s185 = smul.addr %s181, 256
        %s186 = sadd.s32 %s184, %s185
        %s187 = smul.addr %s186, 4
        %s188 = scalar_lea.vmem %s1, %s187
        %s189 = smul.u32 64, %s18
      $region24: #{unet_forward.15} parent=15 // pred_fallthru
        _
      // Predicated region
      $region25: #{unet_forward.15} parent=15 // pred_check
        %p190 = pneg %p106
      $region26: #{unet_forward.15} parent=15 // pred_check_branch
        %192 = sbr.rel (%p190) target = $region28
      $region27: #{unet_forward.15} parent=15 // pred_region
        %p193 = scmp.lt.s32.totalorder %s16, 3
        %s194 = scalar_select %p193, %s16, 3
        %s195 = smul.addr %s194, 2
        %s196 = scalar_lea.vmem %s2, %s195
      $region28: #{unet_forward.15} parent=15 // pred_fallthru
        _
    $region16: #{unet_forward.15} parent=5 // pred_fallthru
      _
    %p197 = scmp.le.s32.totalorder 1, %s9
    %p198 = scmp.lt.s32.totalorder %s9, 9
    %p199 = pnand %p197, %p198
    %p200 = pneg %p199
    // Predicated region
    $region29: #{unet_forward.15} parent=5 // pred_check
      _
    $region30: #{unet_forward.15} parent=5 // pred_check_branch
      %202 = sbr.rel (%p199) target = $region32
    $region31: #{unet_forward.15} parent=5 // pred_region
      %s203 = ssub.s32 %s9, 1
      %s204 = smul.u32 4, %s21
      %p205 = scmp.lt.s32.totalorder %s19, 3
      %s206 = scalar_select %p205, %s19, 3
      %p207 = scmp.lt.s32.totalorder %s20, 0
      %s208 = scalar_select %p207, %s20, 0
      %p209 = scmp.lt.s32.totalorder %s204, 7
      %s210 = scalar_select %p209, %s204, 7
      %s211 = smul.addr %s208, 8
      %s212 = sadd.s32 %s210, %s211
      %s213 = smul.addr %s206, 8
      %s214 = sadd.s32 %s212, %s213
      %s215 = smul.addr %s214, 4
      %s216 = scalar_lea.vmem %s0, %s215
      %p217 = pneg %p58
      %p218 = pneg %p55
      %s219 = smul.u32 64, %s21
      %p220 = scmp.lt.s32.totalorder %s19, 3
      %s221 = scalar_select %p220, %s19, 3
      %p222 = scmp.lt.s32.totalorder %s219, 127
      %s223 = scalar_select %p222, %s219, 127
      %s224 = smul.addr %s223, 2
      %s225 = smul.addr %s221, 256
      %s226 = sadd.s32 %s224, %s225
      %s227 = smul.addr %s226, 4
      %s228 = scalar_lea.vmem %s1, %s227
      %p229 = pneg %p86
      %p230 = pneg %p83
      %p231 = scmp.lt.s32.totalorder %s19, 3
      %s232 = scalar_select %p231, %s19, 3
      %s233 = smul.addr %s232, 2
      %s234 = scalar_lea.vmem %s2, %s233
      %p235 = pneg %p112
      %p236 = pneg %p109
      %p237 = pneg %p140
      %p238 = pneg %p137
      %p239 = scmp.lt.s32.totalorder %s19, 3
      %s240 = scalar_select %p239, %s19, 3
      %p241 = scmp.lt.s32.totalorder %s20, 0
      %s242 = scalar_select %p241, %s20, 0
      %s243 = smul.addr %s242, 2
      %s244 = smul.addr %s240, 2
      %s245 = sadd.s32 %s243, %s244
      %s246 = smul.addr %s245, 8
      %s247 = scalar_lea.vmem %s3, %s246
      %s248 = smul.u32 4, %s21
      %p249 = scmp.lt.s32.totalorder %s19, 3
      %s250 = scalar_select %p249, %s19, 3
      %p251 = scmp.lt.s32.totalorder %s20, 0
      %s252 = scalar_select %p251, %s20, 0
      %p253 = scmp.lt.s32.totalorder %s248, 7
      %s254 = scalar_select %p253, %s248, 7
      %s255 = smul.addr %s252, 8
      %s256 = sadd.s32 %s254, %s255
      %s257 = smul.addr %s250, 8
      %s258 = sadd.s32 %s256, %s257
      %s259 = smul.addr %s258, 4
      %s260 = scalar_lea.vmem %s0, %s259
      %s261 = smul.u32 4, %s21
      %s262 = smul.u32 64, %s21
      %p263 = scmp.lt.s32.totalorder %s19, 3
      %s264 = scalar_select %p263, %s19, 3
      %p265 = scmp.lt.s32.totalorder %s262, 127
      %s266 = scalar_select %p265, %s262, 127
      %s267 = smul.addr %s266, 2
      %s268 = smul.addr %s264, 256
      %s269 = sadd.s32 %s267, %s268
      %s270 = smul.addr %s269, 4
      %s271 = scalar_lea.vmem %s1, %s270
      %s272 = smul.u32 64, %s21
      %p273 = scmp.lt.s32.totalorder %s19, 3
      %s274 = scalar_select %p273, %s19, 3
      %s275 = smul.addr %s274, 2
      %s276 = scalar_lea.vmem %s2, %s275
      %p277 = scmp.lt.s32.totalorder %s19, 3
      %s278 = scalar_select %p277, %s19, 3
      %p279 = scmp.lt.s32.totalorder %s20, 0
      %s280 = scalar_select %p279, %s20, 0
      %s281 = smul.addr %s280, 2
      %s282 = smul.addr %s278, 2
      %s283 = sadd.s32 %s281, %s282
      %s284 = smul.addr %s283, 8
      %s285 = scalar_lea.vmem %s3, %s284
      %p286 = scmp.eq.s32.totalorder %s21, 0
      // Predicated region
      $region33: #{unet_forward.15} parent=31 // pred_check
        %p287 = pneg %p286
      $region34: #{unet_forward.15} parent=31 // pred_check_branch
        %289 = sbr.rel (%p287) target = $region36
      $region35: #{unet_forward.15} parent=31 // pred_region
        %290 = vst [vmem:[#allocation2] sm:$0xff] 0.0
        %291 = vst [vmem:[#allocation2 + $0x8] sm:$0xff] 0.0
      $region36: #{unet_forward.15} parent=31 // pred_fallthru
        _
      %v292 = vld [vmem:[#allocation2] sm:$0xff]
      %v293 = vld [vmem:[#allocation2 + $0x8] sm:$0xff]
      %v294 = vld [vmem:[%s260] sm:$0xff]
      %v295 = vld [vmem:[%s260 + $0x8] sm:$0xff]
      %v296 = vld [vmem:[%s271] sm:$0xff]
      %v297 = vld [vmem:[%s271 + $0x8] sm:$0xff]
      %v298 = vld [vmem:[%s271 + $0x10] sm:$0xff]
      %v299 = vld [vmem:[%s271 + $0x18] sm:$0xff]
      %v300 = vld [vmem:[%s271 + $0x20] sm:$0xff]
      %v301 = vld [vmem:[%s271 + $0x28] sm:$0xff]
      %v302 = vld [vmem:[%s271 + $0x30] sm:$0xff]
      %v303 = vld [vmem:[%s271 + $0x38] sm:$0xff]
      %v304 = vld [vmem:[%s271 + $0x40] sm:$0xff]
      %v305 = vld [vmem:[%s271 + $0x48] sm:$0xff]
      %v306 = vld [vmem:[%s271 + $0x50] sm:$0xff]
      %v307 = vld [vmem:[%s271 + $0x58] sm:$0xff]
      %v308 = vld [vmem:[%s271 + $0x60] sm:$0xff]
      %v309 = vld [vmem:[%s271 + $0x68] sm:$0xff]
      %v310 = vld [vmem:[%s271 + $0x70] sm:$0xff]
      %v311 = vld [vmem:[%s271 + $0x78] sm:$0xff]
      %v312 = vld [vmem:[%s271 + $0x80] sm:$0xff]
      %v313 = vld [vmem:[%s271 + $0x88] sm:$0xff]
      %v314 = vld [vmem:[%s271 + $0x90] sm:$0xff]
      %v315 = vld [vmem:[%s271 + $0x98] sm:$0xff]
      %v316 = vld [vmem:[%s271 + $0xa0] sm:$0xff]
      %v317 = vld [vmem:[%s271 + $0xa8] sm:$0xff]
      %v318 = vld [vmem:[%s271 + $0xb0] sm:$0xff]
      %v319 = vld [vmem:[%s271 + $0xb8] sm:$0xff]
      %v320 = vld [vmem:[%s271 + $0xc0] sm:$0xff]
      %v321 = vld [vmem:[%s271 + $0xc8] sm:$0xff]
      %v322 = vld [vmem:[%s271 + $0xd0] sm:$0xff]
      %v323 = vld [vmem:[%s271 + $0xd8] sm:$0xff]
      %v324 = vld [vmem:[%s271 + $0xe0] sm:$0xff]
      %v325 = vld [vmem:[%s271 + $0xe8] sm:$0xff]
      %v326 = vld [vmem:[%s271 + $0xf0] sm:$0xff]
      %v327 = vld [vmem:[%s271 + $0xf8] sm:$0xff]
      %v328 = vld [vmem:[%s271 + $0x100] sm:$0xff]
      %v329 = vld [vmem:[%s271 + $0x108] sm:$0xff]
      %v330 = vld [vmem:[%s271 + $0x110] sm:$0xff]
      %v331 = vld [vmem:[%s271 + $0x118] sm:$0xff]
      %v332 = vld [vmem:[%s271 + $0x120] sm:$0xff]
      %v333 = vld [vmem:[%s271 + $0x128] sm:$0xff]
      %v334 = vld [vmem:[%s271 + $0x130] sm:$0xff]
      %v335 = vld [vmem:[%s271 + $0x138] sm:$0xff]
      %v336 = vld [vmem:[%s271 + $0x140] sm:$0xff]
      %v337 = vld [vmem:[%s271 + $0x148] sm:$0xff]
      %v338 = vld [vmem:[%s271 + $0x150] sm:$0xff]
      %v339 = vld [vmem:[%s271 + $0x158] sm:$0xff]
      %v340 = vld [vmem:[%s271 + $0x160] sm:$0xff]
      %v341 = vld [vmem:[%s271 + $0x168] sm:$0xff]
      %v342 = vld [vmem:[%s271 + $0x170] sm:$0xff]
      %v343 = vld [vmem:[%s271 + $0x178] sm:$0xff]
      %v344 = vld [vmem:[%s271 + $0x180] sm:$0xff]
      %v345 = vld [vmem:[%s271 + $0x188] sm:$0xff]
      %v346 = vld [vmem:[%s271 + $0x190] sm:$0xff]
      %v347 = vld [vmem:[%s271 + $0x198] sm:$0xff]
      %v348 = vld [vmem:[%s271 + $0x1a0] sm:$0xff]
      %v349 = vld [vmem:[%s271 + $0x1a8] sm:$0xff]
      %v350 = vld [vmem:[%s271 + $0x1b0] sm:$0xff]
      %v351 = vld [vmem:[%s271 + $0x1b8] sm:$0xff]
      %v352 = vld [vmem:[%s271 + $0x1c0] sm:$0xff]
      %v353 = vld [vmem:[%s271 + $0x1c8] sm:$0xff]
      %v354 = vld [vmem:[%s271 + $0x1d0] sm:$0xff]
      %v355 = vld [vmem:[%s271 + $0x1d8] sm:$0xff]
      %v356 = vld [vmem:[%s271 + $0x1e0] sm:$0xff]
      %v357 = vld [vmem:[%s271 + $0x1e8] sm:$0xff]
      %v358 = vld [vmem:[%s271 + $0x1f0] sm:$0xff]
      %v359 = vld [vmem:[%s271 + $0x1f8] sm:$0xff]
      %v362 = vunpack.c.l.b16 %v294
      %v363 = vunpack.c.h.b16 %v294
      %v364 = vunpack.c.l.b16 %v295
      %v365 = vunpack.c.h.b16 %v295
      %v366 = vpack.c.b16 %v362, %v362
      %v367 = vpack.c.b16 %v363, %v363
      %v368 = vpack.c.b16 %v364, %v364
      %v369 = vpack.c.b16 %v365, %v365
      %v438 = vunpack.c.l.b16 %v296
      %v439 = vunpack.c.h.b16 %v296
      %v440 = vunpack.c.l.b16 %v297
      %v441 = vunpack.c.h.b16 %v297
      %v442 = vunpack.c.l.b16 %v298
      %v443 = vunpack.c.h.b16 %v298
      %v444 = vunpack.c.l.b16 %v299
      %v445 = vunpack.c.h.b16 %v299
      %v446 = vunpack.c.l.b16 %v300
      %v447 = vunpack.c.h.b16 %v300
      %v448 = vunpack.c.l.b16 %v301
      %v449 = vunpack.c.h.b16 %v301
      %v450 = vunpack.c.l.b16 %v302
      %v451 = vunpack.c.h.b16 %v302
      %v452 = vunpack.c.l.b16 %v303
      %v453 = vunpack.c.h.b16 %v303
      %v454 = vunpack.c.l.b16 %v304
      %v455 = vunpack.c.h.b16 %v304
      %v456 = vunpack.c.l.b16 %v305
      %v457 = vunpack.c.h.b16 %v305
      %v458 = vunpack.c.l.b16 %v306
      %v459 = vunpack.c.h.b16 %v306
      %v460 = vunpack.c.l.b16 %v307
      %v461 = vunpack.c.h.b16 %v307
      %v462 = vunpack.c.l.b16 %v308
      %v463 = vunpack.c.h.b16 %v308
      %v464 = vunpack.c.l.b16 %v309
      %v465 = vunpack.c.h.b16 %v309
      %v466 = vunpack.c.l.b16 %v310
      %v467 = vunpack.c.h.b16 %v310
      %v468 = vunpack.c.l.b16 %v311
      %v469 = vunpack.c.h.b16 %v311
      %v470 = vunpack.c.l.b16 %v312
      %v471 = vunpack.c.h.b16 %v312
      %v472 = vunpack.c.l.b16 %v313
      %v473 = vunpack.c.h.b16 %v313
      %v474 = vunpack.c.l.b16 %v314
      %v475 = vunpack.c.h.b16 %v314
      %v476 = vunpack.c.l.b16 %v315
      %v477 = vunpack.c.h.b16 %v315
      %v478 = vunpack.c.l.b16 %v316
      %v479 = vunpack.c.h.b16 %v316
      %v480 = vunpack.c.l.b16 %v317
      %v481 = vunpack.c.h.b16 %v317
      %v482 = vunpack.c.l.b16 %v318
      %v483 = vunpack.c.h.b16 %v318
      %v484 = vunpack.c.l.b16 %v319
      %v485 = vunpack.c.h.b16 %v319
      %v486 = vunpack.c.l.b16 %v320
      %v487 = vunpack.c.h.b16 %v320
      %v488 = vunpack.c.l.b16 %v321
      %v489 = vunpack.c.h.b16 %v321
      %v490 = vunpack.c.l.b16 %v322
      %v491 = vunpack.c.h.b16 %v322
      %v492 = vunpack.c.l.b16 %v323
      %v493 = vunpack.c.h.b16 %v323
      %v494 = vunpack.c.l.b16 %v324
      %v495 = vunpack.c.h.b16 %v324
      %v496 = vunpack.c.l.b16 %v325
      %v497 = vunpack.c.h.b16 %v325
      %v498 = vunpack.c.l.b16 %v326
      %v499 = vunpack.c.h.b16 %v326
      %v500 = vunpack.c.l.b16 %v327
      %v501 = vunpack.c.h.b16 %v327
      %v502 = vunpack.c.l.b16 %v328
      %v503 = vunpack.c.h.b16 %v328
      %v504 = vunpack.c.l.b16 %v329
      %v505 = vunpack.c.h.b16 %v329
      %v506 = vunpack.c.l.b16 %v330
      %v507 = vunpack.c.h.b16 %v330
      %v508 = vunpack.c.l.b16 %v331
      %v509 = vunpack.c.h.b16 %v331
      %v510 = vunpack.c.l.b16 %v332
      %v511 = vunpack.c.h.b16 %v332
      %v512 = vunpack.c.l.b16 %v333
      %v513 = vunpack.c.h.b16 %v333
      %v514 = vunpack.c.l.b16 %v334
      %v515 = vunpack.c.h.b16 %v334
      %v516 = vunpack.c.l.b16 %v335
      %v517 = vunpack.c.h.b16 %v335
      %v518 = vunpack.c.l.b16 %v336
      %v519 = vunpack.c.h.b16 %v336
      %v520 = vunpack.c.l.b16 %v337
      %v521 = vunpack.c.h.b16 %v337
      %v522 = vunpack.c.l.b16 %v338
      %v523 = vunpack.c.h.b16 %v338
      %v524 = vunpack.c.l.b16 %v339
      %v525 = vunpack.c.h.b16 %v339
      %v526 = vunpack.c.l.b16 %v340
      %v527 = vunpack.c.h.b16 %v340
      %v528 = vunpack.c.l.b16 %v341
      %v529 = vunpack.c.h.b16 %v341
      %v530 = vunpack.c.l.b16 %v342
      %v531 = vunpack.c.h.b16 %v342
      %v532 = vunpack.c.l.b16 %v343
      %v533 = vunpack.c.h.b16 %v343
      %v534 = vunpack.c.l.b16 %v344
      %v535 = vunpack.c.h.b16 %v344
      %v536 = vunpack.c.l.b16 %v345
      %v537 = vunpack.c.h.b16 %v345
      %v538 = vunpack.c.l.b16 %v346
      %v539 = vunpack.c.h.b16 %v346
      %v540 = vunpack.c.l.b16 %v347
      %v541 = vunpack.c.h.b16 %v347
      %v542 = vunpack.c.l.b16 %v348
      %v543 = vunpack.c.h.b16 %v348
      %v544 = vunpack.c.l.b16 %v349
      %v545 = vunpack.c.h.b16 %v349
      %v546 = vunpack.c.l.b16 %v350
      %v547 = vunpack.c.h.b16 %v350
      %v548 = vunpack.c.l.b16 %v351
      %v549 = vunpack.c.h.b16 %v351
      %v550 = vunpack.c.l.b16 %v352
      %v551 = vunpack.c.h.b16 %v352
      %v552 = vunpack.c.l.b16 %v353
      %v553 = vunpack.c.h.b16 %v353
      %v554 = vunpack.c.l.b16 %v354
      %v555 = vunpack.c.h.b16 %v354
      %v556 = vunpack.c.l.b16 %v355
      %v557 = vunpack.c.h.b16 %v355
      %v558 = vunpack.c.l.b16 %v356
      %v559 = vunpack.c.h.b16 %v356
      %v560 = vunpack.c.l.b16 %v357
      %v561 = vunpack.c.h.b16 %v357
      %v562 = vunpack.c.l.b16 %v358
      %v563 = vunpack.c.h.b16 %v358
      %v564 = vunpack.c.l.b16 %v359
      %v565 = vunpack.c.h.b16 %v359
      %v566 = vpack.c.b16 %v440, %v438
      %v567 = vpack.c.b16 %v441, %v439
      %v568 = vpack.c.b16 %v444, %v442
      %v569 = vpack.c.b16 %v445, %v443
      %v570 = vpack.c.b16 %v448, %v446
      %v571 = vpack.c.b16 %v449, %v447
      %v572 = vpack.c.b16 %v452, %v450
      %v573 = vpack.c.b16 %v453, %v451
      %v574 = vpack.c.b16 %v456, %v454
      %v575 = vpack.c.b16 %v457, %v455
      %v576 = vpack.c.b16 %v460, %v458
      %v577 = vpack.c.b16 %v461, %v459
      %v578 = vpack.c.b16 %v464, %v462
      %v579 = vpack.c.b16 %v465, %v463
      %v580 = vpack.c.b16 %v468, %v466
      %v581 = vpack.c.b16 %v469, %v467
      %v582 = vpack.c.b16 %v472, %v470
      %v583 = vpack.c.b16 %v473, %v471
      %v584 = vpack.c.b16 %v476, %v474
      %v585 = vpack.c.b16 %v477, %v475
      %v586 = vpack.c.b16 %v480, %v478
      %v587 = vpack.c.b16 %v481, %v479
      %v588 = vpack.c.b16 %v484, %v482
      %v589 = vpack.c.b16 %v485, %v483
      %v590 = vpack.c.b16 %v488, %v486
      %v591 = vpack.c.b16 %v489, %v487
      %v592 = vpack.c.b16 %v492, %v490
      %v593 = vpack.c.b16 %v493, %v491
      %v594 = vpack.c.b16 %v496, %v494
      %v595 = vpack.c.b16 %v497, %v495
      %v596 = vpack.c.b16 %v500, %v498
      %v597 = vpack.c.b16 %v501, %v499
      %v598 = vpack.c.b16 %v504, %v502
      %v599 = vpack.c.b16 %v505, %v503
      %v600 = vpack.c.b16 %v508, %v506
      %v601 = vpack.c.b16 %v509, %v507
      %v602 = vpack.c.b16 %v512, %v510
      %v603 = vpack.c.b16 %v513, %v511
      %v604 = vpack.c.b16 %v516, %v514
      %v605 = vpack.c.b16 %v517, %v515
      %v606 = vpack.c.b16 %v520, %v518
      %v607 = vpack.c.b16 %v521, %v519
      %v608 = vpack.c.b16 %v524, %v522
      %v609 = vpack.c.b16 %v525, %v523
      %v610 = vpack.c.b16 %v528, %v526
      %v611 = vpack.c.b16 %v529, %v527
      %v612 = vpack.c.b16 %v532, %v530
      %v613 = vpack.c.b16 %v533, %v531
      %v614 = vpack.c.b16 %v536, %v534
      %v615 = vpack.c.b16 %v537, %v535
      %v616 = vpack.c.b16 %v540, %v538
      %v617 = vpack.c.b16 %v541, %v539
      %v618 = vpack.c.b16 %v544, %v542
      %v619 = vpack.c.b16 %v545, %v543
      %v620 = vpack.c.b16 %v548, %v546
      %v621 = vpack.c.b16 %v549, %v547
      %v622 = vpack.c.b16 %v552, %v550
      %v623 = vpack.c.b16 %v553, %v551
      %v624 = vpack.c.b16 %v556, %v554
      %v625 = vpack.c.b16 %v557, %v555
      %v626 = vpack.c.b16 %v560, %v558
      %v627 = vpack.c.b16 %v561, %v559
      %v628 = vpack.c.b16 %v564, %v562
      %v629 = vpack.c.b16 %v565, %v563
      %694 = vmatprep.subr.bf16.mxu0 %v567
      %695 = vmatpush1.bf16.msra.mxu0 %v566
      %696 = vmatprep.subr.bf16.mxu0 %v569
      %697 = vmatpush1.bf16.msra.mxu0 %v568
      %698 = vmatprep.subr.bf16.mxu0 %v571
      %699 = vmatpush1.bf16.msra.mxu0 %v570
      %700 = vmatprep.subr.bf16.mxu0 %v573
      %701 = vmatpush1.bf16.msra.mxu0 %v572
      %702 = vmatprep.subr.bf16.mxu0 %v575
      %703 = vmatpush1.bf16.msra.mxu0 %v574
      %704 = vmatprep.subr.bf16.mxu0 %v577
      %705 = vmatpush1.bf16.msra.mxu0 %v576
      %706 = vmatprep.subr.bf16.mxu0 %v579
      %707 = vmatpush1.bf16.msra.mxu0 %v578
      %708 = vmatprep.subr.bf16.mxu0 %v581
      %709 = vmatpush1.bf16.msra.mxu0 %v580
      %710 = vmatprep.subr.bf16.mxu0 %v583
      %711 = vmatpush1.bf16.msra.mxu0 %v582
      %712 = vmatprep.subr.bf16.mxu0 %v585
      %713 = vmatpush1.bf16.msra.mxu0 %v584
      %714 = vmatprep.subr.bf16.mxu0 %v587
      %715 = vmatpush1.bf16.msra.mxu0 %v586
      %716 = vmatprep.subr.bf16.mxu0 %v589
      %717 = vmatpush1.bf16.msra.mxu0 %v588
      %718 = vmatprep.subr.bf16.mxu0 %v591
      %719 = vmatpush1.bf16.msra.mxu0 %v590
      %720 = vmatprep.subr.bf16.mxu0 %v593
      %721 = vmatpush1.bf16.msra.mxu0 %v592
      %722 = vmatprep.subr.bf16.mxu0 %v595
      %723 = vmatpush1.bf16.msra.mxu0 %v594
      %724 = vmatprep.subr.bf16.mxu0 %v597
      %725 = vmatpush1.bf16.msra.mxu0 %v596
      %726 = vmatprep.mubr.bf16.mxu0 %v367
      %727 = vmatmul.mubr.bf16.gmra.mrb[0].mxu0 %v366
      %v728 = vpop.f32.mrb[0].mxu0
      %v729 = vadd.f32 0.0, %v728
      %v730 = vpop.f32.mrb[0].mxu0
      %v731 = vadd.f32 0.0, %v730
      %v732 = vpop.f32.mrb[0].mxu0
      %v733 = vpop.f32.mrb[0].mxu0
      %734 = vdwg.mxu0
      %735 = vmatprep.subr.bf16.mxu0 %v599
      %736 = vmatpush1.bf16.msra.mxu0 %v598
      %737 = vmatprep.subr.bf16.mxu0 %v601
      %738 = vmatpush1.bf16.msra.mxu0 %v600
      %739 = vmatprep.subr.bf16.mxu0 %v603
      %740 = vmatpush1.bf16.msra.mxu0 %v602
      %741 = vmatprep.subr.bf16.mxu0 %v605
      %742 = vmatpush1.bf16.msra.mxu0 %v604
      %743 = vmatprep.subr.bf16.mxu0 %v607
      %744 = vmatpush1.bf16.msra.mxu0 %v606
      %745 = vmatprep.subr.bf16.mxu0 %v609
      %746 = vmatpush1.bf16.msra.mxu0 %v608
      %747 = vmatprep.subr.bf16.mxu0 %v611
      %748 = vmatpush1.bf16.msra.mxu0 %v610
      %749 = vmatprep.subr.bf16.mxu0 %v613
      %750 = vmatpush1.bf16.msra.mxu0 %v612
      %751 = vmatprep.subr.bf16.mxu0 %v615
      %752 = vmatpush1.bf16.msra.mxu0 %v614
      %753 = vmatprep.subr.bf16.mxu0 %v617
      %754 = vmatpush1.bf16.msra.mxu0 %v616
      %755 = vmatprep.subr.bf16.mxu0 %v619
      %756 = vmatpush1.bf16.msra.mxu0 %v618
      %757 = vmatprep.subr.bf16.mxu0 %v621
      %758 = vmatpush1.bf16.msra.mxu0 %v620
      %759 = vmatprep.subr.bf16.mxu0 %v623
      %760 = vmatpush1.bf16.msra.mxu0 %v622
      %761 = vmatprep.subr.bf16.mxu0 %v625
      %762 = vmatpush1.bf16.msra.mxu0 %v624
      %763 = vmatprep.subr.bf16.mxu0 %v627
      %764 = vmatpush1.bf16.msra.mxu0 %v626
      %765 = vmatprep.subr.bf16.mxu0 %v629
      %766 = vmatpush1.bf16.msra.mxu0 %v628
      %767 = vmatprep.mubr.bf16.mxu0 %v369
      %768 = vmatmul.mubr.bf16.gmra.mrb[0].mxu0 %v368
      %v769 = vpop.f32.mrb[0].mxu0
      %v770 = vadd.f32 %v729, %v769
      %v771 = vpop.f32.mrb[0].mxu0
      %v772 = vadd.f32 %v731, %v771
      %v773 = vpop.f32.mrb[0].mxu0
      %v774 = vpop.f32.mrb[0].mxu0
      %775 = vdwg.mxu0
      %v776 = vadd.f32 %v292, %v770
      %v777 = vadd.f32 %v293, %v772
      %778 = vst [vmem:[#allocation2] sm:$0xff] %v776
      %779 = vst [vmem:[#allocation2 + $0x8] sm:$0xff] %v777
      %p780 = scmp.eq.s32.totalorder %s21, 1
      // Predicated region
      $region37: #{unet_forward.15} parent=31 // pred_check
        %p781 = pneg %p780
      $region38: #{unet_forward.15} parent=31 // pred_check_branch
        %783 = sbr.rel (%p781) target = $region40
      $region39: #{unet_forward.15} parent=31 // pred_region
        %v784 = vld [vmem:[#allocation2] sm:$0xff]
        %v785 = vld [vmem:[#allocation2 + $0x8] sm:$0xff]
        %v786 = vld [vmem:[%s276] sm:$0x3]
        %v788 = vlaneseq
        %v789 = vshrl.u32 %v788, 7
        %v790 = vsub.s32 0, %v789
        %v791 = vrot.slane %v786, %v790
        %v792 = vlaneseq
        %v793 = vshrl.u32 %v792, 7
        %v794 = vsub.s32 1, %v793
        %v795 = vrot.slane %v786, %v794
        %v798 = vadd.f32 %v784, %v791
        %v799 = vadd.f32 %v785, %v795
        %800 = vst [vmem:[%s285] sm:$0xff] %v798
        %801 = vst [vmem:[%s285 + $0x8] sm:$0xff] %v799
      $region40: #{unet_forward.15} parent=31 // pred_fallthru
        _
      %p802 = scmp.lt.s32.totalorder %s19, 3
      %s803 = scalar_select %p802, %s19, 3
      %p804 = scmp.lt.s32.totalorder %s20, 0
      %s805 = scalar_select %p804, %s20, 0
      %s806 = smul.addr %s805, 2
      %s807 = smul.addr %s803, 2
      %s808 = sadd.s32 %s806, %s807
      %s809 = smul.addr %s808, 8
      %s810 = scalar_lea.vmem %s3, %s809
      // Predicated region
      $region41: #{unet_forward.15} parent=31 // pred_check
        %p811 = pneg %p137
      $region42: #{unet_forward.15} parent=31 // pred_check_branch
        %813 = sbr.rel (%p811) target = $region44
      $region43: #{unet_forward.15} parent=31 // pred_region
        _
      $region44: #{unet_forward.15} parent=31 // pred_fallthru
        _
    $region32: #{unet_forward.15} parent=5 // pred_fallthru
      _
    %p814 = scmp.le.s32.totalorder 2, %s9
    // Predicated region
    $region45: #{unet_forward.15} parent=5 // pred_check
      %p815 = pneg %p814
    $region46: #{unet_forward.15} parent=5 // pred_check_branch
      %817 = sbr.rel (%p815) target = $region48
    $region47: #{unet_forward.15} parent=5 // pred_region
      %s818 = ssub.s32 %s9, 2
      // Predicated region
      $region49: #{unet_forward.15} parent=47 // pred_check
        %p819 = pneg %p143
      $region50: #{unet_forward.15} parent=47 // pred_check_branch
        %821 = sbr.rel (%p819) target = $region52
      $region51: #{unet_forward.15} parent=47 // pred_region
        %p822 = scmp.lt.s32.totalorder %s22, 3
        %s823 = scalar_select %p822, %s22, 3
        %p824 = scmp.lt.s32.totalorder %s23, 0
        %s825 = scalar_select %p824, %s23, 0
        %s826 = smul.addr %s825, 2
        %s827 = smul.addr %s823, 2
        %s828 = sadd.s32 %s826, %s827
        %s829 = smul.addr %s828, 8
        %s830 = scalar_lea.vmem %s3, %s829
      $region52: #{unet_forward.15} parent=47 // pred_fallthru
        _
    $region48: #{unet_forward.15} parent=5 // pred_fallthru
      _
  $region6: #{unet_forward.15} parent=0 // loop_footer
    %s13 = sadd.s32 1, %s9
  $region7: #{unet_forward.15} parent=0 // loop_footer_branch
    %8 = sbr.rel target = $region3
  $region8: #{unet_forward.15} parent=0 // loop_exit
    _

// kernel: unet_forward.16
$region0: #{unet_forward.16}
  #allocation0 [shape = 'u32[]', space=smem, size = 0x4, offset = 0x4, fixed_abs, tag = 'smem constant byte address 0x4 - core index']
  #allocation1 [shape = 'u32[144,128]{1,0:T(1,128)}', space=vmem, size = 0x12000, scoped, tag = 'internal scratch']
  #allocation2 [shape = 'f32[8,256]{1,0:T(8,128)}', space=vmem, size = 0x2000, scoped, tag = 'scratch operand']
  %s0 = inlined_call_operand.vmem [shape: bf16[4,8,2048], index: 0, kind: input, shape index: {}]
  %s1 = inlined_call_operand.vmem [shape: bf16[4,2048,256], index: 1, kind: input, shape index: {}]
  %s2 = inlined_call_operand.vmem [shape: f32[4,1,256], index: 2, kind: input, shape index: {}]
  %s3 = inlined_call_operand.vmem [shape: f32[4,8,256], index: 3, kind: output, shape index: {}]
  %s4 = sld [smem:[#allocation0]]
  $region53: #{unet_forward.16} parent=0
    _
  %s6 = ssub.s32 1, %s4
  %s7 = scalar_select 0, %s6, %s4
  loop: start=0, step=1, limit=10
  $region2: #{unet_forward.16} parent=0 // loop_pre_header
    _
  $region3: #{unet_forward.16} parent=0 // loop_header
    %s9 = sphi 0, %s13
    %p10 = scmp.ge.s32.totalorder %s9, 10
    %s16 = sphi 0, %s35
    %s17 = sphi 0, %s31
    %s18 = sphi 0, %s27
    %s19 = sphi 0, %s16
    %s20 = sphi 0, %s17
    %s21 = sphi 0, %s18
    %s22 = sphi 0, %s19
    %s23 = sphi 0, %s20
    %s24 = sphi 0, %s21
    %s42 = sphi 0, %s44
    %s45 = sphi 0, %s42
    %s46 = sphi 0, %s45
    %s62 = sphi 0, %s46
    %s70 = sphi 0, %s72
    %s73 = sphi 0, %s70
    %s74 = sphi 0, %s73
    %s90 = sphi 0, %s74
    %s96 = sphi 0, %s98
    %s99 = sphi 0, %s96
    %s100 = sphi 0, %s99
    %s116 = sphi 0, %s100
    %s124 = sphi 0, %s126
    %s127 = sphi 0, %s124
    %s128 = sphi 0, %s127
    %s144 = sphi 0, %s128
  $region4: #{unet_forward.16} parent=0 // loop_header_branch
    %12 = sbr.rel (%p10) target = $region8
  $region5: #{unet_forward.16} parent=0 // loop_body
    %s14 = ssub.s32 %s9, 1
    %s15 = ssub.s32 %s9, 2
    %s25 = sadd.s32 1, %s18
    %p26 = scmp.ge.s32.totalorder %s25, 2
    %s27 = scalar_select %p26, 0, %s25
    %s28 = sadd.s32 1, %s17
    %s29 = scalar_select %p26, %s28, %s17
    %p30 = scmp.ge.s32.totalorder %s29, 1
    %s31 = scalar_select %p30, 0, %s29
    %s32 = sadd.s32 1, %s16
    %s33 = scalar_select %p30, %s32, %s16
    %p34 = scmp.ge.s32.totalorder %s33, 4
    %s35 = scalar_select %p34, 0, %s33
    %s36 = ssub.s32 %s16, %s35
    %s37 = ssub.s32 %s17, %s31
    %s38 = sor.u32 %s36, %s37
    %s39 = ssub.s32 %s18, %s27
    %s40 = sor.u32 %s38, %s39
    %p41 = scmp.eq.s32.totalorder %s40, 0
    %s43 = sadd.s32 %s42, 1
    %s44 = scalar_select %p41, %s42, %s43
    %p47 = pneg %p41
    %p48 = scmp.eq.s32.totalorder %s9, 7
    %p49 = por %p47, %p48
    %p50 = scmp.ne.s32.totalorder %s42, %s45
    %p51 = scmp.eq.s32.totalorder %s9, 0
    %p52 = por %p50, %p51
    %p53 = scmp.ne.s32.totalorder %s42, %s45
    %p54 = scmp.eq.s32.totalorder %s14, 7
    %p55 = por %p53, %p54
    %p56 = scmp.ne.s32.totalorder %s45, %s46
    %p57 = scmp.eq.s32.totalorder %s14, 0
    %p58 = por %p56, %p57
    %p59 = scmp.ne.s32.totalorder %s45, %s46
    %p60 = scmp.eq.s32.totalorder %s15, 7
    %p61 = por %p59, %p60
    %p63 = scmp.ne.s32.totalorder %s46, %s62
    %p64 = scmp.eq.s32.totalorder %s15, 0
    %p65 = por %p63, %p64
    %s66 = ssub.s32 %s16, %s35
    %s67 = ssub.s32 %s18, %s27
    %s68 = sor.u32 %s66, %s67
    %p69 = scmp.eq.s32.totalorder %s68, 0
    %s71 = sadd.s32 %s70, 1
    %s72 = scalar_select %p69, %s70, %s71
    %p75 = pneg %p69
    %p76 = scmp.eq.s32.totalorder %s9, 7
    %p77 = por %p75, %p76
    %p78 = scmp.ne.s32.totalorder %s70, %s73
    %p79 = scmp.eq.s32.totalorder %s9, 0
    %p80 = por %p78, %p79
    %p81 = scmp.ne.s32.totalorder %s70, %s73
    %p82 = scmp.eq.s32.totalorder %s14, 7
    %p83 = por %p81, %p82
    %p84 = scmp.ne.s32.totalorder %s73, %s74
    %p85 = scmp.eq.s32.totalorder %s14, 0
    %p86 = por %p84, %p85
    %p87 = scmp.ne.s32.totalorder %s73, %s74
    %p88 = scmp.eq.s32.totalorder %s15, 7
    %p89 = por %p87, %p88
    %p91 = scmp.ne.s32.totalorder %s74, %s90
    %p92 = scmp.eq.s32.totalorder %s15, 0
    %p93 = por %p91, %p92
    %s94 = ssub.s32 %s16, %s35
    %p95 = scmp.eq.s32.totalorder %s94, 0
    %s97 = sadd.s32 %s96, 1
    %s98 = scalar_select %p95, %s96, %s97
    %p101 = pneg %p95
    %p102 = scmp.eq.s32.totalorder %s9, 7
    %p103 = por %p101, %p102
    %p104 = scmp.ne.s32.totalorder %s96, %s99
    %p105 = scmp.eq.s32.totalorder %s9, 0
    %p106 = por %p104, %p105
    %p107 = scmp.ne.s32.totalorder %s96, %s99
    %p108 = scmp.eq.s32.totalorder %s14, 7
    %p109 = por %p107, %p108
    %p110 = scmp.ne.s32.totalorder %s99, %s100
    %p111 = scmp.eq.s32.totalorder %s14, 0
    %p112 = por %p110, %p111
    %p113 = scmp.ne.s32.totalorder %s99, %s100
    %p114 = scmp.eq.s32.totalorder %s15, 7
    %p115 = por %p113, %p114
    %p117 = scmp.ne.s32.totalorder %s100, %s116
    %p118 = scmp.eq.s32.totalorder %s15, 0
    %p119 = por %p117, %p118
    %s120 = ssub.s32 %s16, %s35
    %s121 = ssub.s32 %s17, %s31
    %s122 = sor.u32 %s120, %s121
    %p123 = scmp.eq.s32.totalorder %s122, 0
    %s125 = sadd.s32 %s124, 1
    %s126 = scalar_select %p123, %s124, %s125
    %p129 = pneg %p123
    %p130 = scmp.eq.s32.totalorder %s9, 7
    %p131 = por %p129, %p130
    %p132 = scmp.ne.s32.totalorder %s124, %s127
    %p133 = scmp.eq.s32.totalorder %s9, 0
    %p134 = por %p132, %p133
    %p135 = scmp.ne.s32.totalorder %s124, %s127
    %p136 = scmp.eq.s32.totalorder %s14, 7
    %p137 = por %p135, %p136
    %p138 = scmp.ne.s32.totalorder %s127, %s128
    %p139 = scmp.eq.s32.totalorder %s14, 0
    %p140 = por %p138, %p139
    %p141 = scmp.ne.s32.totalorder %s127, %s128
    %p142 = scmp.eq.s32.totalorder %s15, 7
    %p143 = por %p141, %p142
    %p145 = scmp.ne.s32.totalorder %s128, %s144
    %p146 = scmp.eq.s32.totalorder %s15, 0
    %p147 = por %p145, %p146
    %p148 = scmp.le.s32.totalorder 1, %s9
    %p149 = scmp.lt.s32.totalorder %s9, 9
    %p150 = pnand %p148, %p149
    %p151 = pneg %p150
    // Predicated region
    $region9: #{unet_forward.16} parent=5 // pred_check
      _
    $region10: #{unet_forward.16} parent=5 // pred_check_branch
      %153 = sbr.rel (%p150) target = $region12
    $region11: #{unet_forward.16} parent=5 // pred_region
      %s154 = ssub.s32 %s9, 1
    $region12: #{unet_forward.16} parent=5 // pred_fallthru
      _
    %p155 = scmp.lt.s32.totalorder %s9, 8
    // Predicated region
    $region13: #{unet_forward.16} parent=5 // pred_check
      %p156 = pneg %p155
    $region14: #{unet_forward.16} parent=5 // pred_check_branch
      %158 = sbr.rel (%p156) target = $region16
    $region15: #{unet_forward.16} parent=5 // pred_region
      // Predicated region
      $region17: #{unet_forward.16} parent=15 // pred_check
        %p159 = pneg %p52
      $region18: #{unet_forward.16} parent=15 // pred_check_branch
        %161 = sbr.rel (%p159) target = $region20
      $region19: #{unet_forward.16} parent=15 // pred_region
        %s162 = smul.u32 8, %s18
        %p163 = scmp.lt.s32.totalorder %s16, 3
        %s164 = scalar_select %p163, %s16, 3
        %p165 = scmp.lt.s32.totalorder %s17, 0
        %s166 = scalar_select %p165, %s17, 0
        %p167 = scmp.lt.s32.totalorder %s162, 15
        %s168 = scalar_select %p167, %s162, 15
        %s169 = smul.addr %s166, 16
        %s170 = sadd.s32 %s168, %s169
        %s171 = smul.addr %s164, 16
        %s172 = sadd.s32 %s170, %s171
        %s173 = smul.addr %s172, 4
        %s174 = scalar_lea.vmem %s0, %s173
        %s175 = smul.u32 8, %s18
      $region20: #{unet_forward.16} parent=15 // pred_fallthru
        _
      // Predicated region
      $region21: #{unet_forward.16} parent=15 // pred_check
        %p176 = pneg %p80
      $region22: #{unet_forward.16} parent=15 // pred_check_branch
        %178 = sbr.rel (%p176) target = $region24
      $region23: #{unet_forward.16} parent=15 // pred_region
        %s179 = smul.u32 128, %s18
        %p180 = scmp.lt.s32.totalorder %s16, 3
        %s181 = scalar_select %p180, %s16, 3
        %p182 = scmp.lt.s32.totalorder %s179, 255
        %s183 = scalar_select %p182, %s179, 255
        %s184 = smul.addr %s183, 2
        %s185 = smul.addr %s181, 512
        %s186 = sadd.s32 %s184, %s185
        %s187 = smul.addr %s186, 4
        %s188 = scalar_lea.vmem %s1, %s187
        %s189 = smul.u32 128, %s18
      $region24: #{unet_forward.16} parent=15 // pred_fallthru
        _
      // Predicated region
      $region25: #{unet_forward.16} parent=15 // pred_check
        %p190 = pneg %p106
      $region26: #{unet_forward.16} parent=15 // pred_check_branch
        %192 = sbr.rel (%p190) target = $region28
      $region27: #{unet_forward.16} parent=15 // pred_region
        %p193 = scmp.lt.s32.totalorder %s16, 3
        %s194 = scalar_select %p193, %s16, 3
        %s195 = smul.addr %s194, 2
        %s196 = scalar_lea.vmem %s2, %s195
      $region28: #{unet_forward.16} parent=15 // pred_fallthru
        _
    $region16: #{unet_forward.16} parent=5 // pred_fallthru
      _
    %p197 = scmp.le.s32.totalorder 1, %s9
    %p198 = scmp.lt.s32.totalorder %s9, 9
    %p199 = pnand %p197, %p198
    %p200 = pneg %p199
    // Predicated region
    $region29: #{unet_forward.16} parent=5 // pred_check
      _
    $region30: #{unet_forward.16} parent=5 // pred_check_branch
      %202 = sbr.rel (%p199) target = $region32
    $region31: #{unet_forward.16} parent=5 // pred_region
      %s203 = ssub.s32 %s9, 1
      %s204 = smul.u32 8, %s21
      %p205 = scmp.lt.s32.totalorder %s19, 3
      %s206 = scalar_select %p205, %s19, 3
      %p207 = scmp.lt.s32.totalorder %s20, 0
      %s208 = scalar_select %p207, %s20, 0
      %p209 = scmp.lt.s32.totalorder %s204, 15
      %s210 = scalar_select %p209, %s204, 15
      %s211 = smul.addr %s208, 16
      %s212 = sadd.s32 %s210, %s211
      %s213 = smul.addr %s206, 16
      %s214 = sadd.s32 %s212, %s213
      %s215 = smul.addr %s214, 4
      %s216 = scalar_lea.vmem %s0, %s215
      %p217 = pneg %p58
      %p218 = pneg %p55
      %s219 = smul.u32 128, %s21
      %p220 = scmp.lt.s32.totalorder %s19, 3
      %s221 = scalar_select %p220, %s19, 3
      %p222 = scmp.lt.s32.totalorder %s219, 255
      %s223 = scalar_select %p222, %s219, 255
      %s224 = smul.addr %s223, 2
      %s225 = smul.addr %s221, 512
      %s226 = sadd.s32 %s224, %s225
      %s227 = smul.addr %s226, 4
      %s228 = scalar_lea.vmem %s1, %s227
      %p229 = pneg %p86
      %p230 = pneg %p83
      %p231 = scmp.lt.s32.totalorder %s19, 3
      %s232 = scalar_select %p231, %s19, 3
      %s233 = smul.addr %s232, 2
      %s234 = scalar_lea.vmem %s2, %s233
      %p235 = pneg %p112
      %p236 = pneg %p109
      %p237 = pneg %p140
      %p238 = pneg %p137
      %p239 = scmp.lt.s32.totalorder %s19, 3
      %s240 = scalar_select %p239, %s19, 3
      %p241 = scmp.lt.s32.totalorder %s20, 0
      %s242 = scalar_select %p241, %s20, 0
      %s243 = smul.addr %s242, 2
      %s244 = smul.addr %s240, 2
      %s245 = sadd.s32 %s243, %s244
      %s246 = smul.addr %s245, 8
      %s247 = scalar_lea.vmem %s3, %s246
      %s248 = smul.u32 8, %s21
      %p249 = scmp.lt.s32.totalorder %s19, 3
      %s250 = scalar_select %p249, %s19, 3
      %p251 = scmp.lt.s32.totalorder %s20, 0
      %s252 = scalar_select %p251, %s20, 0
      %p253 = scmp.lt.s32.totalorder %s248, 15
      %s254 = scalar_select %p253, %s248, 15
      %s255 = smul.addr %s252, 16
      %s256 = sadd.s32 %s254, %s255
      %s257 = smul.addr %s250, 16
      %s258 = sadd.s32 %s256, %s257
      %s259 = smul.addr %s258, 4
      %s260 = scalar_lea.vmem %s0, %s259
      %s261 = smul.u32 8, %s21
      %s262 = smul.u32 128, %s21
      %p263 = scmp.lt.s32.totalorder %s19, 3
      %s264 = scalar_select %p263, %s19, 3
      %p265 = scmp.lt.s32.totalorder %s262, 255
      %s266 = scalar_select %p265, %s262, 255
      %s267 = smul.addr %s266, 2
      %s268 = smul.addr %s264, 512
      %s269 = sadd.s32 %s267, %s268
      %s270 = smul.addr %s269, 4
      %s271 = scalar_lea.vmem %s1, %s270
      %s272 = smul.u32 128, %s21
      %p273 = scmp.lt.s32.totalorder %s19, 3
      %s274 = scalar_select %p273, %s19, 3
      %s275 = smul.addr %s274, 2
      %s276 = scalar_lea.vmem %s2, %s275
      %p277 = scmp.lt.s32.totalorder %s19, 3
      %s278 = scalar_select %p277, %s19, 3
      %p279 = scmp.lt.s32.totalorder %s20, 0
      %s280 = scalar_select %p279, %s20, 0
      %s281 = smul.addr %s280, 2
      %s282 = smul.addr %s278, 2
      %s283 = sadd.s32 %s281, %s282
      %s284 = smul.addr %s283, 8
      %s285 = scalar_lea.vmem %s3, %s284
      %p286 = scmp.eq.s32.totalorder %s21, 0
      // Predicated region
      $region33: #{unet_forward.16} parent=31 // pred_check
        %p287 = pneg %p286
      $region34: #{unet_forward.16} parent=31 // pred_check_branch
        %289 = sbr.rel (%p287) target = $region36
      $region35: #{unet_forward.16} parent=31 // pred_region
        %290 = vst [vmem:[#allocation2] sm:$0xff] 0.0
        %291 = vst [vmem:[#allocation2 + $0x8] sm:$0xff] 0.0
      $region36: #{unet_forward.16} parent=31 // pred_fallthru
        _
      %v292 = vld [vmem:[#allocation2] sm:$0xff]
      %v293 = vld [vmem:[#allocation2 + $0x8] sm:$0xff]
      %v294 = vld [vmem:[%s260] sm:$0xff]
      %v295 = vld [vmem:[%s260 + $0x8] sm:$0xff]
      %v296 = vld [vmem:[%s260 + $0x10] sm:$0xff]
      %v297 = vld [vmem:[%s260 + $0x18] sm:$0xff]
      %v298 = vld [vmem:[%s271] sm:$0xff]
      %v299 = vld [vmem:[%s271 + $0x8] sm:$0xff]
      %v300 = vld [vmem:[%s271 + $0x10] sm:$0xff]
      %v301 = vld [vmem:[%s271 + $0x18] sm:$0xff]
      %v302 = vld [vmem:[%s271 + $0x20] sm:$0xff]
      %v303 = vld [vmem:[%s271 + $0x28] sm:$0xff]
      %v304 = vld [vmem:[%s271 + $0x30] sm:$0xff]
      %v305 = vld [vmem:[%s271 + $0x38] sm:$0xff]
      %v306 = vld [vmem:[%s271 + $0x40] sm:$0xff]
      %v307 = vld [vmem:[%s271 + $0x48] sm:$0xff]
      %v308 = vld [vmem:[%s271 + $0x50] sm:$0xff]
      %v309 = vld [vmem:[%s271 + $0x58] sm:$0xff]
      %v310 = vld [vmem:[%s271 + $0x60] sm:$0xff]
      %v311 = vld [vmem:[%s271 + $0x68] sm:$0xff]
      %v312 = vld [vmem:[%s271 + $0x70] sm:$0xff]
      %v313 = vld [vmem:[%s271 + $0x78] sm:$0xff]
      %v314 = vld [vmem:[%s271 + $0x80] sm:$0xff]
      %v315 = vld [vmem:[%s271 + $0x88] sm:$0xff]
      %v316 = vld [vmem:[%s271 + $0x90] sm:$0xff]
      %v317 = vld [vmem:[%s271 + $0x98] sm:$0xff]
      %v318 = vld [vmem:[%s271 + $0xa0] sm:$0xff]
      %v319 = vld [vmem:[%s271 + $0xa8] sm:$0xff]
      %v320 = vld [vmem:[%s271 + $0xb0] sm:$0xff]
      %v321 = vld [vmem:[%s271 + $0xb8] sm:$0xff]
      %v322 = vld [vmem:[%s271 + $0xc0] sm:$0xff]
      %v323 = vld [vmem:[%s271 + $0xc8] sm:$0xff]
      %v324 = vld [vmem:[%s271 + $0xd0] sm:$0xff]
      %v325 = vld [vmem:[%s271 + $0xd8] sm:$0xff]
      %v326 = vld [vmem:[%s271 + $0xe0] sm:$0xff]
      %v327 = vld [vmem:[%s271 + $0xe8] sm:$0xff]
      %v328 = vld [vmem:[%s271 + $0xf0] sm:$0xff]
      %v329 = vld [vmem:[%s271 + $0xf8] sm:$0xff]
      %v330 = vld [vmem:[%s271 + $0x100] sm:$0xff]
      %v331 = vld [vmem:[%s271 + $0x108] sm:$0xff]
      %v332 = vld [vmem:[%s271 + $0x110] sm:$0xff]
      %v333 = vld [vmem:[%s271 + $0x118] sm:$0xff]
      %v334 = vld [vmem:[%s271 + $0x120] sm:$0xff]
      %v335 = vld [vmem:[%s271 + $0x128] sm:$0xff]
      %v336 = vld [vmem:[%s271 + $0x130] sm:$0xff]
      %v337 = vld [vmem:[%s271 + $0x138] sm:$0xff]
      %v338 = vld [vmem:[%s271 + $0x140] sm:$0xff]
      %v339 = vld [vmem:[%s271 + $0x148] sm:$0xff]
      %v340 = vld [vmem:[%s271 + $0x150] sm:$0xff]
      %v341 = vld [vmem:[%s271 + $0x158] sm:$0xff]
      %v342 = vld [vmem:[%s271 + $0x160] sm:$0xff]
      %v343 = vld [vmem:[%s271 + $0x168] sm:$0xff]
      %v344 = vld [vmem:[%s271 + $0x170] sm:$0xff]
      %v345 = vld [vmem:[%s271 + $0x178] sm:$0xff]
      %v346 = vld [vmem:[%s271 + $0x180] sm:$0xff]
      %v347 = vld [vmem:[%s271 + $0x188] sm:$0xff]
      %v348 = vld [vmem:[%s271 + $0x190] sm:$0xff]
      %v349 = vld [vmem:[%s271 + $0x198] sm:$0xff]
      %v350 = vld [vmem:[%s271 + $0x1a0] sm:$0xff]
      %v351 = vld [vmem:[%s271 + $0x1a8] sm:$0xff]
      %v352 = vld [vmem:[%s271 + $0x1b0] sm:$0xff]
      %v353 = vld [vmem:[%s271 + $0x1b8] sm:$0xff]
      %v354 = vld [vmem:[%s271 + $0x1c0] sm:$0xff]
      %v355 = vld [vmem:[%s271 + $0x1c8] sm:$0xff]
      %v356 = vld [vmem:[%s271 + $0x1d0] sm:$0xff]
      %v357 = vld [vmem:[%s271 + $0x1d8] sm:$0xff]
      %v358 = vld [vmem:[%s271 + $0x1e0] sm:$0xff]
      %v359 = vld [vmem:[%s271 + $0x1e8] sm:$0xff]
      %v360 = vld [vmem:[%s271 + $0x1f0] sm:$0xff]
      %v361 = vld [vmem:[%s271 + $0x1f8] sm:$0xff]
      %v362 = vld [vmem:[%s271 + $0x200] sm:$0xff]
      %v363 = vld [vmem:[%s271 + $0x208] sm:$0xff]
      %v364 = vld [vmem:[%s271 + $0x210] sm:$0xff]
      %v365 = vld [vmem:[%s271 + $0x218] sm:$0xff]
      %v366 = vld [vmem:[%s271 + $0x220] sm:$0xff]
      %v367 = vld [vmem:[%s271 + $0x228] sm:$0xff]
      %v368 = vld [vmem:[%s271 + $0x230] sm:$0xff]
      %v369 = vld [vmem:[%s271 + $0x238] sm:$0xff]
      %v370 = vld [vmem:[%s271 + $0x240] sm:$0xff]
      %v371 = vld [vmem:[%s271 + $0x248] sm:$0xff]
      %v372 = vld [vmem:[%s271 + $0x250] sm:$0xff]
      %v373 = vld [vmem:[%s271 + $0x258] sm:$0xff]
      %v374 = vld [vmem:[%s271 + $0x260] sm:$0xff]
      %v375 = vld [vmem:[%s271 + $0x268] sm:$0xff]
      %v376 = vld [vmem:[%s271 + $0x270] sm:$0xff]
      %v377 = vld [vmem:[%s271 + $0x278] sm:$0xff]
      %v378 = vld [vmem:[%s271 + $0x280] sm:$0xff]
      %v379 = vld [vmem:[%s271 + $0x288] sm:$0xff]
      %v380 = vld [vmem:[%s271 + $0x290] sm:$0xff]
      %v381 = vld [vmem:[%s271 + $0x298] sm:$0xff]
      %v382 = vld [vmem:[%s271 + $0x2a0] sm:$0xff]
      %v383 = vld [vmem:[%s271 + $0x2a8] sm:$0xff]
      %v384 = vld [vmem:[%s271 + $0x2b0] sm:$0xff]
      %v385 = vld [vmem:[%s271 + $0x2b8] sm:$0xff]
      %v386 = vld [vmem:[%s271 + $0x2c0] sm:$0xff]
      %v387 = vld [vmem:[%s271 + $0x2c8] sm:$0xff]
      %v388 = vld [vmem:[%s271 + $0x2d0] sm:$0xff]
      %v389 = vld [vmem:[%s271 + $0x2d8] sm:$0xff]
      %v390 = vld [vmem:[%s271 + $0x2e0] sm:$0xff]
      %v391 = vld [vmem:[%s271 + $0x2e8] sm:$0xff]
      %v392 = vld [vmem:[%s271 + $0x2f0] sm:$0xff]
      %v393 = vld [vmem:[%s271 + $0x2f8] sm:$0xff]
      %v394 = vld [vmem:[%s271 + $0x300] sm:$0xff]
      %v395 = vld [vmem:[%s271 + $0x308] sm:$0xff]
      %v396 = vld [vmem:[%s271 + $0x310] sm:$0xff]
      %v397 = vld [vmem:[%s271 + $0x318] sm:$0xff]
      %v398 = vld [vmem:[%s271 + $0x320] sm:$0xff]
      %v399 = vld [vmem:[%s271 + $0x328] sm:$0xff]
      %v400 = vld [vmem:[%s271 + $0x330] sm:$0xff]
      %v401 = vld [vmem:[%s271 + $0x338] sm:$0xff]
      %v402 = vld [vmem:[%s271 + $0x340] sm:$0xff]
      %v403 = vld [vmem:[%s271 + $0x348] sm:$0xff]
      %v404 = vld [vmem:[%s271 + $0x350] sm:$0xff]
      %v405 = vld [vmem:[%s271 + $0x358] sm:$0xff]
      %v406 = vld [vmem:[%s271 + $0x360] sm:$0xff]
      %v407 = vld [vmem:[%s271 + $0x368] sm:$0xff]
      %v408 = vld [vmem:[%s271 + $0x370] sm:$0xff]
      %v409 = vld [vmem:[%s271 + $0x378] sm:$0xff]
      %v410 = vld [vmem:[%s271 + $0x380] sm:$0xff]
      %v411 = vld [vmem:[%s271 + $0x388] sm:$0xff]
      %v412 = vld [vmem:[%s271 + $0x390] sm:$0xff]
      %v413 = vld [vmem:[%s271 + $0x398] sm:$0xff]
      %v414 = vld [vmem:[%s271 + $0x3a0] sm:$0xff]
      %v415 = vld [vmem:[%s271 + $0x3a8] sm:$0xff]
      %v416 = vld [vmem:[%s271 + $0x3b0] sm:$0xff]
      %v417 = vld [vmem:[%s271 + $0x3b8] sm:$0xff]
      %v418 = vld [vmem:[%s271 + $0x3c0] sm:$0xff]
      %v419 = vld [vmem:[%s271 + $0x3c8] sm:$0xff]
      %v420 = vld [vmem:[%s271 + $0x3d0] sm:$0xff]
      %v421 = vld [vmem:[%s271 + $0x3d8] sm:$0xff]
      %v422 = vld [vmem:[%s271 + $0x3e0] sm:$0xff]
      %v423 = vld [vmem:[%s271 + $0x3e8] sm:$0xff]
      %v424 = vld [vmem:[%s271 + $0x3f0] sm:$0xff]
      %v425 = vld [vmem:[%s271 + $0x3f8] sm:$0xff]
      %v430 = vunpack.c.l.b16 %v294
      %v431 = vunpack.c.h.b16 %v294
      %v432 = vunpack.c.l.b16 %v295
      %v433 = vunpack.c.h.b16 %v295
      %v434 = vunpack.c.l.b16 %v296
      %v435 = vunpack.c.h.b16 %v296
      %v436 = vunpack.c.l.b16 %v297
      %v437 = vunpack.c.h.b16 %v297
      %v438 = vpack.c.b16 %v430, %v430
      %v439 = vpack.c.b16 %v431, %v431
      %v440 = vpack.c.b16 %v432, %v432
      %v441 = vpack.c.b16 %v433, %v433
      %v442 = vpack.c.b16 %v434, %v434
      %v443 = vpack.c.b16 %v435, %v435
      %v444 = vpack.c.b16 %v436, %v436
      %v445 = vpack.c.b16 %v437, %v437
      %v582 = vunpack.c.l.b16 %v298
      %v583 = vunpack.c.h.b16 %v298
      %v584 = vunpack.c.l.b16 %v299
      %v585 = vunpack.c.h.b16 %v299
      %v586 = vunpack.c.l.b16 %v300
      %v587 = vunpack.c.h.b16 %v300
      %v588 = vunpack.c.l.b16 %v301
      %v589 = vunpack.c.h.b16 %v301
      %v590 = vunpack.c.l.b16 %v302
      %v591 = vunpack.c.h.b16 %v302
      %v592 = vunpack.c.l.b16 %v303
      %v593 = vunpack.c.h.b16 %v303
      %v594 = vunpack.c.l.b16 %v304
      %v595 = vunpack.c.h.b16 %v304
      %v596 = vunpack.c.l.b16 %v305
      %v597 = vunpack.c.h.b16 %v305
      %v598 = vunpack.c.l.b16 %v306
      %v599 = vunpack.c.h.b16 %v306
      %v600 = vunpack.c.l.b16 %v307
      %v601 = vunpack.c.h.b16 %v307
      %v602 = vunpack.c.l.b16 %v308
      %v603 = vunpack.c.h.b16 %v308
      %v604 = vunpack.c.l.b16 %v309
      %v605 = vunpack.c.h.b16 %v309
      %v606 = vunpack.c.l.b16 %v310
      %v607 = vunpack.c.h.b16 %v310
      %v608 = vunpack.c.l.b16 %v311
      %v609 = vunpack.c.h.b16 %v311
      %v610 = vunpack.c.l.b16 %v312
      %v611 = vunpack.c.h.b16 %v312
      %v612 = vunpack.c.l.b16 %v313
      %v613 = vunpack.c.h.b16 %v313
      %v614 = vunpack.c.l.b16 %v314
      %v615 = vunpack.c.h.b16 %v314
      %v616 = vunpack.c.l.b16 %v315
      %v617 = vunpack.c.h.b16 %v315
      %v618 = vunpack.c.l.b16 %v316
      %v619 = vunpack.c.h.b16 %v316
      %v620 = vunpack.c.l.b16 %v317
      %v621 = vunpack.c.h.b16 %v317
      %v622 = vunpack.c.l.b16 %v318
      %v623 = vunpack.c.h.b16 %v318
      %v624 = vunpack.c.l.b16 %v319
      %v625 = vunpack.c.h.b16 %v319
      %v626 = vunpack.c.l.b16 %v320
      %v627 = vunpack.c.h.b16 %v320
      %v628 = vunpack.c.l.b16 %v321
      %v629 = vunpack.c.h.b16 %v321
      %v630 = vunpack.c.l.b16 %v322
      %v631 = vunpack.c.h.b16 %v322
      %v632 = vunpack.c.l.b16 %v323
      %v633 = vunpack.c.h.b16 %v323
      %v634 = vunpack.c.l.b16 %v324
      %v635 = vunpack.c.h.b16 %v324
      %v636 = vunpack.c.l.b16 %v325
      %v637 = vunpack.c.h.b16 %v325
      %v638 = vunpack.c.l.b16 %v326
      %v639 = vunpack.c.h.b16 %v326
      %v640 = vunpack.c.l.b16 %v327
      %v641 = vunpack.c.h.b16 %v327
      %v642 = vunpack.c.l.b16 %v328
      %v643 = vunpack.c.h.b16 %v328
      %v644 = vunpack.c.l.b16 %v329
      %v645 = vunpack.c.h.b16 %v329
      %v646 = vunpack.c.l.b16 %v330
      %v647 = vunpack.c.h.b16 %v330
      %v648 = vunpack.c.l.b16 %v331
      %v649 = vunpack.c.h.b16 %v331
      %v650 = vunpack.c.l.b16 %v332
      %v651 = vunpack.c.h.b16 %v332
      %v652 = vunpack.c.l.b16 %v333
      %v653 = vunpack.c.h.b16 %v333
      %v654 = vunpack.c.l.b16 %v334
      %v655 = vunpack.c.h.b16 %v334
      %v656 = vunpack.c.l.b16 %v335
      %v657 = vunpack.c.h.b16 %v335
      %v658 = vunpack.c.l.b16 %v336
      %v659 = vunpack.c.h.b16 %v336
      %v660 = vunpack.c.l.b16 %v337
      %v661 = vunpack.c.h.b16 %v337
      %v662 = vunpack.c.l.b16 %v338
      %v663 = vunpack.c.h.b16 %v338
      %v664 = vunpack.c.l.b16 %v339
      %v665 = vunpack.c.h.b16 %v339
      %v666 = vunpack.c.l.b16 %v340
      %v667 = vunpack.c.h.b16 %v340
      %v668 = vunpack.c.l.b16 %v341
      %v669 = vunpack.c.h.b16 %v341
      %v670 = vunpack.c.l.b16 %v342
      %v671 = vunpack.c.h.b16 %v342
      %v672 = vunpack.c.l.b16 %v343
      %v673 = vunpack.c.h.b16 %v343
      %v674 = vunpack.c.l.b16 %v344
      %v675 = vunpack.c.h.b16 %v344
      %v676 = vunpack.c.l.b16 %v345
      %v677 = vunpack.c.h.b16 %v345
      %v678 = vunpack.c.l.b16 %v346
      %v679 = vunpack.c.h.b16 %v346
      %v680 = vunpack.c.l.b16 %v347
      %v681 = vunpack.c.h.b16 %v347
      %v682 = vunpack.c.l.b16 %v348
      %v683 = vunpack.c.h.b16 %v348
      %v684 = vunpack.c.l.b16 %v349
      %v685 = vunpack.c.h.b16 %v349
      %v686 = vunpack.c.l.b16 %v350
      %v687 = vunpack.c.h.b16 %v350
      %v688 = vunpack.c.l.b16 %v351
      %v689 = vunpack.c.h.b16 %v351
      %v690 = vunpack.c.l.b16 %v352
      %v691 = vunpack.c.h.b16 %v352
      %v692 = vunpack.c.l.b16 %v353
      %v693 = vunpack.c.h.b16 %v353
      %v694 = vunpack.c.l.b16 %v354
      %v695 = vunpack.c.h.b16 %v354
      %v696 = vunpack.c.l.b16 %v355
      %v697 = vunpack.c.h.b16 %v355
      %v698 = vunpack.c.l.b16 %v356
      %v699 = vunpack.c.h.b16 %v356
      %v700 = vunpack.c.l.b16 %v357
      %v701 = vunpack.c.h.b16 %v357
      %v702 = vunpack.c.l.b16 %v358
      %v703 = vunpack.c.h.b16 %v358
      %v704 = vunpack.c.l.b16 %v359
      %v705 = vunpack.c.h.b16 %v359
      %v706 = vunpack.c.l.b16 %v360
      %v707 = vunpack.c.h.b16 %v360
      %v708 = vunpack.c.l.b16 %v361
      %v709 = vunpack.c.h.b16 %v361
      %v710 = vunpack.c.l.b16 %v362
      %v711 = vunpack.c.h.b16 %v362
      %v712 = vunpack.c.l.b16 %v363
      %v713 = vunpack.c.h.b16 %v363
      %v714 = vunpack.c.l.b16 %v364
      %v715 = vunpack.c.h.b16 %v364
      %v716 = vunpack.c.l.b16 %v365
      %v717 = vunpack.c.h.b16 %v365
      %v718 = vunpack.c.l.b16 %v366
      %v719 = vunpack.c.h.b16 %v366
      %v720 = vunpack.c.l.b16 %v367
      %v721 = vunpack.c.h.b16 %v367
      %v722 = vunpack.c.l.b16 %v368
      %v723 = vunpack.c.h.b16 %v368
      %v724 = vunpack.c.l.b16 %v369
      %v725 = vunpack.c.h.b16 %v369
      %v726 = vunpack.c.l.b16 %v370
      %v727 = vunpack.c.h.b16 %v370
      %v728 = vunpack.c.l.b16 %v371
      %v729 = vunpack.c.h.b16 %v371
      %v730 = vunpack.c.l.b16 %v372
      %v731 = vunpack.c.h.b16 %v372
      %v732 = vunpack.c.l.b16 %v373
      %v733 = vunpack.c.h.b16 %v373
      %v734 = vunpack.c.l.b16 %v374
      %v735 = vunpack.c.h.b16 %v374
      %v736 = vunpack.c.l.b16 %v375
      %v737 = vunpack.c.h.b16 %v375
      %v738 = vunpack.c.l.b16 %v376
      %v739 = vunpack.c.h.b16 %v376
      %v740 = vunpack.c.l.b16 %v377
      %v741 = vunpack.c.h.b16 %v377
      %v742 = vunpack.c.l.b16 %v378
      %v743 = vunpack.c.h.b16 %v378
      %v744 = vunpack.c.l.b16 %v379
      %v745 = vunpack.c.h.b16 %v379
      %v746 = vunpack.c.l.b16 %v380
      %v747 = vunpack.c.h.b16 %v380
      %v748 = vunpack.c.l.b16 %v381
      %v749 = vunpack.c.h.b16 %v381
      %v750 = vunpack.c.l.b16 %v382
      %v751 = vunpack.c.h.b16 %v382
      %v752 = vunpack.c.l.b16 %v383
      %v753 = vunpack.c.h.b16 %v383
      %v754 = vunpack.c.l.b16 %v384
      %v755 = vunpack.c.h.b16 %v384
      %v756 = vunpack.c.l.b16 %v385
      %v757 = vunpack.c.h.b16 %v385
      %v758 = vunpack.c.l.b16 %v386
      %v759 = vunpack.c.h.b16 %v386
      %v760 = vunpack.c.l.b16 %v387
      %v761 = vunpack.c.h.b16 %v387
      %v762 = vunpack.c.l.b16 %v388
      %v763 = vunpack.c.h.b16 %v388
      %v764 = vunpack.c.l.b16 %v389
      %v765 = vunpack.c.h.b16 %v389
      %v766 = vunpack.c.l.b16 %v390
      %v767 = vunpack.c.h.b16 %v390
      %v768 = vunpack.c.l.b16 %v391
      %v769 = vunpack.c.h.b16 %v391
      %v770 = vunpack.c.l.b16 %v392
      %v771 = vunpack.c.h.b16 %v392
      %v772 = vunpack.c.l.b16 %v393
      %v773 = vunpack.c.h.b16 %v393
      %v774 = vunpack.c.l.b16 %v394
      %v775 = vunpack.c.h.b16 %v394
      %v776 = vunpack.c.l.b16 %v395
      %v777 = vunpack.c.h.b16 %v395
      %v778 = vunpack.c.l.b16 %v396
      %v779 = vunpack.c.h.b16 %v396
      %v780 = vunpack.c.l.b16 %v397
      %v781 = vunpack.c.h.b16 %v397
      %v782 = vunpack.c.l.b16 %v398
      %v783 = vunpack.c.h.b16 %v398
      %v784 = vunpack.c.l.b16 %v399
      %v785 = vunpack.c.h.b16 %v399
      %v786 = vunpack.c.l.b16 %v400
      %v787 = vunpack.c.h.b16 %v400
      %v788 = vunpack.c.l.b16 %v401
      %v789 = vunpack.c.h.b16 %v401
      %v790 = vunpack.c.l.b16 %v402
      %v791 = vunpack.c.h.b16 %v402
      %v792 = vunpack.c.l.b16 %v403
      %v793 = vunpack.c.h.b16 %v403
      %v794 = vunpack.c.l.b16 %v404
      %v795 = vunpack.c.h.b16 %v404
      %v796 = vunpack.c.l.b16 %v405
      %v797 = vunpack.c.h.b16 %v405
      %v798 = vunpack.c.l.b16 %v406
      %v799 = vunpack.c.h.b16 %v406
      %v800 = vunpack.c.l.b16 %v407
      %v801 = vunpack.c.h.b16 %v407
      %v802 = vunpack.c.l.b16 %v408
      %v803 = vunpack.c.h.b16 %v408
      %v804 = vunpack.c.l.b16 %v409
      %v805 = vunpack.c.h.b16 %v409
      %v806 = vunpack.c.l.b16 %v410
      %v807 = vunpack.c.h.b16 %v410
      %v808 = vunpack.c.l.b16 %v411
      %v809 = vunpack.c.h.b16 %v411
      %v810 = vunpack.c.l.b16 %v412
      %v811 = vunpack.c.h.b16 %v412
      %v812 = vunpack.c.l.b16 %v413
      %v813 = vunpack.c.h.b16 %v413
      %v814 = vunpack.c.l.b16 %v414
      %v815 = vunpack.c.h.b16 %v414
      %v816 = vunpack.c.l.b16 %v415
      %v817 = vunpack.c.h.b16 %v415
      %v818 = vunpack.c.l.b16 %v416
      %v819 = vunpack.c.h.b16 %v416
      %v820 = vunpack.c.l.b16 %v417
      %v821 = vunpack.c.h.b16 %v417
      %v822 = vunpack.c.l.b16 %v418
      %v823 = vunpack.c.h.b16 %v418
      %v824 = vunpack.c.l.b16 %v419
      %v825 = vunpack.c.h.b16 %v419
      %v826 = vunpack.c.l.b16 %v420
      %v827 = vunpack.c.h.b16 %v420
      %v828 = vunpack.c.l.b16 %v421
      %v829 = vunpack.c.h.b16 %v421
      %v830 = vunpack.c.l.b16 %v422
      %v831 = vunpack.c.h.b16 %v422
      %v832 = vunpack.c.l.b16 %v423
      %v833 = vunpack.c.h.b16 %v423
      %v834 = vunpack.c.l.b16 %v424
      %v835 = vunpack.c.h.b16 %v424
      %v836 = vunpack.c.l.b16 %v425
      %v837 = vunpack.c.h.b16 %v425
      %v838 = vpack.c.b16 %v584, %v582
      %v839 = vpack.c.b16 %v585, %v583
      %v840 = vpack.c.b16 %v588, %v586
      %v841 = vpack.c.b16 %v589, %v587
      %v842 = vpack.c.b16 %v592, %v590
      %v843 = vpack.c.b16 %v593, %v591
      %v844 = vpack.c.b16 %v596, %v594
      %v845 = vpack.c.b16 %v597, %v595
      %v846 = vpack.c.b16 %v600, %v598
      %v847 = vpack.c.b16 %v601, %v599
      %v848 = vpack.c.b16 %v604, %v602
      %v849 = vpack.c.b16 %v605, %v603
      %v850 = vpack.c.b16 %v608, %v606
      %v851 = vpack.c.b16 %v609, %v607
      %v852 = vpack.c.b16 %v612, %v610
      %v853 = vpack.c.b16 %v613, %v611
      %v854 = vpack.c.b16 %v616, %v614
      %v855 = vpack.c.b16 %v617, %v615
      %v856 = vpack.c.b16 %v620, %v618
      %v857 = vpack.c.b16 %v621, %v619
      %v858 = vpack.c.b16 %v624, %v622
      %v859 = vpack.c.b16 %v625, %v623
      %v860 = vpack.c.b16 %v628, %v626
      %v861 = vpack.c.b16 %v629, %v627
      %v862 = vpack.c.b16 %v632, %v630
      %v863 = vpack.c.b16 %v633, %v631
      %v864 = vpack.c.b16 %v636, %v634
      %v865 = vpack.c.b16 %v637, %v635
      %v866 = vpack.c.b16 %v640, %v638
      %v867 = vpack.c.b16 %v641, %v639
      %v868 = vpack.c.b16 %v644, %v642
      %v869 = vpack.c.b16 %v645, %v643
      %v870 = vpack.c.b16 %v648, %v646
      %v871 = vpack.c.b16 %v649, %v647
      %v872 = vpack.c.b16 %v652, %v650
      %v873 = vpack.c.b16 %v653, %v651
      %v874 = vpack.c.b16 %v656, %v654
      %v875 = vpack.c.b16 %v657, %v655
      %v876 = vpack.c.b16 %v660, %v658
      %v877 = vpack.c.b16 %v661, %v659
      %v878 = vpack.c.b16 %v664, %v662
      %v879 = vpack.c.b16 %v665, %v663
      %v880 = vpack.c.b16 %v668, %v666
      %v881 = vpack.c.b16 %v669, %v667
      %v882 = vpack.c.b16 %v672, %v670
      %v883 = vpack.c.b16 %v673, %v671
      %v884 = vpack.c.b16 %v676, %v674
      %v885 = vpack.c.b16 %v677, %v675
      %v886 = vpack.c.b16 %v680, %v678
      %v887 = vpack.c.b16 %v681, %v679
      %v888 = vpack.c.b16 %v684, %v682
      %v889 = vpack.c.b16 %v685, %v683
      %v890 = vpack.c.b16 %v688, %v686
      %v891 = vpack.c.b16 %v689, %v687
      %v892 = vpack.c.b16 %v692, %v690
      %v893 = vpack.c.b16 %v693, %v691
      %v894 = vpack.c.b16 %v696, %v694
      %v895 = vpack.c.b16 %v697, %v695
      %v896 = vpack.c.b16 %v700, %v698
      %v897 = vpack.c.b16 %v701, %v699
      %v898 = vpack.c.b16 %v704, %v702
      %v899 = vpack.c.b16 %v705, %v703
      %v900 = vpack.c.b16 %v708, %v706
      %v901 = vpack.c.b16 %v709, %v707
      %v902 = vpack.c.b16 %v712, %v710
      %v903 = vpack.c.b16 %v713, %v711
      %v904 = vpack.c.b16 %v716, %v714
      %v905 = vpack.c.b16 %v717, %v715
      %v906 = vpack.c.b16 %v720, %v718
      %v907 = vpack.c.b16 %v721, %v719
      %v908 = vpack.c.b16 %v724, %v722
      %v909 = vpack.c.b16 %v725, %v723
      %v910 = vpack.c.b16 %v728, %v726
      %v911 = vpack.c.b16 %v729, %v727
      %v912 = vpack.c.b16 %v732, %v730
      %v913 = vpack.c.b16 %v733, %v731
      %v914 = vpack.c.b16 %v736, %v734
      %v915 = vpack.c.b16 %v737, %v735
      %v916 = vpack.c.b16 %v740, %v738
      %v917 = vpack.c.b16 %v741, %v739
      %v918 = vpack.c.b16 %v744, %v742
      %v919 = vpack.c.b16 %v745, %v743
      %v920 = vpack.c.b16 %v748, %v746
      %v921 = vpack.c.b16 %v749, %v747
      %v922 = vpack.c.b16 %v752, %v750
      %v923 = vpack.c.b16 %v753, %v751
      %v924 = vpack.c.b16 %v756, %v754
      %v925 = vpack.c.b16 %v757, %v755
      %v926 = vpack.c.b16 %v760, %v758
      %v927 = vpack.c.b16 %v761, %v759
      %v928 = vpack.c.b16 %v764, %v762
      %v929 = vpack.c.b16 %v765, %v763
      %v930 = vpack.c.b16 %v768, %v766
      %v931 = vpack.c.b16 %v769, %v767
      %v932 = vpack.c.b16 %v772, %v770
      %v933 = vpack.c.b16 %v773, %v771
      %v934 = vpack.c.b16 %v776, %v774
      %v935 = vpack.c.b16 %v777, %v775
      %v936 = vpack.c.b16 %v780, %v778
      %v937 = vpack.c.b16 %v781, %v779
      %v938 = vpack.c.b16 %v784, %v782
      %v939 = vpack.c.b16 %v785, %v783
      %v940 = vpack.c.b16 %v788, %v786
      %v941 = vpack.c.b16 %v789, %v787
      %v942 = vpack.c.b16 %v792, %v790
      %v943 = vpack.c.b16 %v793, %v791
      %v944 = vpack.c.b16 %v796, %v794
      %v945 = vpack.c.b16 %v797, %v795
      %v946 = vpack.c.b16 %v800, %v798
      %v947 = vpack.c.b16 %v801, %v799
      %v948 = vpack.c.b16 %v804, %v802
      %v949 = vpack.c.b16 %v805, %v803
      %v950 = vpack.c.b16 %v808, %v806
      %v951 = vpack.c.b16 %v809, %v807
      %v952 = vpack.c.b16 %v812, %v810
      %v953 = vpack.c.b16 %v813, %v811
      %v954 = vpack.c.b16 %v816, %v814
      %v955 = vpack.c.b16 %v817, %v815
      %v956 = vpack.c.b16 %v820, %v818
      %v957 = vpack.c.b16 %v821, %v819
      %v958 = vpack.c.b16 %v824, %v822
      %v959 = vpack.c.b16 %v825, %v823
      %v960 = vpack.c.b16 %v828, %v826
      %v961 = vpack.c.b16 %v829, %v827
      %v962 = vpack.c.b16 %v832, %v830
      %v963 = vpack.c.b16 %v833, %v831
      %v964 = vpack.c.b16 %v836, %v834
      %v965 = vpack.c.b16 %v837, %v835
      %1094 = vmatprep.subr.bf16.mxu0 %v839
      %1095 = vmatpush1.bf16.msra.mxu0 %v838
      %1096 = vmatprep.subr.bf16.mxu0 %v841
      %1097 = vmatpush1.bf16.msra.mxu0 %v840
      %1098 = vmatprep.subr.bf16.mxu0 %v843
      %1099 = vmatpush1.bf16.msra.mxu0 %v842
      %1100 = vmatprep.subr.bf16.mxu0 %v845
      %1101 = vmatpush1.bf16.msra.mxu0 %v844
      %1102 = vmatprep.subr.bf16.mxu0 %v847
      %1103 = vmatpush1.bf16.msra.mxu0 %v846
      %1104 = vmatprep.subr.bf16.mxu0 %v849
      %1105 = vmatpush1.bf16.msra.mxu0 %v848
      %1106 = vmatprep.subr.bf16.mxu0 %v851
      %1107 = vmatpush1.bf16.msra.mxu0 %v850
      %1108 = vmatprep.subr.bf16.mxu0 %v853
      %1109 = vmatpush1.bf16.msra.mxu0 %v852
      %1110 = vmatprep.subr.bf16.mxu0 %v855
      %1111 = vmatpush1.bf16.msra.mxu0 %v854
      %1112 = vmatprep.subr.bf16.mxu0 %v857
      %1113 = vmatpush1.bf16.msra.mxu0 %v856
      %1114 = vmatprep.subr.bf16.mxu0 %v859
      %1115 = vmatpush1.bf16.msra.mxu0 %v858
      %1116 = vmatprep.subr.bf16.mxu0 %v861
      %1117 = vmatpush1.bf16.msra.mxu0 %v860
      %1118 = vmatprep.subr.bf16.mxu0 %v863
      %1119 = vmatpush1.bf16.msra.mxu0 %v862
      %1120 = vmatprep.subr.bf16.mxu0 %v865
      %1121 = vmatpush1.bf16.msra.mxu0 %v864
      %1122 = vmatprep.subr.bf16.mxu0 %v867
      %1123 = vmatpush1.bf16.msra.mxu0 %v866
      %1124 = vmatprep.subr.bf16.mxu0 %v869
      %1125 = vmatpush1.bf16.msra.mxu0 %v868
      %1126 = vmatprep.mubr.bf16.mxu0 %v439
      %1127 = vmatmul.mubr.bf16.gmra.mrb[0].mxu0 %v438
      %v1128 = vpop.f32.mrb[0].mxu0
      %v1129 = vadd.f32 0.0, %v1128
      %v1130 = vpop.f32.mrb[0].mxu0
      %v1131 = vadd.f32 0.0, %v1130
      %v1132 = vpop.f32.mrb[0].mxu0
      %v1133 = vpop.f32.mrb[0].mxu0
      %1134 = vdwg.mxu0
      %1135 = vmatprep.subr.bf16.mxu0 %v871
      %1136 = vmatpush1.bf16.msra.mxu0 %v870
      %1137 = vmatprep.subr.bf16.mxu0 %v873
      %1138 = vmatpush1.bf16.msra.mxu0 %v872
      %1139 = vmatprep.subr.bf16.mxu0 %v875
      %1140 = vmatpush1.bf16.msra.mxu0 %v874
      %1141 = vmatprep.subr.bf16.mxu0 %v877
      %1142 = vmatpush1.bf16.msra.mxu0 %v876
      %1143 = vmatprep.subr.bf16.mxu0 %v879
      %1144 = vmatpush1.bf16.msra.mxu0 %v878
      %1145 = vmatprep.subr.bf16.mxu0 %v881
      %1146 = vmatpush1.bf16.msra.mxu0 %v880
      %1147 = vmatprep.subr.bf16.mxu0 %v883
      %1148 = vmatpush1.bf16.msra.mxu0 %v882
      %1149 = vmatprep.subr.bf16.mxu0 %v885
      %1150 = vmatpush1.bf16.msra.mxu0 %v884
      %1151 = vmatprep.subr.bf16.mxu0 %v887
      %1152 = vmatpush1.bf16.msra.mxu0 %v886
      %1153 = vmatprep.subr.bf16.mxu0 %v889
      %1154 = vmatpush1.bf16.msra.mxu0 %v888
      %1155 = vmatprep.subr.bf16.mxu0 %v891
      %1156 = vmatpush1.bf16.msra.mxu0 %v890
      %1157 = vmatprep.subr.bf16.mxu0 %v893
      %1158 = vmatpush1.bf16.msra.mxu0 %v892
      %1159 = vmatprep.subr.bf16.mxu0 %v895
      %1160 = vmatpush1.bf16.msra.mxu0 %v894
      %1161 = vmatprep.subr.bf16.mxu0 %v897
      %1162 = vmatpush1.bf16.msra.mxu0 %v896
      %1163 = vmatprep.subr.bf16.mxu0 %v899
      %1164 = vmatpush1.bf16.msra.mxu0 %v898
      %1165 = vmatprep.subr.bf16.mxu0 %v901
      %1166 = vmatpush1.bf16.msra.mxu0 %v900
      %1167 = vmatprep.mubr.bf16.mxu0 %v441
      %1168 = vmatmul.mubr.bf16.gmra.mrb[0].mxu0 %v440
      %v1169 = vpop.f32.mrb[0].mxu0
      %v1170 = vadd.f32 %v1129, %v1169
      %v1171 = vpop.f32.mrb[0].mxu0
      %v1172 = vadd.f32 %v1131, %v1171
      %v1173 = vpop.f32.mrb[0].mxu0
      %v1174 = vpop.f32.mrb[0].mxu0
      %1175 = vdwg.mxu0
      %1176 = vmatprep.subr.bf16.mxu0 %v903
      %1177 = vmatpush1.bf16.msra.mxu0 %v902
      %1178 = vmatprep.subr.bf16.mxu0 %v905
      %1179 = vmatpush1.bf16.msra.mxu0 %v904
      %1180 = vmatprep.subr.bf16.mxu0 %v907
      %1181 = vmatpush1.bf16.msra.mxu0 %v906
      %1182 = vmatprep.subr.bf16.mxu0 %v909
      %1183 = vmatpush1.bf16.msra.mxu0 %v908
      %1184 = vmatprep.subr.bf16.mxu0 %v911
      %1185 = vmatpush1.bf16.msra.mxu0 %v910
      %1186 = vmatprep.subr.bf16.mxu0 %v913
      %1187 = vmatpush1.bf16.msra.mxu0 %v912
      %1188 = vmatprep.subr.bf16.mxu0 %v915
      %1189 = vmatpush1.bf16.msra.mxu0 %v914
      %1190 = vmatprep.subr.bf16.mxu0 %v917
      %1191 = vmatpush1.bf16.msra.mxu0 %v916
      %1192 = vmatprep.subr.bf16.mxu0 %v919
      %1193 = vmatpush1.bf16.msra.mxu0 %v918
      %1194 = vmatprep.subr.bf16.mxu0 %v921
      %1195 = vmatpush1.bf16.msra.mxu0 %v920
      %1196 = vmatprep.subr.bf16.mxu0 %v923
      %1197 = vmatpush1.bf16.msra.mxu0 %v922
      %1198 = vmatprep.subr.bf16.mxu0 %v925
      %1199 = vmatpush1.bf16.msra.mxu0 %v924
      %1200 = vmatprep.subr.bf16.mxu0 %v927
      %1201 = vmatpush1.bf16.msra.mxu0 %v926
      %1202 = vmatprep.subr.bf16.mxu0 %v929
      %1203 = vmatpush1.bf16.msra.mxu0 %v928
      %1204 = vmatprep.subr.bf16.mxu0 %v931
      %1205 = vmatpush1.bf16.msra.mxu0 %v930
      %1206 = vmatprep.subr.bf16.mxu0 %v933
      %1207 = vmatpush1.bf16.msra.mxu0 %v932
      %1208 = vmatprep.mubr.bf16.mxu0 %v443
      %1209 = vmatmul.mubr.bf16.gmra.mrb[0].mxu0 %v442
      %v1210 = vpop.f32.mrb[0].mxu0
      %v1211 = vadd.f32 %v1170, %v1210
      %v1212 = vpop.f32.mrb[0].mxu0
      %v1213 = vadd.f32 %v1172, %v1212
      %v1214 = vpop.f32.mrb[0].mxu0
      %v1215 = vpop.f32.mrb[0].mxu0
      %1216 = vdwg.mxu0
      %1217 = vmatprep.subr.bf16.mxu0 %v935
      %1218 = vmatpush1.bf16.msra.mxu0 %v934
      %1219 = vmatprep.subr.bf16.mxu0 %v937
      %1220 = vmatpush1.bf16.msra.mxu0 %v936
      %1221 = vmatprep.subr.bf16.mxu0 %v939
      %1222 = vmatpush1.bf16.msra.mxu0 %v938
      %1223 = vmatprep.subr.bf16.mxu0 %v941
      %1224 = vmatpush1.bf16.msra.mxu0 %v940
      %1225 = vmatprep.subr.bf16.mxu0 %v943
      %1226 = vmatpush1.bf16.msra.mxu0 %v942
      %1227 = vmatprep.subr.bf16.mxu0 %v945
      %1228 = vmatpush1.bf16.msra.mxu0 %v944
      %1229 = vmatprep.subr.bf16.mxu0 %v947
      %1230 = vmatpush1.bf16.msra.mxu0 %v946
      %1231 = vmatprep.subr.bf16.mxu0 %v949
      %1232 = vmatpush1.bf16.msra.mxu0 %v948
      %1233 = vmatprep.subr.bf16.mxu0 %v951
      %1234 = vmatpush1.bf16.msra.mxu0 %v950
      %1235 = vmatprep.subr.bf16.mxu0 %v953
      %1236 = vmatpush1.bf16.msra.mxu0 %v952
      %1237 = vmatprep.subr.bf16.mxu0 %v955
      %1238 = vmatpush1.bf16.msra.mxu0 %v954
      %1239 = vmatprep.subr.bf16.mxu0 %v957
      %1240 = vmatpush1.bf16.msra.mxu0 %v956
      %1241 = vmatprep.subr.bf16.mxu0 %v959
      %1242 = vmatpush1.bf16.msra.mxu0 %v958
      %1243 = vmatprep.subr.bf16.mxu0 %v961
      %1244 = vmatpush1.bf16.msra.mxu0 %v960
      %1245 = vmatprep.subr.bf16.mxu0 %v963
      %1246 = vmatpush1.bf16.msra.mxu0 %v962
      %1247 = vmatprep.subr.bf16.mxu0 %v965
      %1248 = vmatpush1.bf16.msra.mxu0 %v964
      %1249 = vmatprep.mubr.bf16.mxu0 %v445
      %1250 = vmatmul.mubr.bf16.gmra.mrb[0].mxu0 %v444
      %v1251 = vpop.f32.mrb[0].mxu0
      %v1252 = vadd.f32 %v1211, %v1251
      %v1253 = vpop.f32.mrb[0].mxu0
      %v1254 = vadd.f32 %v1213, %v1253
      %v1255 = vpop.f32.mrb[0].mxu0
      %v1256 = vpop.f32.mrb[0].mxu0
      %1257 = vdwg.mxu0
      %v1258 = vadd.f32 %v292, %v1252
      %v1259 = vadd.f32 %v293, %v1254
      %1260 = vst [vmem:[#allocation2] sm:$0xff] %v1258
      %1261 = vst [vmem:[#allocation2 + $0x8] sm:$0xff] %v1259
      %p1262 = scmp.eq.s32.totalorder %s21, 1
      // Predicated region
      $region37: #{unet_forward.16} parent=31 // pred_check
        %p1263 = pneg %p1262
      $region38: #{unet_forward.16} parent=31 // pred_check_branch
        %1265 = sbr.rel (%p1263) target = $region40
      $region39: #{unet_forward.16} parent=31 // pred_region
        %v1266 = vld [vmem:[#allocation2] sm:$0xff]
        %v1267 = vld [vmem:[#allocation2 + $0x8] sm:$0xff]
        %v1268 = vld [vmem:[%s276] sm:$0x3]
        %v1270 = vlaneseq
        %v1271 = vshrl.u32 %v1270, 7
        %v1272 = vsub.s32 0, %v1271
        %v1273 = vrot.slane %v1268, %v1272
        %v1274 = vlaneseq
        %v1275 = vshrl.u32 %v1274, 7
        %v1276 = vsub.s32 1, %v1275
        %v1277 = vrot.slane %v1268, %v1276
        %v1280 = vadd.f32 %v1266, %v1273
        %v1281 = vadd.f32 %v1267, %v1277
        %1282 = vst [vmem:[%s285] sm:$0xff] %v1280
        %1283 = vst [vmem:[%s285 + $0x8] sm:$0xff] %v1281
      $region40: #{unet_forward.16} parent=31 // pred_fallthru
        _
      %p1284 = scmp.lt.s32.totalorder %s19, 3
      %s1285 = scalar_select %p1284, %s19, 3
      %p1286 = scmp.lt.s32.totalorder %s20, 0
      %s1287 = scalar_select %p1286, %s20, 0
      %s1288 = smul.addr %s1287, 2
      %s1289 = smul.addr %s1285, 2
      %s1290 = sadd.s32 %s1288, %s1289
      %s1291 = smul.addr %s1290, 8
      %s1292 = scalar_lea.vmem %s3, %s1291
      // Predicated region
      $region41: #{unet_forward.16} parent=31 // pred_check
        %p1293 = pneg %p137
      $region42: #{unet_forward.16} parent=31 // pred_check_branch
        %1295 = sbr.rel (%p1293) target = $region44
      $region43: #{unet_forward.16} parent=31 // pred_region
        _
      $region44: #{unet_forward.16} parent=31 // pred_fallthru
        _
    $region32: #{unet_forward.16} parent=5 // pred_fallthru
      _
    %p1296 = scmp.le.s32.totalorder 2, %s9
    // Predicated region
    $region45: #{unet_forward.16} parent=5 // pred_check
      %p1297 = pneg %p1296
    $region46: #{unet_forward.16} parent=5 // pred_check_branch
      %1299 = sbr.rel (%p1297) target = $region48
    $region47: #{unet_forward.16} parent=5 // pred_region
      %s1300 = ssub.s32 %s9, 2
      // Predicated region
      $region49: #{unet_forward.16} parent=47 // pred_check
        %p1301 = pneg %p143
      $region50: #{unet_forward.16} parent=47 // pred_check_branch
        %1303 = sbr.rel (%p1301) target = $region52
      $region51: #{unet_forward.16} parent=47 // pred_region
        %p1304 = scmp.lt.s32.totalorder %s22, 3
        %s1305 = scalar_select %p1304, %s22, 3
        %p1306 = scmp.lt.s32.totalorder %s23, 0
        %s1307 = scalar_select %p1306, %s23, 0
        %s1308 = smul.addr %s1307, 2
        %s1309 = smul.addr %s1305, 2
        %s1310 = sadd.s32 %s1308, %s1309
        %s1311 = smul.addr %s1310, 8
        %s1312 = scalar_lea.vmem %s3, %s1311
      $region52: #{unet_forward.16} parent=47 // pred_fallthru
        _
    $region48: #{unet_forward.16} parent=5 // pred_fallthru
      _
  $region6: #{unet_forward.16} parent=0 // loop_footer
    %s13 = sadd.s32 1, %s9
  $region7: #{unet_forward.16} parent=0 // loop_footer_branch
    %8 = sbr.rel target = $region3
  $region8: #{unet_forward.16} parent=0 // loop_exit
    _

// kernel: unet_forward.17
$region0: #{unet_forward.17}
  #allocation0 [shape = 'u32[]', space=smem, size = 0x4, offset = 0x4, fixed_abs, tag = 'smem constant byte address 0x4 - core index']
  #allocation1 [shape = 'u32[144,128]{1,0:T(1,128)}', space=vmem, size = 0x12000, scoped, tag = 'internal scratch']
  #allocation2 [shape = 'f32[16,128]{1,0:T(8,128)}', space=vmem, size = 0x2000, scoped, tag = 'scratch operand']
  %s0 = inlined_call_operand.vmem [shape: bf16[4,32,2048], index: 0, kind: input, shape index: {}]
  %s1 = inlined_call_operand.vmem [shape: bf16[4,2048,128], index: 1, kind: input, shape index: {}]
  %s2 = inlined_call_operand.vmem [shape: f32[4,1,128], index: 2, kind: input, shape index: {}]
  %s3 = inlined_call_operand.vmem [shape: f32[4,32,128], index: 3, kind: output, shape index: {}]
  %s4 = sld [smem:[#allocation0]]
  $region76: #{unet_forward.17} parent=0
    _
  %s6 = ssub.s32 1, %s4
  %s7 = scalar_select 0, %s6, %s4
  $region1: #{unet_forward.17} parent=0
    #allocation3 [shape = 'u8[65536]{0}', space=vmem, size = 0x10000, scoped, tag = 'input window, operand 0']
    loop: start=0, step=1, limit=18
    $region2: #{unet_forward.17} parent=1 // loop_pre_header
      _
    $region3: #{unet_forward.17} parent=1 // loop_header
      %s9 = sphi 0, %s13
      %p10 = scmp.ge.s32.totalorder %s9, 18
      %s16 = sphi 0, %s35
      %s17 = sphi 0, %s31
      %s18 = sphi 0, %s27
      %s19 = sphi 0, %s16
      %s20 = sphi 0, %s17
      %s21 = sphi 0, %s18
      %s22 = sphi 0, %s19
      %s23 = sphi 0, %s20
      %s24 = sphi 0, %s21
      %s42 = sphi 0, %s44
      %s45 = sphi 0, %s42
      %s46 = sphi 0, %s45
      %s62 = sphi 0, %s46
      %s70 = sphi 0, %s72
      %s73 = sphi 0, %s70
      %s74 = sphi 0, %s73
      %s90 = sphi 0, %s74
      %s96 = sphi 0, %s98
      %s99 = sphi 0, %s96
      %s100 = sphi 0, %s99
      %s116 = sphi 0, %s100
      %s124 = sphi 0, %s126
      %s127 = sphi 0, %s124
      %s128 = sphi 0, %s127
      %s144 = sphi 0, %s128
    $region4: #{unet_forward.17} parent=1 // loop_header_branch
      %12 = sbr.rel (%p10) target = $region8
    $region5: #{unet_forward.17} parent=1 // loop_body
      %s14 = ssub.s32 %s9, 1
      %s15 = ssub.s32 %s9, 2
      %s25 = sadd.s32 1, %s18
      %p26 = scmp.ge.s32.totalorder %s25, 2
      %s27 = scalar_select %p26, 0, %s25
      %s28 = sadd.s32 1, %s17
      %s29 = scalar_select %p26, %s28, %s17
      %p30 = scmp.ge.s32.totalorder %s29, 2
      %s31 = scalar_select %p30, 0, %s29
      %s32 = sadd.s32 1, %s16
      %s33 = scalar_select %p30, %s32, %s16
      %p34 = scmp.ge.s32.totalorder %s33, 4
      %s35 = scalar_select %p34, 0, %s33
      %s36 = ssub.s32 %s16, %s35
      %s37 = ssub.s32 %s17, %s31
      %s38 = sor.u32 %s36, %s37
      %s39 = ssub.s32 %s18, %s27
      %s40 = sor.u32 %s38, %s39
      %p41 = scmp.eq.s32.totalorder %s40, 0
      %s43 = sadd.s32 %s42, 1
      %s44 = scalar_select %p41, %s42, %s43
      %p47 = pneg %p41
      %p48 = scmp.eq.s32.totalorder %s9, 15
      %p49 = por %p47, %p48
      %p50 = scmp.ne.s32.totalorder %s42, %s45
      %p51 = scmp.eq.s32.totalorder %s9, 0
      %p52 = por %p50, %p51
      %p53 = scmp.ne.s32.totalorder %s42, %s45
      %p54 = scmp.eq.s32.totalorder %s14, 15
      %p55 = por %p53, %p54
      %p56 = scmp.ne.s32.totalorder %s45, %s46
      %p57 = scmp.eq.s32.totalorder %s14, 0
      %p58 = por %p56, %p57
      %p59 = scmp.ne.s32.totalorder %s45, %s46
      %p60 = scmp.eq.s32.totalorder %s15, 15
      %p61 = por %p59, %p60
      %p63 = scmp.ne.s32.totalorder %s46, %s62
      %p64 = scmp.eq.s32.totalorder %s15, 0
      %p65 = por %p63, %p64
      %s66 = ssub.s32 %s16, %s35
      %s67 = ssub.s32 %s18, %s27
      %s68 = sor.u32 %s66, %s67
      %p69 = scmp.eq.s32.totalorder %s68, 0
      %s71 = sadd.s32 %s70, 1
      %s72 = scalar_select %p69, %s70, %s71
      %p75 = pneg %p69
      %p76 = scmp.eq.s32.totalorder %s9, 15
      %p77 = por %p75, %p76
      %p78 = scmp.ne.s32.totalorder %s70, %s73
      %p79 = scmp.eq.s32.totalorder %s9, 0
      %p80 = por %p78, %p79
      %p81 = scmp.ne.s32.totalorder %s70, %s73
      %p82 = scmp.eq.s32.totalorder %s14, 15
      %p83 = por %p81, %p82
      %p84 = scmp.ne.s32.totalorder %s73, %s74
      %p85 = scmp.eq.s32.totalorder %s14, 0
      %p86 = por %p84, %p85
      %p87 = scmp.ne.s32.totalorder %s73, %s74
      %p88 = scmp.eq.s32.totalorder %s15, 15
      %p89 = por %p87, %p88
      %p91 = scmp.ne.s32.totalorder %s74, %s90
      %p92 = scmp.eq.s32.totalorder %s15, 0
      %p93 = por %p91, %p92
      %s94 = ssub.s32 %s16, %s35
      %p95 = scmp.eq.s32.totalorder %s94, 0
      %s97 = sadd.s32 %s96, 1
      %s98 = scalar_select %p95, %s96, %s97
      %p101 = pneg %p95
      %p102 = scmp.eq.s32.totalorder %s9, 15
      %p103 = por %p101, %p102
      %p104 = scmp.ne.s32.totalorder %s96, %s99
      %p105 = scmp.eq.s32.totalorder %s9, 0
      %p106 = por %p104, %p105
      %p107 = scmp.ne.s32.totalorder %s96, %s99
      %p108 = scmp.eq.s32.totalorder %s14, 15
      %p109 = por %p107, %p108
      %p110 = scmp.ne.s32.totalorder %s99, %s100
      %p111 = scmp.eq.s32.totalorder %s14, 0
      %p112 = por %p110, %p111
      %p113 = scmp.ne.s32.totalorder %s99, %s100
      %p114 = scmp.eq.s32.totalorder %s15, 15
      %p115 = por %p113, %p114
      %p117 = scmp.ne.s32.totalorder %s100, %s116
      %p118 = scmp.eq.s32.totalorder %s15, 0
      %p119 = por %p117, %p118
      %s120 = ssub.s32 %s16, %s35
      %s121 = ssub.s32 %s17, %s31
      %s122 = sor.u32 %s120, %s121
      %p123 = scmp.eq.s32.totalorder %s122, 0
      %s125 = sadd.s32 %s124, 1
      %s126 = scalar_select %p123, %s124, %s125
      %p129 = pneg %p123
      %p130 = scmp.eq.s32.totalorder %s9, 15
      %p131 = por %p129, %p130
      %p132 = scmp.ne.s32.totalorder %s124, %s127
      %p133 = scmp.eq.s32.totalorder %s9, 0
      %p134 = por %p132, %p133
      %p135 = scmp.ne.s32.totalorder %s124, %s127
      %p136 = scmp.eq.s32.totalorder %s14, 15
      %p137 = por %p135, %p136
      %p138 = scmp.ne.s32.totalorder %s127, %s128
      %p139 = scmp.eq.s32.totalorder %s14, 0
      %p140 = por %p138, %p139
      %p141 = scmp.ne.s32.totalorder %s127, %s128
      %p142 = scmp.eq.s32.totalorder %s15, 15
      %p143 = por %p141, %p142
      %p145 = scmp.ne.s32.totalorder %s128, %s144
      %p146 = scmp.eq.s32.totalorder %s15, 0
      %p147 = por %p145, %p146
      %p148 = scmp.le.s32.totalorder 1, %s9
      %p149 = scmp.lt.s32.totalorder %s9, 17
      %p150 = pnand %p148, %p149
      %p151 = pneg %p150
      // Predicated region
      $region9: #{unet_forward.17} parent=5 // pred_check
        _
      $region10: #{unet_forward.17} parent=5 // pred_check_branch
        %153 = sbr.rel (%p150) target = $region12
      $region11: #{unet_forward.17} parent=5 // pred_region
        %s154 = ssub.s32 %s9, 1
      $region12: #{unet_forward.17} parent=5 // pred_fallthru
        _
      %p155 = scmp.lt.s32.totalorder %s9, 16
      // Predicated region
      $region13: #{unet_forward.17} parent=5 // pred_check
        %p156 = pneg %p155
      $region14: #{unet_forward.17} parent=5 // pred_check_branch
        %158 = sbr.rel (%p156) target = $region16
      $region15: #{unet_forward.17} parent=5 // pred_region
        // Predicated region
        $region17: #{unet_forward.17} parent=15 // pred_check
          %p159 = pneg %p52
        $region18: #{unet_forward.17} parent=15 // pred_check_branch
          %161 = sbr.rel (%p159) target = $region20
        $region19: #{unet_forward.17} parent=15 // pred_region
          %s162 = sand.u32 %s42, 1
          %s163 = sand.u32 %s42, 1
          %s164 = smul.addr %s163, 64
          %s165 = scalar_lea.vmem [#allocation3], %s164
          %s166 = smul.u32 2, %s17
          %s167 = smul.u32 8, %s18
          %s168 = smul.addr %s166, 16
          %s169 = sadd.s32 %s167, %s168
          %s170 = smul.addr %s16, 64
          %s171 = sadd.s32 %s169, %s170
          %s172 = smul.addr %s171, 4
          %s173 = scalar_lea.vmem %s0, %s172
          // Predicated region
          $region21: #{unet_forward.17} parent=19 // pred_check
            _
          $region22: #{unet_forward.17} parent=19 // pred_check_branch
            %175 = sbr.rel (0) target = $region24
          $region23: #{unet_forward.17} parent=19 // pred_region
            // Predicated region
            $region25: #{unet_forward.17} parent=23 // pred_check
              _
            $region26: #{unet_forward.17} parent=23 // pred_check_branch
              %177 = sbr.rel (0) target = $region28
            $region27: #{unet_forward.17} parent=23 // pred_region
              loop: start=0, step=1, limit=1
              $region29: #{unet_forward.17} parent=27 // loop_pre_header
                _
              $region30: #{unet_forward.17} parent=27 // loop_header
                %s179 = sphi 0, %s183
                %p180 = scmp.ge.s32.totalorder %s179, 1
                %s184 = sphi %s173, %s173
                %s185 = sphi %s165, %s165
              $region31: #{unet_forward.17} parent=27 // loop_header_branch
                %182 = sbr.rel (%p180) target = $region35
              $region32: #{unet_forward.17} parent=27 // loop_body
                %v186 = vld [vmem:[%s184] sm:$0xff]
                %187 = vst [vmem:[%s185] sm:$0xff] %v186
                %v188 = vld [vmem:[%s184 + $0x8] sm:$0xff]
                %189 = vst [vmem:[%s185 + $0x8] sm:$0xff] %v188
                %v190 = vld [vmem:[%s184 + $0x10] sm:$0xff]
                %191 = vst [vmem:[%s185 + $0x10] sm:$0xff] %v190
                %v192 = vld [vmem:[%s184 + $0x18] sm:$0xff]
                %193 = vst [vmem:[%s185 + $0x18] sm:$0xff] %v192
                %v194 = vld [vmem:[%s184 + $0x40] sm:$0xff]
                %195 = vst [vmem:[%s185 + $0x20] sm:$0xff] %v194
                %v196 = vld [vmem:[%s184 + $0x48] sm:$0xff]
                %197 = vst [vmem:[%s185 + $0x28] sm:$0xff] %v196
                %v198 = vld [vmem:[%s184 + $0x50] sm:$0xff]
                %199 = vst [vmem:[%s185 + $0x30] sm:$0xff] %v198
                %v200 = vld [vmem:[%s184 + $0x58] sm:$0xff]
                %201 = vst [vmem:[%s185 + $0x38] sm:$0xff] %v200
              $region33: #{unet_forward.17} parent=27 // loop_footer
                %s183 = sadd.s32 1, %s179
              $region34: #{unet_forward.17} parent=27 // loop_footer_branch
                %178 = sbr.rel target = $region30
              $region35: #{unet_forward.17} parent=27 // loop_exit
                _
            $region28: #{unet_forward.17} parent=23 // pred_fallthru
              _
            // Predicated region
            $region36: #{unet_forward.17} parent=23 // pred_check
              _
            $region37: #{unet_forward.17} parent=23 // pred_check_branch
              %203 = sbr.rel target = $region39
            $region38: #{unet_forward.17} parent=23 // pred_region
              _
            $region39: #{unet_forward.17} parent=23 // pred_fallthru
              _
          $region24: #{unet_forward.17} parent=19 // pred_fallthru
            _
          %204 = vnop
        $region20: #{unet_forward.17} parent=15 // pred_fallthru
          _
        // Predicated region
        $region40: #{unet_forward.17} parent=15 // pred_check
          %p205 = pneg %p80
        $region41: #{unet_forward.17} parent=15 // pred_check_branch
          %207 = sbr.rel (%p205) target = $region43
        $region42: #{unet_forward.17} parent=15 // pred_region
          %s208 = smul.u32 128, %s18
          %p209 = scmp.lt.s32.totalorder %s16, 3
          %s210 = scalar_select %p209, %s16, 3
          %p211 = scmp.lt.s32.totalorder %s208, 255
          %s212 = scalar_select %p211, %s208, 255
          %s213 = smul.addr %s210, 256
          %s214 = sadd.s32 %s212, %s213
          %s215 = smul.addr %s214, 4
          %s216 = scalar_lea.vmem %s1, %s215
          %s217 = smul.u32 128, %s18
        $region43: #{unet_forward.17} parent=15 // pred_fallthru
          _
        // Predicated region
        $region44: #{unet_forward.17} parent=15 // pred_check
          %p218 = pneg %p106
        $region45: #{unet_forward.17} parent=15 // pred_check_branch
          %220 = sbr.rel (%p218) target = $region47
        $region46: #{unet_forward.17} parent=15 // pred_region
          %p221 = scmp.lt.s32.totalorder %s16, 3
          %s222 = scalar_select %p221, %s16, 3
          %s223 = scalar_lea.vmem %s2, %s222
        $region47: #{unet_forward.17} parent=15 // pred_fallthru
          _
      $region16: #{unet_forward.17} parent=5 // pred_fallthru
        _
      %p224 = scmp.le.s32.totalorder 1, %s9
      %p225 = scmp.lt.s32.totalorder %s9, 17
      %p226 = pnand %p224, %p225
      %p227 = pneg %p226
      // Predicated region
      $region48: #{unet_forward.17} parent=5 // pred_check
        _
      $region49: #{unet_forward.17} parent=5 // pred_check_branch
        %229 = sbr.rel (%p226) target = $region51
      $region50: #{unet_forward.17} parent=5 // pred_region
        %s230 = ssub.s32 %s9, 1
        %s231 = sand.u32 %s45, 1
        %s232 = sand.u32 %s45, 1
        %s233 = smul.addr %s232, 64
        %s234 = scalar_lea.vmem [#allocation3], %s233
        // Predicated region
        $region52: #{unet_forward.17} parent=50 // pred_check
          %p235 = pneg %p58
        $region53: #{unet_forward.17} parent=50 // pred_check_branch
          %237 = sbr.rel (%p235) target = $region55
        $region54: #{unet_forward.17} parent=50 // pred_region
          _
        $region55: #{unet_forward.17} parent=50 // pred_fallthru
          _
        %s238 = sand.u32 %s45, 1
        %s239 = sand.u32 %s45, 1
        %s240 = smul.addr %s239, 64
        %s241 = scalar_lea.vmem [#allocation3], %s240
        %p242 = pneg %p58
        %p243 = pneg %p55
        %s244 = smul.u32 128, %s21
        %p245 = scmp.lt.s32.totalorder %s19, 3
        %s246 = scalar_select %p245, %s19, 3
        %p247 = scmp.lt.s32.totalorder %s244, 255
        %s248 = scalar_select %p247, %s244, 255
        %s249 = smul.addr %s246, 256
        %s250 = sadd.s32 %s248, %s249
        %s251 = smul.addr %s250, 4
        %s252 = scalar_lea.vmem %s1, %s251
        %p253 = pneg %p86
        %p254 = pneg %p83
        %p255 = scmp.lt.s32.totalorder %s19, 3
        %s256 = scalar_select %p255, %s19, 3
        %s257 = scalar_lea.vmem %s2, %s256
        %p258 = pneg %p112
        %p259 = pneg %p109
        %p260 = pneg %p140
        %p261 = pneg %p137
        %s262 = smul.u32 2, %s20
        %p263 = scmp.lt.s32.totalorder %s19, 3
        %s264 = scalar_select %p263, %s19, 3
        %p265 = scmp.lt.s32.totalorder %s262, 3
        %s266 = scalar_select %p265, %s262, 3
        %s267 = smul.addr %s264, 4
        %s268 = sadd.s32 %s266, %s267
        %s269 = smul.addr %s268, 8
        %s270 = scalar_lea.vmem %s3, %s269
        %s271 = smul.u32 2, %s20
        %s272 = smul.u32 8, %s21
        %s273 = smul.u32 128, %s21
        %p274 = scmp.lt.s32.totalorder %s19, 3
        %s275 = scalar_select %p274, %s19, 3
        %p276 = scmp.lt.s32.totalorder %s273, 255
        %s277 = scalar_select %p276, %s273, 255
        %s278 = smul.addr %s275, 256
        %s279 = sadd.s32 %s277, %s278
        %s280 = smul.addr %s279, 4
        %s281 = scalar_lea.vmem %s1, %s280
        %s282 = smul.u32 128, %s21
        %p283 = scmp.lt.s32.totalorder %s19, 3
        %s284 = scalar_select %p283, %s19, 3
        %s285 = scalar_lea.vmem %s2, %s284
        %s286 = smul.u32 2, %s20
        %p287 = scmp.lt.s32.totalorder %s19, 3
        %s288 = scalar_select %p287, %s19, 3
        %p289 = scmp.lt.s32.totalorder %s286, 3
        %s290 = scalar_select %p289, %s286, 3
        %s291 = smul.addr %s288, 4
        %s292 = sadd.s32 %s290, %s291
        %s293 = smul.addr %s292, 8
        %s294 = scalar_lea.vmem %s3, %s293
        %s295 = smul.u32 2, %s20
        %p297 = scmp.eq.s32.totalorder %s21, 0
        // Predicated region
        $region56: #{unet_forward.17} parent=50 // pred_check
          %p298 = pneg %p297
        $region57: #{unet_forward.17} parent=50 // pred_check_branch
          %300 = sbr.rel (%p298) target = $region59
        $region58: #{unet_forward.17} parent=50 // pred_region
          %301 = vst [vmem:[#allocation2] sm:$0xff] 0.0
          %302 = vst [vmem:[#allocation2 + $0x8] sm:$0xff] 0.0
        $region59: #{unet_forward.17} parent=50 // pred_fallthru
          _
        %v303 = vld [vmem:[#allocation2] sm:$0xff]
        %v304 = vld [vmem:[#allocation2 + $0x8] sm:$0xff]
        %v305 = vld [vmem:[%s234] sm:$0xff]
        %v306 = vld [vmem:[%s234 + $0x8] sm:$0xff]
        %v307 = vld [vmem:[%s234 + $0x10] sm:$0xff]
        %v308 = vld [vmem:[%s234 + $0x18] sm:$0xff]
        %v309 = vld [vmem:[%s234 + $0x20] sm:$0xff]
        %v310 = vld [vmem:[%s234 + $0x28] sm:$0xff]
        %v311 = vld [vmem:[%s234 + $0x30] sm:$0xff]
        %v312 = vld [vmem:[%s234 + $0x38] sm:$0xff]
        %v313 = vld [vmem:[%s281] sm:$0xf]
        %v314 = vld [vmem:[%s281 + $0x4] sm:$0xf]
        %v315 = vld [vmem:[%s281 + $0x8] sm:$0xf]
        %v316 = vld [vmem:[%s281 + $0xc] sm:$0xf]
        %v317 = vld [vmem:[%s281 + $0x10] sm:$0xf]
        %v318 = vld [vmem:[%s281 + $0x14] sm:$0xf]
        %v319 = vld [vmem:[%s281 + $0x18] sm:$0xf]
        %v320 = vld [vmem:[%s281 + $0x1c] sm:$0xf]
        %v321 = vld [vmem:[%s281 + $0x20] sm:$0xf]
        %v322 = vld [vmem:[%s281 + $0x24] sm:$0xf]
        %v323 = vld [vmem:[%s281 + $0x28] sm:$0xf]
        %v324 = vld [vmem:[%s281 + $0x2c] sm:$0xf]
        %v325 = vld [vmem:[%s281 + $0x30] sm:$0xf]
        %v326 = vld [vmem:[%s281 + $0x34] sm:$0xf]
        %v327 = vld [vmem:[%s281 + $0x38] sm:$0xf]
        %v328 = vld [vmem:[%s281 + $0x3c] sm:$0xf]
        %v329 = vld [vmem:[%s281 + $0x40] sm:$0xf]
        %v330 = vld [vmem:[%s281 + $0x44] sm:$0xf]
        %v331 = vld [vmem:[%s281 + $0x48] sm:$0xf]
        %v332 = vld [vmem:[%s281 + $0x4c] sm:$0xf]
        %v333 = vld [vmem:[%s281 + $0x50] sm:$0xf]
        %v334 = vld [vmem:[%s281 + $0x54] sm:$0xf]
        %v335 = vld [vmem:[%s281 + $0x58] sm:$0xf]
        %v336 = vld [vmem:[%s281 + $0x5c] sm:$0xf]
        %v337 = vld [vmem:[%s281 + $0x60] sm:$0xf]
        %v338 = vld [vmem:[%s281 + $0x64] sm:$0xf]
        %v339 = vld [vmem:[%s281 + $0x68] sm:$0xf]
        %v340 = vld [vmem:[%s281 + $0x6c] sm:$0xf]
        %v341 = vld [vmem:[%s281 + $0x70] sm:$0xf]
        %v342 = vld [vmem:[%s281 + $0x74] sm:$0xf]
        %v343 = vld [vmem:[%s281 + $0x78] sm:$0xf]
        %v344 = vld [vmem:[%s281 + $0x7c] sm:$0xf]
        %v345 = vld [vmem:[%s281 + $0x80] sm:$0xf]
        %v346 = vld [vmem:[%s281 + $0x84] sm:$0xf]
        %v347 = vld [vmem:[%s281 + $0x88] sm:$0xf]
        %v348 = vld [vmem:[%s281 + $0x8c] sm:$0xf]
        %v349 = vld [vmem:[%s281 + $0x90] sm:$0xf]
        %v350 = vld [vmem:[%s281 + $0x94] sm:$0xf]
        %v351 = vld [vmem:[%s281 + $0x98] sm:$0xf]
        %v352 = vld [vmem:[%s281 + $0x9c] sm:$0xf]
        %v353 = vld [vmem:[%s281 + $0xa0] sm:$0xf]
        %v354 = vld [vmem:[%s281 + $0xa4] sm:$0xf]
        %v355 = vld [vmem:[%s281 + $0xa8] sm:$0xf]
        %v356 = vld [vmem:[%s281 + $0xac] sm:$0xf]
        %v357 = vld [vmem:[%s281 + $0xb0] sm:$0xf]
        %v358 = vld [vmem:[%s281 + $0xb4] sm:$0xf]
        %v359 = vld [vmem:[%s281 + $0xb8] sm:$0xf]
        %v360 = vld [vmem:[%s281 + $0xbc] sm:$0xf]
        %v361 = vld [vmem:[%s281 + $0xc0] sm:$0xf]
        %v362 = vld [vmem:[%s281 + $0xc4] sm:$0xf]
        %v363 = vld [vmem:[%s281 + $0xc8] sm:$0xf]
        %v364 = vld [vmem:[%s281 + $0xcc] sm:$0xf]
        %v365 = vld [vmem:[%s281 + $0xd0] sm:$0xf]
        %v366 = vld [vmem:[%s281 + $0xd4] sm:$0xf]
        %v367 = vld [vmem:[%s281 + $0xd8] sm:$0xf]
        %v368 = vld [vmem:[%s281 + $0xdc] sm:$0xf]
        %v369 = vld [vmem:[%s281 + $0xe0] sm:$0xf]
        %v370 = vld [vmem:[%s281 + $0xe4] sm:$0xf]
        %v371 = vld [vmem:[%s281 + $0xe8] sm:$0xf]
        %v372 = vld [vmem:[%s281 + $0xec] sm:$0xf]
        %v373 = vld [vmem:[%s281 + $0xf0] sm:$0xf]
        %v374 = vld [vmem:[%s281 + $0xf4] sm:$0xf]
        %v375 = vld [vmem:[%s281 + $0xf8] sm:$0xf]
        %v376 = vld [vmem:[%s281 + $0xfc] sm:$0xf]
        %v377 = vld [vmem:[%s281 + $0x100] sm:$0xf]
        %v378 = vld [vmem:[%s281 + $0x104] sm:$0xf]
        %v379 = vld [vmem:[%s281 + $0x108] sm:$0xf]
        %v380 = vld [vmem:[%s281 + $0x10c] sm:$0xf]
        %v381 = vld [vmem:[%s281 + $0x110] sm:$0xf]
        %v382 = vld [vmem:[%s281 + $0x114] sm:$0xf]
        %v383 = vld [vmem:[%s281 + $0x118] sm:$0xf]
        %v384 = vld [vmem:[%s281 + $0x11c] sm:$0xf]
        %v385 = vld [vmem:[%s281 + $0x120] sm:$0xf]
        %v386 = vld [vmem:[%s281 + $0x124] sm:$0xf]
        %v387 = vld [vmem:[%s281 + $0x128] sm:$0xf]
        %v388 = vld [vmem:[%s281 + $0x12c] sm:$0xf]
        %v389 = vld [vmem:[%s281 + $0x130] sm:$0xf]
        %v390 = vld [vmem:[%s281 + $0x134] sm:$0xf]
        %v391 = vld [vmem:[%s281 + $0x138] sm:$0xf]
        %v392 = vld [vmem:[%s281 + $0x13c] sm:$0xf]
        %v393 = vld [vmem:[%s281 + $0x140] sm:$0xf]
        %v394 = vld [vmem:[%s281 + $0x144] sm:$0xf]
        %v395 = vld [vmem:[%s281 + $0x148] sm:$0xf]
        %v396 = vld [vmem:[%s281 + $0x14c] sm:$0xf]
        %v397 = vld [vmem:[%s281 + $0x150] sm:$0xf]
        %v398 = vld [vmem:[%s281 + $0x154] sm:$0xf]
        %v399 = vld [vmem:[%s281 + $0x158] sm:$0xf]
        %v400 = vld [vmem:[%s281 + $0x15c] sm:$0xf]
        %v401 = vld [vmem:[%s281 + $0x160] sm:$0xf]
        %v402 = vld [vmem:[%s281 + $0x164] sm:$0xf]
        %v403 = vld [vmem:[%s281 + $0x168] sm:$0xf]
        %v404 = vld [vmem:[%s281 + $0x16c] sm:$0xf]
        %v405 = vld [vmem:[%s281 + $0x170] sm:$0xf]
        %v406 = vld [vmem:[%s281 + $0x174] sm:$0xf]
        %v407 = vld [vmem:[%s281 + $0x178] sm:$0xf]
        %v408 = vld [vmem:[%s281 + $0x17c] sm:$0xf]
        %v409 = vld [vmem:[%s281 + $0x180] sm:$0xf]
        %v410 = vld [vmem:[%s281 + $0x184] sm:$0xf]
        %v411 = vld [vmem:[%s281 + $0x188] sm:$0xf]
        %v412 = vld [vmem:[%s281 + $0x18c] sm:$0xf]
        %v413 = vld [vmem:[%s281 + $0x190] sm:$0xf]
        %v414 = vld [vmem:[%s281 + $0x194] sm:$0xf]
        %v415 = vld [vmem:[%s281 + $0x198] sm:$0xf]
        %v416 = vld [vmem:[%s281 + $0x19c] sm:$0xf]
        %v417 = vld [vmem:[%s281 + $0x1a0] sm:$0xf]
        %v418 = vld [vmem:[%s281 + $0x1a4] sm:$0xf]
        %v419 = vld [vmem:[%s281 + $0x1a8] sm:$0xf]
        %v420 = vld [vmem:[%s281 + $0x1ac] sm:$0xf]
        %v421 = vld [vmem:[%s281 + $0x1b0] sm:$0xf]
        %v422 = vld [vmem:[%s281 + $0x1b4] sm:$0xf]
        %v423 = vld [vmem:[%s281 + $0x1b8] sm:$0xf]
        %v424 = vld [vmem:[%s281 + $0x1bc] sm:$0xf]
        %v425 = vld [vmem:[%s281 + $0x1c0] sm:$0xf]
        %v426 = vld [vmem:[%s281 + $0x1c4] sm:$0xf]
        %v427 = vld [vmem:[%s281 + $0x1c8] sm:$0xf]
        %v428 = vld [vmem:[%s281 + $0x1cc] sm:$0xf]
        %v429 = vld [vmem:[%s281 + $0x1d0] sm:$0xf]
        %v430 = vld [vmem:[%s281 + $0x1d4] sm:$0xf]
        %v431 = vld [vmem:[%s281 + $0x1d8] sm:$0xf]
        %v432 = vld [vmem:[%s281 + $0x1dc] sm:$0xf]
        %v433 = vld [vmem:[%s281 + $0x1e0] sm:$0xf]
        %v434 = vld [vmem:[%s281 + $0x1e4] sm:$0xf]
        %v435 = vld [vmem:[%s281 + $0x1e8] sm:$0xf]
        %v436 = vld [vmem:[%s281 + $0x1ec] sm:$0xf]
        %v437 = vld [vmem:[%s281 + $0x1f0] sm:$0xf]
        %v438 = vld [vmem:[%s281 + $0x1f4] sm:$0xf]
        %v439 = vld [vmem:[%s281 + $0x1f8] sm:$0xf]
        %v440 = vld [vmem:[%s281 + $0x1fc] sm:$0xf]
        %v449 = vunpack.c.l.b16 %v305
        %v450 = vunpack.c.h.b16 %v305
        %v451 = vunpack.c.l.b16 %v306
        %v452 = vunpack.c.h.b16 %v306
        %v453 = vunpack.c.l.b16 %v307
        %v454 = vunpack.c.h.b16 %v307
        %v455 = vunpack.c.l.b16 %v308
        %v456 = vunpack.c.h.b16 %v308
        %v457 = vunpack.c.l.b16 %v309
        %v458 = vunpack.c.h.b16 %v309
        %v459 = vunpack.c.l.b16 %v310
        %v460 = vunpack.c.h.b16 %v310
        %v461 = vunpack.c.l.b16 %v311
        %v462 = vunpack.c.h.b16 %v311
        %v463 = vunpack.c.l.b16 %v312
        %v464 = vunpack.c.h.b16 %v312
        %v465 = vpack.c.b16 %v457, %v449
        %v466 = vpack.c.b16 %v458, %v450
        %v467 = vpack.c.b16 %v459, %v451
        %v468 = vpack.c.b16 %v460, %v452
        %v469 = vpack.c.b16 %v461, %v453
        %v470 = vpack.c.b16 %v462, %v454
        %v471 = vpack.c.b16 %v463, %v455
        %v472 = vpack.c.b16 %v464, %v456
        %v609 = vunpack.c.l.b16 %v313
        %v610 = vunpack.c.l.b16 %v314
        %v611 = vunpack.c.l.b16 %v315
        %v612 = vunpack.c.l.b16 %v316
        %v613 = vunpack.c.l.b16 %v317
        %v614 = vunpack.c.l.b16 %v318
        %v615 = vunpack.c.l.b16 %v319
        %v616 = vunpack.c.l.b16 %v320
        %v617 = vunpack.c.l.b16 %v321
        %v618 = vunpack.c.l.b16 %v322
        %v619 = vunpack.c.l.b16 %v323
        %v620 = vunpack.c.l.b16 %v324
        %v621 = vunpack.c.l.b16 %v325
        %v622 = vunpack.c.l.b16 %v326
        %v623 = vunpack.c.l.b16 %v327
        %v624 = vunpack.c.l.b16 %v328
        %v625 = vunpack.c.l.b16 %v329
        %v626 = vunpack.c.l.b16 %v330
        %v627 = vunpack.c.l.b16 %v331
        %v628 = vunpack.c.l.b16 %v332
        %v629 = vunpack.c.l.b16 %v333
        %v630 = vunpack.c.l.b16 %v334
        %v631 = vunpack.c.l.b16 %v335
        %v632 = vunpack.c.l.b16 %v336
        %v633 = vunpack.c.l.b16 %v337
        %v634 = vunpack.c.l.b16 %v338
        %v635 = vunpack.c.l.b16 %v339
        %v636 = vunpack.c.l.b16 %v340
        %v637 = vunpack.c.l.b16 %v341
        %v638 = vunpack.c.l.b16 %v342
        %v639 = vunpack.c.l.b16 %v343
        %v640 = vunpack.c.l.b16 %v344
        %v641 = vunpack.c.l.b16 %v345
        %v642 = vunpack.c.l.b16 %v346
        %v643 = vunpack.c.l.b16 %v347
        %v644 = vunpack.c.l.b16 %v348
        %v645 = vunpack.c.l.b16 %v349
        %v646 = vunpack.c.l.b16 %v350
        %v647 = vunpack.c.l.b16 %v351
        %v648 = vunpack.c.l.b16 %v352
        %v649 = vunpack.c.l.b16 %v353
        %v650 = vunpack.c.l.b16 %v354
        %v651 = vunpack.c.l.b16 %v355
        %v652 = vunpack.c.l.b16 %v356
        %v653 = vunpack.c.l.b16 %v357
        %v654 = vunpack.c.l.b16 %v358
        %v655 = vunpack.c.l.b16 %v359
        %v656 = vunpack.c.l.b16 %v360
        %v657 = vunpack.c.l.b16 %v361
        %v658 = vunpack.c.l.b16 %v362
        %v659 = vunpack.c.l.b16 %v363
        %v660 = vunpack.c.l.b16 %v364
        %v661 = vunpack.c.l.b16 %v365
        %v662 = vunpack.c.l.b16 %v366
        %v663 = vunpack.c.l.b16 %v367
        %v664 = vunpack.c.l.b16 %v368
        %v665 = vunpack.c.l.b16 %v369
        %v666 = vunpack.c.l.b16 %v370
        %v667 = vunpack.c.l.b16 %v371
        %v668 = vunpack.c.l.b16 %v372
        %v669 = vunpack.c.l.b16 %v373
        %v670 = vunpack.c.l.b16 %v374
        %v671 = vunpack.c.l.b16 %v375
        %v672 = vunpack.c.l.b16 %v376
        %v673 = vunpack.c.l.b16 %v377
        %v674 = vunpack.c.l.b16 %v378
        %v675 = vunpack.c.l.b16 %v379
        %v676 = vunpack.c.l.b16 %v380
        %v677 = vunpack.c.l.b16 %v381
        %v678 = vunpack.c.l.b16 %v382
        %v679 = vunpack.c.l.b16 %v383
        %v680 = vunpack.c.l.b16 %v384
        %v681 = vunpack.c.l.b16 %v385
        %v682 = vunpack.c.l.b16 %v386
        %v683 = vunpack.c.l.b16 %v387
        %v684 = vunpack.c.l.b16 %v388
        %v685 = vunpack.c.l.b16 %v389
        %v686 = vunpack.c.l.b16 %v390
        %v687 = vunpack.c.l.b16 %v391
        %v688 = vunpack.c.l.b16 %v392
        %v689 = vunpack.c.l.b16 %v393
        %v690 = vunpack.c.l.b16 %v394
        %v691 = vunpack.c.l.b16 %v395
        %v692 = vunpack.c.l.b16 %v396
        %v693 = vunpack.c.l.b16 %v397
        %v694 = vunpack.c.l.b16 %v398
        %v695 = vunpack.c.l.b16 %v399
        %v696 = vunpack.c.l.b16 %v400
        %v697 = vunpack.c.l.b16 %v401
        %v698 = vunpack.c.l.b16 %v402
        %v699 = vunpack.c.l.b16 %v403
        %v700 = vunpack.c.l.b16 %v404
        %v701 = vunpack.c.l.b16 %v405
        %v702 = vunpack.c.l.b16 %v406
        %v703 = vunpack.c.l.b16 %v407
        %v704 = vunpack.c.l.b16 %v408
        %v705 = vunpack.c.l.b16 %v409
        %v706 = vunpack.c.l.b16 %v410
        %v707 = vunpack.c.l.b16 %v411
        %v708 = vunpack.c.l.b16 %v412
        %v709 = vunpack.c.l.b16 %v413
        %v710 = vunpack.c.l.b16 %v414
        %v711 = vunpack.c.l.b16 %v415
        %v712 = vunpack.c.l.b16 %v416
        %v713 = vunpack.c.l.b16 %v417
        %v714 = vunpack.c.l.b16 %v418
        %v715 = vunpack.c.l.b16 %v419
        %v716 = vunpack.c.l.b16 %v420
        %v717 = vunpack.c.l.b16 %v421
        %v718 = vunpack.c.l.b16 %v422
        %v719 = vunpack.c.l.b16 %v423
        %v720 = vunpack.c.l.b16 %v424
        %v721 = vunpack.c.l.b16 %v425
        %v722 = vunpack.c.l.b16 %v426
        %v723 = vunpack.c.l.b16 %v427
        %v724 = vunpack.c.l.b16 %v428
        %v725 = vunpack.c.l.b16 %v429
        %v726 = vunpack.c.l.b16 %v430
        %v727 = vunpack.c.l.b16 %v431
        %v728 = vunpack.c.l.b16 %v432
        %v729 = vunpack.c.l.b16 %v433
        %v730 = vunpack.c.l.b16 %v434
        %v731 = vunpack.c.l.b16 %v435
        %v732 = vunpack.c.l.b16 %v436
        %v733 = vunpack.c.l.b16 %v437
        %v734 = vunpack.c.l.b16 %v438
        %v735 = vunpack.c.l.b16 %v439
        %v736 = vunpack.c.l.b16 %v440
        %v737 = vpack.c.b16 %v610, %v609
        %v738 = vpack.c.b16 %v612, %v611
        %v739 = vpack.c.b16 %v614, %v613
        %v740 = vpack.c.b16 %v616, %v615
        %v741 = vpack.c.b16 %v618, %v617
        %v742 = vpack.c.b16 %v620, %v619
        %v743 = vpack.c.b16 %v622, %v621
        %v744 = vpack.c.b16 %v624, %v623
        %v745 = vpack.c.b16 %v626, %v625
        %v746 = vpack.c.b16 %v628, %v627
        %v747 = vpack.c.b16 %v630, %v629
        %v748 = vpack.c.b16 %v632, %v631
        %v749 = vpack.c.b16 %v634, %v633
        %v750 = vpack.c.b16 %v636, %v635
        %v751 = vpack.c.b16 %v638, %v637
        %v752 = vpack.c.b16 %v640, %v639
        %v753 = vpack.c.b16 %v642, %v641
        %v754 = vpack.c.b16 %v644, %v643
        %v755 = vpack.c.b16 %v646, %v645
        %v756 = vpack.c.b16 %v648, %v647
        %v757 = vpack.c.b16 %v650, %v649
        %v758 = vpack.c.b16 %v652, %v651
        %v759 = vpack.c.b16 %v654, %v653
        %v760 = vpack.c.b16 %v656, %v655
        %v761 = vpack.c.b16 %v658, %v657
        %v762 = vpack.c.b16 %v660, %v659
        %v763 = vpack.c.b16 %v662, %v661
        %v764 = vpack.c.b16 %v664, %v663
        %v765 = vpack.c.b16 %v666, %v665
        %v766 = vpack.c.b16 %v668, %v667
        %v767 = vpack.c.b16 %v670, %v669
        %v768 = vpack.c.b16 %v672, %v671
        %v769 = vpack.c.b16 %v674, %v673
        %v770 = vpack.c.b16 %v676, %v675
        %v771 = vpack.c.b16 %v678, %v677
        %v772 = vpack.c.b16 %v680, %v679
        %v773 = vpack.c.b16 %v682, %v681
        %v774 = vpack.c.b16 %v684, %v683
        %v775 = vpack.c.b16 %v686, %v685
        %v776 = vpack.c.b16 %v688, %v687
        %v777 = vpack.c.b16 %v690, %v689
        %v778 = vpack.c.b16 %v692, %v691
        %v779 = vpack.c.b16 %v694, %v693
        %v780 = vpack.c.b16 %v696, %v695
        %v781 = vpack.c.b16 %v698, %v697
        %v782 = vpack.c.b16 %v700, %v699
        %v783 = vpack.c.b16 %v702, %v701
        %v784 = vpack.c.b16 %v704, %v703
        %v785 = vpack.c.b16 %v706, %v705
        %v786 = vpack.c.b16 %v708, %v707
        %v787 = vpack.c.b16 %v710, %v709
        %v788 = vpack.c.b16 %v712, %v711
        %v789 = vpack.c.b16 %v714, %v713
        %v790 = vpack.c.b16 %v716, %v715
        %v791 = vpack.c.b16 %v718, %v717
        %v792 = vpack.c.b16 %v720, %v719
        %v793 = vpack.c.b16 %v722, %v721
        %v794 = vpack.c.b16 %v724, %v723
        %v795 = vpack.c.b16 %v726, %v725
        %v796 = vpack.c.b16 %v728, %v727
        %v797 = vpack.c.b16 %v730, %v729
        %v798 = vpack.c.b16 %v732, %v731
        %v799 = vpack.c.b16 %v734, %v733
        %v800 = vpack.c.b16 %v736, %v735
        %865 = vmatprep.subr.bf16.mxu0 0
        %866 = vmatpush1.bf16.msra.mxu0 %v737
        %867 = vmatprep.subr.bf16.mxu0 0
        %868 = vmatpush1.bf16.msra.mxu0 %v738
        %869 = vmatprep.subr.bf16.mxu0 0
        %870 = vmatpush1.bf16.msra.mxu0 %v739
        %871 = vmatprep.subr.bf16.mxu0 0
        %872 = vmatpush1.bf16.msra.mxu0 %v740
        %873 = vmatprep.subr.bf16.mxu0 0
        %874 = vmatpush1.bf16.msra.mxu0 %v741
        %875 = vmatprep.subr.bf16.mxu0 0
        %876 = vmatpush1.bf16.msra.mxu0 %v742
        %877 = vmatprep.subr.bf16.mxu0 0
        %878 = vmatpush1.bf16.msra.mxu0 %v743
        %879 = vmatprep.subr.bf16.mxu0 0
        %880 = vmatpush1.bf16.msra.mxu0 %v744
        %881 = vmatprep.subr.bf16.mxu0 0
        %882 = vmatpush1.bf16.msra.mxu0 %v745
        %883 = vmatprep.subr.bf16.mxu0 0
        %884 = vmatpush1.bf16.msra.mxu0 %v746
        %885 = vmatprep.subr.bf16.mxu0 0
        %886 = vmatpush1.bf16.msra.mxu0 %v747
        %887 = vmatprep.subr.bf16.mxu0 0
        %888 = vmatpush1.bf16.msra.mxu0 %v748
        %889 = vmatprep.subr.bf16.mxu0 0
        %890 = vmatpush1.bf16.msra.mxu0 %v749
        %891 = vmatprep.subr.bf16.mxu0 0
        %892 = vmatpush1.bf16.msra.mxu0 %v750
        %893 = vmatprep.subr.bf16.mxu0 0
        %894 = vmatpush1.bf16.msra.mxu0 %v751
        %895 = vmatprep.subr.bf16.mxu0 0
        %896 = vmatpush1.bf16.msra.mxu0 %v752
        %897 = vmatprep.mubr.bf16.mxu0 %v466
        %898 = vmatmul.mubr.bf16.gmra.mrb[0].mxu0 %v465
        %v899 = vpop.f32.mrb[0].mxu0
        %v900 = vadd.f32 0.0, %v899
        %v901 = vpop.f32.mrb[0].mxu0
        %v902 = vpop.f32.mrb[0].mxu0
        %v903 = vadd.f32 0.0, %v902
        %v904 = vpop.f32.mrb[0].mxu0
        %905 = vdwg.mxu0
        %906 = vmatprep.subr.bf16.mxu0 0
        %907 = vmatpush1.bf16.msra.mxu0 %v753
        %908 = vmatprep.subr.bf16.mxu0 0
        %909 = vmatpush1.bf16.msra.mxu0 %v754
        %910 = vmatprep.subr.bf16.mxu0 0
        %911 = vmatpush1.bf16.msra.mxu0 %v755
        %912 = vmatprep.subr.bf16.mxu0 0
        %913 = vmatpush1.bf16.msra.mxu0 %v756
        %914 = vmatprep.subr.bf16.mxu0 0
        %915 = vmatpush1.bf16.msra.mxu0 %v757
        %916 = vmatprep.subr.bf16.mxu0 0
        %917 = vmatpush1.bf16.msra.mxu0 %v758
        %918 = vmatprep.subr.bf16.mxu0 0
        %919 = vmatpush1.bf16.msra.mxu0 %v759
        %920 = vmatprep.subr.bf16.mxu0 0
        %921 = vmatpush1.bf16.msra.mxu0 %v760
        %922 = vmatprep.subr.bf16.mxu0 0
        %923 = vmatpush1.bf16.msra.mxu0 %v761
        %924 = vmatprep.subr.bf16.mxu0 0
        %925 = vmatpush1.bf16.msra.mxu0 %v762
        %926 = vmatprep.subr.bf16.mxu0 0
        %927 = vmatpush1.bf16.msra.mxu0 %v763
        %928 = vmatprep.subr.bf16.mxu0 0
        %929 = vmatpush1.bf16.msra.mxu0 %v764
        %930 = vmatprep.subr.bf16.mxu0 0
        %931 = vmatpush1.bf16.msra.mxu0 %v765
        %932 = vmatprep.subr.bf16.mxu0 0
        %933 = vmatpush1.bf16.msra.mxu0 %v766
        %934 = vmatprep.subr.bf16.mxu0 0
        %935 = vmatpush1.bf16.msra.mxu0 %v767
        %936 = vmatprep.subr.bf16.mxu0 0
        %937 = vmatpush1.bf16.msra.mxu0 %v768
        %938 = vmatprep.mubr.bf16.mxu0 %v468
        %939 = vmatmul.mubr.bf16.gmra.mrb[0].mxu0 %v467
        %v940 = vpop.f32.mrb[0].mxu0
        %v941 = vadd.f32 %v900, %v940
        %v942 = vpop.f32.mrb[0].mxu0
        %v943 = vpop.f32.mrb[0].mxu0
        %v944 = vadd.f32 %v903, %v943
        %v945 = vpop.f32.mrb[0].mxu0
        %946 = vdwg.mxu0
        %947 = vmatprep.subr.bf16.mxu0 0
        %948 = vmatpush1.bf16.msra.mxu0 %v769
        %949 = vmatprep.subr.bf16.mxu0 0
        %950 = vmatpush1.bf16.msra.mxu0 %v770
        %951 = vmatprep.subr.bf16.mxu0 0
        %952 = vmatpush1.bf16.msra.mxu0 %v771
        %953 = vmatprep.subr.bf16.mxu0 0
        %954 = vmatpush1.bf16.msra.mxu0 %v772
        %955 = vmatprep.subr.bf16.mxu0 0
        %956 = vmatpush1.bf16.msra.mxu0 %v773
        %957 = vmatprep.subr.bf16.mxu0 0
        %958 = vmatpush1.bf16.msra.mxu0 %v774
        %959 = vmatprep.subr.bf16.mxu0 0
        %960 = vmatpush1.bf16.msra.mxu0 %v775
        %961 = vmatprep.subr.bf16.mxu0 0
        %962 = vmatpush1.bf16.msra.mxu0 %v776
        %963 = vmatprep.subr.bf16.mxu0 0
        %964 = vmatpush1.bf16.msra.mxu0 %v777
        %965 = vmatprep.subr.bf16.mxu0 0
        %966 = vmatpush1.bf16.msra.mxu0 %v778
        %967 = vmatprep.subr.bf16.mxu0 0
        %968 = vmatpush1.bf16.msra.mxu0 %v779
        %969 = vmatprep.subr.bf16.mxu0 0
        %970 = vmatpush1.bf16.msra.mxu0 %v780
        %971 = vmatprep.subr.bf16.mxu0 0
        %972 = vmatpush1.bf16.msra.mxu0 %v781
        %973 = vmatprep.subr.bf16.mxu0 0
        %974 = vmatpush1.bf16.msra.mxu0 %v782
        %975 = vmatprep.subr.bf16.mxu0 0
        %976 = vmatpush1.bf16.msra.mxu0 %v783
        %977 = vmatprep.subr.bf16.mxu0 0
        %978 = vmatpush1.bf16.msra.mxu0 %v784
        %979 = vmatprep.mubr.bf16.mxu0 %v470
        %980 = vmatmul.mubr.bf16.gmra.mrb[0].mxu0 %v469
        %v981 = vpop.f32.mrb[0].mxu0
        %v982 = vadd.f32 %v941, %v981
        %v983 = vpop.f32.mrb[0].mxu0
        %v984 = vpop.f32.mrb[0].mxu0
        %v985 = vadd.f32 %v944, %v984
        %v986 = vpop.f32.mrb[0].mxu0
        %987 = vdwg.mxu0
        %988 = vmatprep.subr.bf16.mxu0 0
        %989 = vmatpush1.bf16.msra.mxu0 %v785
        %990 = vmatprep.subr.bf16.mxu0 0
        %991 = vmatpush1.bf16.msra.mxu0 %v786
        %992 = vmatprep.subr.bf16.mxu0 0
        %993 = vmatpush1.bf16.msra.mxu0 %v787
        %994 = vmatprep.subr.bf16.mxu0 0
        %995 = vmatpush1.bf16.msra.mxu0 %v788
        %996 = vmatprep.subr.bf16.mxu0 0
        %997 = vmatpush1.bf16.msra.mxu0 %v789
        %998 = vmatprep.subr.bf16.mxu0 0
        %999 = vmatpush1.bf16.msra.mxu0 %v790
        %1000 = vmatprep.subr.bf16.mxu0 0
        %1001 = vmatpush1.bf16.msra.mxu0 %v791
        %1002 = vmatprep.subr.bf16.mxu0 0
        %1003 = vmatpush1.bf16.msra.mxu0 %v792
        %1004 = vmatprep.subr.bf16.mxu0 0
        %1005 = vmatpush1.bf16.msra.mxu0 %v793
        %1006 = vmatprep.subr.bf16.mxu0 0
        %1007 = vmatpush1.bf16.msra.mxu0 %v794
        %1008 = vmatprep.subr.bf16.mxu0 0
        %1009 = vmatpush1.bf16.msra.mxu0 %v795
        %1010 = vmatprep.subr.bf16.mxu0 0
        %1011 = vmatpush1.bf16.msra.mxu0 %v796
        %1012 = vmatprep.subr.bf16.mxu0 0
        %1013 = vmatpush1.bf16.msra.mxu0 %v797
        %1014 = vmatprep.subr.bf16.mxu0 0
        %1015 = vmatpush1.bf16.msra.mxu0 %v798
        %1016 = vmatprep.subr.bf16.mxu0 0
        %1017 = vmatpush1.bf16.msra.mxu0 %v799
        %1018 = vmatprep.subr.bf16.mxu0 0
        %1019 = vmatpush1.bf16.msra.mxu0 %v800
        %1020 = vmatprep.mubr.bf16.mxu0 %v472
        %1021 = vmatmul.mubr.bf16.gmra.mrb[0].mxu0 %v471
        %v1022 = vpop.f32.mrb[0].mxu0
        %v1023 = vadd.f32 %v982, %v1022
        %v1024 = vpop.f32.mrb[0].mxu0
        %v1025 = vpop.f32.mrb[0].mxu0
        %v1026 = vadd.f32 %v985, %v1025
        %v1027 = vpop.f32.mrb[0].mxu0
        %1028 = vdwg.mxu0
        %v1029 = vadd.f32 %v303, %v1023
        %v1030 = vadd.f32 %v304, %v1026
        %1031 = vst [vmem:[#allocation2] sm:$0xff] %v1029
        %1032 = vst [vmem:[#allocation2 + $0x8] sm:$0xff] %v1030
        %p1033 = scmp.eq.s32.totalorder %s21, 1
        // Predicated region
        $region60: #{unet_forward.17} parent=50 // pred_check
          %p1034 = pneg %p1033
        $region61: #{unet_forward.17} parent=50 // pred_check_branch
          %1036 = sbr.rel (%p1034) target = $region63
        $region62: #{unet_forward.17} parent=50 // pred_region
          %v1037 = vld [vmem:[#allocation2] sm:$0xff]
          %v1038 = vld [vmem:[#allocation2 + $0x8] sm:$0xff]
          %v1039 = vld [vmem:[%s285] sm:$0x1]
          %v1041 = vlaneseq
          %v1042 = vshrl.u32 %v1041, 7
          %v1043 = vsub.s32 0, %v1042
          %v1044 = vrot.slane %v1039, %v1043
          %v1046 = vadd.f32 %v1037, %v1044
          %v1047 = vadd.f32 %v1038, %v1044
          %1048 = vst [vmem:[%s294] sm:$0xff] %v1046
          %1049 = vst [vmem:[%s294 + $0x8] sm:$0xff] %v1047
        $region63: #{unet_forward.17} parent=50 // pred_fallthru
          _
        %s1050 = smul.u32 2, %s20
        %p1051 = scmp.lt.s32.totalorder %s19, 3
        %s1052 = scalar_select %p1051, %s19, 3
        %p1053 = scmp.lt.s32.totalorder %s1050, 3
        %s1054 = scalar_select %p1053, %s1050, 3
        %s1055 = smul.addr %s1052, 4
        %s1056 = sadd.s32 %s1054, %s1055
        %s1057 = smul.addr %s1056, 8
        %s1058 = scalar_lea.vmem %s3, %s1057
        // Predicated region
        $region64: #{unet_forward.17} parent=50 // pred_check
          %p1059 = pneg %p137
        $region65: #{unet_forward.17} parent=50 // pred_check_branch
          %1061 = sbr.rel (%p1059) target = $region67
        $region66: #{unet_forward.17} parent=50 // pred_region
          %s1062 = smul.u32 2, %s20
        $region67: #{unet_forward.17} parent=50 // pred_fallthru
          _
      $region51: #{unet_forward.17} parent=5 // pred_fallthru
        _
      %p1063 = scmp.le.s32.totalorder 2, %s9
      // Predicated region
      $region68: #{unet_forward.17} parent=5 // pred_check
        %p1064 = pneg %p1063
      $region69: #{unet_forward.17} parent=5 // pred_check_branch
        %1066 = sbr.rel (%p1064) target = $region71
      $region70: #{unet_forward.17} parent=5 // pred_region
        %s1067 = ssub.s32 %s9, 2
        // Predicated region
        $region72: #{unet_forward.17} parent=70 // pred_check
          %p1068 = pneg %p143
        $region73: #{unet_forward.17} parent=70 // pred_check_branch
          %1070 = sbr.rel (%p1068) target = $region75
        $region74: #{unet_forward.17} parent=70 // pred_region
          %s1071 = smul.u32 2, %s23
          %p1072 = scmp.lt.s32.totalorder %s22, 3
          %s1073 = scalar_select %p1072, %s22, 3
          %p1074 = scmp.lt.s32.totalorder %s1071, 3
          %s1075 = scalar_select %p1074, %s1071, 3
          %s1076 = smul.addr %s1073, 4
          %s1077 = sadd.s32 %s1075, %s1076
          %s1078 = smul.addr %s1077, 8
          %s1079 = scalar_lea.vmem %s3, %s1078
        $region75: #{unet_forward.17} parent=70 // pred_fallthru
          _
      $region71: #{unet_forward.17} parent=5 // pred_fallthru
        _
    $region6: #{unet_forward.17} parent=1 // loop_footer
      %s13 = sadd.s32 1, %s9
    $region7: #{unet_forward.17} parent=1 // loop_footer_branch
      %8 = sbr.rel target = $region3
    $region8: #{unet_forward.17} parent=1 // loop_exit
      _

// kernel: unet_forward.18
$region0: #{unet_forward.18}
  #allocation0 [shape = 'u32[]', space=smem, size = 0x4, offset = 0x4, fixed_abs, tag = 'smem constant byte address 0x4 - core index']
  #allocation1 [shape = 'u32[144,128]{1,0:T(1,128)}', space=vmem, size = 0x12000, scoped, tag = 'internal scratch']
  #allocation2 [shape = 'f32[64,128]{1,0:T(8,128)}', space=vmem, size = 0x8000, scoped, tag = 'scratch operand']
  %s0 = inlined_call_operand.vmem [shape: bf16[4,128,1024], index: 0, kind: input, shape index: {}]
  %s1 = inlined_call_operand.vmem [shape: bf16[4,1024,128], index: 1, kind: input, shape index: {}]
  %s2 = inlined_call_operand.vmem [shape: f32[4,1,128], index: 2, kind: input, shape index: {}]
  %s3 = inlined_call_operand.vmem [shape: f32[4,128,128], index: 3, kind: output, shape index: {}]
  %s4 = sld [smem:[#allocation0]]
  $region76: #{unet_forward.18} parent=0
    _
  %s6 = ssub.s32 1, %s4
  %s7 = scalar_select 0, %s6, %s4
  $region1: #{unet_forward.18} parent=0
    #allocation3 [shape = 'u8[131072]{0}', space=vmem, size = 0x20000, scoped, tag = 'input window, operand 0']
    loop: start=0, step=1, limit=18
    $region2: #{unet_forward.18} parent=1 // loop_pre_header
      _
    $region3: #{unet_forward.18} parent=1 // loop_header
      %s9 = sphi 0, %s13
      %p10 = scmp.ge.s32.totalorder %s9, 18
      %s16 = sphi 0, %s35
      %s17 = sphi 0, %s31
      %s18 = sphi 0, %s27
      %s19 = sphi 0, %s16
      %s20 = sphi 0, %s17
      %s21 = sphi 0, %s18
      %s22 = sphi 0, %s19
      %s23 = sphi 0, %s20
      %s24 = sphi 0, %s21
      %s42 = sphi 0, %s44
      %s45 = sphi 0, %s42
      %s46 = sphi 0, %s45
      %s62 = sphi 0, %s46
      %s70 = sphi 0, %s72
      %s73 = sphi 0, %s70
      %s74 = sphi 0, %s73
      %s90 = sphi 0, %s74
      %s96 = sphi 0, %s98
      %s99 = sphi 0, %s96
      %s100 = sphi 0, %s99
      %s116 = sphi 0, %s100
      %s124 = sphi 0, %s126
      %s127 = sphi 0, %s124
      %s128 = sphi 0, %s127
      %s144 = sphi 0, %s128
    $region4: #{unet_forward.18} parent=1 // loop_header_branch
      %12 = sbr.rel (%p10) target = $region8
    $region5: #{unet_forward.18} parent=1 // loop_body
      %s14 = ssub.s32 %s9, 1
      %s15 = ssub.s32 %s9, 2
      %s25 = sadd.s32 1, %s18
      %p26 = scmp.ge.s32.totalorder %s25, 2
      %s27 = scalar_select %p26, 0, %s25
      %s28 = sadd.s32 1, %s17
      %s29 = scalar_select %p26, %s28, %s17
      %p30 = scmp.ge.s32.totalorder %s29, 2
      %s31 = scalar_select %p30, 0, %s29
      %s32 = sadd.s32 1, %s16
      %s33 = scalar_select %p30, %s32, %s16
      %p34 = scmp.ge.s32.totalorder %s33, 4
      %s35 = scalar_select %p34, 0, %s33
      %s36 = ssub.s32 %s16, %s35
      %s37 = ssub.s32 %s17, %s31
      %s38 = sor.u32 %s36, %s37
      %s39 = ssub.s32 %s18, %s27
      %s40 = sor.u32 %s38, %s39
      %p41 = scmp.eq.s32.totalorder %s40, 0
      %s43 = sadd.s32 %s42, 1
      %s44 = scalar_select %p41, %s42, %s43
      %p47 = pneg %p41
      %p48 = scmp.eq.s32.totalorder %s9, 15
      %p49 = por %p47, %p48
      %p50 = scmp.ne.s32.totalorder %s42, %s45
      %p51 = scmp.eq.s32.totalorder %s9, 0
      %p52 = por %p50, %p51
      %p53 = scmp.ne.s32.totalorder %s42, %s45
      %p54 = scmp.eq.s32.totalorder %s14, 15
      %p55 = por %p53, %p54
      %p56 = scmp.ne.s32.totalorder %s45, %s46
      %p57 = scmp.eq.s32.totalorder %s14, 0
      %p58 = por %p56, %p57
      %p59 = scmp.ne.s32.totalorder %s45, %s46
      %p60 = scmp.eq.s32.totalorder %s15, 15
      %p61 = por %p59, %p60
      %p63 = scmp.ne.s32.totalorder %s46, %s62
      %p64 = scmp.eq.s32.totalorder %s15, 0
      %p65 = por %p63, %p64
      %s66 = ssub.s32 %s16, %s35
      %s67 = ssub.s32 %s18, %s27
      %s68 = sor.u32 %s66, %s67
      %p69 = scmp.eq.s32.totalorder %s68, 0
      %s71 = sadd.s32 %s70, 1
      %s72 = scalar_select %p69, %s70, %s71
      %p75 = pneg %p69
      %p76 = scmp.eq.s32.totalorder %s9, 15
      %p77 = por %p75, %p76
      %p78 = scmp.ne.s32.totalorder %s70, %s73
      %p79 = scmp.eq.s32.totalorder %s9, 0
      %p80 = por %p78, %p79
      %p81 = scmp.ne.s32.totalorder %s70, %s73
      %p82 = scmp.eq.s32.totalorder %s14, 15
      %p83 = por %p81, %p82
      %p84 = scmp.ne.s32.totalorder %s73, %s74
      %p85 = scmp.eq.s32.totalorder %s14, 0
      %p86 = por %p84, %p85
      %p87 = scmp.ne.s32.totalorder %s73, %s74
      %p88 = scmp.eq.s32.totalorder %s15, 15
      %p89 = por %p87, %p88
      %p91 = scmp.ne.s32.totalorder %s74, %s90
      %p92 = scmp.eq.s32.totalorder %s15, 0
      %p93 = por %p91, %p92
      %s94 = ssub.s32 %s16, %s35
      %p95 = scmp.eq.s32.totalorder %s94, 0
      %s97 = sadd.s32 %s96, 1
      %s98 = scalar_select %p95, %s96, %s97
      %p101 = pneg %p95
      %p102 = scmp.eq.s32.totalorder %s9, 15
      %p103 = por %p101, %p102
      %p104 = scmp.ne.s32.totalorder %s96, %s99
      %p105 = scmp.eq.s32.totalorder %s9, 0
      %p106 = por %p104, %p105
      %p107 = scmp.ne.s32.totalorder %s96, %s99
      %p108 = scmp.eq.s32.totalorder %s14, 15
      %p109 = por %p107, %p108
      %p110 = scmp.ne.s32.totalorder %s99, %s100
      %p111 = scmp.eq.s32.totalorder %s14, 0
      %p112 = por %p110, %p111
      %p113 = scmp.ne.s32.totalorder %s99, %s100
      %p114 = scmp.eq.s32.totalorder %s15, 15
      %p115 = por %p113, %p114
      %p117 = scmp.ne.s32.totalorder %s100, %s116
      %p118 = scmp.eq.s32.totalorder %s15, 0
      %p119 = por %p117, %p118
      %s120 = ssub.s32 %s16, %s35
      %s121 = ssub.s32 %s17, %s31
      %s122 = sor.u32 %s120, %s121
      %p123 = scmp.eq.s32.totalorder %s122, 0
      %s125 = sadd.s32 %s124, 1
      %s126 = scalar_select %p123, %s124, %s125
      %p129 = pneg %p123
      %p130 = scmp.eq.s32.totalorder %s9, 15
      %p131 = por %p129, %p130
      %p132 = scmp.ne.s32.totalorder %s124, %s127
      %p133 = scmp.eq.s32.totalorder %s9, 0
      %p134 = por %p132, %p133
      %p135 = scmp.ne.s32.totalorder %s124, %s127
      %p136 = scmp.eq.s32.totalorder %s14, 15
      %p137 = por %p135, %p136
      %p138 = scmp.ne.s32.totalorder %s127, %s128
      %p139 = scmp.eq.s32.totalorder %s14, 0
      %p140 = por %p138, %p139
      %p141 = scmp.ne.s32.totalorder %s127, %s128
      %p142 = scmp.eq.s32.totalorder %s15, 15
      %p143 = por %p141, %p142
      %p145 = scmp.ne.s32.totalorder %s128, %s144
      %p146 = scmp.eq.s32.totalorder %s15, 0
      %p147 = por %p145, %p146
      %p148 = scmp.le.s32.totalorder 1, %s9
      %p149 = scmp.lt.s32.totalorder %s9, 17
      %p150 = pnand %p148, %p149
      %p151 = pneg %p150
      // Predicated region
      $region9: #{unet_forward.18} parent=5 // pred_check
        _
      $region10: #{unet_forward.18} parent=5 // pred_check_branch
        %153 = sbr.rel (%p150) target = $region12
      $region11: #{unet_forward.18} parent=5 // pred_region
        %s154 = ssub.s32 %s9, 1
      $region12: #{unet_forward.18} parent=5 // pred_fallthru
        _
      %p155 = scmp.lt.s32.totalorder %s9, 16
      // Predicated region
      $region13: #{unet_forward.18} parent=5 // pred_check
        %p156 = pneg %p155
      $region14: #{unet_forward.18} parent=5 // pred_check_branch
        %158 = sbr.rel (%p156) target = $region16
      $region15: #{unet_forward.18} parent=5 // pred_region
        // Predicated region
        $region17: #{unet_forward.18} parent=15 // pred_check
          %p159 = pneg %p52
        $region18: #{unet_forward.18} parent=15 // pred_check_branch
          %161 = sbr.rel (%p159) target = $region20
        $region19: #{unet_forward.18} parent=15 // pred_region
          %s162 = sand.u32 %s42, 1
          %s163 = sand.u32 %s42, 1
          %s164 = smul.addr %s163, 128
          %s165 = scalar_lea.vmem [#allocation3], %s164
          %s166 = smul.u32 8, %s17
          %s167 = smul.u32 4, %s18
          %s168 = smul.addr %s166, 8
          %s169 = sadd.s32 %s167, %s168
          %s170 = smul.addr %s16, 128
          %s171 = sadd.s32 %s169, %s170
          %s172 = smul.addr %s171, 4
          %s173 = scalar_lea.vmem %s0, %s172
          // Predicated region
          $region21: #{unet_forward.18} parent=19 // pred_check
            _
          $region22: #{unet_forward.18} parent=19 // pred_check_branch
            %175 = sbr.rel (0) target = $region24
          $region23: #{unet_forward.18} parent=19 // pred_region
            // Predicated region
            $region25: #{unet_forward.18} parent=23 // pred_check
              _
            $region26: #{unet_forward.18} parent=23 // pred_check_branch
              %177 = sbr.rel (0) target = $region28
            $region27: #{unet_forward.18} parent=23 // pred_region
              loop: start=0, step=1, limit=1
              $region29: #{unet_forward.18} parent=27 // loop_pre_header
                _
              $region30: #{unet_forward.18} parent=27 // loop_header
                %s179 = sphi 0, %s183
                %p180 = scmp.ge.s32.totalorder %s179, 1
                %s184 = sphi %s173, %s173
                %s185 = sphi %s165, %s165
              $region31: #{unet_forward.18} parent=27 // loop_header_branch
                %182 = sbr.rel (%p180) target = $region35
              $region32: #{unet_forward.18} parent=27 // loop_body
                %v186 = vld [vmem:[%s184] sm:$0xff]
                %187 = vst [vmem:[%s185] sm:$0xff] %v186
                %v188 = vld [vmem:[%s184 + $0x8] sm:$0xff]
                %189 = vst [vmem:[%s185 + $0x8] sm:$0xff] %v188
                %v190 = vld [vmem:[%s184 + $0x20] sm:$0xff]
                %191 = vst [vmem:[%s185 + $0x10] sm:$0xff] %v190
                %v192 = vld [vmem:[%s184 + $0x28] sm:$0xff]
                %193 = vst [vmem:[%s185 + $0x18] sm:$0xff] %v192
                %v194 = vld [vmem:[%s184 + $0x40] sm:$0xff]
                %195 = vst [vmem:[%s185 + $0x20] sm:$0xff] %v194
                %v196 = vld [vmem:[%s184 + $0x48] sm:$0xff]
                %197 = vst [vmem:[%s185 + $0x28] sm:$0xff] %v196
                %v198 = vld [vmem:[%s184 + $0x60] sm:$0xff]
                %199 = vst [vmem:[%s185 + $0x30] sm:$0xff] %v198
                %v200 = vld [vmem:[%s184 + $0x68] sm:$0xff]
                %201 = vst [vmem:[%s185 + $0x38] sm:$0xff] %v200
                %v202 = vld [vmem:[%s184 + $0x80] sm:$0xff]
                %203 = vst [vmem:[%s185 + $0x40] sm:$0xff] %v202
                %v204 = vld [vmem:[%s184 + $0x88] sm:$0xff]
                %205 = vst [vmem:[%s185 + $0x48] sm:$0xff] %v204
                %v206 = vld [vmem:[%s184 + $0xa0] sm:$0xff]
                %207 = vst [vmem:[%s185 + $0x50] sm:$0xff] %v206
                %v208 = vld [vmem:[%s184 + $0xa8] sm:$0xff]
                %209 = vst [vmem:[%s185 + $0x58] sm:$0xff] %v208
                %v210 = vld [vmem:[%s184 + $0xc0] sm:$0xff]
                %211 = vst [vmem:[%s185 + $0x60] sm:$0xff] %v210
                %v212 = vld [vmem:[%s184 + $0xc8] sm:$0xff]
                %213 = vst [vmem:[%s185 + $0x68] sm:$0xff] %v212
                %v214 = vld [vmem:[%s184 + $0xe0] sm:$0xff]
                %215 = vst [vmem:[%s185 + $0x70] sm:$0xff] %v214
                %v216 = vld [vmem:[%s184 + $0xe8] sm:$0xff]
                %217 = vst [vmem:[%s185 + $0x78] sm:$0xff] %v216
              $region33: #{unet_forward.18} parent=27 // loop_footer
                %s183 = sadd.s32 1, %s179
              $region34: #{unet_forward.18} parent=27 // loop_footer_branch
                %178 = sbr.rel target = $region30
              $region35: #{unet_forward.18} parent=27 // loop_exit
                _
            $region28: #{unet_forward.18} parent=23 // pred_fallthru
              _
            // Predicated region
            $region36: #{unet_forward.18} parent=23 // pred_check
              _
            $region37: #{unet_forward.18} parent=23 // pred_check_branch
              %219 = sbr.rel target = $region39
            $region38: #{unet_forward.18} parent=23 // pred_region
              _
            $region39: #{unet_forward.18} parent=23 // pred_fallthru
              _
          $region24: #{unet_forward.18} parent=19 // pred_fallthru
            _
          %220 = vnop
        $region20: #{unet_forward.18} parent=15 // pred_fallthru
          _
        // Predicated region
        $region40: #{unet_forward.18} parent=15 // pred_check
          %p221 = pneg %p80
        $region41: #{unet_forward.18} parent=15 // pred_check_branch
          %223 = sbr.rel (%p221) target = $region43
        $region42: #{unet_forward.18} parent=15 // pred_region
          %s224 = smul.u32 64, %s18
          %p225 = scmp.lt.s32.totalorder %s16, 3
          %s226 = scalar_select %p225, %s16, 3
          %p227 = scmp.lt.s32.totalorder %s224, 127
          %s228 = scalar_select %p227, %s224, 127
          %s229 = smul.addr %s226, 128
          %s230 = sadd.s32 %s228, %s229
          %s231 = smul.addr %s230, 4
          %s232 = scalar_lea.vmem %s1, %s231
          %s233 = smul.u32 64, %s18
        $region43: #{unet_forward.18} parent=15 // pred_fallthru
          _
        // Predicated region
        $region44: #{unet_forward.18} parent=15 // pred_check
          %p234 = pneg %p106
        $region45: #{unet_forward.18} parent=15 // pred_check_branch
          %236 = sbr.rel (%p234) target = $region47
        $region46: #{unet_forward.18} parent=15 // pred_region
          %p237 = scmp.lt.s32.totalorder %s16, 3
          %s238 = scalar_select %p237, %s16, 3
          %s239 = scalar_lea.vmem %s2, %s238
        $region47: #{unet_forward.18} parent=15 // pred_fallthru
          _
      $region16: #{unet_forward.18} parent=5 // pred_fallthru
        _
      %p240 = scmp.le.s32.totalorder 1, %s9
      %p241 = scmp.lt.s32.totalorder %s9, 17
      %p242 = pnand %p240, %p241
      %p243 = pneg %p242
      // Predicated region
      $region48: #{unet_forward.18} parent=5 // pred_check
        _
      $region49: #{unet_forward.18} parent=5 // pred_check_branch
        %245 = sbr.rel (%p242) target = $region51
      $region50: #{unet_forward.18} parent=5 // pred_region
        %s246 = ssub.s32 %s9, 1
        %s247 = sand.u32 %s45, 1
        %s248 = sand.u32 %s45, 1
        %s249 = smul.addr %s248, 128
        %s250 = scalar_lea.vmem [#allocation3], %s249
        // Predicated region
        $region52: #{unet_forward.18} parent=50 // pred_check
          %p251 = pneg %p58
        $region53: #{unet_forward.18} parent=50 // pred_check_branch
          %253 = sbr.rel (%p251) target = $region55
        $region54: #{unet_forward.18} parent=50 // pred_region
          _
        $region55: #{unet_forward.18} parent=50 // pred_fallthru
          _
        %s254 = sand.u32 %s45, 1
        %s255 = sand.u32 %s45, 1
        %s256 = smul.addr %s255, 128
        %s257 = scalar_lea.vmem [#allocation3], %s256
        %p258 = pneg %p58
        %p259 = pneg %p55
        %s260 = smul.u32 64, %s21
        %p261 = scmp.lt.s32.totalorder %s19, 3
        %s262 = scalar_select %p261, %s19, 3
        %p263 = scmp.lt.s32.totalorder %s260, 127
        %s264 = scalar_select %p263, %s260, 127
        %s265 = smul.addr %s262, 128
        %s266 = sadd.s32 %s264, %s265
        %s267 = smul.addr %s266, 4
        %s268 = scalar_lea.vmem %s1, %s267
        %p269 = pneg %p86
        %p270 = pneg %p83
        %p271 = scmp.lt.s32.totalorder %s19, 3
        %s272 = scalar_select %p271, %s19, 3
        %s273 = scalar_lea.vmem %s2, %s272
        %p274 = pneg %p112
        %p275 = pneg %p109
        %p276 = pneg %p140
        %p277 = pneg %p137
        %s278 = smul.u32 8, %s20
        %p279 = scmp.lt.s32.totalorder %s19, 3
        %s280 = scalar_select %p279, %s19, 3
        %p281 = scmp.lt.s32.totalorder %s278, 15
        %s282 = scalar_select %p281, %s278, 15
        %s283 = smul.addr %s280, 16
        %s284 = sadd.s32 %s282, %s283
        %s285 = smul.addr %s284, 8
        %s286 = scalar_lea.vmem %s3, %s285
        %s287 = smul.u32 8, %s20
        %s288 = smul.u32 4, %s21
        %s289 = smul.u32 64, %s21
        %p290 = scmp.lt.s32.totalorder %s19, 3
        %s291 = scalar_select %p290, %s19, 3
        %p292 = scmp.lt.s32.totalorder %s289, 127
        %s293 = scalar_select %p292, %s289, 127
        %s294 = smul.addr %s291, 128
        %s295 = sadd.s32 %s293, %s294
        %s296 = smul.addr %s295, 4
        %s297 = scalar_lea.vmem %s1, %s296
        %s298 = smul.u32 64, %s21
        %p299 = scmp.lt.s32.totalorder %s19, 3
        %s300 = scalar_select %p299, %s19, 3
        %s301 = scalar_lea.vmem %s2, %s300
        %s302 = smul.u32 8, %s20
        %p303 = scmp.lt.s32.totalorder %s19, 3
        %s304 = scalar_select %p303, %s19, 3
        %p305 = scmp.lt.s32.totalorder %s302, 15
        %s306 = scalar_select %p305, %s302, 15
        %s307 = smul.addr %s304, 16
        %s308 = sadd.s32 %s306, %s307
        %s309 = smul.addr %s308, 8
        %s310 = scalar_lea.vmem %s3, %s309
        %s311 = smul.u32 8, %s20
        %p313 = scmp.eq.s32.totalorder %s21, 0
        // Predicated region
        $region56: #{unet_forward.18} parent=50 // pred_check
          %p314 = pneg %p313
        $region57: #{unet_forward.18} parent=50 // pred_check_branch
          %316 = sbr.rel (%p314) target = $region59
        $region58: #{unet_forward.18} parent=50 // pred_region
          %317 = vst [vmem:[#allocation2] sm:$0xff] 0.0
          %318 = vst [vmem:[#allocation2 + $0x8] sm:$0xff] 0.0
          %319 = vst [vmem:[#allocation2 + $0x10] sm:$0xff] 0.0
          %320 = vst [vmem:[#allocation2 + $0x18] sm:$0xff] 0.0
          %321 = vst [vmem:[#allocation2 + $0x20] sm:$0xff] 0.0
          %322 = vst [vmem:[#allocation2 + $0x28] sm:$0xff] 0.0
          %323 = vst [vmem:[#allocation2 + $0x30] sm:$0xff] 0.0
          %324 = vst [vmem:[#allocation2 + $0x38] sm:$0xff] 0.0
        $region59: #{unet_forward.18} parent=50 // pred_fallthru
          _
        %v325 = vld [vmem:[#allocation2] sm:$0xff]
        %v326 = vld [vmem:[#allocation2 + $0x8] sm:$0xff]
        %v327 = vld [vmem:[#allocation2 + $0x10] sm:$0xff]
        %v328 = vld [vmem:[#allocation2 + $0x18] sm:$0xff]
        %v329 = vld [vmem:[#allocation2 + $0x20] sm:$0xff]
        %v330 = vld [vmem:[#allocation2 + $0x28] sm:$0xff]
        %v331 = vld [vmem:[#allocation2 + $0x30] sm:$0xff]
        %v332 = vld [vmem:[#allocation2 + $0x38] sm:$0xff]
        %v333 = vld [vmem:[%s250] sm:$0xff]
        %v334 = vld [vmem:[%s250 + $0x8] sm:$0xff]
        %v335 = vld [vmem:[%s250 + $0x10] sm:$0xff]
        %v336 = vld [vmem:[%s250 + $0x18] sm:$0xff]
        %v337 = vld [vmem:[%s250 + $0x20] sm:$0xff]
        %v338 = vld [vmem:[%s250 + $0x28] sm:$0xff]
        %v339 = vld [vmem:[%s250 + $0x30] sm:$0xff]
        %v340 = vld [vmem:[%s250 + $0x38] sm:$0xff]
        %v341 = vld [vmem:[%s250 + $0x40] sm:$0xff]
        %v342 = vld [vmem:[%s250 + $0x48] sm:$0xff]
        %v343 = vld [vmem:[%s250 + $0x50] sm:$0xff]
        %v344 = vld [vmem:[%s250 + $0x58] sm:$0xff]
        %v345 = vld [vmem:[%s250 + $0x60] sm:$0xff]
        %v346 = vld [vmem:[%s250 + $0x68] sm:$0xff]
        %v347 = vld [vmem:[%s250 + $0x70] sm:$0xff]
        %v348 = vld [vmem:[%s250 + $0x78] sm:$0xff]
        %v349 = vld [vmem:[%s297] sm:$0xf]
        %v350 = vld [vmem:[%s297 + $0x4] sm:$0xf]
        %v351 = vld [vmem:[%s297 + $0x8] sm:$0xf]
        %v352 = vld [vmem:[%s297 + $0xc] sm:$0xf]
        %v353 = vld [vmem:[%s297 + $0x10] sm:$0xf]
        %v354 = vld [vmem:[%s297 + $0x14] sm:$0xf]
        %v355 = vld [vmem:[%s297 + $0x18] sm:$0xf]
        %v356 = vld [vmem:[%s297 + $0x1c] sm:$0xf]
        %v357 = vld [vmem:[%s297 + $0x20] sm:$0xf]
        %v358 = vld [vmem:[%s297 + $0x24] sm:$0xf]
        %v359 = vld [vmem:[%s297 + $0x28] sm:$0xf]
        %v360 = vld [vmem:[%s297 + $0x2c] sm:$0xf]
        %v361 = vld [vmem:[%s297 + $0x30] sm:$0xf]
        %v362 = vld [vmem:[%s297 + $0x34] sm:$0xf]
        %v363 = vld [vmem:[%s297 + $0x38] sm:$0xf]
        %v364 = vld [vmem:[%s297 + $0x3c] sm:$0xf]
        %v365 = vld [vmem:[%s297 + $0x40] sm:$0xf]
        %v366 = vld [vmem:[%s297 + $0x44] sm:$0xf]
        %v367 = vld [vmem:[%s297 + $0x48] sm:$0xf]
        %v368 = vld [vmem:[%s297 + $0x4c] sm:$0xf]
        %v369 = vld [vmem:[%s297 + $0x50] sm:$0xf]
        %v370 = vld [vmem:[%s297 + $0x54] sm:$0xf]
        %v371 = vld [vmem:[%s297 + $0x58] sm:$0xf]
        %v372 = vld [vmem:[%s297 + $0x5c] sm:$0xf]
        %v373 = vld [vmem:[%s297 + $0x60] sm:$0xf]
        %v374 = vld [vmem:[%s297 + $0x64] sm:$0xf]
        %v375 = vld [vmem:[%s297 + $0x68] sm:$0xf]
        %v376 = vld [vmem:[%s297 + $0x6c] sm:$0xf]
        %v377 = vld [vmem:[%s297 + $0x70] sm:$0xf]
        %v378 = vld [vmem:[%s297 + $0x74] sm:$0xf]
        %v379 = vld [vmem:[%s297 + $0x78] sm:$0xf]
        %v380 = vld [vmem:[%s297 + $0x7c] sm:$0xf]
        %v381 = vld [vmem:[%s297 + $0x80] sm:$0xf]
        %v382 = vld [vmem:[%s297 + $0x84] sm:$0xf]
        %v383 = vld [vmem:[%s297 + $0x88] sm:$0xf]
        %v384 = vld [vmem:[%s297 + $0x8c] sm:$0xf]
        %v385 = vld [vmem:[%s297 + $0x90] sm:$0xf]
        %v386 = vld [vmem:[%s297 + $0x94] sm:$0xf]
        %v387 = vld [vmem:[%s297 + $0x98] sm:$0xf]
        %v388 = vld [vmem:[%s297 + $0x9c] sm:$0xf]
        %v389 = vld [vmem:[%s297 + $0xa0] sm:$0xf]
        %v390 = vld [vmem:[%s297 + $0xa4] sm:$0xf]
        %v391 = vld [vmem:[%s297 + $0xa8] sm:$0xf]
        %v392 = vld [vmem:[%s297 + $0xac] sm:$0xf]
        %v393 = vld [vmem:[%s297 + $0xb0] sm:$0xf]
        %v394 = vld [vmem:[%s297 + $0xb4] sm:$0xf]
        %v395 = vld [vmem:[%s297 + $0xb8] sm:$0xf]
        %v396 = vld [vmem:[%s297 + $0xbc] sm:$0xf]
        %v397 = vld [vmem:[%s297 + $0xc0] sm:$0xf]
        %v398 = vld [vmem:[%s297 + $0xc4] sm:$0xf]
        %v399 = vld [vmem:[%s297 + $0xc8] sm:$0xf]
        %v400 = vld [vmem:[%s297 + $0xcc] sm:$0xf]
        %v401 = vld [vmem:[%s297 + $0xd0] sm:$0xf]
        %v402 = vld [vmem:[%s297 + $0xd4] sm:$0xf]
        %v403 = vld [vmem:[%s297 + $0xd8] sm:$0xf]
        %v404 = vld [vmem:[%s297 + $0xdc] sm:$0xf]
        %v405 = vld [vmem:[%s297 + $0xe0] sm:$0xf]
        %v406 = vld [vmem:[%s297 + $0xe4] sm:$0xf]
        %v407 = vld [vmem:[%s297 + $0xe8] sm:$0xf]
        %v408 = vld [vmem:[%s297 + $0xec] sm:$0xf]
        %v409 = vld [vmem:[%s297 + $0xf0] sm:$0xf]
        %v410 = vld [vmem:[%s297 + $0xf4] sm:$0xf]
        %v411 = vld [vmem:[%s297 + $0xf8] sm:$0xf]
        %v412 = vld [vmem:[%s297 + $0xfc] sm:$0xf]
        %v429 = vunpack.c.l.b16 %v333
        %v430 = vunpack.c.h.b16 %v333
        %v431 = vunpack.c.l.b16 %v334
        %v432 = vunpack.c.h.b16 %v334
        %v433 = vunpack.c.l.b16 %v335
        %v434 = vunpack.c.h.b16 %v335
        %v435 = vunpack.c.l.b16 %v336
        %v436 = vunpack.c.h.b16 %v336
        %v437 = vunpack.c.l.b16 %v337
        %v438 = vunpack.c.h.b16 %v337
        %v439 = vunpack.c.l.b16 %v338
        %v440 = vunpack.c.h.b16 %v338
        %v441 = vunpack.c.l.b16 %v339
        %v442 = vunpack.c.h.b16 %v339
        %v443 = vunpack.c.l.b16 %v340
        %v444 = vunpack.c.h.b16 %v340
        %v445 = vunpack.c.l.b16 %v341
        %v446 = vunpack.c.h.b16 %v341
        %v447 = vunpack.c.l.b16 %v342
        %v448 = vunpack.c.h.b16 %v342
        %v449 = vunpack.c.l.b16 %v343
        %v450 = vunpack.c.h.b16 %v343
        %v451 = vunpack.c.l.b16 %v344
        %v452 = vunpack.c.h.b16 %v344
        %v453 = vunpack.c.l.b16 %v345
        %v454 = vunpack.c.h.b16 %v345
        %v455 = vunpack.c.l.b16 %v346
        %v456 = vunpack.c.h.b16 %v346
        %v457 = vunpack.c.l.b16 %v347
        %v458 = vunpack.c.h.b16 %v347
        %v459 = vunpack.c.l.b16 %v348
        %v460 = vunpack.c.h.b16 %v348
        %v461 = vpack.c.b16 %v433, %v429
        %v462 = vpack.c.b16 %v434, %v430
        %v463 = vpack.c.b16 %v435, %v431
        %v464 = vpack.c.b16 %v436, %v432
        %v465 = vpack.c.b16 %v441, %v437
        %v466 = vpack.c.b16 %v442, %v438
        %v467 = vpack.c.b16 %v443, %v439
        %v468 = vpack.c.b16 %v444, %v440
        %v469 = vpack.c.b16 %v449, %v445
        %v470 = vpack.c.b16 %v450, %v446
        %v471 = vpack.c.b16 %v451, %v447
        %v472 = vpack.c.b16 %v452, %v448
        %v473 = vpack.c.b16 %v457, %v453
        %v474 = vpack.c.b16 %v458, %v454
        %v475 = vpack.c.b16 %v459, %v455
        %v476 = vpack.c.b16 %v460, %v456
        %v557 = vunpack.c.l.b16 %v349
        %v558 = vunpack.c.l.b16 %v350
        %v559 = vunpack.c.l.b16 %v351
        %v560 = vunpack.c.l.b16 %v352
        %v561 = vunpack.c.l.b16 %v353
        %v562 = vunpack.c.l.b16 %v354
        %v563 = vunpack.c.l.b16 %v355
        %v564 = vunpack.c.l.b16 %v356
        %v565 = vunpack.c.l.b16 %v357
        %v566 = vunpack.c.l.b16 %v358
        %v567 = vunpack.c.l.b16 %v359
        %v568 = vunpack.c.l.b16 %v360
        %v569 = vunpack.c.l.b16 %v361
        %v570 = vunpack.c.l.b16 %v362
        %v571 = vunpack.c.l.b16 %v363
        %v572 = vunpack.c.l.b16 %v364
        %v573 = vunpack.c.l.b16 %v365
        %v574 = vunpack.c.l.b16 %v366
        %v575 = vunpack.c.l.b16 %v367
        %v576 = vunpack.c.l.b16 %v368
        %v577 = vunpack.c.l.b16 %v369
        %v578 = vunpack.c.l.b16 %v370
        %v579 = vunpack.c.l.b16 %v371
        %v580 = vunpack.c.l.b16 %v372
        %v581 = vunpack.c.l.b16 %v373
        %v582 = vunpack.c.l.b16 %v374
        %v583 = vunpack.c.l.b16 %v375
        %v584 = vunpack.c.l.b16 %v376
        %v585 = vunpack.c.l.b16 %v377
        %v586 = vunpack.c.l.b16 %v378
        %v587 = vunpack.c.l.b16 %v379
        %v588 = vunpack.c.l.b16 %v380
        %v589 = vunpack.c.l.b16 %v381
        %v590 = vunpack.c.l.b16 %v382
        %v591 = vunpack.c.l.b16 %v383
        %v592 = vunpack.c.l.b16 %v384
        %v593 = vunpack.c.l.b16 %v385
        %v594 = vunpack.c.l.b16 %v386
        %v595 = vunpack.c.l.b16 %v387
        %v596 = vunpack.c.l.b16 %v388
        %v597 = vunpack.c.l.b16 %v389
        %v598 = vunpack.c.l.b16 %v390
        %v599 = vunpack.c.l.b16 %v391
        %v600 = vunpack.c.l.b16 %v392
        %v601 = vunpack.c.l.b16 %v393
        %v602 = vunpack.c.l.b16 %v394
        %v603 = vunpack.c.l.b16 %v395
        %v604 = vunpack.c.l.b16 %v396
        %v605 = vunpack.c.l.b16 %v397
        %v606 = vunpack.c.l.b16 %v398
        %v607 = vunpack.c.l.b16 %v399
        %v608 = vunpack.c.l.b16 %v400
        %v609 = vunpack.c.l.b16 %v401
        %v610 = vunpack.c.l.b16 %v402
        %v611 = vunpack.c.l.b16 %v403
        %v612 = vunpack.c.l.b16 %v404
        %v613 = vunpack.c.l.b16 %v405
        %v614 = vunpack.c.l.b16 %v406
        %v615 = vunpack.c.l.b16 %v407
        %v616 = vunpack.c.l.b16 %v408
        %v617 = vunpack.c.l.b16 %v409
        %v618 = vunpack.c.l.b16 %v410
        %v619 = vunpack.c.l.b16 %v411
        %v620 = vunpack.c.l.b16 %v412
        %v621 = vpack.c.b16 %v558, %v557
        %v622 = vpack.c.b16 %v560, %v559
        %v623 = vpack.c.b16 %v562, %v561
        %v624 = vpack.c.b16 %v564, %v563
        %v625 = vpack.c.b16 %v566, %v565
        %v626 = vpack.c.b16 %v568, %v567
        %v627 = vpack.c.b16 %v570, %v569
        %v628 = vpack.c.b16 %v572, %v571
        %v629 = vpack.c.b16 %v574, %v573
        %v630 = vpack.c.b16 %v576, %v575
        %v631 = vpack.c.b16 %v578, %v577
        %v632 = vpack.c.b16 %v580, %v579
        %v633 = vpack.c.b16 %v582, %v581
        %v634 = vpack.c.b16 %v584, %v583
        %v635 = vpack.c.b16 %v586, %v585
        %v636 = vpack.c.b16 %v588, %v587
        %v637 = vpack.c.b16 %v590, %v589
        %v638 = vpack.c.b16 %v592, %v591
        %v639 = vpack.c.b16 %v594, %v593
        %v640 = vpack.c.b16 %v596, %v595
        %v641 = vpack.c.b16 %v598, %v597
        %v642 = vpack.c.b16 %v600, %v599
        %v643 = vpack.c.b16 %v602, %v601
        %v644 = vpack.c.b16 %v604, %v603
        %v645 = vpack.c.b16 %v606, %v605
        %v646 = vpack.c.b16 %v608, %v607
        %v647 = vpack.c.b16 %v610, %v609
        %v648 = vpack.c.b16 %v612, %v611
        %v649 = vpack.c.b16 %v614, %v613
        %v650 = vpack.c.b16 %v616, %v615
        %v651 = vpack.c.b16 %v618, %v617
        %v652 = vpack.c.b16 %v620, %v619
        %685 = vmatprep.subr.bf16.mxu0 0
        %686 = vmatpush1.bf16.msra.mxu0 %v621
        %687 = vmatprep.subr.bf16.mxu0 0
        %688 = vmatpush1.bf16.msra.mxu0 %v622
        %689 = vmatprep.subr.bf16.mxu0 0
        %690 = vmatpush1.bf16.msra.mxu0 %v623
        %691 = vmatprep.subr.bf16.mxu0 0
        %692 = vmatpush1.bf16.msra.mxu0 %v624
        %693 = vmatprep.subr.bf16.mxu0 0
        %694 = vmatpush1.bf16.msra.mxu0 %v625
        %695 = vmatprep.subr.bf16.mxu0 0
        %696 = vmatpush1.bf16.msra.mxu0 %v626
        %697 = vmatprep.subr.bf16.mxu0 0
        %698 = vmatpush1.bf16.msra.mxu0 %v627
        %699 = vmatprep.subr.bf16.mxu0 0
        %700 = vmatpush1.bf16.msra.mxu0 %v628
        %701 = vmatprep.subr.bf16.mxu0 0
        %702 = vmatpush1.bf16.msra.mxu0 %v629
        %703 = vmatprep.subr.bf16.mxu0 0
        %704 = vmatpush1.bf16.msra.mxu0 %v630
        %705 = vmatprep.subr.bf16.mxu0 0
        %706 = vmatpush1.bf16.msra.mxu0 %v631
        %707 = vmatprep.subr.bf16.mxu0 0
        %708 = vmatpush1.bf16.msra.mxu0 %v632
        %709 = vmatprep.subr.bf16.mxu0 0
        %710 = vmatpush1.bf16.msra.mxu0 %v633
        %711 = vmatprep.subr.bf16.mxu0 0
        %712 = vmatpush1.bf16.msra.mxu0 %v634
        %713 = vmatprep.subr.bf16.mxu0 0
        %714 = vmatpush1.bf16.msra.mxu0 %v635
        %715 = vmatprep.subr.bf16.mxu0 0
        %716 = vmatpush1.bf16.msra.mxu0 %v636
        %717 = vmatprep.mubr.bf16.mxu0 %v462
        %718 = vmatmul.mubr.bf16.gmra.mrb[0].mxu0 %v461
        %v719 = vpop.f32.mrb[0].mxu0
        %v720 = vadd.f32 0.0, %v719
        %v721 = vpop.f32.mrb[0].mxu0
        %v722 = vpop.f32.mrb[0].mxu0
        %v723 = vadd.f32 0.0, %v722
        %v724 = vpop.f32.mrb[0].mxu0
        %725 = vmatprep.mubr.bf16.mxu0 %v466
        %726 = vmatmul.mubr.bf16.gmra.mrb[0].mxu0 %v465
        %v727 = vpop.f32.mrb[0].mxu0
        %v728 = vadd.f32 0.0, %v727
        %v729 = vpop.f32.mrb[0].mxu0
        %v730 = vpop.f32.mrb[0].mxu0
        %v731 = vadd.f32 0.0, %v730
        %v732 = vpop.f32.mrb[0].mxu0
        %733 = vmatprep.mubr.bf16.mxu0 %v470
        %734 = vmatmul.mubr.bf16.gmra.mrb[0].mxu0 %v469
        %v735 = vpop.f32.mrb[0].mxu0
        %v736 = vadd.f32 0.0, %v735
        %v737 = vpop.f32.mrb[0].mxu0
        %v738 = vpop.f32.mrb[0].mxu0
        %v739 = vadd.f32 0.0, %v738
        %v740 = vpop.f32.mrb[0].mxu0
        %741 = vmatprep.mubr.bf16.mxu0 %v474
        %742 = vmatmul.mubr.bf16.gmra.mrb[0].mxu0 %v473
        %v743 = vpop.f32.mrb[0].mxu0
        %v744 = vadd.f32 0.0, %v743
        %v745 = vpop.f32.mrb[0].mxu0
        %v746 = vpop.f32.mrb[0].mxu0
        %v747 = vadd.f32 0.0, %v746
        %v748 = vpop.f32.mrb[0].mxu0
        %749 = vdwg.mxu0
        %750 = vmatprep.subr.bf16.mxu0 0
        %751 = vmatpush1.bf16.msra.mxu0 %v637
        %752 = vmatprep.subr.bf16.mxu0 0
        %753 = vmatpush1.bf16.msra.mxu0 %v638
        %754 = vmatprep.subr.bf16.mxu0 0
        %755 = vmatpush1.bf16.msra.mxu0 %v639
        %756 = vmatprep.subr.bf16.mxu0 0
        %757 = vmatpush1.bf16.msra.mxu0 %v640
        %758 = vmatprep.subr.bf16.mxu0 0
        %759 = vmatpush1.bf16.msra.mxu0 %v641
        %760 = vmatprep.subr.bf16.mxu0 0
        %761 = vmatpush1.bf16.msra.mxu0 %v642
        %762 = vmatprep.subr.bf16.mxu0 0
        %763 = vmatpush1.bf16.msra.mxu0 %v643
        %764 = vmatprep.subr.bf16.mxu0 0
        %765 = vmatpush1.bf16.msra.mxu0 %v644
        %766 = vmatprep.subr.bf16.mxu0 0
        %767 = vmatpush1.bf16.msra.mxu0 %v645
        %768 = vmatprep.subr.bf16.mxu0 0
        %769 = vmatpush1.bf16.msra.mxu0 %v646
        %770 = vmatprep.subr.bf16.mxu0 0
        %771 = vmatpush1.bf16.msra.mxu0 %v647
        %772 = vmatprep.subr.bf16.mxu0 0
        %773 = vmatpush1.bf16.msra.mxu0 %v648
        %774 = vmatprep.subr.bf16.mxu0 0
        %775 = vmatpush1.bf16.msra.mxu0 %v649
        %776 = vmatprep.subr.bf16.mxu0 0
        %777 = vmatpush1.bf16.msra.mxu0 %v650
        %778 = vmatprep.subr.bf16.mxu0 0
        %779 = vmatpush1.bf16.msra.mxu0 %v651
        %780 = vmatprep.subr.bf16.mxu0 0
        %781 = vmatpush1.bf16.msra.mxu0 %v652
        %782 = vmatprep.mubr.bf16.mxu0 %v464
        %783 = vmatmul.mubr.bf16.gmra.mrb[0].mxu0 %v463
        %v784 = vpop.f32.mrb[0].mxu0
        %v785 = vadd.f32 %v720, %v784
        %v786 = vpop.f32.mrb[0].mxu0
        %v787 = vpop.f32.mrb[0].mxu0
        %v788 = vadd.f32 %v723, %v787
        %v789 = vpop.f32.mrb[0].mxu0
        %790 = vmatprep.mubr.bf16.mxu0 %v468
        %791 = vmatmul.mubr.bf16.gmra.mrb[0].mxu0 %v467
        %v792 = vpop.f32.mrb[0].mxu0
        %v793 = vadd.f32 %v728, %v792
        %v794 = vpop.f32.mrb[0].mxu0
        %v795 = vpop.f32.mrb[0].mxu0
        %v796 = vadd.f32 %v731, %v795
        %v797 = vpop.f32.mrb[0].mxu0
        %798 = vmatprep.mubr.bf16.mxu0 %v472
        %799 = vmatmul.mubr.bf16.gmra.mrb[0].mxu0 %v471
        %v800 = vpop.f32.mrb[0].mxu0
        %v801 = vadd.f32 %v736, %v800
        %v802 = vpop.f32.mrb[0].mxu0
        %v803 = vpop.f32.mrb[0].mxu0
        %v804 = vadd.f32 %v739, %v803
        %v805 = vpop.f32.mrb[0].mxu0
        %806 = vmatprep.mubr.bf16.mxu0 %v476
        %807 = vmatmul.mubr.bf16.gmra.mrb[0].mxu0 %v475
        %v808 = vpop.f32.mrb[0].mxu0
        %v809 = vadd.f32 %v744, %v808
        %v810 = vpop.f32.mrb[0].mxu0
        %v811 = vpop.f32.mrb[0].mxu0
        %v812 = vadd.f32 %v747, %v811
        %v813 = vpop.f32.mrb[0].mxu0
        %814 = vdwg.mxu0
        %v815 = vadd.f32 %v325, %v785
        %v816 = vadd.f32 %v326, %v788
        %v817 = vadd.f32 %v327, %v793
        %v818 = vadd.f32 %v328, %v796
        %v819 = vadd.f32 %v329, %v801
        %v820 = vadd.f32 %v330, %v804
        %v821 = vadd.f32 %v331, %v809
        %v822 = vadd.f32 %v332, %v812
        %823 = vst [vmem:[#allocation2] sm:$0xff] %v815
        %824 = vst [vmem:[#allocation2 + $0x8] sm:$0xff] %v816
        %825 = vst [vmem:[#allocation2 + $0x10] sm:$0xff] %v817
        %826 = vst [vmem:[#allocation2 + $0x18] sm:$0xff] %v818
        %827 = vst [vmem:[#allocation2 + $0x20] sm:$0xff] %v819
        %828 = vst [vmem:[#allocation2 + $0x28] sm:$0xff] %v820
        %829 = vst [vmem:[#allocation2 + $0x30] sm:$0xff] %v821
        %830 = vst [vmem:[#allocation2 + $0x38] sm:$0xff] %v822
        %p831 = scmp.eq.s32.totalorder %s21, 1
        // Predicated region
        $region60: #{unet_forward.18} parent=50 // pred_check
          %p832 = pneg %p831
        $region61: #{unet_forward.18} parent=50 // pred_check_branch
          %834 = sbr.rel (%p832) target = $region63
        $region62: #{unet_forward.18} parent=50 // pred_region
          %v835 = vld [vmem:[#allocation2] sm:$0xff]
          %v836 = vld [vmem:[#allocation2 + $0x8] sm:$0xff]
          %v837 = vld [vmem:[#allocation2 + $0x10] sm:$0xff]
          %v838 = vld [vmem:[#allocation2 + $0x18] sm:$0xff]
          %v839 = vld [vmem:[#allocation2 + $0x20] sm:$0xff]
          %v840 = vld [vmem:[#allocation2 + $0x28] sm:$0xff]
          %v841 = vld [vmem:[#allocation2 + $0x30] sm:$0xff]
          %v842 = vld [vmem:[#allocation2 + $0x38] sm:$0xff]
          %v843 = vld [vmem:[%s301] sm:$0x1]
          %v845 = vlaneseq
          %v846 = vshrl.u32 %v845, 7
          %v847 = vsub.s32 0, %v846
          %v848 = vrot.slane %v843, %v847
          %v850 = vadd.f32 %v835, %v848
          %v851 = vadd.f32 %v836, %v848
          %v852 = vadd.f32 %v837, %v848
          %v853 = vadd.f32 %v838, %v848
          %v854 = vadd.f32 %v839, %v848
          %v855 = vadd.f32 %v840, %v848
          %v856 = vadd.f32 %v841, %v848
          %v857 = vadd.f32 %v842, %v848
          %858 = vst [vmem:[%s310] sm:$0xff] %v850
          %859 = vst [vmem:[%s310 + $0x8] sm:$0xff] %v851
          %860 = vst [vmem:[%s310 + $0x10] sm:$0xff] %v852
          %861 = vst [vmem:[%s310 + $0x18] sm:$0xff] %v853
          %862 = vst [vmem:[%s310 + $0x20] sm:$0xff] %v854
          %863 = vst [vmem:[%s310 + $0x28] sm:$0xff] %v855
          %864 = vst [vmem:[%s310 + $0x30] sm:$0xff] %v856
          %865 = vst [vmem:[%s310 + $0x38] sm:$0xff] %v857
        $region63: #{unet_forward.18} parent=50 // pred_fallthru
          _
        %s866 = smul.u32 8, %s20
        %p867 = scmp.lt.s32.totalorder %s19, 3
        %s868 = scalar_select %p867, %s19, 3
        %p869 = scmp.lt.s32.totalorder %s866, 15
        %s870 = scalar_select %p869, %s866, 15
        %s871 = smul.addr %s868, 16
        %s872 = sadd.s32 %s870, %s871
        %s873 = smul.addr %s872, 8
        %s874 = scalar_lea.vmem %s3, %s873
        // Predicated region
        $region64: #{unet_forward.18} parent=50 // pred_check
          %p875 = pneg %p137
        $region65: #{unet_forward.18} parent=50 // pred_check_branch
          %877 = sbr.rel (%p875) target = $region67
        $region66: #{unet_forward.18} parent=50 // pred_region
          %s878 = smul.u32 8, %s20
        $region67: #{unet_forward.18} parent=50 // pred_fallthru
          _
      $region51: #{unet_forward.18} parent=5 // pred_fallthru
        _
      %p879 = scmp.le.s32.totalorder 2, %s9
      // Predicated region
      $region68: #{unet_forward.18} parent=5 // pred_check
        %p880 = pneg %p879
      $region69: #{unet_forward.18} parent=5 // pred_check_branch
        %882 = sbr.rel (%p880) target = $region71
      $region70: #{unet_forward.18} parent=5 // pred_region
        %s883 = ssub.s32 %s9, 2
        // Predicated region
        $region72: #{unet_forward.18} parent=70 // pred_check
          %p884 = pneg %p143
        $region73: #{unet_forward.18} parent=70 // pred_check_branch
          %886 = sbr.rel (%p884) target = $region75
        $region74: #{unet_forward.18} parent=70 // pred_region
          %s887 = smul.u32 8, %s23
          %p888 = scmp.lt.s32.totalorder %s22, 3
          %s889 = scalar_select %p888, %s22, 3
          %p890 = scmp.lt.s32.totalorder %s887, 15
          %s891 = scalar_select %p890, %s887, 15
          %s892 = smul.addr %s889, 16
          %s893 = sadd.s32 %s891, %s892
          %s894 = smul.addr %s893, 8
          %s895 = scalar_lea.vmem %s3, %s894
        $region75: #{unet_forward.18} parent=70 // pred_fallthru
          _
      $region71: #{unet_forward.18} parent=5 // pred_fallthru
        _
    $region6: #{unet_forward.18} parent=1 // loop_footer
      %s13 = sadd.s32 1, %s9
    $region7: #{unet_forward.18} parent=1 // loop_footer_branch
      %8 = sbr.rel target = $region3
    $region8: #{unet_forward.18} parent=1 // loop_exit
      _

// kernel: unet_forward.19
$region0: #{unet_forward.19}
  #allocation0 [shape = 'u32[]', space=smem, size = 0x4, offset = 0x4, fixed_abs, tag = 'smem constant byte address 0x4 - core index']
  #allocation1 [shape = 'u32[144,128]{1,0:T(1,128)}', space=vmem, size = 0x12000, scoped, tag = 'internal scratch']
  #allocation2 [shape = 'f32[128,128]{1,0:T(8,128)}', space=vmem, size = 0x10000, scoped, tag = 'scratch operand']
  %s0 = inlined_call_operand.vmem [shape: bf16[1,2048,1024], index: 0, kind: input, shape index: {}]
  %s1 = inlined_call_operand.vmem [shape: bf16[1,1024,128], index: 1, kind: input, shape index: {}]
  %s2 = inlined_call_operand.vmem [shape: f32[1,1,128], index: 2, kind: input, shape index: {}]
  %s3 = inlined_call_operand.vmem [shape: f32[1,2048,128], index: 3, kind: output, shape index: {}]
  %s4 = sld [smem:[#allocation0]]
  $region76: #{unet_forward.19} parent=0
    _
  %s6 = ssub.s32 1, %s4
  %s7 = scalar_select 0, %s6, %s4
  $region1: #{unet_forward.19} parent=0
    #allocation3 [shape = 'u8[262144]{0}', space=vmem, size = 0x40000, scoped, tag = 'input window, operand 0']
    loop: start=0, step=1, limit=34
    $region2: #{unet_forward.19} parent=1 // loop_pre_header
      _
    $region3: #{unet_forward.19} parent=1 // loop_header
      %s9 = sphi 0, %s13
      %p10 = scmp.ge.s32.totalorder %s9, 34
      %s16 = sphi 0, %s35
      %s17 = sphi 0, %s31
      %s18 = sphi 0, %s27
      %s19 = sphi 0, %s16
      %s20 = sphi 0, %s17
      %s21 = sphi 0, %s18
      %s22 = sphi 0, %s19
      %s23 = sphi 0, %s20
      %s24 = sphi 0, %s21
      %s42 = sphi 0, %s44
      %s45 = sphi 0, %s42
      %s46 = sphi 0, %s45
      %s62 = sphi 0, %s46
      %s70 = sphi 0, %s72
      %s73 = sphi 0, %s70
      %s74 = sphi 0, %s73
      %s90 = sphi 0, %s74
      %s96 = sphi 0, %s98
      %s99 = sphi 0, %s96
      %s100 = sphi 0, %s99
      %s116 = sphi 0, %s100
      %s124 = sphi 0, %s126
      %s127 = sphi 0, %s124
      %s128 = sphi 0, %s127
      %s144 = sphi 0, %s128
    $region4: #{unet_forward.19} parent=1 // loop_header_branch
      %12 = sbr.rel (%p10) target = $region8
    $region5: #{unet_forward.19} parent=1 // loop_body
      %s14 = ssub.s32 %s9, 1
      %s15 = ssub.s32 %s9, 2
      %s25 = sadd.s32 1, %s18
      %p26 = scmp.ge.s32.totalorder %s25, 2
      %s27 = scalar_select %p26, 0, %s25
      %s28 = sadd.s32 1, %s17
      %s29 = scalar_select %p26, %s28, %s17
      %p30 = scmp.ge.s32.totalorder %s29, 16
      %s31 = scalar_select %p30, 0, %s29
      %s32 = sadd.s32 1, %s16
      %s33 = scalar_select %p30, %s32, %s16
      %p34 = scmp.ge.s32.totalorder %s33, 1
      %s35 = scalar_select %p34, 0, %s33
      %s36 = ssub.s32 %s16, %s35
      %s37 = ssub.s32 %s17, %s31
      %s38 = sor.u32 %s36, %s37
      %s39 = ssub.s32 %s18, %s27
      %s40 = sor.u32 %s38, %s39
      %p41 = scmp.eq.s32.totalorder %s40, 0
      %s43 = sadd.s32 %s42, 1
      %s44 = scalar_select %p41, %s42, %s43
      %p47 = pneg %p41
      %p48 = scmp.eq.s32.totalorder %s9, 31
      %p49 = por %p47, %p48
      %p50 = scmp.ne.s32.totalorder %s42, %s45
      %p51 = scmp.eq.s32.totalorder %s9, 0
      %p52 = por %p50, %p51
      %p53 = scmp.ne.s32.totalorder %s42, %s45
      %p54 = scmp.eq.s32.totalorder %s14, 31
      %p55 = por %p53, %p54
      %p56 = scmp.ne.s32.totalorder %s45, %s46
      %p57 = scmp.eq.s32.totalorder %s14, 0
      %p58 = por %p56, %p57
      %p59 = scmp.ne.s32.totalorder %s45, %s46
      %p60 = scmp.eq.s32.totalorder %s15, 31
      %p61 = por %p59, %p60
      %p63 = scmp.ne.s32.totalorder %s46, %s62
      %p64 = scmp.eq.s32.totalorder %s15, 0
      %p65 = por %p63, %p64
      %s66 = ssub.s32 %s16, %s35
      %s67 = ssub.s32 %s18, %s27
      %s68 = sor.u32 %s66, %s67
      %p69 = scmp.eq.s32.totalorder %s68, 0
      %s71 = sadd.s32 %s70, 1
      %s72 = scalar_select %p69, %s70, %s71
      %p75 = pneg %p69
      %p76 = scmp.eq.s32.totalorder %s9, 31
      %p77 = por %p75, %p76
      %p78 = scmp.ne.s32.totalorder %s70, %s73
      %p79 = scmp.eq.s32.totalorder %s9, 0
      %p80 = por %p78, %p79
      %p81 = scmp.ne.s32.totalorder %s70, %s73
      %p82 = scmp.eq.s32.totalorder %s14, 31
      %p83 = por %p81, %p82
      %p84 = scmp.ne.s32.totalorder %s73, %s74
      %p85 = scmp.eq.s32.totalorder %s14, 0
      %p86 = por %p84, %p85
      %p87 = scmp.ne.s32.totalorder %s73, %s74
      %p88 = scmp.eq.s32.totalorder %s15, 31
      %p89 = por %p87, %p88
      %p91 = scmp.ne.s32.totalorder %s74, %s90
      %p92 = scmp.eq.s32.totalorder %s15, 0
      %p93 = por %p91, %p92
      %s94 = ssub.s32 %s16, %s35
      %p95 = scmp.eq.s32.totalorder %s94, 0
      %s97 = sadd.s32 %s96, 1
      %s98 = scalar_select %p95, %s96, %s97
      %p101 = pneg %p95
      %p102 = scmp.eq.s32.totalorder %s9, 31
      %p103 = por %p101, %p102
      %p104 = scmp.ne.s32.totalorder %s96, %s99
      %p105 = scmp.eq.s32.totalorder %s9, 0
      %p106 = por %p104, %p105
      %p107 = scmp.ne.s32.totalorder %s96, %s99
      %p108 = scmp.eq.s32.totalorder %s14, 31
      %p109 = por %p107, %p108
      %p110 = scmp.ne.s32.totalorder %s99, %s100
      %p111 = scmp.eq.s32.totalorder %s14, 0
      %p112 = por %p110, %p111
      %p113 = scmp.ne.s32.totalorder %s99, %s100
      %p114 = scmp.eq.s32.totalorder %s15, 31
      %p115 = por %p113, %p114
      %p117 = scmp.ne.s32.totalorder %s100, %s116
      %p118 = scmp.eq.s32.totalorder %s15, 0
      %p119 = por %p117, %p118
      %s120 = ssub.s32 %s16, %s35
      %s121 = ssub.s32 %s17, %s31
      %s122 = sor.u32 %s120, %s121
      %p123 = scmp.eq.s32.totalorder %s122, 0
      %s125 = sadd.s32 %s124, 1
      %s126 = scalar_select %p123, %s124, %s125
      %p129 = pneg %p123
      %p130 = scmp.eq.s32.totalorder %s9, 31
      %p131 = por %p129, %p130
      %p132 = scmp.ne.s32.totalorder %s124, %s127
      %p133 = scmp.eq.s32.totalorder %s9, 0
      %p134 = por %p132, %p133
      %p135 = scmp.ne.s32.totalorder %s124, %s127
      %p136 = scmp.eq.s32.totalorder %s14, 31
      %p137 = por %p135, %p136
      %p138 = scmp.ne.s32.totalorder %s127, %s128
      %p139 = scmp.eq.s32.totalorder %s14, 0
      %p140 = por %p138, %p139
      %p141 = scmp.ne.s32.totalorder %s127, %s128
      %p142 = scmp.eq.s32.totalorder %s15, 31
      %p143 = por %p141, %p142
      %p145 = scmp.ne.s32.totalorder %s128, %s144
      %p146 = scmp.eq.s32.totalorder %s15, 0
      %p147 = por %p145, %p146
      %p148 = scmp.le.s32.totalorder 1, %s9
      %p149 = scmp.lt.s32.totalorder %s9, 33
      %p150 = pnand %p148, %p149
      %p151 = pneg %p150
      // Predicated region
      $region9: #{unet_forward.19} parent=5 // pred_check
        _
      $region10: #{unet_forward.19} parent=5 // pred_check_branch
        %153 = sbr.rel (%p150) target = $region12
      $region11: #{unet_forward.19} parent=5 // pred_region
        %s154 = ssub.s32 %s9, 1
        // Predicated region
        $region13: #{unet_forward.19} parent=11 // pred_check
          %p155 = pneg %p112
        $region14: #{unet_forward.19} parent=11 // pred_check_branch
          %157 = sbr.rel (%p155) target = $region16
        $region15: #{unet_forward.19} parent=11 // pred_region
          %p158 = scmp.lt.s32.totalorder %s19, 0
          %s159 = scalar_select %p158, %s19, 0
          %s160 = scalar_lea.vmem %s2, %s159
        $region16: #{unet_forward.19} parent=11 // pred_fallthru
          _
      $region12: #{unet_forward.19} parent=5 // pred_fallthru
        _
      %p161 = scmp.lt.s32.totalorder %s9, 32
      // Predicated region
      $region17: #{unet_forward.19} parent=5 // pred_check
        %p162 = pneg %p161
      $region18: #{unet_forward.19} parent=5 // pred_check_branch
        %164 = sbr.rel (%p162) target = $region20
      $region19: #{unet_forward.19} parent=5 // pred_region
        // Predicated region
        $region21: #{unet_forward.19} parent=19 // pred_check
          %p165 = pneg %p52
        $region22: #{unet_forward.19} parent=19 // pred_check_branch
          %167 = sbr.rel (%p165) target = $region24
        $region23: #{unet_forward.19} parent=19 // pred_region
          %s168 = sand.u32 %s42, 1
          %s169 = sand.u32 %s42, 1
          %s170 = smul.addr %s169, 256
          %s171 = scalar_lea.vmem [#allocation3], %s170
          %s172 = smul.u32 16, %s17
          %s173 = smul.u32 4, %s18
          %s174 = smul.addr %s172, 8
          %s175 = sadd.s32 %s173, %s174
          %s176 = smul.addr %s16, 2048
          %s177 = sadd.s32 %s175, %s176
          %s178 = smul.addr %s177, 4
          %s179 = scalar_lea.vmem %s0, %s178
          // Predicated region
          $region25: #{unet_forward.19} parent=23 // pred_check
            _
          $region26: #{unet_forward.19} parent=23 // pred_check_branch
            %181 = sbr.rel (0) target = $region28
          $region27: #{unet_forward.19} parent=23 // pred_region
            // Predicated region
            $region29: #{unet_forward.19} parent=27 // pred_check
              _
            $region30: #{unet_forward.19} parent=27 // pred_check_branch
              %183 = sbr.rel (0) target = $region32
            $region31: #{unet_forward.19} parent=27 // pred_region
              loop: start=0, step=1, limit=1
              $region33: #{unet_forward.19} parent=31 // loop_pre_header
                _
              $region34: #{unet_forward.19} parent=31 // loop_header
                %s185 = sphi 0, %s189
                %p186 = scmp.ge.s32.totalorder %s185, 1
                %s190 = sphi %s179, %s179
                %s191 = sphi %s171, %s171
              $region35: #{unet_forward.19} parent=31 // loop_header_branch
                %188 = sbr.rel (%p186) target = $region39
              $region36: #{unet_forward.19} parent=31 // loop_body
                %v192 = vld [vmem:[%s190] sm:$0xff]
                %193 = vst [vmem:[%s191] sm:$0xff] %v192
                %v194 = vld [vmem:[%s190 + $0x8] sm:$0xff]
                %195 = vst [vmem:[%s191 + $0x8] sm:$0xff] %v194
                %v196 = vld [vmem:[%s190 + $0x20] sm:$0xff]
                %197 = vst [vmem:[%s191 + $0x10] sm:$0xff] %v196
                %v198 = vld [vmem:[%s190 + $0x28] sm:$0xff]
                %199 = vst [vmem:[%s191 + $0x18] sm:$0xff] %v198
                %v200 = vld [vmem:[%s190 + $0x40] sm:$0xff]
                %201 = vst [vmem:[%s191 + $0x20] sm:$0xff] %v200
                %v202 = vld [vmem:[%s190 + $0x48] sm:$0xff]
                %203 = vst [vmem:[%s191 + $0x28] sm:$0xff] %v202
                %v204 = vld [vmem:[%s190 + $0x60] sm:$0xff]
                %205 = vst [vmem:[%s191 + $0x30] sm:$0xff] %v204
                %v206 = vld [vmem:[%s190 + $0x68] sm:$0xff]
                %207 = vst [vmem:[%s191 + $0x38] sm:$0xff] %v206
                %v208 = vld [vmem:[%s190 + $0x80] sm:$0xff]
                %209 = vst [vmem:[%s191 + $0x40] sm:$0xff] %v208
                %v210 = vld [vmem:[%s190 + $0x88] sm:$0xff]
                %211 = vst [vmem:[%s191 + $0x48] sm:$0xff] %v210
                %v212 = vld [vmem:[%s190 + $0xa0] sm:$0xff]
                %213 = vst [vmem:[%s191 + $0x50] sm:$0xff] %v212
                %v214 = vld [vmem:[%s190 + $0xa8] sm:$0xff]
                %215 = vst [vmem:[%s191 + $0x58] sm:$0xff] %v214
                %v216 = vld [vmem:[%s190 + $0xc0] sm:$0xff]
                %217 = vst [vmem:[%s191 + $0x60] sm:$0xff] %v216
                %v218 = vld [vmem:[%s190 + $0xc8] sm:$0xff]
                %219 = vst [vmem:[%s191 + $0x68] sm:$0xff] %v218
                %v220 = vld [vmem:[%s190 + $0xe0] sm:$0xff]
                %221 = vst [vmem:[%s191 + $0x70] sm:$0xff] %v220
                %v222 = vld [vmem:[%s190 + $0xe8] sm:$0xff]
                %223 = vst [vmem:[%s191 + $0x78] sm:$0xff] %v222
                %v224 = vld [vmem:[%s190 + $0x100] sm:$0xff]
                %225 = vst [vmem:[%s191 + $0x80] sm:$0xff] %v224
                %v226 = vld [vmem:[%s190 + $0x108] sm:$0xff]
                %227 = vst [vmem:[%s191 + $0x88] sm:$0xff] %v226
                %v228 = vld [vmem:[%s190 + $0x120] sm:$0xff]
                %229 = vst [vmem:[%s191 + $0x90] sm:$0xff] %v228
                %v230 = vld [vmem:[%s190 + $0x128] sm:$0xff]
                %231 = vst [vmem:[%s191 + $0x98] sm:$0xff] %v230
                %v232 = vld [vmem:[%s190 + $0x140] sm:$0xff]
                %233 = vst [vmem:[%s191 + $0xa0] sm:$0xff] %v232
                %v234 = vld [vmem:[%s190 + $0x148] sm:$0xff]
                %235 = vst [vmem:[%s191 + $0xa8] sm:$0xff] %v234
                %v236 = vld [vmem:[%s190 + $0x160] sm:$0xff]
                %237 = vst [vmem:[%s191 + $0xb0] sm:$0xff] %v236
                %v238 = vld [vmem:[%s190 + $0x168] sm:$0xff]
                %239 = vst [vmem:[%s191 + $0xb8] sm:$0xff] %v238
                %v240 = vld [vmem:[%s190 + $0x180] sm:$0xff]
                %241 = vst [vmem:[%s191 + $0xc0] sm:$0xff] %v240
                %v242 = vld [vmem:[%s190 + $0x188] sm:$0xff]
                %243 = vst [vmem:[%s191 + $0xc8] sm:$0xff] %v242
                %v244 = vld [vmem:[%s190 + $0x1a0] sm:$0xff]
                %245 = vst [vmem:[%s191 + $0xd0] sm:$0xff] %v244
                %v246 = vld [vmem:[%s190 + $0x1a8] sm:$0xff]
                %247 = vst [vmem:[%s191 + $0xd8] sm:$0xff] %v246
                %v248 = vld [vmem:[%s190 + $0x1c0] sm:$0xff]
                %249 = vst [vmem:[%s191 + $0xe0] sm:$0xff] %v248
                %v250 = vld [vmem:[%s190 + $0x1c8] sm:$0xff]
                %251 = vst [vmem:[%s191 + $0xe8] sm:$0xff] %v250
                %v252 = vld [vmem:[%s190 + $0x1e0] sm:$0xff]
                %253 = vst [vmem:[%s191 + $0xf0] sm:$0xff] %v252
                %v254 = vld [vmem:[%s190 + $0x1e8] sm:$0xff]
                %255 = vst [vmem:[%s191 + $0xf8] sm:$0xff] %v254
              $region37: #{unet_forward.19} parent=31 // loop_footer
                %s189 = sadd.s32 1, %s185
              $region38: #{unet_forward.19} parent=31 // loop_footer_branch
                %184 = sbr.rel target = $region34
              $region39: #{unet_forward.19} parent=31 // loop_exit
                _
            $region32: #{unet_forward.19} parent=27 // pred_fallthru
              _
            // Predicated region
            $region40: #{unet_forward.19} parent=27 // pred_check
              _
            $region41: #{unet_forward.19} parent=27 // pred_check_branch
              %257 = sbr.rel target = $region43
            $region42: #{unet_forward.19} parent=27 // pred_region
              _
            $region43: #{unet_forward.19} parent=27 // pred_fallthru
              _
          $region28: #{unet_forward.19} parent=23 // pred_fallthru
            _
          %258 = vnop
        $region24: #{unet_forward.19} parent=19 // pred_fallthru
          _
        // Predicated region
        $region44: #{unet_forward.19} parent=19 // pred_check
          %p259 = pneg %p80
        $region45: #{unet_forward.19} parent=19 // pred_check_branch
          %261 = sbr.rel (%p259) target = $region47
        $region46: #{unet_forward.19} parent=19 // pred_region
          %s262 = smul.u32 64, %s18
          %p263 = scmp.lt.s32.totalorder %s16, 0
          %s264 = scalar_select %p263, %s16, 0
          %p265 = scmp.lt.s32.totalorder %s262, 127
          %s266 = scalar_select %p265, %s262, 127
          %s267 = smul.addr %s264, 128
          %s268 = sadd.s32 %s266, %s267
          %s269 = smul.addr %s268, 4
          %s270 = scalar_lea.vmem %s1, %s269
          %s271 = smul.u32 64, %s18
        $region47: #{unet_forward.19} parent=19 // pred_fallthru
          _
      $region20: #{unet_forward.19} parent=5 // pred_fallthru
        _
      %p272 = scmp.le.s32.totalorder 1, %s9
      %p273 = scmp.lt.s32.totalorder %s9, 33
      %p274 = pnand %p272, %p273
      %p275 = pneg %p274
      // Predicated region
      $region48: #{unet_forward.19} parent=5 // pred_check
        _
      $region49: #{unet_forward.19} parent=5 // pred_check_branch
        %277 = sbr.rel (%p274) target = $region51
      $region50: #{unet_forward.19} parent=5 // pred_region
        %s278 = ssub.s32 %s9, 1
        %s279 = sand.u32 %s45, 1
        %s280 = sand.u32 %s45, 1
        %s281 = smul.addr %s280, 256
        %s282 = scalar_lea.vmem [#allocation3], %s281
        // Predicated region
        $region52: #{unet_forward.19} parent=50 // pred_check
          %p283 = pneg %p58
        $region53: #{unet_forward.19} parent=50 // pred_check_branch
          %285 = sbr.rel (%p283) target = $region55
        $region54: #{unet_forward.19} parent=50 // pred_region
          _
        $region55: #{unet_forward.19} parent=50 // pred_fallthru
          _
        %s286 = sand.u32 %s45, 1
        %s287 = sand.u32 %s45, 1
        %s288 = smul.addr %s287, 256
        %s289 = scalar_lea.vmem [#allocation3], %s288
        %p290 = pneg %p58
        %p291 = pneg %p55
        %s292 = smul.u32 64, %s21
        %p293 = scmp.lt.s32.totalorder %s19, 0
        %s294 = scalar_select %p293, %s19, 0
        %p295 = scmp.lt.s32.totalorder %s292, 127
        %s296 = scalar_select %p295, %s292, 127
        %s297 = smul.addr %s294, 128
        %s298 = sadd.s32 %s296, %s297
        %s299 = smul.addr %s298, 4
        %s300 = scalar_lea.vmem %s1, %s299
        %p301 = pneg %p86
        %p302 = pneg %p83
        %p303 = scmp.lt.s32.totalorder %s19, 0
        %s304 = scalar_select %p303, %s19, 0
        %s305 = scalar_lea.vmem %s2, %s304
        %p306 = pneg %p112
        %p307 = pneg %p109
        %p308 = pneg %p140
        %p309 = pneg %p137
        %s310 = smul.u32 16, %s20
        %p311 = scmp.lt.s32.totalorder %s19, 0
        %s312 = scalar_select %p311, %s19, 0
        %p313 = scmp.lt.s32.totalorder %s310, 255
        %s314 = scalar_select %p313, %s310, 255
        %s315 = smul.addr %s312, 256
        %s316 = sadd.s32 %s314, %s315
        %s317 = smul.addr %s316, 8
        %s318 = scalar_lea.vmem %s3, %s317
        %s319 = smul.u32 16, %s20
        %s320 = smul.u32 4, %s21
        %s321 = smul.u32 64, %s21
        %p322 = scmp.lt.s32.totalorder %s19, 0
        %s323 = scalar_select %p322, %s19, 0
        %p324 = scmp.lt.s32.totalorder %s321, 127
        %s325 = scalar_select %p324, %s321, 127
        %s326 = smul.addr %s323, 128
        %s327 = sadd.s32 %s325, %s326
        %s328 = smul.addr %s327, 4
        %s329 = scalar_lea.vmem %s1, %s328
        %s330 = smul.u32 64, %s21
        %p331 = scmp.lt.s32.totalorder %s19, 0
        %s332 = scalar_select %p331, %s19, 0
        %s333 = scalar_lea.vmem %s2, %s332
        %s334 = smul.u32 16, %s20
        %p335 = scmp.lt.s32.totalorder %s19, 0
        %s336 = scalar_select %p335, %s19, 0
        %p337 = scmp.lt.s32.totalorder %s334, 255
        %s338 = scalar_select %p337, %s334, 255
        %s339 = smul.addr %s336, 256
        %s340 = sadd.s32 %s338, %s339
        %s341 = smul.addr %s340, 8
        %s342 = scalar_lea.vmem %s3, %s341
        %s343 = smul.u32 16, %s20
        %p345 = scmp.eq.s32.totalorder %s21, 0
        // Predicated region
        $region56: #{unet_forward.19} parent=50 // pred_check
          %p346 = pneg %p345
        $region57: #{unet_forward.19} parent=50 // pred_check_branch
          %348 = sbr.rel (%p346) target = $region59
        $region58: #{unet_forward.19} parent=50 // pred_region
          %349 = vst [vmem:[#allocation2] sm:$0xff] 0.0
          %350 = vst [vmem:[#allocation2 + $0x8] sm:$0xff] 0.0
          %351 = vst [vmem:[#allocation2 + $0x10] sm:$0xff] 0.0
          %352 = vst [vmem:[#allocation2 + $0x18] sm:$0xff] 0.0
          %353 = vst [vmem:[#allocation2 + $0x20] sm:$0xff] 0.0
          %354 = vst [vmem:[#allocation2 + $0x28] sm:$0xff] 0.0
          %355 = vst [vmem:[#allocation2 + $0x30] sm:$0xff] 0.0
          %356 = vst [vmem:[#allocation2 + $0x38] sm:$0xff] 0.0
          %357 = vst [vmem:[#allocation2 + $0x40] sm:$0xff] 0.0
          %358 = vst [vmem:[#allocation2 + $0x48] sm:$0xff] 0.0
          %359 = vst [vmem:[#allocation2 + $0x50] sm:$0xff] 0.0
          %360 = vst [vmem:[#allocation2 + $0x58] sm:$0xff] 0.0
          %361 = vst [vmem:[#allocation2 + $0x60] sm:$0xff] 0.0
          %362 = vst [vmem:[#allocation2 + $0x68] sm:$0xff] 0.0
          %363 = vst [vmem:[#allocation2 + $0x70] sm:$0xff] 0.0
          %364 = vst [vmem:[#allocation2 + $0x78] sm:$0xff] 0.0
        $region59: #{unet_forward.19} parent=50 // pred_fallthru
          _
        %v365 = vld [vmem:[#allocation2] sm:$0xff]
        %v366 = vld [vmem:[#allocation2 + $0x8] sm:$0xff]
        %v367 = vld [vmem:[#allocation2 + $0x10] sm:$0xff]
        %v368 = vld [vmem:[#allocation2 + $0x18] sm:$0xff]
        %v369 = vld [vmem:[#allocation2 + $0x20] sm:$0xff]
        %v370 = vld [vmem:[#allocation2 + $0x28] sm:$0xff]
        %v371 = vld [vmem:[#allocation2 + $0x30] sm:$0xff]
        %v372 = vld [vmem:[#allocation2 + $0x38] sm:$0xff]
        %v373 = vld [vmem:[#allocation2 + $0x40] sm:$0xff]
        %v374 = vld [vmem:[#allocation2 + $0x48] sm:$0xff]
        %v375 = vld [vmem:[#allocation2 + $0x50] sm:$0xff]
        %v376 = vld [vmem:[#allocation2 + $0x58] sm:$0xff]
        %v377 = vld [vmem:[#allocation2 + $0x60] sm:$0xff]
        %v378 = vld [vmem:[#allocation2 + $0x68] sm:$0xff]
        %v379 = vld [vmem:[#allocation2 + $0x70] sm:$0xff]
        %v380 = vld [vmem:[#allocation2 + $0x78] sm:$0xff]
        %v381 = vld [vmem:[%s282] sm:$0xff]
        %v382 = vld [vmem:[%s282 + $0x8] sm:$0xff]
        %v383 = vld [vmem:[%s282 + $0x10] sm:$0xff]
        %v384 = vld [vmem:[%s282 + $0x18] sm:$0xff]
        %v385 = vld [vmem:[%s282 + $0x20] sm:$0xff]
        %v386 = vld [vmem:[%s282 + $0x28] sm:$0xff]
        %v387 = vld [vmem:[%s282 + $0x30] sm:$0xff]
        %v388 = vld [vmem:[%s282 + $0x38] sm:$0xff]
        %v389 = vld [vmem:[%s282 + $0x40] sm:$0xff]
        %v390 = vld [vmem:[%s282 + $0x48] sm:$0xff]
        %v391 = vld [vmem:[%s282 + $0x50] sm:$0xff]
        %v392 = vld [vmem:[%s282 + $0x58] sm:$0xff]
        %v393 = vld [vmem:[%s282 + $0x60] sm:$0xff]
        %v394 = vld [vmem:[%s282 + $0x68] sm:$0xff]
        %v395 = vld [vmem:[%s282 + $0x70] sm:$0xff]
        %v396 = vld [vmem:[%s282 + $0x78] sm:$0xff]
        %v397 = vld [vmem:[%s282 + $0x80] sm:$0xff]
        %v398 = vld [vmem:[%s282 + $0x88] sm:$0xff]
        %v399 = vld [vmem:[%s282 + $0x90] sm:$0xff]
        %v400 = vld [vmem:[%s282 + $0x98] sm:$0xff]
        %v401 = vld [vmem:[%s282 + $0xa0] sm:$0xff]
        %v402 = vld [vmem:[%s282 + $0xa8] sm:$0xff]
        %v403 = vld [vmem:[%s282 + $0xb0] sm:$0xff]
        %v404 = vld [vmem:[%s282 + $0xb8] sm:$0xff]
        %v405 = vld [vmem:[%s282 + $0xc0] sm:$0xff]
        %v406 = vld [vmem:[%s282 + $0xc8] sm:$0xff]
        %v407 = vld [vmem:[%s282 + $0xd0] sm:$0xff]
        %v408 = vld [vmem:[%s282 + $0xd8] sm:$0xff]
        %v409 = vld [vmem:[%s282 + $0xe0] sm:$0xff]
        %v410 = vld [vmem:[%s282 + $0xe8] sm:$0xff]
        %v411 = vld [vmem:[%s282 + $0xf0] sm:$0xff]
        %v412 = vld [vmem:[%s282 + $0xf8] sm:$0xff]
        %v413 = vld [vmem:[%s329] sm:$0xf]
        %v414 = vld [vmem:[%s329 + $0x4] sm:$0xf]
        %v415 = vld [vmem:[%s329 + $0x8] sm:$0xf]
        %v416 = vld [vmem:[%s329 + $0xc] sm:$0xf]
        %v417 = vld [vmem:[%s329 + $0x10] sm:$0xf]
        %v418 = vld [vmem:[%s329 + $0x14] sm:$0xf]
        %v419 = vld [vmem:[%s329 + $0x18] sm:$0xf]
        %v420 = vld [vmem:[%s329 + $0x1c] sm:$0xf]
        %v421 = vld [vmem:[%s329 + $0x20] sm:$0xf]
        %v422 = vld [vmem:[%s329 + $0x24] sm:$0xf]
        %v423 = vld [vmem:[%s329 + $0x28] sm:$0xf]
        %v424 = vld [vmem:[%s329 + $0x2c] sm:$0xf]
        %v425 = vld [vmem:[%s329 + $0x30] sm:$0xf]
        %v426 = vld [vmem:[%s329 + $0x34] sm:$0xf]
        %v427 = vld [vmem:[%s329 + $0x38] sm:$0xf]
        %v428 = vld [vmem:[%s329 + $0x3c] sm:$0xf]
        %v429 = vld [vmem:[%s329 + $0x40] sm:$0xf]
        %v430 = vld [vmem:[%s329 + $0x44] sm:$0xf]
        %v431 = vld [vmem:[%s329 + $0x48] sm:$0xf]
        %v432 = vld [vmem:[%s329 + $0x4c] sm:$0xf]
        %v433 = vld [vmem:[%s329 + $0x50] sm:$0xf]
        %v434 = vld [vmem:[%s329 + $0x54] sm:$0xf]
        %v435 = vld [vmem:[%s329 + $0x58] sm:$0xf]
        %v436 = vld [vmem:[%s329 + $0x5c] sm:$0xf]
        %v437 = vld [vmem:[%s329 + $0x60] sm:$0xf]
        %v438 = vld [vmem:[%s329 + $0x64] sm:$0xf]
        %v439 = vld [vmem:[%s329 + $0x68] sm:$0xf]
        %v440 = vld [vmem:[%s329 + $0x6c] sm:$0xf]
        %v441 = vld [vmem:[%s329 + $0x70] sm:$0xf]
        %v442 = vld [vmem:[%s329 + $0x74] sm:$0xf]
        %v443 = vld [vmem:[%s329 + $0x78] sm:$0xf]
        %v444 = vld [vmem:[%s329 + $0x7c] sm:$0xf]
        %v445 = vld [vmem:[%s329 + $0x80] sm:$0xf]
        %v446 = vld [vmem:[%s329 + $0x84] sm:$0xf]
        %v447 = vld [vmem:[%s329 + $0x88] sm:$0xf]
        %v448 = vld [vmem:[%s329 + $0x8c] sm:$0xf]
        %v449 = vld [vmem:[%s329 + $0x90] sm:$0xf]
        %v450 = vld [vmem:[%s329 + $0x94] sm:$0xf]
        %v451 = vld [vmem:[%s329 + $0x98] sm:$0xf]
        %v452 = vld [vmem:[%s329 + $0x9c] sm:$0xf]
        %v453 = vld [vmem:[%s329 + $0xa0] sm:$0xf]
        %v454 = vld [vmem:[%s329 + $0xa4] sm:$0xf]
        %v455 = vld [vmem:[%s329 + $0xa8] sm:$0xf]
        %v456 = vld [vmem:[%s329 + $0xac] sm:$0xf]
        %v457 = vld [vmem:[%s329 + $0xb0] sm:$0xf]
        %v458 = vld [vmem:[%s329 + $0xb4] sm:$0xf]
        %v459 = vld [vmem:[%s329 + $0xb8] sm:$0xf]
        %v460 = vld [vmem:[%s329 + $0xbc] sm:$0xf]
        %v461 = vld [vmem:[%s329 + $0xc0] sm:$0xf]
        %v462 = vld [vmem:[%s329 + $0xc4] sm:$0xf]
        %v463 = vld [vmem:[%s329 + $0xc8] sm:$0xf]
        %v464 = vld [vmem:[%s329 + $0xcc] sm:$0xf]
        %v465 = vld [vmem:[%s329 + $0xd0] sm:$0xf]
        %v466 = vld [vmem:[%s329 + $0xd4] sm:$0xf]
        %v467 = vld [vmem:[%s329 + $0xd8] sm:$0xf]
        %v468 = vld [vmem:[%s329 + $0xdc] sm:$0xf]
        %v469 = vld [vmem:[%s329 + $0xe0] sm:$0xf]
        %v470 = vld [vmem:[%s329 + $0xe4] sm:$0xf]
        %v471 = vld [vmem:[%s329 + $0xe8] sm:$0xf]
        %v472 = vld [vmem:[%s329 + $0xec] sm:$0xf]
        %v473 = vld [vmem:[%s329 + $0xf0] sm:$0xf]
        %v474 = vld [vmem:[%s329 + $0xf4] sm:$0xf]
        %v475 = vld [vmem:[%s329 + $0xf8] sm:$0xf]
        %v476 = vld [vmem:[%s329 + $0xfc] sm:$0xf]
        %v509 = vunpack.c.l.b16 %v381
        %v510 = vunpack.c.h.b16 %v381
        %v511 = vunpack.c.l.b16 %v382
        %v512 = vunpack.c.h.b16 %v382
        %v513 = vunpack.c.l.b16 %v383
        %v514 = vunpack.c.h.b16 %v383
        %v515 = vunpack.c.l.b16 %v384
        %v516 = vunpack.c.h.b16 %v384
        %v517 = vunpack.c.l.b16 %v385
        %v518 = vunpack.c.h.b16 %v385
        %v519 = vunpack.c.l.b16 %v386
        %v520 = vunpack.c.h.b16 %v386
        %v521 = vunpack.c.l.b16 %v387
        %v522 = vunpack.c.h.b16 %v387
        %v523 = vunpack.c.l.b16 %v388
        %v524 = vunpack.c.h.b16 %v388
        %v525 = vunpack.c.l.b16 %v389
        %v526 = vunpack.c.h.b16 %v389
        %v527 = vunpack.c.l.b16 %v390
        %v528 = vunpack.c.h.b16 %v390
        %v529 = vunpack.c.l.b16 %v391
        %v530 = vunpack.c.h.b16 %v391
        %v531 = vunpack.c.l.b16 %v392
        %v532 = vunpack.c.h.b16 %v392
        %v533 = vunpack.c.l.b16 %v393
        %v534 = vunpack.c.h.b16 %v393
        %v535 = vunpack.c.l.b16 %v394
        %v536 = vunpack.c.h.b16 %v394
        %v537 = vunpack.c.l.b16 %v395
        %v538 = vunpack.c.h.b16 %v395
        %v539 = vunpack.c.l.b16 %v396
        %v540 = vunpack.c.h.b16 %v396
        %v541 = vunpack.c.l.b16 %v397
        %v542 = vunpack.c.h.b16 %v397
        %v543 = vunpack.c.l.b16 %v398
        %v544 = vunpack.c.h.b16 %v398
        %v545 = vunpack.c.l.b16 %v399
        %v546 = vunpack.c.h.b16 %v399
        %v547 = vunpack.c.l.b16 %v400
        %v548 = vunpack.c.h.b16 %v400
        %v549 = vunpack.c.l.b16 %v401
        %v550 = vunpack.c.h.b16 %v401
        %v551 = vunpack.c.l.b16 %v402
        %v552 = vunpack.c.h.b16 %v402
        %v553 = vunpack.c.l.b16 %v403
        %v554 = vunpack.c.h.b16 %v403
        %v555 = vunpack.c.l.b16 %v404
        %v556 = vunpack.c.h.b16 %v404
        %v557 = vunpack.c.l.b16 %v405
        %v558 = vunpack.c.h.b16 %v405
        %v559 = vunpack.c.l.b16 %v406
        %v560 = vunpack.c.h.b16 %v406
        %v561 = vunpack.c.l.b16 %v407
        %v562 = vunpack.c.h.b16 %v407
        %v563 = vunpack.c.l.b16 %v408
        %v564 = vunpack.c.h.b16 %v408
        %v565 = vunpack.c.l.b16 %v409
        %v566 = vunpack.c.h.b16 %v409
        %v567 = vunpack.c.l.b16 %v410
        %v568 = vunpack.c.h.b16 %v410
        %v569 = vunpack.c.l.b16 %v411
        %v570 = vunpack.c.h.b16 %v411
        %v571 = vunpack.c.l.b16 %v412
        %v572 = vunpack.c.h.b16 %v412
        %v573 = vpack.c.b16 %v513, %v509
        %v574 = vpack.c.b16 %v514, %v510
        %v575 = vpack.c.b16 %v515, %v511
        %v576 = vpack.c.b16 %v516, %v512
        %v577 = vpack.c.b16 %v521, %v517
        %v578 = vpack.c.b16 %v522, %v518
        %v579 = vpack.c.b16 %v523, %v519
        %v580 = vpack.c.b16 %v524, %v520
        %v581 = vpack.c.b16 %v529, %v525
        %v582 = vpack.c.b16 %v530, %v526
        %v583 = vpack.c.b16 %v531, %v527
        %v584 = vpack.c.b16 %v532, %v528
        %v585 = vpack.c.b16 %v537, %v533
        %v586 = vpack.c.b16 %v538, %v534
        %v587 = vpack.c.b16 %v539, %v535
        %v588 = vpack.c.b16 %v540, %v536
        %v589 = vpack.c.b16 %v545, %v541
        %v590 = vpack.c.b16 %v546, %v542
        %v591 = vpack.c.b16 %v547, %v543
        %v592 = vpack.c.b16 %v548, %v544
        %v593 = vpack.c.b16 %v553, %v549
        %v594 = vpack.c.b16 %v554, %v550
        %v595 = vpack.c.b16 %v555, %v551
        %v596 = vpack.c.b16 %v556, %v552
        %v597 = vpack.c.b16 %v561, %v557
        %v598 = vpack.c.b16 %v562, %v558
        %v599 = vpack.c.b16 %v563, %v559
        %v600 = vpack.c.b16 %v564, %v560
        %v601 = vpack.c.b16 %v569, %v565
        %v602 = vpack.c.b16 %v570, %v566
        %v603 = vpack.c.b16 %v571, %v567
        %v604 = vpack.c.b16 %v572, %v568
        %v701 = vunpack.c.l.b16 %v413
        %v702 = vunpack.c.l.b16 %v414
        %v703 = vunpack.c.l.b16 %v415
        %v704 = vunpack.c.l.b16 %v416
        %v705 = vunpack.c.l.b16 %v417
        %v706 = vunpack.c.l.b16 %v418
        %v707 = vunpack.c.l.b16 %v419
        %v708 = vunpack.c.l.b16 %v420
        %v709 = vunpack.c.l.b16 %v421
        %v710 = vunpack.c.l.b16 %v422
        %v711 = vunpack.c.l.b16 %v423
        %v712 = vunpack.c.l.b16 %v424
        %v713 = vunpack.c.l.b16 %v425
        %v714 = vunpack.c.l.b16 %v426
        %v715 = vunpack.c.l.b16 %v427
        %v716 = vunpack.c.l.b16 %v428
        %v717 = vunpack.c.l.b16 %v429
        %v718 = vunpack.c.l.b16 %v430
        %v719 = vunpack.c.l.b16 %v431
        %v720 = vunpack.c.l.b16 %v432
        %v721 = vunpack.c.l.b16 %v433
        %v722 = vunpack.c.l.b16 %v434
        %v723 = vunpack.c.l.b16 %v435
        %v724 = vunpack.c.l.b16 %v436
        %v725 = vunpack.c.l.b16 %v437
        %v726 = vunpack.c.l.b16 %v438
        %v727 = vunpack.c.l.b16 %v439
        %v728 = vunpack.c.l.b16 %v440
        %v729 = vunpack.c.l.b16 %v441
        %v730 = vunpack.c.l.b16 %v442
        %v731 = vunpack.c.l.b16 %v443
        %v732 = vunpack.c.l.b16 %v444
        %v733 = vunpack.c.l.b16 %v445
        %v734 = vunpack.c.l.b16 %v446
        %v735 = vunpack.c.l.b16 %v447
        %v736 = vunpack.c.l.b16 %v448
        %v737 = vunpack.c.l.b16 %v449
        %v738 = vunpack.c.l.b16 %v450
        %v739 = vunpack.c.l.b16 %v451
        %v740 = vunpack.c.l.b16 %v452
        %v741 = vunpack.c.l.b16 %v453
        %v742 = vunpack.c.l.b16 %v454
        %v743 = vunpack.c.l.b16 %v455
        %v744 = vunpack.c.l.b16 %v456
        %v745 = vunpack.c.l.b16 %v457
        %v746 = vunpack.c.l.b16 %v458
        %v747 = vunpack.c.l.b16 %v459
        %v748 = vunpack.c.l.b16 %v460
        %v749 = vunpack.c.l.b16 %v461
        %v750 = vunpack.c.l.b16 %v462
        %v751 = vunpack.c.l.b16 %v463
        %v752 = vunpack.c.l.b16 %v464
        %v753 = vunpack.c.l.b16 %v465
        %v754 = vunpack.c.l.b16 %v466
        %v755 = vunpack.c.l.b16 %v467
        %v756 = vunpack.c.l.b16 %v468
        %v757 = vunpack.c.l.b16 %v469
        %v758 = vunpack.c.l.b16 %v470
        %v759 = vunpack.c.l.b16 %v471
        %v760 = vunpack.c.l.b16 %v472
        %v761 = vunpack.c.l.b16 %v473
        %v762 = vunpack.c.l.b16 %v474
        %v763 = vunpack.c.l.b16 %v475
        %v764 = vunpack.c.l.b16 %v476
        %v765 = vpack.c.b16 %v702, %v701
        %v766 = vpack.c.b16 %v704, %v703
        %v767 = vpack.c.b16 %v706, %v705
        %v768 = vpack.c.b16 %v708, %v707
        %v769 = vpack.c.b16 %v710, %v709
        %v770 = vpack.c.b16 %v712, %v711
        %v771 = vpack.c.b16 %v714, %v713
        %v772 = vpack.c.b16 %v716, %v715
        %v773 = vpack.c.b16 %v718, %v717
        %v774 = vpack.c.b16 %v720, %v719
        %v775 = vpack.c.b16 %v722, %v721
        %v776 = vpack.c.b16 %v724, %v723
        %v777 = vpack.c.b16 %v726, %v725
        %v778 = vpack.c.b16 %v728, %v727
        %v779 = vpack.c.b16 %v730, %v729
        %v780 = vpack.c.b16 %v732, %v731
        %v781 = vpack.c.b16 %v734, %v733
        %v782 = vpack.c.b16 %v736, %v735
        %v783 = vpack.c.b16 %v738, %v737
        %v784 = vpack.c.b16 %v740, %v739
        %v785 = vpack.c.b16 %v742, %v741
        %v786 = vpack.c.b16 %v744, %v743
        %v787 = vpack.c.b16 %v746, %v745
        %v788 = vpack.c.b16 %v748, %v747
        %v789 = vpack.c.b16 %v750, %v749
        %v790 = vpack.c.b16 %v752, %v751
        %v791 = vpack.c.b16 %v754, %v753
        %v792 = vpack.c.b16 %v756, %v755
        %v793 = vpack.c.b16 %v758, %v757
        %v794 = vpack.c.b16 %v760, %v759
        %v795 = vpack.c.b16 %v762, %v761
        %v796 = vpack.c.b16 %v764, %v763
        %829 = vmatprep.subr.bf16.mxu0 0
        %830 = vmatpush1.bf16.msra.mxu0 %v765
        %831 = vmatprep.subr.bf16.mxu0 0
        %832 = vmatpush1.bf16.msra.mxu0 %v766
        %833 = vmatprep.subr.bf16.mxu0 0
        %834 = vmatpush1.bf16.msra.mxu0 %v767
        %835 = vmatprep.subr.bf16.mxu0 0
        %836 = vmatpush1.bf16.msra.mxu0 %v768
        %837 = vmatprep.subr.bf16.mxu0 0
        %838 = vmatpush1.bf16.msra.mxu0 %v769
        %839 = vmatprep.subr.bf16.mxu0 0
        %840 = vmatpush1.bf16.msra.mxu0 %v770
        %841 = vmatprep.subr.bf16.mxu0 0
        %842 = vmatpush1.bf16.msra.mxu0 %v771
        %843 = vmatprep.subr.bf16.mxu0 0
        %844 = vmatpush1.bf16.msra.mxu0 %v772
        %845 = vmatprep.subr.bf16.mxu0 0
        %846 = vmatpush1.bf16.msra.mxu0 %v773
        %847 = vmatprep.subr.bf16.mxu0 0
        %848 = vmatpush1.bf16.msra.mxu0 %v774
        %849 = vmatprep.subr.bf16.mxu0 0
        %850 = vmatpush1.bf16.msra.mxu0 %v775
        %851 = vmatprep.subr.bf16.mxu0 0
        %852 = vmatpush1.bf16.msra.mxu0 %v776
        %853 = vmatprep.subr.bf16.mxu0 0
        %854 = vmatpush1.bf16.msra.mxu0 %v777
        %855 = vmatprep.subr.bf16.mxu0 0
        %856 = vmatpush1.bf16.msra.mxu0 %v778
        %857 = vmatprep.subr.bf16.mxu0 0
        %858 = vmatpush1.bf16.msra.mxu0 %v779
        %859 = vmatprep.subr.bf16.mxu0 0
        %860 = vmatpush1.bf16.msra.mxu0 %v780
        %861 = vmatprep.mubr.bf16.mxu0 %v574
        %862 = vmatmul.mubr.bf16.gmra.mrb[0].mxu0 %v573
        %v863 = vpop.f32.mrb[0].mxu0
        %v864 = vadd.f32 0.0, %v863
        %v865 = vpop.f32.mrb[0].mxu0
        %v866 = vpop.f32.mrb[0].mxu0
        %v867 = vadd.f32 0.0, %v866
        %v868 = vpop.f32.mrb[0].mxu0
        %869 = vmatprep.mubr.bf16.mxu0 %v578
        %870 = vmatmul.mubr.bf16.gmra.mrb[0].mxu0 %v577
        %v871 = vpop.f32.mrb[0].mxu0
        %v872 = vadd.f32 0.0, %v871
        %v873 = vpop.f32.mrb[0].mxu0
        %v874 = vpop.f32.mrb[0].mxu0
        %v875 = vadd.f32 0.0, %v874
        %v876 = vpop.f32.mrb[0].mxu0
        %877 = vmatprep.mubr.bf16.mxu0 %v582
        %878 = vmatmul.mubr.bf16.gmra.mrb[0].mxu0 %v581
        %v879 = vpop.f32.mrb[0].mxu0
        %v880 = vadd.f32 0.0, %v879
        %v881 = vpop.f32.mrb[0].mxu0
        %v882 = vpop.f32.mrb[0].mxu0
        %v883 = vadd.f32 0.0, %v882
        %v884 = vpop.f32.mrb[0].mxu0
        %885 = vmatprep.mubr.bf16.mxu0 %v586
        %886 = vmatmul.mubr.bf16.gmra.mrb[0].mxu0 %v585
        %v887 = vpop.f32.mrb[0].mxu0
        %v888 = vadd.f32 0.0, %v887
        %v889 = vpop.f32.mrb[0].mxu0
        %v890 = vpop.f32.mrb[0].mxu0
        %v891 = vadd.f32 0.0, %v890
        %v892 = vpop.f32.mrb[0].mxu0
        %893 = vmatprep.mubr.bf16.mxu0 %v590
        %894 = vmatmul.mubr.bf16.gmra.mrb[0].mxu0 %v589
        %v895 = vpop.f32.mrb[0].mxu0
        %v896 = vadd.f32 0.0, %v895
        %v897 = vpop.f32.mrb[0].mxu0
        %v898 = vpop.f32.mrb[0].mxu0
        %v899 = vadd.f32 0.0, %v898
        %v900 = vpop.f32.mrb[0].mxu0
        %901 = vmatprep.mubr.bf16.mxu0 %v594
        %902 = vmatmul.mubr.bf16.gmra.mrb[0].mxu0 %v593
        %v903 = vpop.f32.mrb[0].mxu0
        %v904 = vadd.f32 0.0, %v903
        %v905 = vpop.f32.mrb[0].mxu0
        %v906 = vpop.f32.mrb[0].mxu0
        %v907 = vadd.f32 0.0, %v906
        %v908 = vpop.f32.mrb[0].mxu0
        %909 = vmatprep.mubr.bf16.mxu0 %v598
        %910 = vmatmul.mubr.bf16.gmra.mrb[0].mxu0 %v597
        %v911 = vpop.f32.mrb[0].mxu0
        %v912 = vadd.f32 0.0, %v911
        %v913 = vpop.f32.mrb[0].mxu0
        %v914 = vpop.f32.mrb[0].mxu0
        %v915 = vadd.f32 0.0, %v914
        %v916 = vpop.f32.mrb[0].mxu0
        %917 = vmatprep.mubr.bf16.mxu0 %v602
        %918 = vmatmul.mubr.bf16.gmra.mrb[0].mxu0 %v601
        %v919 = vpop.f32.mrb[0].mxu0
        %v920 = vadd.f32 0.0, %v919
        %v921 = vpop.f32.mrb[0].mxu0
        %v922 = vpop.f32.mrb[0].mxu0
        %v923 = vadd.f32 0.0, %v922
        %v924 = vpop.f32.mrb[0].mxu0
        %925 = vdwg.mxu0
        %926 = vmatprep.subr.bf16.mxu0 0
        %927 = vmatpush1.bf16.msra.mxu0 %v781
        %928 = vmatprep.subr.bf16.mxu0 0
        %929 = vmatpush1.bf16.msra.mxu0 %v782
        %930 = vmatprep.subr.bf16.mxu0 0
        %931 = vmatpush1.bf16.msra.mxu0 %v783
        %932 = vmatprep.subr.bf16.mxu0 0
        %933 = vmatpush1.bf16.msra.mxu0 %v784
        %934 = vmatprep.subr.bf16.mxu0 0
        %935 = vmatpush1.bf16.msra.mxu0 %v785
        %936 = vmatprep.subr.bf16.mxu0 0
        %937 = vmatpush1.bf16.msra.mxu0 %v786
        %938 = vmatprep.subr.bf16.mxu0 0
        %939 = vmatpush1.bf16.msra.mxu0 %v787
        %940 = vmatprep.subr.bf16.mxu0 0
        %941 = vmatpush1.bf16.msra.mxu0 %v788
        %942 = vmatprep.subr.bf16.mxu0 0
        %943 = vmatpush1.bf16.msra.mxu0 %v789
        %944 = vmatprep.subr.bf16.mxu0 0
        %945 = vmatpush1.bf16.msra.mxu0 %v790
        %946 = vmatprep.subr.bf16.mxu0 0
        %947 = vmatpush1.bf16.msra.mxu0 %v791
        %948 = vmatprep.subr.bf16.mxu0 0
        %949 = vmatpush1.bf16.msra.mxu0 %v792
        %950 = vmatprep.subr.bf16.mxu0 0
        %951 = vmatpush1.bf16.msra.mxu0 %v793
        %952 = vmatprep.subr.bf16.mxu0 0
        %953 = vmatpush1.bf16.msra.mxu0 %v794
        %954 = vmatprep.subr.bf16.mxu0 0
        %955 = vmatpush1.bf16.msra.mxu0 %v795
        %956 = vmatprep.subr.bf16.mxu0 0
        %957 = vmatpush1.bf16.msra.mxu0 %v796
        %958 = vmatprep.mubr.bf16.mxu0 %v576
        %959 = vmatmul.mubr.bf16.gmra.mrb[0].mxu0 %v575
        %v960 = vpop.f32.mrb[0].mxu0
        %v961 = vadd.f32 %v864, %v960
        %v962 = vpop.f32.mrb[0].mxu0
        %v963 = vpop.f32.mrb[0].mxu0
        %v964 = vadd.f32 %v867, %v963
        %v965 = vpop.f32.mrb[0].mxu0
        %966 = vmatprep.mubr.bf16.mxu0 %v580
        %967 = vmatmul.mubr.bf16.gmra.mrb[0].mxu0 %v579
        %v968 = vpop.f32.mrb[0].mxu0
        %v969 = vadd.f32 %v872, %v968
        %v970 = vpop.f32.mrb[0].mxu0
        %v971 = vpop.f32.mrb[0].mxu0
        %v972 = vadd.f32 %v875, %v971
        %v973 = vpop.f32.mrb[0].mxu0
        %974 = vmatprep.mubr.bf16.mxu0 %v584
        %975 = vmatmul.mubr.bf16.gmra.mrb[0].mxu0 %v583
        %v976 = vpop.f32.mrb[0].mxu0
        %v977 = vadd.f32 %v880, %v976
        %v978 = vpop.f32.mrb[0].mxu0
        %v979 = vpop.f32.mrb[0].mxu0
        %v980 = vadd.f32 %v883, %v979
        %v981 = vpop.f32.mrb[0].mxu0
        %982 = vmatprep.mubr.bf16.mxu0 %v588
        %983 = vmatmul.mubr.bf16.gmra.mrb[0].mxu0 %v587
        %v984 = vpop.f32.mrb[0].mxu0
        %v985 = vadd.f32 %v888, %v984
        %v986 = vpop.f32.mrb[0].mxu0
        %v987 = vpop.f32.mrb[0].mxu0
        %v988 = vadd.f32 %v891, %v987
        %v989 = vpop.f32.mrb[0].mxu0
        %990 = vmatprep.mubr.bf16.mxu0 %v592
        %991 = vmatmul.mubr.bf16.gmra.mrb[0].mxu0 %v591
        %v992 = vpop.f32.mrb[0].mxu0
        %v993 = vadd.f32 %v896, %v992
        %v994 = vpop.f32.mrb[0].mxu0
        %v995 = vpop.f32.mrb[0].mxu0
        %v996 = vadd.f32 %v899, %v995
        %v997 = vpop.f32.mrb[0].mxu0
        %998 = vmatprep.mubr.bf16.mxu0 %v596
        %999 = vmatmul.mubr.bf16.gmra.mrb[0].mxu0 %v595
        %v1000 = vpop.f32.mrb[0].mxu0
        %v1001 = vadd.f32 %v904, %v1000
        %v1002 = vpop.f32.mrb[0].mxu0
        %v1003 = vpop.f32.mrb[0].mxu0
        %v1004 = vadd.f32 %v907, %v1003
        %v1005 = vpop.f32.mrb[0].mxu0
        %1006 = vmatprep.mubr.bf16.mxu0 %v600
        %1007 = vmatmul.mubr.bf16.gmra.mrb[0].mxu0 %v599
        %v1008 = vpop.f32.mrb[0].mxu0
        %v1009 = vadd.f32 %v912, %v1008
        %v1010 = vpop.f32.mrb[0].mxu0
        %v1011 = vpop.f32.mrb[0].mxu0
        %v1012 = vadd.f32 %v915, %v1011
        %v1013 = vpop.f32.mrb[0].mxu0
        %1014 = vmatprep.mubr.bf16.mxu0 %v604
        %1015 = vmatmul.mubr.bf16.gmra.mrb[0].mxu0 %v603
        %v1016 = vpop.f32.mrb[0].mxu0
        %v1017 = vadd.f32 %v920, %v1016
        %v1018 = vpop.f32.mrb[0].mxu0
        %v1019 = vpop.f32.mrb[0].mxu0
        %v1020 = vadd.f32 %v923, %v1019
        %v1021 = vpop.f32.mrb[0].mxu0
        %1022 = vdwg.mxu0
        %v1023 = vadd.f32 %v365, %v961
        %v1024 = vadd.f32 %v366, %v964
        %v1025 = vadd.f32 %v367, %v969
        %v1026 = vadd.f32 %v368, %v972
        %v1027 = vadd.f32 %v369, %v977
        %v1028 = vadd.f32 %v370, %v980
        %v1029 = vadd.f32 %v371, %v985
        %v1030 = vadd.f32 %v372, %v988
        %v1031 = vadd.f32 %v373, %v993
        %v1032 = vadd.f32 %v374, %v996
        %v1033 = vadd.f32 %v375, %v1001
        %v1034 = vadd.f32 %v376, %v1004
        %v1035 = vadd.f32 %v377, %v1009
        %v1036 = vadd.f32 %v378, %v1012
        %v1037 = vadd.f32 %v379, %v1017
        %v1038 = vadd.f32 %v380, %v1020
        %1039 = vst [vmem:[#allocation2] sm:$0xff] %v1023
        %1040 = vst [vmem:[#allocation2 + $0x8] sm:$0xff] %v1024
        %1041 = vst [vmem:[#allocation2 + $0x10] sm:$0xff] %v1025
        %1042 = vst [vmem:[#allocation2 + $0x18] sm:$0xff] %v1026
        %1043 = vst [vmem:[#allocation2 + $0x20] sm:$0xff] %v1027
        %1044 = vst [vmem:[#allocation2 + $0x28] sm:$0xff] %v1028
        %1045 = vst [vmem:[#allocation2 + $0x30] sm:$0xff] %v1029
        %1046 = vst [vmem:[#allocation2 + $0x38] sm:$0xff] %v1030
        %1047 = vst [vmem:[#allocation2 + $0x40] sm:$0xff] %v1031
        %1048 = vst [vmem:[#allocation2 + $0x48] sm:$0xff] %v1032
        %1049 = vst [vmem:[#allocation2 + $0x50] sm:$0xff] %v1033
        %1050 = vst [vmem:[#allocation2 + $0x58] sm:$0xff] %v1034
        %1051 = vst [vmem:[#allocation2 + $0x60] sm:$0xff] %v1035
        %1052 = vst [vmem:[#allocation2 + $0x68] sm:$0xff] %v1036
        %1053 = vst [vmem:[#allocation2 + $0x70] sm:$0xff] %v1037
        %1054 = vst [vmem:[#allocation2 + $0x78] sm:$0xff] %v1038
        %p1055 = scmp.eq.s32.totalorder %s21, 1
        // Predicated region
        $region60: #{unet_forward.19} parent=50 // pred_check
          %p1056 = pneg %p1055
        $region61: #{unet_forward.19} parent=50 // pred_check_branch
          %1058 = sbr.rel (%p1056) target = $region63
        $region62: #{unet_forward.19} parent=50 // pred_region
          %v1059 = vld [vmem:[#allocation2] sm:$0xff]
          %v1060 = vld [vmem:[#allocation2 + $0x8] sm:$0xff]
          %v1061 = vld [vmem:[#allocation2 + $0x10] sm:$0xff]
          %v1062 = vld [vmem:[#allocation2 + $0x18] sm:$0xff]
          %v1063 = vld [vmem:[#allocation2 + $0x20] sm:$0xff]
          %v1064 = vld [vmem:[#allocation2 + $0x28] sm:$0xff]
          %v1065 = vld [vmem:[#allocation2 + $0x30] sm:$0xff]
          %v1066 = vld [vmem:[#allocation2 + $0x38] sm:$0xff]
          %v1067 = vld [vmem:[#allocation2 + $0x40] sm:$0xff]
          %v1068 = vld [vmem:[#allocation2 + $0x48] sm:$0xff]
          %v1069 = vld [vmem:[#allocation2 + $0x50] sm:$0xff]
          %v1070 = vld [vmem:[#allocation2 + $0x58] sm:$0xff]
          %v1071 = vld [vmem:[#allocation2 + $0x60] sm:$0xff]
          %v1072 = vld [vmem:[#allocation2 + $0x68] sm:$0xff]
          %v1073 = vld [vmem:[#allocation2 + $0x70] sm:$0xff]
          %v1074 = vld [vmem:[#allocation2 + $0x78] sm:$0xff]
          %v1075 = vld [vmem:[%s333] sm:$0x1]
          %v1077 = vlaneseq
          %v1078 = vshrl.u32 %v1077, 7
          %v1079 = vsub.s32 0, %v1078
          %v1080 = vrot.slane %v1075, %v1079
          %v1082 = vadd.f32 %v1059, %v1080
          %v1083 = vadd.f32 %v1060, %v1080
          %v1084 = vadd.f32 %v1061, %v1080
          %v1085 = vadd.f32 %v1062, %v1080
          %v1086 = vadd.f32 %v1063, %v1080
          %v1087 = vadd.f32 %v1064, %v1080
          %v1088 = vadd.f32 %v1065, %v1080
          %v1089 = vadd.f32 %v1066, %v1080
          %v1090 = vadd.f32 %v1067, %v1080
          %v1091 = vadd.f32 %v1068, %v1080
          %v1092 = vadd.f32 %v1069, %v1080
          %v1093 = vadd.f32 %v1070, %v1080
          %v1094 = vadd.f32 %v1071, %v1080
          %v1095 = vadd.f32 %v1072, %v1080
          %v1096 = vadd.f32 %v1073, %v1080
          %v1097 = vadd.f32 %v1074, %v1080
          %v1098 = vtanh.pop %v1082
          %v1099 = vtanh.pop %v1083
          %v1100 = vtanh.pop %v1084
          %v1101 = vtanh.pop %v1085
          %v1102 = vtanh.pop %v1086
          %v1103 = vtanh.pop %v1087
          %v1104 = vtanh.pop %v1088
          %v1105 = vtanh.pop %v1089
          %v1106 = vtanh.pop %v1090
          %v1107 = vtanh.pop %v1091
          %v1108 = vtanh.pop %v1092
          %v1109 = vtanh.pop %v1093
          %v1110 = vtanh.pop %v1094
          %v1111 = vtanh.pop %v1095
          %v1112 = vtanh.pop %v1096
          %v1113 = vtanh.pop %v1097
          %1114 = vst [vmem:[%s342] sm:$0xff] %v1098
          %1115 = vst [vmem:[%s342 + $0x8] sm:$0xff] %v1099
          %1116 = vst [vmem:[%s342 + $0x10] sm:$0xff] %v1100
          %1117 = vst [vmem:[%s342 + $0x18] sm:$0xff] %v1101
          %1118 = vst [vmem:[%s342 + $0x20] sm:$0xff] %v1102
          %1119 = vst [vmem:[%s342 + $0x28] sm:$0xff] %v1103
          %1120 = vst [vmem:[%s342 + $0x30] sm:$0xff] %v1104
          %1121 = vst [vmem:[%s342 + $0x38] sm:$0xff] %v1105
          %1122 = vst [vmem:[%s342 + $0x40] sm:$0xff] %v1106
          %1123 = vst [vmem:[%s342 + $0x48] sm:$0xff] %v1107
          %1124 = vst [vmem:[%s342 + $0x50] sm:$0xff] %v1108
          %1125 = vst [vmem:[%s342 + $0x58] sm:$0xff] %v1109
          %1126 = vst [vmem:[%s342 + $0x60] sm:$0xff] %v1110
          %1127 = vst [vmem:[%s342 + $0x68] sm:$0xff] %v1111
          %1128 = vst [vmem:[%s342 + $0x70] sm:$0xff] %v1112
          %1129 = vst [vmem:[%s342 + $0x78] sm:$0xff] %v1113
        $region63: #{unet_forward.19} parent=50 // pred_fallthru
          _
        %s1130 = smul.u32 16, %s20
        %p1131 = scmp.lt.s32.totalorder %s19, 0
        %s1132 = scalar_select %p1131, %s19, 0
        %p1133 = scmp.lt.s32.totalorder %s1130, 255
        %s1134 = scalar_select %p1133, %s1130, 255
        %s1135 = smul.addr %s1132, 256
        %s1136 = sadd.s32 %s1134, %s1135
        %s1137 = smul.addr %s1136, 8
        %s1138 = scalar_lea.vmem %s3, %s1137
        // Predicated region
        $region64: #{unet_forward.19} parent=50 // pred_check
          %p1139 = pneg %p137
        $region65: #{unet_forward.19} parent=50 // pred_check_branch
          %1141 = sbr.rel (%p1139) target = $region67
        $region66: #{unet_forward.19} parent=50 // pred_region
          %s1142 = smul.u32 16, %s20
        $region67: #{unet_forward.19} parent=50 // pred_fallthru
          _
      $region51: #{unet_forward.19} parent=5 // pred_fallthru
        _
      %p1143 = scmp.le.s32.totalorder 2, %s9
      // Predicated region
      $region68: #{unet_forward.19} parent=5 // pred_check
        %p1144 = pneg %p1143
      $region69: #{unet_forward.19} parent=5 // pred_check_branch
        %1146 = sbr.rel (%p1144) target = $region71
      $region70: #{unet_forward.19} parent=5 // pred_region
        %s1147 = ssub.s32 %s9, 2
        // Predicated region
        $region72: #{unet_forward.19} parent=70 // pred_check
          %p1148 = pneg %p143
        $region73: #{unet_forward.19} parent=70 // pred_check_branch
          %1150 = sbr.rel (%p1148) target = $region75
        $region74: #{unet_forward.19} parent=70 // pred_region
          %s1151 = smul.u32 16, %s23
          %p1152 = scmp.lt.s32.totalorder %s22, 0
          %s1153 = scalar_select %p1152, %s22, 0
          %p1154 = scmp.lt.s32.totalorder %s1151, 255
          %s1155 = scalar_select %p1154, %s1151, 255
          %s1156 = smul.addr %s1153, 256
          %s1157 = sadd.s32 %s1155, %s1156
          %s1158 = smul.addr %s1157, 8
          %s1159 = scalar_lea.vmem %s3, %s1158
        $region75: #{unet_forward.19} parent=70 // pred_fallthru
          _
      $region71: #{unet_forward.19} parent=5 // pred_fallthru
        _
    $region6: #{unet_forward.19} parent=1 // loop_footer
      %s13 = sadd.s32 1, %s9
    $region7: #{unet_forward.19} parent=1 // loop_footer_branch
      %8 = sbr.rel target = $region3
    $region8: #{unet_forward.19} parent=1 // loop_exit
      _

</llo_original>
